<compile_context>
chip_gen: v7x
topology: tpu7x:2x2x1
jax: 0.10.0
libtpu: 0.0.40
codegen_flags: <defaults>
</compile_context>

<pallas_src>
import math
import numpy as np
import jax
import jax.numpy as jnp
from jax.experimental import pallas as pl
from jax.experimental.pallas import tpu as pltpu


# ----------------------------------------------------------------------------
# Kernel
# ----------------------------------------------------------------------------
def make_lstm_kernel(L, Tc, Hp, Bb, matmul_dtype, out_dtype, return_all_c):
    """L layers, Tc time steps per grid iteration, Hp = lane-padded hidden."""

    def gate_update(gates, c_prev):
        # gates: (Bb, 4*Hp) f32, lane-aligned gate chunks [i, f, c, o]
        i_gate = jax.nn.sigmoid(gates[:, 0 * Hp:1 * Hp])
        f_gate = jax.nn.sigmoid(gates[:, 1 * Hp:2 * Hp])
        c_gate = jnp.tanh(gates[:, 2 * Hp:3 * Hp])
        o_gate = jax.nn.sigmoid(gates[:, 3 * Hp:4 * Hp])
        ncx = f_gate * c_prev + i_gate * c_gate
        nhx = o_gate * jnp.tanh(ncx)
        return ncx, nhx

    def kernel(*refs):
        it = iter(refs)
        gx_ref = next(it)                         # (Tc, Bb, 4Hp) streamed
        w0_hbm = next(it)                         # (Hp, 4Hp) in HBM (ANY)
        wstk_hbm = next(it) if L > 1 else None    # (L-1, 2Hp, 4Hp) in HBM
        b_ref = next(it) if L > 1 else None       # (L-1, 1, 4Hp) f32
        allh_ref = next(it)                       # (Tc, L, Bb, Hp)
        allc_ref = next(it) if return_all_c else None
        w0_scr = next(it)                         # resident W_hh[0]
        wstk_scr = next(it) if L > 1 else None    # resident fused weights
        hx_scr = next(it)                         # (Bb, L*Hp) hidden slab
        c_scr = next(it)                          # (L, Bb, Hp) f32 cell state

        t_chunk = pl.program_id(1)   # axis 0 = batch block, axis 1 = time

        @pl.when(t_chunk == 0)
        def _init():
            # One-time (per batch block / per core) weight residency: weights
            # stay single-buffered in VMEM for the whole recurrence instead of
            # being re-DMA'd / double-buffered each grid step.  With the
            # default Bb the batch grid has a single block, so this runs once
            # per core.
            pltpu.sync_copy(w0_hbm, w0_scr)
            if L > 1:
                pltpu.sync_copy(wstk_hbm, wstk_scr)
            # zero initial h / c states (get_zero_states)
            hx_scr[...] = jnp.zeros_like(hx_scr)
            c_scr[...] = jnp.zeros_like(c_scr)

        # Hoisted bias broadcasts: emitted once per grid step, reused Tc times
        # (JAX does not CSE broadcast_in_dim inside the unrolled loop).
        if L > 1:
            b_bcast = [jnp.broadcast_to(b_ref[i - 1], (Bb, 4 * Hp))
                       for i in range(1, L)]

        for tl in range(Tc):
            # ---- layer 0: x-projection precomputed outside; only h @ W_hh --
            gates = gx_ref[tl].astype(jnp.float32) + jnp.dot(
                hx_scr[:, 0:Hp], w0_scr[...],
                preferred_element_type=jnp.float32)
            ncx, nhx = gate_update(gates, c_scr[0])
            c_scr[0] = ncx
            hx_scr[:, 0:Hp] = nhx.astype(matmul_dtype)   # single h store
            allh_ref[tl, 0] = nhx.astype(out_dtype)
            if return_all_c:
                allc_ref[tl, 0] = ncx.astype(out_dtype)

            # ---- layers 1..L-1: single fused matmul on the [x ; h] slab ----
            for i in range(1, L):
                gates = b_bcast[i - 1] + jnp.dot(
                    hx_scr[:, (i - 1) * Hp:(i + 1) * Hp], wstk_scr[i - 1],
                    preferred_element_type=jnp.float32)
                ncx, nhx = gate_update(gates, c_scr[i])
                c_scr[i] = ncx
                hx_scr[:, i * Hp:(i + 1) * Hp] = nhx.astype(matmul_dtype)
                allh_ref[tl, i] = nhx.astype(out_dtype)
                if return_all_c:
                    allc_ref[tl, i] = ncx.astype(out_dtype)

    return kernel


# ----------------------------------------------------------------------------
# Wrapper
# ----------------------------------------------------------------------------
def _pad_gate_cols(a, H, Hp):
    """Pad last axis from 4H to 4Hp, padding each of the 4 gate chunks."""
    if Hp == H:
        return a
    lead = a.shape[:-1]
    a4 = a.reshape(lead + (4, H))
    pad = [(0, 0)] * (len(lead) + 1) + [(0, Hp - H)]
    return jnp.pad(a4, pad).reshape(lead + (4 * Hp,))


def _pad_rows(a, H, Hp):
    if Hp == H:
        return a
    return jnp.pad(a, ((0, Hp - H), (0, 0)))


def _default_batch_block(B, target=256):
    """Largest batch block <= target that divides B (multiple of 8)."""
    if B <= target:
        return B
    for cand in range(target, 7, -8):
        if B % cand == 0:
            return cand
    return B


def self_lstm_forward(x, w_ih, w_hh, b, *,
                      time_block=8, batch_block=None,
                      matmul_dtype=jnp.bfloat16,
                      out_dtype=jnp.float32,
                      return_all_c=True,
                      vmem_limit_bytes=None):
    """x: (T, B, D_in) f32.  w_ih[i]: (D_i, 4H).  w_hh[i]: (H, 4H).
    b[i]: (1, 4H) (= b_ih + b_hh).  Returns (outputs (T,B,H),
    all_h (T*L,B,H), all_c (T*L,B,H) or None) matching the PyTorch module."""
    T, B, D_in = x.shape
    L = len(w_hh)
    H = w_hh[0].shape[0]
    Hp = ((H + 127) // 128) * 128            # lane-aligned hidden size

    Tc = max(1, min(time_block, T))
    Bb = batch_block if batch_block is not None else _default_batch_block(B)
    assert B % Bb == 0 and (Bb % 8 == 0 or Bb == B), \
        "batch block must divide B and be sublane-(8) aligned"
    nb = B // Bb
    nt = pl.cdiv(T, Tc)
    Tpad = nt * Tc

    # Hoisted layer-0 input projection: one big (T*B, D_in) x (D_in, 4H)
    # matmul with no serial dependence, done by XLA, streamed into the kernel
    # in matmul_dtype (halves HBM read traffic for the bf16 path).
    gx_dtype = matmul_dtype
    gx = (x.reshape(T * B, D_in) @ w_ih[0] + b[0]).reshape(T, B, 4 * H)
    gx = _pad_gate_cols(gx, H, Hp).astype(gx_dtype)
    if Tpad != T:
        gx = jnp.pad(gx, ((0, Tpad - T), (0, 0), (0, 0)))

    # Weights: lane-pad, fuse W_ih/W_hh for layers >= 1, cast matmul operands.
    w0hh = _pad_gate_cols(_pad_rows(w_hh[0], H, Hp), H, Hp).astype(matmul_dtype)

    inputs = [gx, w0hh]
    in_specs = [
        pl.BlockSpec((Tc, Bb, 4 * Hp), lambda bb, tt: (tt, bb, 0)),
        pl.BlockSpec(memory_space=pl.ANY),      # kept resident in VMEM scratch
    ]
    if L > 1:
        wstk = jnp.stack([
            jnp.concatenate(
                [_pad_gate_cols(_pad_rows(w_ih[i], H, Hp), H, Hp),
                 _pad_gate_cols(_pad_rows(w_hh[i], H, Hp), H, Hp)], axis=0)
            for i in range(1, L)], axis=0).astype(matmul_dtype)
        bvec = jnp.stack([_pad_gate_cols(b[i], H, Hp) for i in range(1, L)],
                         axis=0).astype(jnp.float32)
        inputs += [wstk, bvec]
        in_specs += [
            pl.BlockSpec(memory_space=pl.ANY),
            pl.BlockSpec((L - 1, 1, 4 * Hp), lambda bb, tt: (0, 0, 0)),
        ]

    n_out = 2 if return_all_c else 1
    out_specs = [pl.BlockSpec((Tc, L, Bb, Hp), lambda bb, tt: (tt, 0, bb, 0))
                 for _ in range(n_out)]
    out_shape = [jax.ShapeDtypeStruct((Tpad, L, B, Hp), out_dtype)
                 for _ in range(n_out)]

    scratch_shapes = [pltpu.VMEM((Hp, 4 * Hp), matmul_dtype)]        # W_hh[0]
    if L > 1:
        scratch_shapes.append(
            pltpu.VMEM((L - 1, 2 * Hp, 4 * Hp), matmul_dtype))       # stacked W
    scratch_shapes += [
        pltpu.VMEM((Bb, L * Hp), matmul_dtype),   # hidden slab [h_0|...|h_{L-1}]
        pltpu.VMEM((L, Bb, Hp), jnp.float32),     # cell states (f32)
    ]

    if vmem_limit_bytes is None:
        itm = lambda dt: jnp.dtype(dt).itemsize
        gx_blk = Tc * Bb * 4 * Hp * itm(gx_dtype)
        out_blk = Tc * L * Bb * Hp * itm(out_dtype)
        bias_blk = (L - 1) * 4 * Hp * 4
        w_bytes = (Hp * 4 * Hp + (L - 1) * 2 * Hp * 4 * Hp) * itm(matmul_dtype)
        state_bytes = Bb * L * Hp * itm(matmul_dtype) + L * Bb * Hp * 4
        need = (2 * (gx_blk + bias_blk) + 2 * n_out * out_blk
                + w_bytes + state_bytes)
        # 1.5x headroom; keep below v7x's 64 MiB physical VMEM.
        vmem_limit_bytes = int(min(max(int(1.5 * need), 32 << 20), 48 << 20))

    # Megacore: only shard the batch axis across cores when each shard still
    # feeds the MXU (Bb >= 128); splitting a starved recurrence only
    # duplicates per-core weight copies and init overhead.
    batch_sem = "parallel" if (nb > 1 and Bb >= 128) else "arbitrary"

    kernel = make_lstm_kernel(L, Tc, Hp, Bb, matmul_dtype, out_dtype,
                              return_all_c)
    outs = pl.pallas_call(
        kernel,
        grid_spec=pltpu.PrefetchScalarGridSpec(
            num_scalar_prefetch=0,
            grid=(nb, nt),
            in_specs=in_specs,
            out_specs=out_specs,
            scratch_shapes=scratch_shapes,
        ),
        out_shape=out_shape,
        compiler_params=pltpu.CompilerParams(
            dimension_semantics=(batch_sem, "arbitrary"),
            vmem_limit_bytes=vmem_limit_bytes),
    )(*inputs)

    # Un-pad and match the PyTorch return values.
    all_h = outs[0][:T, :, :, :H]
    outputs = all_h[:, L - 1]                    # top-layer hidden per step
    all_h_flat = all_h.reshape(T * L, B, H)
    if return_all_c:
        all_c_flat = outs[1][:T, :, :, :H].reshape(T * L, B, H)
    else:
        all_c_flat = None
    return outputs, all_h_flat, all_c_flat


# ----------------------------------------------------------------------------
# Pure-JAX reference mirroring the PyTorch forward.
# ----------------------------------------------------------------------------
def ref_forward(x, w_ih, w_hh, b):
    T, B, _ = x.shape
    L = len(w_hh)
    H = w_hh[0].shape[0]
    h = jnp.zeros((L, B, H), jnp.float32)
    c = jnp.zeros((L, B, H), jnp.float32)
    outs, allh, allc = [], [], []
    for t in range(T):
        inp = x[t]
        new_h, new_c = [], []
        for i in range(L):
            gates = inp @ w_ih[i] + h[i] @ w_hh[i] + b[i]
            ig = jax.nn.sigmoid(gates[:, 0 * H:1 * H])
            fg = jax.nn.sigmoid(gates[:, 1 * H:2 * H])
            cg = jnp.tanh(gates[:, 2 * H:3 * H])
            og = jax.nn.sigmoid(gates[:, 3 * H:4 * H])
            nc = fg * c[i] + ig * cg
            nh = og * jnp.tanh(nc)
            new_h.append(nh)
            new_c.append(nc)
            inp = nh
        h = jnp.stack(new_h, 0)
        c = jnp.stack(new_c, 0)
        outs.append(h[-1])
        allh.append(h)
        allc.append(c)
    return (jnp.stack(outs, 0),
            jnp.concatenate(allh, 0),
            jnp.concatenate(allc, 0))


if __name__ == "__main__":
    # Small shapes consistent with the module's forward: (seq, batch, feature)
    T, B = 12, 16
    input_size, hidden_size, num_layers = 16, 32, 2
    H, L = hidden_size, num_layers

    key = jax.random.PRNGKey(0)
    k_x, *k_w = jax.random.split(key, 1 + 4 * L)
    stdv = 1.0 / math.sqrt(H)  # reset_parameters: uniform(-stdv, stdv)

    x = jax.random.normal(k_x, (T, B, input_size), dtype=jnp.float32)

    w_ih, w_hh, b = [], [], []
    kidx = 0
    for i in range(L):
        d_i = input_size if i == 0 else H
        w_ih.append(jax.random.uniform(k_w[kidx], (d_i, 4 * H),
                                       minval=-stdv, maxval=stdv,
                                       dtype=jnp.float32)); kidx += 1
        w_hh.append(jax.random.uniform(k_w[kidx], (H, 4 * H),
                                       minval=-stdv, maxval=stdv,
                                       dtype=jnp.float32)); kidx += 1
        b_ih = jax.random.uniform(k_w[kidx], (1, 4 * H),
                                  minval=-stdv, maxval=stdv,
                                  dtype=jnp.float32); kidx += 1
        b_hh = jax.random.uniform(k_w[kidx], (1, 4 * H),
                                  minval=-stdv, maxval=stdv,
                                  dtype=jnp.float32); kidx += 1
        b.append(b_ih + b_hh)  # Linear biases from w_ih and w_hh just sum

    ref_out, ref_h, ref_c = ref_forward(x, w_ih, w_hh, b)

    # --- f32 matmul path: matches the f32 reference tightly. ---------------
    outputs, all_h, all_c = jax.block_until_ready(
        self_lstm_forward(x, w_ih, w_hh, b, matmul_dtype=jnp.float32))
    assert np.allclose(np.asarray(outputs), np.asarray(ref_out), atol=1e-4), \
        "outputs mismatch (f32)"
    assert np.allclose(np.asarray(all_h), np.asarray(ref_h), atol=1e-4), \
        "h states mismatch (f32)"
    assert np.allclose(np.asarray(all_c), np.asarray(ref_c), atol=1e-4), \
        "c states mismatch (f32)"

    # --- default path: bf16 matmul operands + bf16 gx stream (v6e/v7x MXU);
    # gating math and cell state stay f32.  h is carried in bf16 across the
    # recurrence, so rounding accumulates with sequence length (loose tol).
    outputs_bf, all_h_bf, all_c_bf = jax.block_until_ready(
        self_lstm_forward(x, w_ih, w_hh, b))
    assert np.allclose(np.asarray(outputs_bf), np.asarray(ref_out), atol=1e-1), \
        "outputs mismatch (bf16)"
    assert np.allclose(np.asarray(all_h_bf), np.asarray(ref_h), atol=1e-1), \
        "h states mismatch (bf16)"

    print("KERNEL_OK")
</pallas_src>

<mosaic_0001>
module attributes {stable_mosaic.version = 11 : i64} {
  func.func @kernel(%arg0: i32, %arg1: i32, %arg2: memref<8x16x512xf32, #tpu.memory_space<vmem>>, %arg3: memref<128x512xf32, #tpu.memory_space<any>>, %arg4: memref<1x256x512xf32, #tpu.memory_space<any>>, %arg5: memref<1x1x512xf32, #tpu.memory_space<vmem>>, %arg6: memref<8x2x16x128xf32, #tpu.memory_space<vmem>>, %arg7: memref<8x2x16x128xf32, #tpu.memory_space<vmem>>, %arg8: memref<128x512xf32, #tpu.memory_space<vmem>>, %arg9: memref<1x256x512xf32, #tpu.memory_space<vmem>>, %arg10: memref<16x256xf32, #tpu.memory_space<vmem>>, %arg11: memref<2x16x128xf32, #tpu.memory_space<vmem>>) attributes {dimension_semantics = [#tpu.dimension_semantics<arbitrary>, #tpu.dimension_semantics<arbitrary>], iteration_bounds = array<i64: 1, 2>, scalar_prefetch = 0 : i64, scratch_operands = 4 : i64, tpu.core_type = #tpu.core_type<tc>, window_params = [{transform_indices = @transform_0, window_bounds = array<i64: 8, 16, 512>}, {}, {}, {pipeline_mode = #tpu.pipeline_mode<synchronous>, transform_indices = @transform_3, window_bounds = array<i64: 1, 1, 512>}, {transform_indices = @transform_4, window_bounds = array<i64: 8, 2, 16, 128>}, {transform_indices = @transform_5, window_bounds = array<i64: 8, 2, 16, 128>}]} {
    %c0_i32 = arith.constant 0 : i32
    %0 = arith.cmpi eq, %arg1, %c0_i32 : i32
    %1 = arith.extui %0 : i1 to i32
    %c0_i32_0 = arith.constant 0 : i32
    %2 = arith.cmpi ne, %1, %c0_i32_0 : i32
    scf.if %2 {
      "tpu.region"() ({
        %691 = tpu.sem_alloc : memref<!tpu.dma_semaphore, #tpu.memory_space<semaphore_mem>>
        tpu.enqueue_dma source(%arg3 : memref<128x512xf32, #tpu.memory_space<any>>) target(%arg8 : memref<128x512xf32, #tpu.memory_space<vmem>>) target_semaphore(%691 : memref<!tpu.dma_semaphore, #tpu.memory_space<semaphore_mem>>)
        tpu.wait_dma2 semaphore(%691 : memref<!tpu.dma_semaphore, #tpu.memory_space<semaphore_mem>>) src(%arg3 : memref<128x512xf32, #tpu.memory_space<any>>) dst(%arg8 : memref<128x512xf32, #tpu.memory_space<vmem>>)
        tpu.yield
      }) : () -> ()
      "tpu.region"() ({
        %691 = tpu.sem_alloc : memref<!tpu.dma_semaphore, #tpu.memory_space<semaphore_mem>>
        tpu.enqueue_dma source(%arg4 : memref<1x256x512xf32, #tpu.memory_space<any>>) target(%arg9 : memref<1x256x512xf32, #tpu.memory_space<vmem>>) target_semaphore(%691 : memref<!tpu.dma_semaphore, #tpu.memory_space<semaphore_mem>>)
        tpu.wait_dma2 semaphore(%691 : memref<!tpu.dma_semaphore, #tpu.memory_space<semaphore_mem>>) src(%arg4 : memref<1x256x512xf32, #tpu.memory_space<any>>) dst(%arg9 : memref<1x256x512xf32, #tpu.memory_space<vmem>>)
        tpu.yield
      }) : () -> ()
      %cst_410 = arith.constant 0.000000e+00 : f32
      %687 = vector.broadcast %cst_410 : f32 to vector<16x256xf32>
      %c0_411 = arith.constant 0 : index
      %c0_412 = arith.constant 0 : index
      %688 = vector.load %arg10[%c0_411, %c0_412] : memref<16x256xf32, #tpu.memory_space<vmem>>, vector<16x256xf32>
      tpu.vector_store %arg10[%c0_411, %c0_412], %687 {strides = array<i32>} : memref<16x256xf32, #tpu.memory_space<vmem>>, vector<16x256xf32>,
      %cst_413 = arith.constant 0.000000e+00 : f32
      %689 = vector.broadcast %cst_413 : f32 to vector<2x16x128xf32>
      %c0_414 = arith.constant 0 : index
      %c0_415 = arith.constant 0 : index
      %c0_416 = arith.constant 0 : index
      %690 = vector.load %arg11[%c0_414, %c0_415, %c0_416] : memref<2x16x128xf32, #tpu.memory_space<vmem>>, vector<2x16x128xf32>
      tpu.vector_store %arg11[%c0_414, %c0_415, %c0_416], %689 {strides = array<i32>} : memref<2x16x128xf32, #tpu.memory_space<vmem>>, vector<2x16x128xf32>,
    } else {
    }
    %c0 = arith.constant 0 : index
    %c0_1 = arith.constant 0 : index
    %c0_2 = arith.constant 0 : index
    %3 = vector.load %arg5[%c0, %c0_1, %c0_2] : memref<1x1x512xf32, #tpu.memory_space<vmem>>, vector<1x1x512xf32>
    %4 = vector.shape_cast %3 : vector<1x1x512xf32> to vector<1x512xf32>
    %5 = vector.shape_cast %4 : vector<1x512xf32> to vector<1x512xf32>
    %6 = vector.broadcast %5 : vector<1x512xf32> to vector<16x512xf32>
    %c0_3 = arith.constant 0 : index
    %c0_4 = arith.constant 0 : index
    %c0_5 = arith.constant 0 : index
    %7 = vector.load %arg2[%c0_3, %c0_4, %c0_5] : memref<8x16x512xf32, #tpu.memory_space<vmem>>, vector<1x16x512xf32>
    %8 = vector.shape_cast %7 : vector<1x16x512xf32> to vector<16x512xf32>
    %c0_6 = arith.constant 0 : index
    %c0_7 = arith.constant 0 : index
    %9 = vector.load %arg10[%c0_6, %c0_7] : memref<16x256xf32, #tpu.memory_space<vmem>>, vector<16x128xf32>
    %c0_8 = arith.constant 0 : index
    %c0_9 = arith.constant 0 : index
    %10 = vector.load %arg8[%c0_8, %c0_9] : memref<128x512xf32, #tpu.memory_space<vmem>>, vector<128x512xf32>
    %cst = arith.constant dense<0.000000e+00> : vector<16x512xf32>
    %11 = tpu.matmul %9, %10, %cst {dimension_numbers = #tpu.dot_dimension_numbers<[1], [0], [0], [1], [0, 0, 1, 1], [], []>} : vector<16x128xf32>, vector<128x512xf32>, vector<16x512xf32> -> vector<16x512xf32>
    %12 = arith.addf %8, %11 : vector<16x512xf32>
    %c0_10 = arith.constant 0 : index
    %c0_11 = arith.constant 0 : index
    %c0_12 = arith.constant 0 : index
    %13 = vector.load %arg11[%c0_10, %c0_11, %c0_12] : memref<2x16x128xf32, #tpu.memory_space<vmem>>, vector<1x16x128xf32>
    %14 = vector.shape_cast %13 : vector<1x16x128xf32> to vector<16x128xf32>
    %15 = vector.extract_strided_slice %12 {offsets = [0, 0], sizes = [16, 128], strides = [1, 1]} : vector<16x512xf32> to vector<16x128xf32>
    %16 = arith.negf %15 : vector<16x128xf32>
    %17 = math.exp %16 : vector<16x128xf32>
    %cst_13 = arith.constant 1.000000e+00 : f32
    %18 = vector.broadcast %cst_13 : f32 to vector<16x128xf32>
    %19 = arith.addf %18, %17 : vector<16x128xf32>
    %20 = arith.divf %18, %19 : vector<16x128xf32>
    %21 = vector.extract_strided_slice %12 {offsets = [0, 128], sizes = [16, 128], strides = [1, 1]} : vector<16x512xf32> to vector<16x128xf32>
    %22 = arith.negf %21 : vector<16x128xf32>
    %23 = math.exp %22 : vector<16x128xf32>
    %cst_14 = arith.constant 1.000000e+00 : f32
    %24 = vector.broadcast %cst_14 : f32 to vector<16x128xf32>
    %25 = arith.addf %24, %23 : vector<16x128xf32>
    %26 = arith.divf %24, %25 : vector<16x128xf32>
    %27 = vector.extract_strided_slice %12 {offsets = [0, 256], sizes = [16, 128], strides = [1, 1]} : vector<16x512xf32> to vector<16x128xf32>
    %28 = math.tanh %27 : vector<16x128xf32>
    %29 = vector.extract_strided_slice %12 {offsets = [0, 384], sizes = [16, 128], strides = [1, 1]} : vector<16x512xf32> to vector<16x128xf32>
    %30 = arith.negf %29 : vector<16x128xf32>
    %31 = math.exp %30 : vector<16x128xf32>
    %cst_15 = arith.constant 1.000000e+00 : f32
    %32 = vector.broadcast %cst_15 : f32 to vector<16x128xf32>
    %33 = arith.addf %32, %31 : vector<16x128xf32>
    %34 = arith.divf %32, %33 : vector<16x128xf32>
    %35 = arith.mulf %26, %14 : vector<16x128xf32>
    %36 = arith.mulf %20, %28 : vector<16x128xf32>
    %37 = arith.addf %35, %36 : vector<16x128xf32>
    %38 = math.tanh %37 : vector<16x128xf32>
    %39 = arith.mulf %34, %38 : vector<16x128xf32>
    %c0_16 = arith.constant 0 : index
    %c0_17 = arith.constant 0 : index
    %c0_18 = arith.constant 0 : index
    %40 = vector.load %arg11[%c0_16, %c0_17, %c0_18] : memref<2x16x128xf32, #tpu.memory_space<vmem>>, vector<1x16x128xf32>
    %41 = vector.shape_cast %40 : vector<1x16x128xf32> to vector<16x128xf32>
    %42 = vector.shape_cast %37 : vector<16x128xf32> to vector<1x16x128xf32>
    tpu.vector_store %arg11[%c0_16, %c0_17, %c0_18], %42 {strides = array<i32>} : memref<2x16x128xf32, #tpu.memory_space<vmem>>, vector<1x16x128xf32>,
    %c0_19 = arith.constant 0 : index
    %c0_20 = arith.constant 0 : index
    %43 = vector.load %arg10[%c0_19, %c0_20] : memref<16x256xf32, #tpu.memory_space<vmem>>, vector<16x128xf32>
    tpu.vector_store %arg10[%c0_19, %c0_20], %39 {strides = array<i32>} : memref<16x256xf32, #tpu.memory_space<vmem>>, vector<16x128xf32>,
    %c0_21 = arith.constant 0 : index
    %c0_22 = arith.constant 0 : index
    %c0_23 = arith.constant 0 : index
    %c0_24 = arith.constant 0 : index
    %44 = vector.load %arg6[%c0_21, %c0_22, %c0_23, %c0_24] : memref<8x2x16x128xf32, #tpu.memory_space<vmem>>, vector<1x1x16x128xf32>
    %45 = vector.shape_cast %44 : vector<1x1x16x128xf32> to vector<16x128xf32>
    %46 = vector.shape_cast %39 : vector<16x128xf32> to vector<1x1x16x128xf32>
    tpu.vector_store %arg6[%c0_21, %c0_22, %c0_23, %c0_24], %46 {strides = array<i32>} : memref<8x2x16x128xf32, #tpu.memory_space<vmem>>, vector<1x1x16x128xf32>,
    %c0_25 = arith.constant 0 : index
    %c0_26 = arith.constant 0 : index
    %c0_27 = arith.constant 0 : index
    %c0_28 = arith.constant 0 : index
    %47 = vector.load %arg7[%c0_25, %c0_26, %c0_27, %c0_28] : memref<8x2x16x128xf32, #tpu.memory_space<vmem>>, vector<1x1x16x128xf32>
    %48 = vector.shape_cast %47 : vector<1x1x16x128xf32> to vector<16x128xf32>
    %49 = vector.shape_cast %37 : vector<16x128xf32> to vector<1x1x16x128xf32>
    tpu.vector_store %arg7[%c0_25, %c0_26, %c0_27, %c0_28], %49 {strides = array<i32>} : memref<8x2x16x128xf32, #tpu.memory_space<vmem>>, vector<1x1x16x128xf32>,
    %c0_29 = arith.constant 0 : index
    %c0_30 = arith.constant 0 : index
    %50 = vector.load %arg10[%c0_29, %c0_30] : memref<16x256xf32, #tpu.memory_space<vmem>>, vector<16x256xf32>
    %c0_31 = arith.constant 0 : index
    %c0_32 = arith.constant 0 : index
    %c0_33 = arith.constant 0 : index
    %51 = vector.load %arg9[%c0_31, %c0_32, %c0_33] : memref<1x256x512xf32, #tpu.memory_space<vmem>>, vector<1x256x512xf32>
    %52 = vector.shape_cast %51 : vector<1x256x512xf32> to vector<256x512xf32>
    %cst_34 = arith.constant dense<0.000000e+00> : vector<16x512xf32>
    %53 = tpu.matmul %50, %52, %cst_34 {dimension_numbers = #tpu.dot_dimension_numbers<[1], [0], [0], [1], [0, 0, 1, 1], [], []>} : vector<16x256xf32>, vector<256x512xf32>, vector<16x512xf32> -> vector<16x512xf32>
    %54 = arith.addf %6, %53 : vector<16x512xf32>
    %c1 = arith.constant 1 : index
    %c0_35 = arith.constant 0 : index
    %c0_36 = arith.constant 0 : index
    %55 = vector.load %arg11[%c1, %c0_35, %c0_36] : memref<2x16x128xf32, #tpu.memory_space<vmem>>, vector<1x16x128xf32>
    %56 = vector.shape_cast %55 : vector<1x16x128xf32> to vector<16x128xf32>
    %57 = vector.extract_strided_slice %54 {offsets = [0, 0], sizes = [16, 128], strides = [1, 1]} : vector<16x512xf32> to vector<16x128xf32>
    %58 = arith.negf %57 : vector<16x128xf32>
    %59 = math.exp %58 : vector<16x128xf32>
    %cst_37 = arith.constant 1.000000e+00 : f32
    %60 = vector.broadcast %cst_37 : f32 to vector<16x128xf32>
    %61 = arith.addf %60, %59 : vector<16x128xf32>
    %62 = arith.divf %60, %61 : vector<16x128xf32>
    %63 = vector.extract_strided_slice %54 {offsets = [0, 128], sizes = [16, 128], strides = [1, 1]} : vector<16x512xf32> to vector<16x128xf32>
    %64 = arith.negf %63 : vector<16x128xf32>
    %65 = math.exp %64 : vector<16x128xf32>
    %cst_38 = arith.constant 1.000000e+00 : f32
    %66 = vector.broadcast %cst_38 : f32 to vector<16x128xf32>
    %67 = arith.addf %66, %65 : vector<16x128xf32>
    %68 = arith.divf %66, %67 : vector<16x128xf32>
    %69 = vector.extract_strided_slice %54 {offsets = [0, 256], sizes = [16, 128], strides = [1, 1]} : vector<16x512xf32> to vector<16x128xf32>
    %70 = math.tanh %69 : vector<16x128xf32>
    %71 = vector.extract_strided_slice %54 {offsets = [0, 384], sizes = [16, 128], strides = [1, 1]} : vector<16x512xf32> to vector<16x128xf32>
    %72 = arith.negf %71 : vector<16x128xf32>
    %73 = math.exp %72 : vector<16x128xf32>
    %cst_39 = arith.constant 1.000000e+00 : f32
    %74 = vector.broadcast %cst_39 : f32 to vector<16x128xf32>
    %75 = arith.addf %74, %73 : vector<16x128xf32>
    %76 = arith.divf %74, %75 : vector<16x128xf32>
    %77 = arith.mulf %68, %56 : vector<16x128xf32>
    %78 = arith.mulf %62, %70 : vector<16x128xf32>
    %79 = arith.addf %77, %78 : vector<16x128xf32>
    %80 = math.tanh %79 : vector<16x128xf32>
    %81 = arith.mulf %76, %80 : vector<16x128xf32>
    %c1_40 = arith.constant 1 : index
    %c0_41 = arith.constant 0 : index
    %c0_42 = arith.constant 0 : index
    %82 = vector.load %arg11[%c1_40, %c0_41, %c0_42] : memref<2x16x128xf32, #tpu.memory_space<vmem>>, vector<1x16x128xf32>
    %83 = vector.shape_cast %82 : vector<1x16x128xf32> to vector<16x128xf32>
    %84 = vector.shape_cast %79 : vector<16x128xf32> to vector<1x16x128xf32>
    tpu.vector_store %arg11[%c1_40, %c0_41, %c0_42], %84 {strides = array<i32>} : memref<2x16x128xf32, #tpu.memory_space<vmem>>, vector<1x16x128xf32>,
    %c0_43 = arith.constant 0 : index
    %c128 = arith.constant 128 : index
    %85 = vector.load %arg10[%c0_43, %c128] : memref<16x256xf32, #tpu.memory_space<vmem>>, vector<16x128xf32>
    tpu.vector_store %arg10[%c0_43, %c128], %81 {strides = array<i32>} : memref<16x256xf32, #tpu.memory_space<vmem>>, vector<16x128xf32>,
    %c0_44 = arith.constant 0 : index
    %c1_45 = arith.constant 1 : index
    %c0_46 = arith.constant 0 : index
    %c0_47 = arith.constant 0 : index
    %86 = vector.load %arg6[%c0_44, %c1_45, %c0_46, %c0_47] : memref<8x2x16x128xf32, #tpu.memory_space<vmem>>, vector<1x1x16x128xf32>
    %87 = vector.shape_cast %86 : vector<1x1x16x128xf32> to vector<16x128xf32>
    %88 = vector.shape_cast %81 : vector<16x128xf32> to vector<1x1x16x128xf32>
    tpu.vector_store %arg6[%c0_44, %c1_45, %c0_46, %c0_47], %88 {strides = array<i32>} : memref<8x2x16x128xf32, #tpu.memory_space<vmem>>, vector<1x1x16x128xf32>,
    %c0_48 = arith.constant 0 : index
    %c1_49 = arith.constant 1 : index
    %c0_50 = arith.constant 0 : index
    %c0_51 = arith.constant 0 : index
    %89 = vector.load %arg7[%c0_48, %c1_49, %c0_50, %c0_51] : memref<8x2x16x128xf32, #tpu.memory_space<vmem>>, vector<1x1x16x128xf32>
    %90 = vector.shape_cast %89 : vector<1x1x16x128xf32> to vector<16x128xf32>
    %91 = vector.shape_cast %79 : vector<16x128xf32> to vector<1x1x16x128xf32>
    tpu.vector_store %arg7[%c0_48, %c1_49, %c0_50, %c0_51], %91 {strides = array<i32>} : memref<8x2x16x128xf32, #tpu.memory_space<vmem>>, vector<1x1x16x128xf32>,
    %c1_52 = arith.constant 1 : index
    %c0_53 = arith.constant 0 : index
    %c0_54 = arith.constant 0 : index
    %92 = vector.load %arg2[%c1_52, %c0_53, %c0_54] : memref<8x16x512xf32, #tpu.memory_space<vmem>>, vector<1x16x512xf32>
    %93 = vector.shape_cast %92 : vector<1x16x512xf32> to vector<16x512xf32>
    %c0_55 = arith.constant 0 : index
    %c0_56 = arith.constant 0 : index
    %94 = vector.load %arg10[%c0_55, %c0_56] : memref<16x256xf32, #tpu.memory_space<vmem>>, vector<16x128xf32>
    %c0_57 = arith.constant 0 : index
    %c0_58 = arith.constant 0 : index
    %95 = vector.load %arg8[%c0_57, %c0_58] : memref<128x512xf32, #tpu.memory_space<vmem>>, vector<128x512xf32>
    %cst_59 = arith.constant dense<0.000000e+00> : vector<16x512xf32>
    %96 = tpu.matmul %94, %95, %cst_59 {dimension_numbers = #tpu.dot_dimension_numbers<[1], [0], [0], [1], [0, 0, 1, 1], [], []>} : vector<16x128xf32>, vector<128x512xf32>, vector<16x512xf32> -> vector<16x512xf32>
    %97 = arith.addf %93, %96 : vector<16x512xf32>
    %c0_60 = arith.constant 0 : index
    %c0_61 = arith.constant 0 : index
    %c0_62 = arith.constant 0 : index
    %98 = vector.load %arg11[%c0_60, %c0_61, %c0_62] : memref<2x16x128xf32, #tpu.memory_space<vmem>>, vector<1x16x128xf32>
    %99 = vector.shape_cast %98 : vector<1x16x128xf32> to vector<16x128xf32>
    %100 = vector.extract_strided_slice %97 {offsets = [0, 0], sizes = [16, 128], strides = [1, 1]} : vector<16x512xf32> to vector<16x128xf32>
    %101 = arith.negf %100 : vector<16x128xf32>
    %102 = math.exp %101 : vector<16x128xf32>
    %cst_63 = arith.constant 1.000000e+00 : f32
    %103 = vector.broadcast %cst_63 : f32 to vector<16x128xf32>
    %104 = arith.addf %103, %102 : vector<16x128xf32>
    %105 = arith.divf %103, %104 : vector<16x128xf32>
    %106 = vector.extract_strided_slice %97 {offsets = [0, 128], sizes = [16, 128], strides = [1, 1]} : vector<16x512xf32> to vector<16x128xf32>
    %107 = arith.negf %106 : vector<16x128xf32>
    %108 = math.exp %107 : vector<16x128xf32>
    %cst_64 = arith.constant 1.000000e+00 : f32
    %109 = vector.broadcast %cst_64 : f32 to vector<16x128xf32>
    %110 = arith.addf %109, %108 : vector<16x128xf32>
    %111 = arith.divf %109, %110 : vector<16x128xf32>
    %112 = vector.extract_strided_slice %97 {offsets = [0, 256], sizes = [16, 128], strides = [1, 1]} : vector<16x512xf32> to vector<16x128xf32>
    %113 = math.tanh %112 : vector<16x128xf32>
    %114 = vector.extract_strided_slice %97 {offsets = [0, 384], sizes = [16, 128], strides = [1, 1]} : vector<16x512xf32> to vector<16x128xf32>
    %115 = arith.negf %114 : vector<16x128xf32>
    %116 = math.exp %115 : vector<16x128xf32>
    %cst_65 = arith.constant 1.000000e+00 : f32
    %117 = vector.broadcast %cst_65 : f32 to vector<16x128xf32>
    %118 = arith.addf %117, %116 : vector<16x128xf32>
    %119 = arith.divf %117, %118 : vector<16x128xf32>
    %120 = arith.mulf %111, %99 : vector<16x128xf32>
    %121 = arith.mulf %105, %113 : vector<16x128xf32>
    %122 = arith.addf %120, %121 : vector<16x128xf32>
    %123 = math.tanh %122 : vector<16x128xf32>
    %124 = arith.mulf %119, %123 : vector<16x128xf32>
    %c0_66 = arith.constant 0 : index
    %c0_67 = arith.constant 0 : index
    %c0_68 = arith.constant 0 : index
    %125 = vector.load %arg11[%c0_66, %c0_67, %c0_68] : memref<2x16x128xf32, #tpu.memory_space<vmem>>, vector<1x16x128xf32>
    %126 = vector.shape_cast %125 : vector<1x16x128xf32> to vector<16x128xf32>
    %127 = vector.shape_cast %122 : vector<16x128xf32> to vector<1x16x128xf32>
    tpu.vector_store %arg11[%c0_66, %c0_67, %c0_68], %127 {strides = array<i32>} : memref<2x16x128xf32, #tpu.memory_space<vmem>>, vector<1x16x128xf32>,
    %c0_69 = arith.constant 0 : index
    %c0_70 = arith.constant 0 : index
    %128 = vector.load %arg10[%c0_69, %c0_70] : memref<16x256xf32, #tpu.memory_space<vmem>>, vector<16x128xf32>
    tpu.vector_store %arg10[%c0_69, %c0_70], %124 {strides = array<i32>} : memref<16x256xf32, #tpu.memory_space<vmem>>, vector<16x128xf32>,
    %c1_71 = arith.constant 1 : index
    %c0_72 = arith.constant 0 : index
    %c0_73 = arith.constant 0 : index
    %c0_74 = arith.constant 0 : index
    %129 = vector.load %arg6[%c1_71, %c0_72, %c0_73, %c0_74] : memref<8x2x16x128xf32, #tpu.memory_space<vmem>>, vector<1x1x16x128xf32>
    %130 = vector.shape_cast %129 : vector<1x1x16x128xf32> to vector<16x128xf32>
    %131 = vector.shape_cast %124 : vector<16x128xf32> to vector<1x1x16x128xf32>
    tpu.vector_store %arg6[%c1_71, %c0_72, %c0_73, %c0_74], %131 {strides = array<i32>} : memref<8x2x16x128xf32, #tpu.memory_space<vmem>>, vector<1x1x16x128xf32>,
    %c1_75 = arith.constant 1 : index
    %c0_76 = arith.constant 0 : index
    %c0_77 = arith.constant 0 : index
    %c0_78 = arith.constant 0 : index
    %132 = vector.load %arg7[%c1_75, %c0_76, %c0_77, %c0_78] : memref<8x2x16x128xf32, #tpu.memory_space<vmem>>, vector<1x1x16x128xf32>
    %133 = vector.shape_cast %132 : vector<1x1x16x128xf32> to vector<16x128xf32>
    %134 = vector.shape_cast %122 : vector<16x128xf32> to vector<1x1x16x128xf32>
    tpu.vector_store %arg7[%c1_75, %c0_76, %c0_77, %c0_78], %134 {strides = array<i32>} : memref<8x2x16x128xf32, #tpu.memory_space<vmem>>, vector<1x1x16x128xf32>,
    %c0_79 = arith.constant 0 : index
    %c0_80 = arith.constant 0 : index
    %135 = vector.load %arg10[%c0_79, %c0_80] : memref<16x256xf32, #tpu.memory_space<vmem>>, vector<16x256xf32>
    %c0_81 = arith.constant 0 : index
    %c0_82 = arith.constant 0 : index
    %c0_83 = arith.constant 0 : index
    %136 = vector.load %arg9[%c0_81, %c0_82, %c0_83] : memref<1x256x512xf32, #tpu.memory_space<vmem>>, vector<1x256x512xf32>
    %137 = vector.shape_cast %136 : vector<1x256x512xf32> to vector<256x512xf32>
    %cst_84 = arith.constant dense<0.000000e+00> : vector<16x512xf32>
    %138 = tpu.matmul %135, %137, %cst_84 {dimension_numbers = #tpu.dot_dimension_numbers<[1], [0], [0], [1], [0, 0, 1, 1], [], []>} : vector<16x256xf32>, vector<256x512xf32>, vector<16x512xf32> -> vector<16x512xf32>
    %139 = arith.addf %6, %138 : vector<16x512xf32>
    %c1_85 = arith.constant 1 : index
    %c0_86 = arith.constant 0 : index
    %c0_87 = arith.constant 0 : index
    %140 = vector.load %arg11[%c1_85, %c0_86, %c0_87] : memref<2x16x128xf32, #tpu.memory_space<vmem>>, vector<1x16x128xf32>
    %141 = vector.shape_cast %140 : vector<1x16x128xf32> to vector<16x128xf32>
    %142 = vector.extract_strided_slice %139 {offsets = [0, 0], sizes = [16, 128], strides = [1, 1]} : vector<16x512xf32> to vector<16x128xf32>
    %143 = arith.negf %142 : vector<16x128xf32>
    %144 = math.exp %143 : vector<16x128xf32>
    %cst_88 = arith.constant 1.000000e+00 : f32
    %145 = vector.broadcast %cst_88 : f32 to vector<16x128xf32>
    %146 = arith.addf %145, %144 : vector<16x128xf32>
    %147 = arith.divf %145, %146 : vector<16x128xf32>
    %148 = vector.extract_strided_slice %139 {offsets = [0, 128], sizes = [16, 128], strides = [1, 1]} : vector<16x512xf32> to vector<16x128xf32>
    %149 = arith.negf %148 : vector<16x128xf32>
    %150 = math.exp %149 : vector<16x128xf32>
    %cst_89 = arith.constant 1.000000e+00 : f32
    %151 = vector.broadcast %cst_89 : f32 to vector<16x128xf32>
    %152 = arith.addf %151, %150 : vector<16x128xf32>
    %153 = arith.divf %151, %152 : vector<16x128xf32>
    %154 = vector.extract_strided_slice %139 {offsets = [0, 256], sizes = [16, 128], strides = [1, 1]} : vector<16x512xf32> to vector<16x128xf32>
    %155 = math.tanh %154 : vector<16x128xf32>
    %156 = vector.extract_strided_slice %139 {offsets = [0, 384], sizes = [16, 128], strides = [1, 1]} : vector<16x512xf32> to vector<16x128xf32>
    %157 = arith.negf %156 : vector<16x128xf32>
    %158 = math.exp %157 : vector<16x128xf32>
    %cst_90 = arith.constant 1.000000e+00 : f32
    %159 = vector.broadcast %cst_90 : f32 to vector<16x128xf32>
    %160 = arith.addf %159, %158 : vector<16x128xf32>
    %161 = arith.divf %159, %160 : vector<16x128xf32>
    %162 = arith.mulf %153, %141 : vector<16x128xf32>
    %163 = arith.mulf %147, %155 : vector<16x128xf32>
    %164 = arith.addf %162, %163 : vector<16x128xf32>
    %165 = math.tanh %164 : vector<16x128xf32>
    %166 = arith.mulf %161, %165 : vector<16x128xf32>
    %c1_91 = arith.constant 1 : index
    %c0_92 = arith.constant 0 : index
    %c0_93 = arith.constant 0 : index
    %167 = vector.load %arg11[%c1_91, %c0_92, %c0_93] : memref<2x16x128xf32, #tpu.memory_space<vmem>>, vector<1x16x128xf32>
    %168 = vector.shape_cast %167 : vector<1x16x128xf32> to vector<16x128xf32>
    %169 = vector.shape_cast %164 : vector<16x128xf32> to vector<1x16x128xf32>
    tpu.vector_store %arg11[%c1_91, %c0_92, %c0_93], %169 {strides = array<i32>} : memref<2x16x128xf32, #tpu.memory_space<vmem>>, vector<1x16x128xf32>,
    %c0_94 = arith.constant 0 : index
    %c128_95 = arith.constant 128 : index
    %170 = vector.load %arg10[%c0_94, %c128_95] : memref<16x256xf32, #tpu.memory_space<vmem>>, vector<16x128xf32>
    tpu.vector_store %arg10[%c0_94, %c128_95], %166 {strides = array<i32>} : memref<16x256xf32, #tpu.memory_space<vmem>>, vector<16x128xf32>,
    %c1_96 = arith.constant 1 : index
    %c1_97 = arith.constant 1 : index
    %c0_98 = arith.constant 0 : index
    %c0_99 = arith.constant 0 : index
    %171 = vector.load %arg6[%c1_96, %c1_97, %c0_98, %c0_99] : memref<8x2x16x128xf32, #tpu.memory_space<vmem>>, vector<1x1x16x128xf32>
    %172 = vector.shape_cast %171 : vector<1x1x16x128xf32> to vector<16x128xf32>
    %173 = vector.shape_cast %166 : vector<16x128xf32> to vector<1x1x16x128xf32>
    tpu.vector_store %arg6[%c1_96, %c1_97, %c0_98, %c0_99], %173 {strides = array<i32>} : memref<8x2x16x128xf32, #tpu.memory_space<vmem>>, vector<1x1x16x128xf32>,
    %c1_100 = arith.constant 1 : index
    %c1_101 = arith.constant 1 : index
    %c0_102 = arith.constant 0 : index
    %c0_103 = arith.constant 0 : index
    %174 = vector.load %arg7[%c1_100, %c1_101, %c0_102, %c0_103] : memref<8x2x16x128xf32, #tpu.memory_space<vmem>>, vector<1x1x16x128xf32>
    %175 = vector.shape_cast %174 : vector<1x1x16x128xf32> to vector<16x128xf32>
    %176 = vector.shape_cast %164 : vector<16x128xf32> to vector<1x1x16x128xf32>
    tpu.vector_store %arg7[%c1_100, %c1_101, %c0_102, %c0_103], %176 {strides = array<i32>} : memref<8x2x16x128xf32, #tpu.memory_space<vmem>>, vector<1x1x16x128xf32>,
    %c2 = arith.constant 2 : index
    %c0_104 = arith.constant 0 : index
    %c0_105 = arith.constant 0 : index
    %177 = vector.load %arg2[%c2, %c0_104, %c0_105] : memref<8x16x512xf32, #tpu.memory_space<vmem>>, vector<1x16x512xf32>
    %178 = vector.shape_cast %177 : vector<1x16x512xf32> to vector<16x512xf32>
    %c0_106 = arith.constant 0 : index
    %c0_107 = arith.constant 0 : index
    %179 = vector.load %arg10[%c0_106, %c0_107] : memref<16x256xf32, #tpu.memory_space<vmem>>, vector<16x128xf32>
    %c0_108 = arith.constant 0 : index
    %c0_109 = arith.constant 0 : index
    %180 = vector.load %arg8[%c0_108, %c0_109] : memref<128x512xf32, #tpu.memory_space<vmem>>, vector<128x512xf32>
    %cst_110 = arith.constant dense<0.000000e+00> : vector<16x512xf32>
    %181 = tpu.matmul %179, %180, %cst_110 {dimension_numbers = #tpu.dot_dimension_numbers<[1], [0], [0], [1], [0, 0, 1, 1], [], []>} : vector<16x128xf32>, vector<128x512xf32>, vector<16x512xf32> -> vector<16x512xf32>
    %182 = arith.addf %178, %181 : vector<16x512xf32>
    %c0_111 = arith.constant 0 : index
    %c0_112 = arith.constant 0 : index
    %c0_113 = arith.constant 0 : index
    %183 = vector.load %arg11[%c0_111, %c0_112, %c0_113] : memref<2x16x128xf32, #tpu.memory_space<vmem>>, vector<1x16x128xf32>
    %184 = vector.shape_cast %183 : vector<1x16x128xf32> to vector<16x128xf32>
    %185 = vector.extract_strided_slice %182 {offsets = [0, 0], sizes = [16, 128], strides = [1, 1]} : vector<16x512xf32> to vector<16x128xf32>
    %186 = arith.negf %185 : vector<16x128xf32>
    %187 = math.exp %186 : vector<16x128xf32>
    %cst_114 = arith.constant 1.000000e+00 : f32
    %188 = vector.broadcast %cst_114 : f32 to vector<16x128xf32>
    %189 = arith.addf %188, %187 : vector<16x128xf32>
    %190 = arith.divf %188, %189 : vector<16x128xf32>
    %191 = vector.extract_strided_slice %182 {offsets = [0, 128], sizes = [16, 128], strides = [1, 1]} : vector<16x512xf32> to vector<16x128xf32>
    %192 = arith.negf %191 : vector<16x128xf32>
    %193 = math.exp %192 : vector<16x128xf32>
    %cst_115 = arith.constant 1.000000e+00 : f32
    %194 = vector.broadcast %cst_115 : f32 to vector<16x128xf32>
    %195 = arith.addf %194, %193 : vector<16x128xf32>
    %196 = arith.divf %194, %195 : vector<16x128xf32>
    %197 = vector.extract_strided_slice %182 {offsets = [0, 256], sizes = [16, 128], strides = [1, 1]} : vector<16x512xf32> to vector<16x128xf32>
    %198 = math.tanh %197 : vector<16x128xf32>
    %199 = vector.extract_strided_slice %182 {offsets = [0, 384], sizes = [16, 128], strides = [1, 1]} : vector<16x512xf32> to vector<16x128xf32>
    %200 = arith.negf %199 : vector<16x128xf32>
    %201 = math.exp %200 : vector<16x128xf32>
    %cst_116 = arith.constant 1.000000e+00 : f32
    %202 = vector.broadcast %cst_116 : f32 to vector<16x128xf32>
    %203 = arith.addf %202, %201 : vector<16x128xf32>
    %204 = arith.divf %202, %203 : vector<16x128xf32>
    %205 = arith.mulf %196, %184 : vector<16x128xf32>
    %206 = arith.mulf %190, %198 : vector<16x128xf32>
    %207 = arith.addf %205, %206 : vector<16x128xf32>
    %208 = math.tanh %207 : vector<16x128xf32>
    %209 = arith.mulf %204, %208 : vector<16x128xf32>
    %c0_117 = arith.constant 0 : index
    %c0_118 = arith.constant 0 : index
    %c0_119 = arith.constant 0 : index
    %210 = vector.load %arg11[%c0_117, %c0_118, %c0_119] : memref<2x16x128xf32, #tpu.memory_space<vmem>>, vector<1x16x128xf32>
    %211 = vector.shape_cast %210 : vector<1x16x128xf32> to vector<16x128xf32>
    %212 = vector.shape_cast %207 : vector<16x128xf32> to vector<1x16x128xf32>
    tpu.vector_store %arg11[%c0_117, %c0_118, %c0_119], %212 {strides = array<i32>} : memref<2x16x128xf32, #tpu.memory_space<vmem>>, vector<1x16x128xf32>,
    %c0_120 = arith.constant 0 : index
    %c0_121 = arith.constant 0 : index
    %213 = vector.load %arg10[%c0_120, %c0_121] : memref<16x256xf32, #tpu.memory_space<vmem>>, vector<16x128xf32>
    tpu.vector_store %arg10[%c0_120, %c0_121], %209 {strides = array<i32>} : memref<16x256xf32, #tpu.memory_space<vmem>>, vector<16x128xf32>,
    %c2_122 = arith.constant 2 : index
    %c0_123 = arith.constant 0 : index
    %c0_124 = arith.constant 0 : index
    %c0_125 = arith.constant 0 : index
    %214 = vector.load %arg6[%c2_122, %c0_123, %c0_124, %c0_125] : memref<8x2x16x128xf32, #tpu.memory_space<vmem>>, vector<1x1x16x128xf32>
    %215 = vector.shape_cast %214 : vector<1x1x16x128xf32> to vector<16x128xf32>
    %216 = vector.shape_cast %209 : vector<16x128xf32> to vector<1x1x16x128xf32>
    tpu.vector_store %arg6[%c2_122, %c0_123, %c0_124, %c0_125], %216 {strides = array<i32>} : memref<8x2x16x128xf32, #tpu.memory_space<vmem>>, vector<1x1x16x128xf32>,
    %c2_126 = arith.constant 2 : index
    %c0_127 = arith.constant 0 : index
    %c0_128 = arith.constant 0 : index
    %c0_129 = arith.constant 0 : index
    %217 = vector.load %arg7[%c2_126, %c0_127, %c0_128, %c0_129] : memref<8x2x16x128xf32, #tpu.memory_space<vmem>>, vector<1x1x16x128xf32>
    %218 = vector.shape_cast %217 : vector<1x1x16x128xf32> to vector<16x128xf32>
    %219 = vector.shape_cast %207 : vector<16x128xf32> to vector<1x1x16x128xf32>
    tpu.vector_store %arg7[%c2_126, %c0_127, %c0_128, %c0_129], %219 {strides = array<i32>} : memref<8x2x16x128xf32, #tpu.memory_space<vmem>>, vector<1x1x16x128xf32>,
    %c0_130 = arith.constant 0 : index
    %c0_131 = arith.constant 0 : index
    %220 = vector.load %arg10[%c0_130, %c0_131] : memref<16x256xf32, #tpu.memory_space<vmem>>, vector<16x256xf32>
    %c0_132 = arith.constant 0 : index
    %c0_133 = arith.constant 0 : index
    %c0_134 = arith.constant 0 : index
    %221 = vector.load %arg9[%c0_132, %c0_133, %c0_134] : memref<1x256x512xf32, #tpu.memory_space<vmem>>, vector<1x256x512xf32>
    %222 = vector.shape_cast %221 : vector<1x256x512xf32> to vector<256x512xf32>
    %cst_135 = arith.constant dense<0.000000e+00> : vector<16x512xf32>
    %223 = tpu.matmul %220, %222, %cst_135 {dimension_numbers = #tpu.dot_dimension_numbers<[1], [0], [0], [1], [0, 0, 1, 1], [], []>} : vector<16x256xf32>, vector<256x512xf32>, vector<16x512xf32> -> vector<16x512xf32>
    %224 = arith.addf %6, %223 : vector<16x512xf32>
    %c1_136 = arith.constant 1 : index
    %c0_137 = arith.constant 0 : index
    %c0_138 = arith.constant 0 : index
    %225 = vector.load %arg11[%c1_136, %c0_137, %c0_138] : memref<2x16x128xf32, #tpu.memory_space<vmem>>, vector<1x16x128xf32>
    %226 = vector.shape_cast %225 : vector<1x16x128xf32> to vector<16x128xf32>
    %227 = vector.extract_strided_slice %224 {offsets = [0, 0], sizes = [16, 128], strides = [1, 1]} : vector<16x512xf32> to vector<16x128xf32>
    %228 = arith.negf %227 : vector<16x128xf32>
    %229 = math.exp %228 : vector<16x128xf32>
    %cst_139 = arith.constant 1.000000e+00 : f32
    %230 = vector.broadcast %cst_139 : f32 to vector<16x128xf32>
    %231 = arith.addf %230, %229 : vector<16x128xf32>
    %232 = arith.divf %230, %231 : vector<16x128xf32>
    %233 = vector.extract_strided_slice %224 {offsets = [0, 128], sizes = [16, 128], strides = [1, 1]} : vector<16x512xf32> to vector<16x128xf32>
    %234 = arith.negf %233 : vector<16x128xf32>
    %235 = math.exp %234 : vector<16x128xf32>
    %cst_140 = arith.constant 1.000000e+00 : f32
    %236 = vector.broadcast %cst_140 : f32 to vector<16x128xf32>
    %237 = arith.addf %236, %235 : vector<16x128xf32>
    %238 = arith.divf %236, %237 : vector<16x128xf32>
    %239 = vector.extract_strided_slice %224 {offsets = [0, 256], sizes = [16, 128], strides = [1, 1]} : vector<16x512xf32> to vector<16x128xf32>
    %240 = math.tanh %239 : vector<16x128xf32>
    %241 = vector.extract_strided_slice %224 {offsets = [0, 384], sizes = [16, 128], strides = [1, 1]} : vector<16x512xf32> to vector<16x128xf32>
    %242 = arith.negf %241 : vector<16x128xf32>
    %243 = math.exp %242 : vector<16x128xf32>
    %cst_141 = arith.constant 1.000000e+00 : f32
    %244 = vector.broadcast %cst_141 : f32 to vector<16x128xf32>
    %245 = arith.addf %244, %243 : vector<16x128xf32>
    %246 = arith.divf %244, %245 : vector<16x128xf32>
    %247 = arith.mulf %238, %226 : vector<16x128xf32>
    %248 = arith.mulf %232, %240 : vector<16x128xf32>
    %249 = arith.addf %247, %248 : vector<16x128xf32>
    %250 = math.tanh %249 : vector<16x128xf32>
    %251 = arith.mulf %246, %250 : vector<16x128xf32>
    %c1_142 = arith.constant 1 : index
    %c0_143 = arith.constant 0 : index
    %c0_144 = arith.constant 0 : index
    %252 = vector.load %arg11[%c1_142, %c0_143, %c0_144] : memref<2x16x128xf32, #tpu.memory_space<vmem>>, vector<1x16x128xf32>
    %253 = vector.shape_cast %252 : vector<1x16x128xf32> to vector<16x128xf32>
    %254 = vector.shape_cast %249 : vector<16x128xf32> to vector<1x16x128xf32>
    tpu.vector_store %arg11[%c1_142, %c0_143, %c0_144], %254 {strides = array<i32>} : memref<2x16x128xf32, #tpu.memory_space<vmem>>, vector<1x16x128xf32>,
    %c0_145 = arith.constant 0 : index
    %c128_146 = arith.constant 128 : index
    %255 = vector.load %arg10[%c0_145, %c128_146] : memref<16x256xf32, #tpu.memory_space<vmem>>, vector<16x128xf32>
    tpu.vector_store %arg10[%c0_145, %c128_146], %251 {strides = array<i32>} : memref<16x256xf32, #tpu.memory_space<vmem>>, vector<16x128xf32>,
    %c2_147 = arith.constant 2 : index
    %c1_148 = arith.constant 1 : index
    %c0_149 = arith.constant 0 : index
    %c0_150 = arith.constant 0 : index
    %256 = vector.load %arg6[%c2_147, %c1_148, %c0_149, %c0_150] : memref<8x2x16x128xf32, #tpu.memory_space<vmem>>, vector<1x1x16x128xf32>
    %257 = vector.shape_cast %256 : vector<1x1x16x128xf32> to vector<16x128xf32>
    %258 = vector.shape_cast %251 : vector<16x128xf32> to vector<1x1x16x128xf32>
    tpu.vector_store %arg6[%c2_147, %c1_148, %c0_149, %c0_150], %258 {strides = array<i32>} : memref<8x2x16x128xf32, #tpu.memory_space<vmem>>, vector<1x1x16x128xf32>,
    %c2_151 = arith.constant 2 : index
    %c1_152 = arith.constant 1 : index
    %c0_153 = arith.constant 0 : index
    %c0_154 = arith.constant 0 : index
    %259 = vector.load %arg7[%c2_151, %c1_152, %c0_153, %c0_154] : memref<8x2x16x128xf32, #tpu.memory_space<vmem>>, vector<1x1x16x128xf32>
    %260 = vector.shape_cast %259 : vector<1x1x16x128xf32> to vector<16x128xf32>
    %261 = vector.shape_cast %249 : vector<16x128xf32> to vector<1x1x16x128xf32>
    tpu.vector_store %arg7[%c2_151, %c1_152, %c0_153, %c0_154], %261 {strides = array<i32>} : memref<8x2x16x128xf32, #tpu.memory_space<vmem>>, vector<1x1x16x128xf32>,
    %c3 = arith.constant 3 : index
    %c0_155 = arith.constant 0 : index
    %c0_156 = arith.constant 0 : index
    %262 = vector.load %arg2[%c3, %c0_155, %c0_156] : memref<8x16x512xf32, #tpu.memory_space<vmem>>, vector<1x16x512xf32>
    %263 = vector.shape_cast %262 : vector<1x16x512xf32> to vector<16x512xf32>
    %c0_157 = arith.constant 0 : index
    %c0_158 = arith.constant 0 : index
    %264 = vector.load %arg10[%c0_157, %c0_158] : memref<16x256xf32, #tpu.memory_space<vmem>>, vector<16x128xf32>
    %c0_159 = arith.constant 0 : index
    %c0_160 = arith.constant 0 : index
    %265 = vector.load %arg8[%c0_159, %c0_160] : memref<128x512xf32, #tpu.memory_space<vmem>>, vector<128x512xf32>
    %cst_161 = arith.constant dense<0.000000e+00> : vector<16x512xf32>
    %266 = tpu.matmul %264, %265, %cst_161 {dimension_numbers = #tpu.dot_dimension_numbers<[1], [0], [0], [1], [0, 0, 1, 1], [], []>} : vector<16x128xf32>, vector<128x512xf32>, vector<16x512xf32> -> vector<16x512xf32>
    %267 = arith.addf %263, %266 : vector<16x512xf32>
    %c0_162 = arith.constant 0 : index
    %c0_163 = arith.constant 0 : index
    %c0_164 = arith.constant 0 : index
    %268 = vector.load %arg11[%c0_162, %c0_163, %c0_164] : memref<2x16x128xf32, #tpu.memory_space<vmem>>, vector<1x16x128xf32>
    %269 = vector.shape_cast %268 : vector<1x16x128xf32> to vector<16x128xf32>
    %270 = vector.extract_strided_slice %267 {offsets = [0, 0], sizes = [16, 128], strides = [1, 1]} : vector<16x512xf32> to vector<16x128xf32>
    %271 = arith.negf %270 : vector<16x128xf32>
    %272 = math.exp %271 : vector<16x128xf32>
    %cst_165 = arith.constant 1.000000e+00 : f32
    %273 = vector.broadcast %cst_165 : f32 to vector<16x128xf32>
    %274 = arith.addf %273, %272 : vector<16x128xf32>
    %275 = arith.divf %273, %274 : vector<16x128xf32>
    %276 = vector.extract_strided_slice %267 {offsets = [0, 128], sizes = [16, 128], strides = [1, 1]} : vector<16x512xf32> to vector<16x128xf32>
    %277 = arith.negf %276 : vector<16x128xf32>
    %278 = math.exp %277 : vector<16x128xf32>
    %cst_166 = arith.constant 1.000000e+00 : f32
    %279 = vector.broadcast %cst_166 : f32 to vector<16x128xf32>
    %280 = arith.addf %279, %278 : vector<16x128xf32>
    %281 = arith.divf %279, %280 : vector<16x128xf32>
    %282 = vector.extract_strided_slice %267 {offsets = [0, 256], sizes = [16, 128], strides = [1, 1]} : vector<16x512xf32> to vector<16x128xf32>
    %283 = math.tanh %282 : vector<16x128xf32>
    %284 = vector.extract_strided_slice %267 {offsets = [0, 384], sizes = [16, 128], strides = [1, 1]} : vector<16x512xf32> to vector<16x128xf32>
    %285 = arith.negf %284 : vector<16x128xf32>
    %286 = math.exp %285 : vector<16x128xf32>
    %cst_167 = arith.constant 1.000000e+00 : f32
    %287 = vector.broadcast %cst_167 : f32 to vector<16x128xf32>
    %288 = arith.addf %287, %286 : vector<16x128xf32>
    %289 = arith.divf %287, %288 : vector<16x128xf32>
    %290 = arith.mulf %281, %269 : vector<16x128xf32>
    %291 = arith.mulf %275, %283 : vector<16x128xf32>
    %292 = arith.addf %290, %291 : vector<16x128xf32>
    %293 = math.tanh %292 : vector<16x128xf32>
    %294 = arith.mulf %289, %293 : vector<16x128xf32>
    %c0_168 = arith.constant 0 : index
    %c0_169 = arith.constant 0 : index
    %c0_170 = arith.constant 0 : index
    %295 = vector.load %arg11[%c0_168, %c0_169, %c0_170] : memref<2x16x128xf32, #tpu.memory_space<vmem>>, vector<1x16x128xf32>
    %296 = vector.shape_cast %295 : vector<1x16x128xf32> to vector<16x128xf32>
    %297 = vector.shape_cast %292 : vector<16x128xf32> to vector<1x16x128xf32>
    tpu.vector_store %arg11[%c0_168, %c0_169, %c0_170], %297 {strides = array<i32>} : memref<2x16x128xf32, #tpu.memory_space<vmem>>, vector<1x16x128xf32>,
    %c0_171 = arith.constant 0 : index
    %c0_172 = arith.constant 0 : index
    %298 = vector.load %arg10[%c0_171, %c0_172] : memref<16x256xf32, #tpu.memory_space<vmem>>, vector<16x128xf32>
    tpu.vector_store %arg10[%c0_171, %c0_172], %294 {strides = array<i32>} : memref<16x256xf32, #tpu.memory_space<vmem>>, vector<16x128xf32>,
    %c3_173 = arith.constant 3 : index
    %c0_174 = arith.constant 0 : index
    %c0_175 = arith.constant 0 : index
    %c0_176 = arith.constant 0 : index
    %299 = vector.load %arg6[%c3_173, %c0_174, %c0_175, %c0_176] : memref<8x2x16x128xf32, #tpu.memory_space<vmem>>, vector<1x1x16x128xf32>
    %300 = vector.shape_cast %299 : vector<1x1x16x128xf32> to vector<16x128xf32>
    %301 = vector.shape_cast %294 : vector<16x128xf32> to vector<1x1x16x128xf32>
    tpu.vector_store %arg6[%c3_173, %c0_174, %c0_175, %c0_176], %301 {strides = array<i32>} : memref<8x2x16x128xf32, #tpu.memory_space<vmem>>, vector<1x1x16x128xf32>,
    %c3_177 = arith.constant 3 : index
    %c0_178 = arith.constant 0 : index
    %c0_179 = arith.constant 0 : index
    %c0_180 = arith.constant 0 : index
    %302 = vector.load %arg7[%c3_177, %c0_178, %c0_179, %c0_180] : memref<8x2x16x128xf32, #tpu.memory_space<vmem>>, vector<1x1x16x128xf32>
    %303 = vector.shape_cast %302 : vector<1x1x16x128xf32> to vector<16x128xf32>
    %304 = vector.shape_cast %292 : vector<16x128xf32> to vector<1x1x16x128xf32>
    tpu.vector_store %arg7[%c3_177, %c0_178, %c0_179, %c0_180], %304 {strides = array<i32>} : memref<8x2x16x128xf32, #tpu.memory_space<vmem>>, vector<1x1x16x128xf32>,
    %c0_181 = arith.constant 0 : index
    %c0_182 = arith.constant 0 : index
    %305 = vector.load %arg10[%c0_181, %c0_182] : memref<16x256xf32, #tpu.memory_space<vmem>>, vector<16x256xf32>
    %c0_183 = arith.constant 0 : index
    %c0_184 = arith.constant 0 : index
    %c0_185 = arith.constant 0 : index
    %306 = vector.load %arg9[%c0_183, %c0_184, %c0_185] : memref<1x256x512xf32, #tpu.memory_space<vmem>>, vector<1x256x512xf32>
    %307 = vector.shape_cast %306 : vector<1x256x512xf32> to vector<256x512xf32>
    %cst_186 = arith.constant dense<0.000000e+00> : vector<16x512xf32>
    %308 = tpu.matmul %305, %307, %cst_186 {dimension_numbers = #tpu.dot_dimension_numbers<[1], [0], [0], [1], [0, 0, 1, 1], [], []>} : vector<16x256xf32>, vector<256x512xf32>, vector<16x512xf32> -> vector<16x512xf32>
    %309 = arith.addf %6, %308 : vector<16x512xf32>
    %c1_187 = arith.constant 1 : index
    %c0_188 = arith.constant 0 : index
    %c0_189 = arith.constant 0 : index
    %310 = vector.load %arg11[%c1_187, %c0_188, %c0_189] : memref<2x16x128xf32, #tpu.memory_space<vmem>>, vector<1x16x128xf32>
    %311 = vector.shape_cast %310 : vector<1x16x128xf32> to vector<16x128xf32>
    %312 = vector.extract_strided_slice %309 {offsets = [0, 0], sizes = [16, 128], strides = [1, 1]} : vector<16x512xf32> to vector<16x128xf32>
    %313 = arith.negf %312 : vector<16x128xf32>
    %314 = math.exp %313 : vector<16x128xf32>
    %cst_190 = arith.constant 1.000000e+00 : f32
    %315 = vector.broadcast %cst_190 : f32 to vector<16x128xf32>
    %316 = arith.addf %315, %314 : vector<16x128xf32>
    %317 = arith.divf %315, %316 : vector<16x128xf32>
    %318 = vector.extract_strided_slice %309 {offsets = [0, 128], sizes = [16, 128], strides = [1, 1]} : vector<16x512xf32> to vector<16x128xf32>
    %319 = arith.negf %318 : vector<16x128xf32>
    %320 = math.exp %319 : vector<16x128xf32>
    %cst_191 = arith.constant 1.000000e+00 : f32
    %321 = vector.broadcast %cst_191 : f32 to vector<16x128xf32>
    %322 = arith.addf %321, %320 : vector<16x128xf32>
    %323 = arith.divf %321, %322 : vector<16x128xf32>
    %324 = vector.extract_strided_slice %309 {offsets = [0, 256], sizes = [16, 128], strides = [1, 1]} : vector<16x512xf32> to vector<16x128xf32>
    %325 = math.tanh %324 : vector<16x128xf32>
    %326 = vector.extract_strided_slice %309 {offsets = [0, 384], sizes = [16, 128], strides = [1, 1]} : vector<16x512xf32> to vector<16x128xf32>
    %327 = arith.negf %326 : vector<16x128xf32>
    %328 = math.exp %327 : vector<16x128xf32>
    %cst_192 = arith.constant 1.000000e+00 : f32
    %329 = vector.broadcast %cst_192 : f32 to vector<16x128xf32>
    %330 = arith.addf %329, %328 : vector<16x128xf32>
    %331 = arith.divf %329, %330 : vector<16x128xf32>
    %332 = arith.mulf %323, %311 : vector<16x128xf32>
    %333 = arith.mulf %317, %325 : vector<16x128xf32>
    %334 = arith.addf %332, %333 : vector<16x128xf32>
    %335 = math.tanh %334 : vector<16x128xf32>
    %336 = arith.mulf %331, %335 : vector<16x128xf32>
    %c1_193 = arith.constant 1 : index
    %c0_194 = arith.constant 0 : index
    %c0_195 = arith.constant 0 : index
    %337 = vector.load %arg11[%c1_193, %c0_194, %c0_195] : memref<2x16x128xf32, #tpu.memory_space<vmem>>, vector<1x16x128xf32>
    %338 = vector.shape_cast %337 : vector<1x16x128xf32> to vector<16x128xf32>
    %339 = vector.shape_cast %334 : vector<16x128xf32> to vector<1x16x128xf32>
    tpu.vector_store %arg11[%c1_193, %c0_194, %c0_195], %339 {strides = array<i32>} : memref<2x16x128xf32, #tpu.memory_space<vmem>>, vector<1x16x128xf32>,
    %c0_196 = arith.constant 0 : index
    %c128_197 = arith.constant 128 : index
    %340 = vector.load %arg10[%c0_196, %c128_197] : memref<16x256xf32, #tpu.memory_space<vmem>>, vector<16x128xf32>
    tpu.vector_store %arg10[%c0_196, %c128_197], %336 {strides = array<i32>} : memref<16x256xf32, #tpu.memory_space<vmem>>, vector<16x128xf32>,
    %c3_198 = arith.constant 3 : index
    %c1_199 = arith.constant 1 : index
    %c0_200 = arith.constant 0 : index
    %c0_201 = arith.constant 0 : index
    %341 = vector.load %arg6[%c3_198, %c1_199, %c0_200, %c0_201] : memref<8x2x16x128xf32, #tpu.memory_space<vmem>>, vector<1x1x16x128xf32>
    %342 = vector.shape_cast %341 : vector<1x1x16x128xf32> to vector<16x128xf32>
    %343 = vector.shape_cast %336 : vector<16x128xf32> to vector<1x1x16x128xf32>
    tpu.vector_store %arg6[%c3_198, %c1_199, %c0_200, %c0_201], %343 {strides = array<i32>} : memref<8x2x16x128xf32, #tpu.memory_space<vmem>>, vector<1x1x16x128xf32>,
    %c3_202 = arith.constant 3 : index
    %c1_203 = arith.constant 1 : index
    %c0_204 = arith.constant 0 : index
    %c0_205 = arith.constant 0 : index
    %344 = vector.load %arg7[%c3_202, %c1_203, %c0_204, %c0_205] : memref<8x2x16x128xf32, #tpu.memory_space<vmem>>, vector<1x1x16x128xf32>
    %345 = vector.shape_cast %344 : vector<1x1x16x128xf32> to vector<16x128xf32>
    %346 = vector.shape_cast %334 : vector<16x128xf32> to vector<1x1x16x128xf32>
    tpu.vector_store %arg7[%c3_202, %c1_203, %c0_204, %c0_205], %346 {strides = array<i32>} : memref<8x2x16x128xf32, #tpu.memory_space<vmem>>, vector<1x1x16x128xf32>,
    %c4 = arith.constant 4 : index
    %c0_206 = arith.constant 0 : index
    %c0_207 = arith.constant 0 : index
    %347 = vector.load %arg2[%c4, %c0_206, %c0_207] : memref<8x16x512xf32, #tpu.memory_space<vmem>>, vector<1x16x512xf32>
    %348 = vector.shape_cast %347 : vector<1x16x512xf32> to vector<16x512xf32>
    %c0_208 = arith.constant 0 : index
    %c0_209 = arith.constant 0 : index
    %349 = vector.load %arg10[%c0_208, %c0_209] : memref<16x256xf32, #tpu.memory_space<vmem>>, vector<16x128xf32>
    %c0_210 = arith.constant 0 : index
    %c0_211 = arith.constant 0 : index
    %350 = vector.load %arg8[%c0_210, %c0_211] : memref<128x512xf32, #tpu.memory_space<vmem>>, vector<128x512xf32>
    %cst_212 = arith.constant dense<0.000000e+00> : vector<16x512xf32>
    %351 = tpu.matmul %349, %350, %cst_212 {dimension_numbers = #tpu.dot_dimension_numbers<[1], [0], [0], [1], [0, 0, 1, 1], [], []>} : vector<16x128xf32>, vector<128x512xf32>, vector<16x512xf32> -> vector<16x512xf32>
    %352 = arith.addf %348, %351 : vector<16x512xf32>
    %c0_213 = arith.constant 0 : index
    %c0_214 = arith.constant 0 : index
    %c0_215 = arith.constant 0 : index
    %353 = vector.load %arg11[%c0_213, %c0_214, %c0_215] : memref<2x16x128xf32, #tpu.memory_space<vmem>>, vector<1x16x128xf32>
    %354 = vector.shape_cast %353 : vector<1x16x128xf32> to vector<16x128xf32>
    %355 = vector.extract_strided_slice %352 {offsets = [0, 0], sizes = [16, 128], strides = [1, 1]} : vector<16x512xf32> to vector<16x128xf32>
    %356 = arith.negf %355 : vector<16x128xf32>
    %357 = math.exp %356 : vector<16x128xf32>
    %cst_216 = arith.constant 1.000000e+00 : f32
    %358 = vector.broadcast %cst_216 : f32 to vector<16x128xf32>
    %359 = arith.addf %358, %357 : vector<16x128xf32>
    %360 = arith.divf %358, %359 : vector<16x128xf32>
    %361 = vector.extract_strided_slice %352 {offsets = [0, 128], sizes = [16, 128], strides = [1, 1]} : vector<16x512xf32> to vector<16x128xf32>
    %362 = arith.negf %361 : vector<16x128xf32>
    %363 = math.exp %362 : vector<16x128xf32>
    %cst_217 = arith.constant 1.000000e+00 : f32
    %364 = vector.broadcast %cst_217 : f32 to vector<16x128xf32>
    %365 = arith.addf %364, %363 : vector<16x128xf32>
    %366 = arith.divf %364, %365 : vector<16x128xf32>
    %367 = vector.extract_strided_slice %352 {offsets = [0, 256], sizes = [16, 128], strides = [1, 1]} : vector<16x512xf32> to vector<16x128xf32>
    %368 = math.tanh %367 : vector<16x128xf32>
    %369 = vector.extract_strided_slice %352 {offsets = [0, 384], sizes = [16, 128], strides = [1, 1]} : vector<16x512xf32> to vector<16x128xf32>
    %370 = arith.negf %369 : vector<16x128xf32>
    %371 = math.exp %370 : vector<16x128xf32>
    %cst_218 = arith.constant 1.000000e+00 : f32
    %372 = vector.broadcast %cst_218 : f32 to vector<16x128xf32>
    %373 = arith.addf %372, %371 : vector<16x128xf32>
    %374 = arith.divf %372, %373 : vector<16x128xf32>
    %375 = arith.mulf %366, %354 : vector<16x128xf32>
    %376 = arith.mulf %360, %368 : vector<16x128xf32>
    %377 = arith.addf %375, %376 : vector<16x128xf32>
    %378 = math.tanh %377 : vector<16x128xf32>
    %379 = arith.mulf %374, %378 : vector<16x128xf32>
    %c0_219 = arith.constant 0 : index
    %c0_220 = arith.constant 0 : index
    %c0_221 = arith.constant 0 : index
    %380 = vector.load %arg11[%c0_219, %c0_220, %c0_221] : memref<2x16x128xf32, #tpu.memory_space<vmem>>, vector<1x16x128xf32>
    %381 = vector.shape_cast %380 : vector<1x16x128xf32> to vector<16x128xf32>
    %382 = vector.shape_cast %377 : vector<16x128xf32> to vector<1x16x128xf32>
    tpu.vector_store %arg11[%c0_219, %c0_220, %c0_221], %382 {strides = array<i32>} : memref<2x16x128xf32, #tpu.memory_space<vmem>>, vector<1x16x128xf32>,
    %c0_222 = arith.constant 0 : index
    %c0_223 = arith.constant 0 : index
    %383 = vector.load %arg10[%c0_222, %c0_223] : memref<16x256xf32, #tpu.memory_space<vmem>>, vector<16x128xf32>
    tpu.vector_store %arg10[%c0_222, %c0_223], %379 {strides = array<i32>} : memref<16x256xf32, #tpu.memory_space<vmem>>, vector<16x128xf32>,
    %c4_224 = arith.constant 4 : index
    %c0_225 = arith.constant 0 : index
    %c0_226 = arith.constant 0 : index
    %c0_227 = arith.constant 0 : index
    %384 = vector.load %arg6[%c4_224, %c0_225, %c0_226, %c0_227] : memref<8x2x16x128xf32, #tpu.memory_space<vmem>>, vector<1x1x16x128xf32>
    %385 = vector.shape_cast %384 : vector<1x1x16x128xf32> to vector<16x128xf32>
    %386 = vector.shape_cast %379 : vector<16x128xf32> to vector<1x1x16x128xf32>
    tpu.vector_store %arg6[%c4_224, %c0_225, %c0_226, %c0_227], %386 {strides = array<i32>} : memref<8x2x16x128xf32, #tpu.memory_space<vmem>>, vector<1x1x16x128xf32>,
    %c4_228 = arith.constant 4 : index
    %c0_229 = arith.constant 0 : index
    %c0_230 = arith.constant 0 : index
    %c0_231 = arith.constant 0 : index
    %387 = vector.load %arg7[%c4_228, %c0_229, %c0_230, %c0_231] : memref<8x2x16x128xf32, #tpu.memory_space<vmem>>, vector<1x1x16x128xf32>
    %388 = vector.shape_cast %387 : vector<1x1x16x128xf32> to vector<16x128xf32>
    %389 = vector.shape_cast %377 : vector<16x128xf32> to vector<1x1x16x128xf32>
    tpu.vector_store %arg7[%c4_228, %c0_229, %c0_230, %c0_231], %389 {strides = array<i32>} : memref<8x2x16x128xf32, #tpu.memory_space<vmem>>, vector<1x1x16x128xf32>,
    %c0_232 = arith.constant 0 : index
    %c0_233 = arith.constant 0 : index
    %390 = vector.load %arg10[%c0_232, %c0_233] : memref<16x256xf32, #tpu.memory_space<vmem>>, vector<16x256xf32>
    %c0_234 = arith.constant 0 : index
    %c0_235 = arith.constant 0 : index
    %c0_236 = arith.constant 0 : index
    %391 = vector.load %arg9[%c0_234, %c0_235, %c0_236] : memref<1x256x512xf32, #tpu.memory_space<vmem>>, vector<1x256x512xf32>
    %392 = vector.shape_cast %391 : vector<1x256x512xf32> to vector<256x512xf32>
    %cst_237 = arith.constant dense<0.000000e+00> : vector<16x512xf32>
    %393 = tpu.matmul %390, %392, %cst_237 {dimension_numbers = #tpu.dot_dimension_numbers<[1], [0], [0], [1], [0, 0, 1, 1], [], []>} : vector<16x256xf32>, vector<256x512xf32>, vector<16x512xf32> -> vector<16x512xf32>
    %394 = arith.addf %6, %393 : vector<16x512xf32>
    %c1_238 = arith.constant 1 : index
    %c0_239 = arith.constant 0 : index
    %c0_240 = arith.constant 0 : index
    %395 = vector.load %arg11[%c1_238, %c0_239, %c0_240] : memref<2x16x128xf32, #tpu.memory_space<vmem>>, vector<1x16x128xf32>
    %396 = vector.shape_cast %395 : vector<1x16x128xf32> to vector<16x128xf32>
    %397 = vector.extract_strided_slice %394 {offsets = [0, 0], sizes = [16, 128], strides = [1, 1]} : vector<16x512xf32> to vector<16x128xf32>
    %398 = arith.negf %397 : vector<16x128xf32>
    %399 = math.exp %398 : vector<16x128xf32>
    %cst_241 = arith.constant 1.000000e+00 : f32
    %400 = vector.broadcast %cst_241 : f32 to vector<16x128xf32>
    %401 = arith.addf %400, %399 : vector<16x128xf32>
    %402 = arith.divf %400, %401 : vector<16x128xf32>
    %403 = vector.extract_strided_slice %394 {offsets = [0, 128], sizes = [16, 128], strides = [1, 1]} : vector<16x512xf32> to vector<16x128xf32>
    %404 = arith.negf %403 : vector<16x128xf32>
    %405 = math.exp %404 : vector<16x128xf32>
    %cst_242 = arith.constant 1.000000e+00 : f32
    %406 = vector.broadcast %cst_242 : f32 to vector<16x128xf32>
    %407 = arith.addf %406, %405 : vector<16x128xf32>
    %408 = arith.divf %406, %407 : vector<16x128xf32>
    %409 = vector.extract_strided_slice %394 {offsets = [0, 256], sizes = [16, 128], strides = [1, 1]} : vector<16x512xf32> to vector<16x128xf32>
    %410 = math.tanh %409 : vector<16x128xf32>
    %411 = vector.extract_strided_slice %394 {offsets = [0, 384], sizes = [16, 128], strides = [1, 1]} : vector<16x512xf32> to vector<16x128xf32>
    %412 = arith.negf %411 : vector<16x128xf32>
    %413 = math.exp %412 : vector<16x128xf32>
    %cst_243 = arith.constant 1.000000e+00 : f32
    %414 = vector.broadcast %cst_243 : f32 to vector<16x128xf32>
    %415 = arith.addf %414, %413 : vector<16x128xf32>
    %416 = arith.divf %414, %415 : vector<16x128xf32>
    %417 = arith.mulf %408, %396 : vector<16x128xf32>
    %418 = arith.mulf %402, %410 : vector<16x128xf32>
    %419 = arith.addf %417, %418 : vector<16x128xf32>
    %420 = math.tanh %419 : vector<16x128xf32>
    %421 = arith.mulf %416, %420 : vector<16x128xf32>
    %c1_244 = arith.constant 1 : index
    %c0_245 = arith.constant 0 : index
    %c0_246 = arith.constant 0 : index
    %422 = vector.load %arg11[%c1_244, %c0_245, %c0_246] : memref<2x16x128xf32, #tpu.memory_space<vmem>>, vector<1x16x128xf32>
    %423 = vector.shape_cast %422 : vector<1x16x128xf32> to vector<16x128xf32>
    %424 = vector.shape_cast %419 : vector<16x128xf32> to vector<1x16x128xf32>
    tpu.vector_store %arg11[%c1_244, %c0_245, %c0_246], %424 {strides = array<i32>} : memref<2x16x128xf32, #tpu.memory_space<vmem>>, vector<1x16x128xf32>,
    %c0_247 = arith.constant 0 : index
    %c128_248 = arith.constant 128 : index
    %425 = vector.load %arg10[%c0_247, %c128_248] : memref<16x256xf32, #tpu.memory_space<vmem>>, vector<16x128xf32>
    tpu.vector_store %arg10[%c0_247, %c128_248], %421 {strides = array<i32>} : memref<16x256xf32, #tpu.memory_space<vmem>>, vector<16x128xf32>,
    %c4_249 = arith.constant 4 : index
    %c1_250 = arith.constant 1 : index
    %c0_251 = arith.constant 0 : index
    %c0_252 = arith.constant 0 : index
    %426 = vector.load %arg6[%c4_249, %c1_250, %c0_251, %c0_252] : memref<8x2x16x128xf32, #tpu.memory_space<vmem>>, vector<1x1x16x128xf32>
    %427 = vector.shape_cast %426 : vector<1x1x16x128xf32> to vector<16x128xf32>
    %428 = vector.shape_cast %421 : vector<16x128xf32> to vector<1x1x16x128xf32>
    tpu.vector_store %arg6[%c4_249, %c1_250, %c0_251, %c0_252], %428 {strides = array<i32>} : memref<8x2x16x128xf32, #tpu.memory_space<vmem>>, vector<1x1x16x128xf32>,
    %c4_253 = arith.constant 4 : index
    %c1_254 = arith.constant 1 : index
    %c0_255 = arith.constant 0 : index
    %c0_256 = arith.constant 0 : index
    %429 = vector.load %arg7[%c4_253, %c1_254, %c0_255, %c0_256] : memref<8x2x16x128xf32, #tpu.memory_space<vmem>>, vector<1x1x16x128xf32>
    %430 = vector.shape_cast %429 : vector<1x1x16x128xf32> to vector<16x128xf32>
    %431 = vector.shape_cast %419 : vector<16x128xf32> to vector<1x1x16x128xf32>
    tpu.vector_store %arg7[%c4_253, %c1_254, %c0_255, %c0_256], %431 {strides = array<i32>} : memref<8x2x16x128xf32, #tpu.memory_space<vmem>>, vector<1x1x16x128xf32>,
    %c5 = arith.constant 5 : index
    %c0_257 = arith.constant 0 : index
    %c0_258 = arith.constant 0 : index
    %432 = vector.load %arg2[%c5, %c0_257, %c0_258] : memref<8x16x512xf32, #tpu.memory_space<vmem>>, vector<1x16x512xf32>
    %433 = vector.shape_cast %432 : vector<1x16x512xf32> to vector<16x512xf32>
    %c0_259 = arith.constant 0 : index
    %c0_260 = arith.constant 0 : index
    %434 = vector.load %arg10[%c0_259, %c0_260] : memref<16x256xf32, #tpu.memory_space<vmem>>, vector<16x128xf32>
    %c0_261 = arith.constant 0 : index
    %c0_262 = arith.constant 0 : index
    %435 = vector.load %arg8[%c0_261, %c0_262] : memref<128x512xf32, #tpu.memory_space<vmem>>, vector<128x512xf32>
    %cst_263 = arith.constant dense<0.000000e+00> : vector<16x512xf32>
    %436 = tpu.matmul %434, %435, %cst_263 {dimension_numbers = #tpu.dot_dimension_numbers<[1], [0], [0], [1], [0, 0, 1, 1], [], []>} : vector<16x128xf32>, vector<128x512xf32>, vector<16x512xf32> -> vector<16x512xf32>
    %437 = arith.addf %433, %436 : vector<16x512xf32>
    %c0_264 = arith.constant 0 : index
    %c0_265 = arith.constant 0 : index
    %c0_266 = arith.constant 0 : index
    %438 = vector.load %arg11[%c0_264, %c0_265, %c0_266] : memref<2x16x128xf32, #tpu.memory_space<vmem>>, vector<1x16x128xf32>
    %439 = vector.shape_cast %438 : vector<1x16x128xf32> to vector<16x128xf32>
    %440 = vector.extract_strided_slice %437 {offsets = [0, 0], sizes = [16, 128], strides = [1, 1]} : vector<16x512xf32> to vector<16x128xf32>
    %441 = arith.negf %440 : vector<16x128xf32>
    %442 = math.exp %441 : vector<16x128xf32>
    %cst_267 = arith.constant 1.000000e+00 : f32
    %443 = vector.broadcast %cst_267 : f32 to vector<16x128xf32>
    %444 = arith.addf %443, %442 : vector<16x128xf32>
    %445 = arith.divf %443, %444 : vector<16x128xf32>
    %446 = vector.extract_strided_slice %437 {offsets = [0, 128], sizes = [16, 128], strides = [1, 1]} : vector<16x512xf32> to vector<16x128xf32>
    %447 = arith.negf %446 : vector<16x128xf32>
    %448 = math.exp %447 : vector<16x128xf32>
    %cst_268 = arith.constant 1.000000e+00 : f32
    %449 = vector.broadcast %cst_268 : f32 to vector<16x128xf32>
    %450 = arith.addf %449, %448 : vector<16x128xf32>
    %451 = arith.divf %449, %450 : vector<16x128xf32>
    %452 = vector.extract_strided_slice %437 {offsets = [0, 256], sizes = [16, 128], strides = [1, 1]} : vector<16x512xf32> to vector<16x128xf32>
    %453 = math.tanh %452 : vector<16x128xf32>
    %454 = vector.extract_strided_slice %437 {offsets = [0, 384], sizes = [16, 128], strides = [1, 1]} : vector<16x512xf32> to vector<16x128xf32>
    %455 = arith.negf %454 : vector<16x128xf32>
    %456 = math.exp %455 : vector<16x128xf32>
    %cst_269 = arith.constant 1.000000e+00 : f32
    %457 = vector.broadcast %cst_269 : f32 to vector<16x128xf32>
    %458 = arith.addf %457, %456 : vector<16x128xf32>
    %459 = arith.divf %457, %458 : vector<16x128xf32>
    %460 = arith.mulf %451, %439 : vector<16x128xf32>
    %461 = arith.mulf %445, %453 : vector<16x128xf32>
    %462 = arith.addf %460, %461 : vector<16x128xf32>
    %463 = math.tanh %462 : vector<16x128xf32>
    %464 = arith.mulf %459, %463 : vector<16x128xf32>
    %c0_270 = arith.constant 0 : index
    %c0_271 = arith.constant 0 : index
    %c0_272 = arith.constant 0 : index
    %465 = vector.load %arg11[%c0_270, %c0_271, %c0_272] : memref<2x16x128xf32, #tpu.memory_space<vmem>>, vector<1x16x128xf32>
    %466 = vector.shape_cast %465 : vector<1x16x128xf32> to vector<16x128xf32>
    %467 = vector.shape_cast %462 : vector<16x128xf32> to vector<1x16x128xf32>
    tpu.vector_store %arg11[%c0_270, %c0_271, %c0_272], %467 {strides = array<i32>} : memref<2x16x128xf32, #tpu.memory_space<vmem>>, vector<1x16x128xf32>,
    %c0_273 = arith.constant 0 : index
    %c0_274 = arith.constant 0 : index
    %468 = vector.load %arg10[%c0_273, %c0_274] : memref<16x256xf32, #tpu.memory_space<vmem>>, vector<16x128xf32>
    tpu.vector_store %arg10[%c0_273, %c0_274], %464 {strides = array<i32>} : memref<16x256xf32, #tpu.memory_space<vmem>>, vector<16x128xf32>,
    %c5_275 = arith.constant 5 : index
    %c0_276 = arith.constant 0 : index
    %c0_277 = arith.constant 0 : index
    %c0_278 = arith.constant 0 : index
    %469 = vector.load %arg6[%c5_275, %c0_276, %c0_277, %c0_278] : memref<8x2x16x128xf32, #tpu.memory_space<vmem>>, vector<1x1x16x128xf32>
    %470 = vector.shape_cast %469 : vector<1x1x16x128xf32> to vector<16x128xf32>
    %471 = vector.shape_cast %464 : vector<16x128xf32> to vector<1x1x16x128xf32>
    tpu.vector_store %arg6[%c5_275, %c0_276, %c0_277, %c0_278], %471 {strides = array<i32>} : memref<8x2x16x128xf32, #tpu.memory_space<vmem>>, vector<1x1x16x128xf32>,
    %c5_279 = arith.constant 5 : index
    %c0_280 = arith.constant 0 : index
    %c0_281 = arith.constant 0 : index
    %c0_282 = arith.constant 0 : index
    %472 = vector.load %arg7[%c5_279, %c0_280, %c0_281, %c0_282] : memref<8x2x16x128xf32, #tpu.memory_space<vmem>>, vector<1x1x16x128xf32>
    %473 = vector.shape_cast %472 : vector<1x1x16x128xf32> to vector<16x128xf32>
    %474 = vector.shape_cast %462 : vector<16x128xf32> to vector<1x1x16x128xf32>
    tpu.vector_store %arg7[%c5_279, %c0_280, %c0_281, %c0_282], %474 {strides = array<i32>} : memref<8x2x16x128xf32, #tpu.memory_space<vmem>>, vector<1x1x16x128xf32>,
    %c0_283 = arith.constant 0 : index
    %c0_284 = arith.constant 0 : index
    %475 = vector.load %arg10[%c0_283, %c0_284] : memref<16x256xf32, #tpu.memory_space<vmem>>, vector<16x256xf32>
    %c0_285 = arith.constant 0 : index
    %c0_286 = arith.constant 0 : index
    %c0_287 = arith.constant 0 : index
    %476 = vector.load %arg9[%c0_285, %c0_286, %c0_287] : memref<1x256x512xf32, #tpu.memory_space<vmem>>, vector<1x256x512xf32>
    %477 = vector.shape_cast %476 : vector<1x256x512xf32> to vector<256x512xf32>
    %cst_288 = arith.constant dense<0.000000e+00> : vector<16x512xf32>
    %478 = tpu.matmul %475, %477, %cst_288 {dimension_numbers = #tpu.dot_dimension_numbers<[1], [0], [0], [1], [0, 0, 1, 1], [], []>} : vector<16x256xf32>, vector<256x512xf32>, vector<16x512xf32> -> vector<16x512xf32>
    %479 = arith.addf %6, %478 : vector<16x512xf32>
    %c1_289 = arith.constant 1 : index
    %c0_290 = arith.constant 0 : index
    %c0_291 = arith.constant 0 : index
    %480 = vector.load %arg11[%c1_289, %c0_290, %c0_291] : memref<2x16x128xf32, #tpu.memory_space<vmem>>, vector<1x16x128xf32>
    %481 = vector.shape_cast %480 : vector<1x16x128xf32> to vector<16x128xf32>
    %482 = vector.extract_strided_slice %479 {offsets = [0, 0], sizes = [16, 128], strides = [1, 1]} : vector<16x512xf32> to vector<16x128xf32>
    %483 = arith.negf %482 : vector<16x128xf32>
    %484 = math.exp %483 : vector<16x128xf32>
    %cst_292 = arith.constant 1.000000e+00 : f32
    %485 = vector.broadcast %cst_292 : f32 to vector<16x128xf32>
    %486 = arith.addf %485, %484 : vector<16x128xf32>
    %487 = arith.divf %485, %486 : vector<16x128xf32>
    %488 = vector.extract_strided_slice %479 {offsets = [0, 128], sizes = [16, 128], strides = [1, 1]} : vector<16x512xf32> to vector<16x128xf32>
    %489 = arith.negf %488 : vector<16x128xf32>
    %490 = math.exp %489 : vector<16x128xf32>
    %cst_293 = arith.constant 1.000000e+00 : f32
    %491 = vector.broadcast %cst_293 : f32 to vector<16x128xf32>
    %492 = arith.addf %491, %490 : vector<16x128xf32>
    %493 = arith.divf %491, %492 : vector<16x128xf32>
    %494 = vector.extract_strided_slice %479 {offsets = [0, 256], sizes = [16, 128], strides = [1, 1]} : vector<16x512xf32> to vector<16x128xf32>
    %495 = math.tanh %494 : vector<16x128xf32>
    %496 = vector.extract_strided_slice %479 {offsets = [0, 384], sizes = [16, 128], strides = [1, 1]} : vector<16x512xf32> to vector<16x128xf32>
    %497 = arith.negf %496 : vector<16x128xf32>
    %498 = math.exp %497 : vector<16x128xf32>
    %cst_294 = arith.constant 1.000000e+00 : f32
    %499 = vector.broadcast %cst_294 : f32 to vector<16x128xf32>
    %500 = arith.addf %499, %498 : vector<16x128xf32>
    %501 = arith.divf %499, %500 : vector<16x128xf32>
    %502 = arith.mulf %493, %481 : vector<16x128xf32>
    %503 = arith.mulf %487, %495 : vector<16x128xf32>
    %504 = arith.addf %502, %503 : vector<16x128xf32>
    %505 = math.tanh %504 : vector<16x128xf32>
    %506 = arith.mulf %501, %505 : vector<16x128xf32>
    %c1_295 = arith.constant 1 : index
    %c0_296 = arith.constant 0 : index
    %c0_297 = arith.constant 0 : index
    %507 = vector.load %arg11[%c1_295, %c0_296, %c0_297] : memref<2x16x128xf32, #tpu.memory_space<vmem>>, vector<1x16x128xf32>
    %508 = vector.shape_cast %507 : vector<1x16x128xf32> to vector<16x128xf32>
    %509 = vector.shape_cast %504 : vector<16x128xf32> to vector<1x16x128xf32>
    tpu.vector_store %arg11[%c1_295, %c0_296, %c0_297], %509 {strides = array<i32>} : memref<2x16x128xf32, #tpu.memory_space<vmem>>, vector<1x16x128xf32>,
    %c0_298 = arith.constant 0 : index
    %c128_299 = arith.constant 128 : index
    %510 = vector.load %arg10[%c0_298, %c128_299] : memref<16x256xf32, #tpu.memory_space<vmem>>, vector<16x128xf32>
    tpu.vector_store %arg10[%c0_298, %c128_299], %506 {strides = array<i32>} : memref<16x256xf32, #tpu.memory_space<vmem>>, vector<16x128xf32>,
    %c5_300 = arith.constant 5 : index
    %c1_301 = arith.constant 1 : index
    %c0_302 = arith.constant 0 : index
    %c0_303 = arith.constant 0 : index
    %511 = vector.load %arg6[%c5_300, %c1_301, %c0_302, %c0_303] : memref<8x2x16x128xf32, #tpu.memory_space<vmem>>, vector<1x1x16x128xf32>
    %512 = vector.shape_cast %511 : vector<1x1x16x128xf32> to vector<16x128xf32>
    %513 = vector.shape_cast %506 : vector<16x128xf32> to vector<1x1x16x128xf32>
    tpu.vector_store %arg6[%c5_300, %c1_301, %c0_302, %c0_303], %513 {strides = array<i32>} : memref<8x2x16x128xf32, #tpu.memory_space<vmem>>, vector<1x1x16x128xf32>,
    %c5_304 = arith.constant 5 : index
    %c1_305 = arith.constant 1 : index
    %c0_306 = arith.constant 0 : index
    %c0_307 = arith.constant 0 : index
    %514 = vector.load %arg7[%c5_304, %c1_305, %c0_306, %c0_307] : memref<8x2x16x128xf32, #tpu.memory_space<vmem>>, vector<1x1x16x128xf32>
    %515 = vector.shape_cast %514 : vector<1x1x16x128xf32> to vector<16x128xf32>
    %516 = vector.shape_cast %504 : vector<16x128xf32> to vector<1x1x16x128xf32>
    tpu.vector_store %arg7[%c5_304, %c1_305, %c0_306, %c0_307], %516 {strides = array<i32>} : memref<8x2x16x128xf32, #tpu.memory_space<vmem>>, vector<1x1x16x128xf32>,
    %c6 = arith.constant 6 : index
    %c0_308 = arith.constant 0 : index
    %c0_309 = arith.constant 0 : index
    %517 = vector.load %arg2[%c6, %c0_308, %c0_309] : memref<8x16x512xf32, #tpu.memory_space<vmem>>, vector<1x16x512xf32>
    %518 = vector.shape_cast %517 : vector<1x16x512xf32> to vector<16x512xf32>
    %c0_310 = arith.constant 0 : index
    %c0_311 = arith.constant 0 : index
    %519 = vector.load %arg10[%c0_310, %c0_311] : memref<16x256xf32, #tpu.memory_space<vmem>>, vector<16x128xf32>
    %c0_312 = arith.constant 0 : index
    %c0_313 = arith.constant 0 : index
    %520 = vector.load %arg8[%c0_312, %c0_313] : memref<128x512xf32, #tpu.memory_space<vmem>>, vector<128x512xf32>
    %cst_314 = arith.constant dense<0.000000e+00> : vector<16x512xf32>
    %521 = tpu.matmul %519, %520, %cst_314 {dimension_numbers = #tpu.dot_dimension_numbers<[1], [0], [0], [1], [0, 0, 1, 1], [], []>} : vector<16x128xf32>, vector<128x512xf32>, vector<16x512xf32> -> vector<16x512xf32>
    %522 = arith.addf %518, %521 : vector<16x512xf32>
    %c0_315 = arith.constant 0 : index
    %c0_316 = arith.constant 0 : index
    %c0_317 = arith.constant 0 : index
    %523 = vector.load %arg11[%c0_315, %c0_316, %c0_317] : memref<2x16x128xf32, #tpu.memory_space<vmem>>, vector<1x16x128xf32>
    %524 = vector.shape_cast %523 : vector<1x16x128xf32> to vector<16x128xf32>
    %525 = vector.extract_strided_slice %522 {offsets = [0, 0], sizes = [16, 128], strides = [1, 1]} : vector<16x512xf32> to vector<16x128xf32>
    %526 = arith.negf %525 : vector<16x128xf32>
    %527 = math.exp %526 : vector<16x128xf32>
    %cst_318 = arith.constant 1.000000e+00 : f32
    %528 = vector.broadcast %cst_318 : f32 to vector<16x128xf32>
    %529 = arith.addf %528, %527 : vector<16x128xf32>
    %530 = arith.divf %528, %529 : vector<16x128xf32>
    %531 = vector.extract_strided_slice %522 {offsets = [0, 128], sizes = [16, 128], strides = [1, 1]} : vector<16x512xf32> to vector<16x128xf32>
    %532 = arith.negf %531 : vector<16x128xf32>
    %533 = math.exp %532 : vector<16x128xf32>
    %cst_319 = arith.constant 1.000000e+00 : f32
    %534 = vector.broadcast %cst_319 : f32 to vector<16x128xf32>
    %535 = arith.addf %534, %533 : vector<16x128xf32>
    %536 = arith.divf %534, %535 : vector<16x128xf32>
    %537 = vector.extract_strided_slice %522 {offsets = [0, 256], sizes = [16, 128], strides = [1, 1]} : vector<16x512xf32> to vector<16x128xf32>
    %538 = math.tanh %537 : vector<16x128xf32>
    %539 = vector.extract_strided_slice %522 {offsets = [0, 384], sizes = [16, 128], strides = [1, 1]} : vector<16x512xf32> to vector<16x128xf32>
    %540 = arith.negf %539 : vector<16x128xf32>
    %541 = math.exp %540 : vector<16x128xf32>
    %cst_320 = arith.constant 1.000000e+00 : f32
    %542 = vector.broadcast %cst_320 : f32 to vector<16x128xf32>
    %543 = arith.addf %542, %541 : vector<16x128xf32>
    %544 = arith.divf %542, %543 : vector<16x128xf32>
    %545 = arith.mulf %536, %524 : vector<16x128xf32>
    %546 = arith.mulf %530, %538 : vector<16x128xf32>
    %547 = arith.addf %545, %546 : vector<16x128xf32>
    %548 = math.tanh %547 : vector<16x128xf32>
    %549 = arith.mulf %544, %548 : vector<16x128xf32>
    %c0_321 = arith.constant 0 : index
    %c0_322 = arith.constant 0 : index
    %c0_323 = arith.constant 0 : index
    %550 = vector.load %arg11[%c0_321, %c0_322, %c0_323] : memref<2x16x128xf32, #tpu.memory_space<vmem>>, vector<1x16x128xf32>
    %551 = vector.shape_cast %550 : vector<1x16x128xf32> to vector<16x128xf32>
    %552 = vector.shape_cast %547 : vector<16x128xf32> to vector<1x16x128xf32>
    tpu.vector_store %arg11[%c0_321, %c0_322, %c0_323], %552 {strides = array<i32>} : memref<2x16x128xf32, #tpu.memory_space<vmem>>, vector<1x16x128xf32>,
    %c0_324 = arith.constant 0 : index
    %c0_325 = arith.constant 0 : index
    %553 = vector.load %arg10[%c0_324, %c0_325] : memref<16x256xf32, #tpu.memory_space<vmem>>, vector<16x128xf32>
    tpu.vector_store %arg10[%c0_324, %c0_325], %549 {strides = array<i32>} : memref<16x256xf32, #tpu.memory_space<vmem>>, vector<16x128xf32>,
    %c6_326 = arith.constant 6 : index
    %c0_327 = arith.constant 0 : index
    %c0_328 = arith.constant 0 : index
    %c0_329 = arith.constant 0 : index
    %554 = vector.load %arg6[%c6_326, %c0_327, %c0_328, %c0_329] : memref<8x2x16x128xf32, #tpu.memory_space<vmem>>, vector<1x1x16x128xf32>
    %555 = vector.shape_cast %554 : vector<1x1x16x128xf32> to vector<16x128xf32>
    %556 = vector.shape_cast %549 : vector<16x128xf32> to vector<1x1x16x128xf32>
    tpu.vector_store %arg6[%c6_326, %c0_327, %c0_328, %c0_329], %556 {strides = array<i32>} : memref<8x2x16x128xf32, #tpu.memory_space<vmem>>, vector<1x1x16x128xf32>,
    %c6_330 = arith.constant 6 : index
    %c0_331 = arith.constant 0 : index
    %c0_332 = arith.constant 0 : index
    %c0_333 = arith.constant 0 : index
    %557 = vector.load %arg7[%c6_330, %c0_331, %c0_332, %c0_333] : memref<8x2x16x128xf32, #tpu.memory_space<vmem>>, vector<1x1x16x128xf32>
    %558 = vector.shape_cast %557 : vector<1x1x16x128xf32> to vector<16x128xf32>
    %559 = vector.shape_cast %547 : vector<16x128xf32> to vector<1x1x16x128xf32>
    tpu.vector_store %arg7[%c6_330, %c0_331, %c0_332, %c0_333], %559 {strides = array<i32>} : memref<8x2x16x128xf32, #tpu.memory_space<vmem>>, vector<1x1x16x128xf32>,
    %c0_334 = arith.constant 0 : index
    %c0_335 = arith.constant 0 : index
    %560 = vector.load %arg10[%c0_334, %c0_335] : memref<16x256xf32, #tpu.memory_space<vmem>>, vector<16x256xf32>
    %c0_336 = arith.constant 0 : index
    %c0_337 = arith.constant 0 : index
    %c0_338 = arith.constant 0 : index
    %561 = vector.load %arg9[%c0_336, %c0_337, %c0_338] : memref<1x256x512xf32, #tpu.memory_space<vmem>>, vector<1x256x512xf32>
    %562 = vector.shape_cast %561 : vector<1x256x512xf32> to vector<256x512xf32>
    %cst_339 = arith.constant dense<0.000000e+00> : vector<16x512xf32>
    %563 = tpu.matmul %560, %562, %cst_339 {dimension_numbers = #tpu.dot_dimension_numbers<[1], [0], [0], [1], [0, 0, 1, 1], [], []>} : vector<16x256xf32>, vector<256x512xf32>, vector<16x512xf32> -> vector<16x512xf32>
    %564 = arith.addf %6, %563 : vector<16x512xf32>
    %c1_340 = arith.constant 1 : index
    %c0_341 = arith.constant 0 : index
    %c0_342 = arith.constant 0 : index
    %565 = vector.load %arg11[%c1_340, %c0_341, %c0_342] : memref<2x16x128xf32, #tpu.memory_space<vmem>>, vector<1x16x128xf32>
    %566 = vector.shape_cast %565 : vector<1x16x128xf32> to vector<16x128xf32>
    %567 = vector.extract_strided_slice %564 {offsets = [0, 0], sizes = [16, 128], strides = [1, 1]} : vector<16x512xf32> to vector<16x128xf32>
    %568 = arith.negf %567 : vector<16x128xf32>
    %569 = math.exp %568 : vector<16x128xf32>
    %cst_343 = arith.constant 1.000000e+00 : f32
    %570 = vector.broadcast %cst_343 : f32 to vector<16x128xf32>
    %571 = arith.addf %570, %569 : vector<16x128xf32>
    %572 = arith.divf %570, %571 : vector<16x128xf32>
    %573 = vector.extract_strided_slice %564 {offsets = [0, 128], sizes = [16, 128], strides = [1, 1]} : vector<16x512xf32> to vector<16x128xf32>
    %574 = arith.negf %573 : vector<16x128xf32>
    %575 = math.exp %574 : vector<16x128xf32>
    %cst_344 = arith.constant 1.000000e+00 : f32
    %576 = vector.broadcast %cst_344 : f32 to vector<16x128xf32>
    %577 = arith.addf %576, %575 : vector<16x128xf32>
    %578 = arith.divf %576, %577 : vector<16x128xf32>
    %579 = vector.extract_strided_slice %564 {offsets = [0, 256], sizes = [16, 128], strides = [1, 1]} : vector<16x512xf32> to vector<16x128xf32>
    %580 = math.tanh %579 : vector<16x128xf32>
    %581 = vector.extract_strided_slice %564 {offsets = [0, 384], sizes = [16, 128], strides = [1, 1]} : vector<16x512xf32> to vector<16x128xf32>
    %582 = arith.negf %581 : vector<16x128xf32>
    %583 = math.exp %582 : vector<16x128xf32>
    %cst_345 = arith.constant 1.000000e+00 : f32
    %584 = vector.broadcast %cst_345 : f32 to vector<16x128xf32>
    %585 = arith.addf %584, %583 : vector<16x128xf32>
    %586 = arith.divf %584, %585 : vector<16x128xf32>
    %587 = arith.mulf %578, %566 : vector<16x128xf32>
    %588 = arith.mulf %572, %580 : vector<16x128xf32>
    %589 = arith.addf %587, %588 : vector<16x128xf32>
    %590 = math.tanh %589 : vector<16x128xf32>
    %591 = arith.mulf %586, %590 : vector<16x128xf32>
    %c1_346 = arith.constant 1 : index
    %c0_347 = arith.constant 0 : index
    %c0_348 = arith.constant 0 : index
    %592 = vector.load %arg11[%c1_346, %c0_347, %c0_348] : memref<2x16x128xf32, #tpu.memory_space<vmem>>, vector<1x16x128xf32>
    %593 = vector.shape_cast %592 : vector<1x16x128xf32> to vector<16x128xf32>
    %594 = vector.shape_cast %589 : vector<16x128xf32> to vector<1x16x128xf32>
    tpu.vector_store %arg11[%c1_346, %c0_347, %c0_348], %594 {strides = array<i32>} : memref<2x16x128xf32, #tpu.memory_space<vmem>>, vector<1x16x128xf32>,
    %c0_349 = arith.constant 0 : index
    %c128_350 = arith.constant 128 : index
    %595 = vector.load %arg10[%c0_349, %c128_350] : memref<16x256xf32, #tpu.memory_space<vmem>>, vector<16x128xf32>
    tpu.vector_store %arg10[%c0_349, %c128_350], %591 {strides = array<i32>} : memref<16x256xf32, #tpu.memory_space<vmem>>, vector<16x128xf32>,
    %c6_351 = arith.constant 6 : index
    %c1_352 = arith.constant 1 : index
    %c0_353 = arith.constant 0 : index
    %c0_354 = arith.constant 0 : index
    %596 = vector.load %arg6[%c6_351, %c1_352, %c0_353, %c0_354] : memref<8x2x16x128xf32, #tpu.memory_space<vmem>>, vector<1x1x16x128xf32>
    %597 = vector.shape_cast %596 : vector<1x1x16x128xf32> to vector<16x128xf32>
    %598 = vector.shape_cast %591 : vector<16x128xf32> to vector<1x1x16x128xf32>
    tpu.vector_store %arg6[%c6_351, %c1_352, %c0_353, %c0_354], %598 {strides = array<i32>} : memref<8x2x16x128xf32, #tpu.memory_space<vmem>>, vector<1x1x16x128xf32>,
    %c6_355 = arith.constant 6 : index
    %c1_356 = arith.constant 1 : index
    %c0_357 = arith.constant 0 : index
    %c0_358 = arith.constant 0 : index
    %599 = vector.load %arg7[%c6_355, %c1_356, %c0_357, %c0_358] : memref<8x2x16x128xf32, #tpu.memory_space<vmem>>, vector<1x1x16x128xf32>
    %600 = vector.shape_cast %599 : vector<1x1x16x128xf32> to vector<16x128xf32>
    %601 = vector.shape_cast %589 : vector<16x128xf32> to vector<1x1x16x128xf32>
    tpu.vector_store %arg7[%c6_355, %c1_356, %c0_357, %c0_358], %601 {strides = array<i32>} : memref<8x2x16x128xf32, #tpu.memory_space<vmem>>, vector<1x1x16x128xf32>,
    %c7 = arith.constant 7 : index
    %c0_359 = arith.constant 0 : index
    %c0_360 = arith.constant 0 : index
    %602 = vector.load %arg2[%c7, %c0_359, %c0_360] : memref<8x16x512xf32, #tpu.memory_space<vmem>>, vector<1x16x512xf32>
    %603 = vector.shape_cast %602 : vector<1x16x512xf32> to vector<16x512xf32>
    %c0_361 = arith.constant 0 : index
    %c0_362 = arith.constant 0 : index
    %604 = vector.load %arg10[%c0_361, %c0_362] : memref<16x256xf32, #tpu.memory_space<vmem>>, vector<16x128xf32>
    %c0_363 = arith.constant 0 : index
    %c0_364 = arith.constant 0 : index
    %605 = vector.load %arg8[%c0_363, %c0_364] : memref<128x512xf32, #tpu.memory_space<vmem>>, vector<128x512xf32>
    %cst_365 = arith.constant dense<0.000000e+00> : vector<16x512xf32>
    %606 = tpu.matmul %604, %605, %cst_365 {dimension_numbers = #tpu.dot_dimension_numbers<[1], [0], [0], [1], [0, 0, 1, 1], [], []>} : vector<16x128xf32>, vector<128x512xf32>, vector<16x512xf32> -> vector<16x512xf32>
    %607 = arith.addf %603, %606 : vector<16x512xf32>
    %c0_366 = arith.constant 0 : index
    %c0_367 = arith.constant 0 : index
    %c0_368 = arith.constant 0 : index
    %608 = vector.load %arg11[%c0_366, %c0_367, %c0_368] : memref<2x16x128xf32, #tpu.memory_space<vmem>>, vector<1x16x128xf32>
    %609 = vector.shape_cast %608 : vector<1x16x128xf32> to vector<16x128xf32>
    %610 = vector.extract_strided_slice %607 {offsets = [0, 0], sizes = [16, 128], strides = [1, 1]} : vector<16x512xf32> to vector<16x128xf32>
    %611 = arith.negf %610 : vector<16x128xf32>
    %612 = math.exp %611 : vector<16x128xf32>
    %cst_369 = arith.constant 1.000000e+00 : f32
    %613 = vector.broadcast %cst_369 : f32 to vector<16x128xf32>
    %614 = arith.addf %613, %612 : vector<16x128xf32>
    %615 = arith.divf %613, %614 : vector<16x128xf32>
    %616 = vector.extract_strided_slice %607 {offsets = [0, 128], sizes = [16, 128], strides = [1, 1]} : vector<16x512xf32> to vector<16x128xf32>
    %617 = arith.negf %616 : vector<16x128xf32>
    %618 = math.exp %617 : vector<16x128xf32>
    %cst_370 = arith.constant 1.000000e+00 : f32
    %619 = vector.broadcast %cst_370 : f32 to vector<16x128xf32>
    %620 = arith.addf %619, %618 : vector<16x128xf32>
    %621 = arith.divf %619, %620 : vector<16x128xf32>
    %622 = vector.extract_strided_slice %607 {offsets = [0, 256], sizes = [16, 128], strides = [1, 1]} : vector<16x512xf32> to vector<16x128xf32>
    %623 = math.tanh %622 : vector<16x128xf32>
    %624 = vector.extract_strided_slice %607 {offsets = [0, 384], sizes = [16, 128], strides = [1, 1]} : vector<16x512xf32> to vector<16x128xf32>
    %625 = arith.negf %624 : vector<16x128xf32>
    %626 = math.exp %625 : vector<16x128xf32>
    %cst_371 = arith.constant 1.000000e+00 : f32
    %627 = vector.broadcast %cst_371 : f32 to vector<16x128xf32>
    %628 = arith.addf %627, %626 : vector<16x128xf32>
    %629 = arith.divf %627, %628 : vector<16x128xf32>
    %630 = arith.mulf %621, %609 : vector<16x128xf32>
    %631 = arith.mulf %615, %623 : vector<16x128xf32>
    %632 = arith.addf %630, %631 : vector<16x128xf32>
    %633 = math.tanh %632 : vector<16x128xf32>
    %634 = arith.mulf %629, %633 : vector<16x128xf32>
    %c0_372 = arith.constant 0 : index
    %c0_373 = arith.constant 0 : index
    %c0_374 = arith.constant 0 : index
    %635 = vector.load %arg11[%c0_372, %c0_373, %c0_374] : memref<2x16x128xf32, #tpu.memory_space<vmem>>, vector<1x16x128xf32>
    %636 = vector.shape_cast %635 : vector<1x16x128xf32> to vector<16x128xf32>
    %637 = vector.shape_cast %632 : vector<16x128xf32> to vector<1x16x128xf32>
    tpu.vector_store %arg11[%c0_372, %c0_373, %c0_374], %637 {strides = array<i32>} : memref<2x16x128xf32, #tpu.memory_space<vmem>>, vector<1x16x128xf32>,
    %c0_375 = arith.constant 0 : index
    %c0_376 = arith.constant 0 : index
    %638 = vector.load %arg10[%c0_375, %c0_376] : memref<16x256xf32, #tpu.memory_space<vmem>>, vector<16x128xf32>
    tpu.vector_store %arg10[%c0_375, %c0_376], %634 {strides = array<i32>} : memref<16x256xf32, #tpu.memory_space<vmem>>, vector<16x128xf32>,
    %c7_377 = arith.constant 7 : index
    %c0_378 = arith.constant 0 : index
    %c0_379 = arith.constant 0 : index
    %c0_380 = arith.constant 0 : index
    %639 = vector.load %arg6[%c7_377, %c0_378, %c0_379, %c0_380] : memref<8x2x16x128xf32, #tpu.memory_space<vmem>>, vector<1x1x16x128xf32>
    %640 = vector.shape_cast %639 : vector<1x1x16x128xf32> to vector<16x128xf32>
    %641 = vector.shape_cast %634 : vector<16x128xf32> to vector<1x1x16x128xf32>
    tpu.vector_store %arg6[%c7_377, %c0_378, %c0_379, %c0_380], %641 {strides = array<i32>} : memref<8x2x16x128xf32, #tpu.memory_space<vmem>>, vector<1x1x16x128xf32>,
    %c7_381 = arith.constant 7 : index
    %c0_382 = arith.constant 0 : index
    %c0_383 = arith.constant 0 : index
    %c0_384 = arith.constant 0 : index
    %642 = vector.load %arg7[%c7_381, %c0_382, %c0_383, %c0_384] : memref<8x2x16x128xf32, #tpu.memory_space<vmem>>, vector<1x1x16x128xf32>
    %643 = vector.shape_cast %642 : vector<1x1x16x128xf32> to vector<16x128xf32>
    %644 = vector.shape_cast %632 : vector<16x128xf32> to vector<1x1x16x128xf32>
    tpu.vector_store %arg7[%c7_381, %c0_382, %c0_383, %c0_384], %644 {strides = array<i32>} : memref<8x2x16x128xf32, #tpu.memory_space<vmem>>, vector<1x1x16x128xf32>,
    %c0_385 = arith.constant 0 : index
    %c0_386 = arith.constant 0 : index
    %645 = vector.load %arg10[%c0_385, %c0_386] : memref<16x256xf32, #tpu.memory_space<vmem>>, vector<16x256xf32>
    %c0_387 = arith.constant 0 : index
    %c0_388 = arith.constant 0 : index
    %c0_389 = arith.constant 0 : index
    %646 = vector.load %arg9[%c0_387, %c0_388, %c0_389] : memref<1x256x512xf32, #tpu.memory_space<vmem>>, vector<1x256x512xf32>
    %647 = vector.shape_cast %646 : vector<1x256x512xf32> to vector<256x512xf32>
    %cst_390 = arith.constant dense<0.000000e+00> : vector<16x512xf32>
    %648 = tpu.matmul %645, %647, %cst_390 {dimension_numbers = #tpu.dot_dimension_numbers<[1], [0], [0], [1], [0, 0, 1, 1], [], []>} : vector<16x256xf32>, vector<256x512xf32>, vector<16x512xf32> -> vector<16x512xf32>
    %649 = arith.addf %6, %648 : vector<16x512xf32>
    %c1_391 = arith.constant 1 : index
    %c0_392 = arith.constant 0 : index
    %c0_393 = arith.constant 0 : index
    %650 = vector.load %arg11[%c1_391, %c0_392, %c0_393] : memref<2x16x128xf32, #tpu.memory_space<vmem>>, vector<1x16x128xf32>
    %651 = vector.shape_cast %650 : vector<1x16x128xf32> to vector<16x128xf32>
    %652 = vector.extract_strided_slice %649 {offsets = [0, 0], sizes = [16, 128], strides = [1, 1]} : vector<16x512xf32> to vector<16x128xf32>
    %653 = arith.negf %652 : vector<16x128xf32>
    %654 = math.exp %653 : vector<16x128xf32>
    %cst_394 = arith.constant 1.000000e+00 : f32
    %655 = vector.broadcast %cst_394 : f32 to vector<16x128xf32>
    %656 = arith.addf %655, %654 : vector<16x128xf32>
    %657 = arith.divf %655, %656 : vector<16x128xf32>
    %658 = vector.extract_strided_slice %649 {offsets = [0, 128], sizes = [16, 128], strides = [1, 1]} : vector<16x512xf32> to vector<16x128xf32>
    %659 = arith.negf %658 : vector<16x128xf32>
    %660 = math.exp %659 : vector<16x128xf32>
    %cst_395 = arith.constant 1.000000e+00 : f32
    %661 = vector.broadcast %cst_395 : f32 to vector<16x128xf32>
    %662 = arith.addf %661, %660 : vector<16x128xf32>
    %663 = arith.divf %661, %662 : vector<16x128xf32>
    %664 = vector.extract_strided_slice %649 {offsets = [0, 256], sizes = [16, 128], strides = [1, 1]} : vector<16x512xf32> to vector<16x128xf32>
    %665 = math.tanh %664 : vector<16x128xf32>
    %666 = vector.extract_strided_slice %649 {offsets = [0, 384], sizes = [16, 128], strides = [1, 1]} : vector<16x512xf32> to vector<16x128xf32>
    %667 = arith.negf %666 : vector<16x128xf32>
    %668 = math.exp %667 : vector<16x128xf32>
    %cst_396 = arith.constant 1.000000e+00 : f32
    %669 = vector.broadcast %cst_396 : f32 to vector<16x128xf32>
    %670 = arith.addf %669, %668 : vector<16x128xf32>
    %671 = arith.divf %669, %670 : vector<16x128xf32>
    %672 = arith.mulf %663, %651 : vector<16x128xf32>
    %673 = arith.mulf %657, %665 : vector<16x128xf32>
    %674 = arith.addf %672, %673 : vector<16x128xf32>
    %675 = math.tanh %674 : vector<16x128xf32>
    %676 = arith.mulf %671, %675 : vector<16x128xf32>
    %c1_397 = arith.constant 1 : index
    %c0_398 = arith.constant 0 : index
    %c0_399 = arith.constant 0 : index
    %677 = vector.load %arg11[%c1_397, %c0_398, %c0_399] : memref<2x16x128xf32, #tpu.memory_space<vmem>>, vector<1x16x128xf32>
    %678 = vector.shape_cast %677 : vector<1x16x128xf32> to vector<16x128xf32>
    %679 = vector.shape_cast %674 : vector<16x128xf32> to vector<1x16x128xf32>
    tpu.vector_store %arg11[%c1_397, %c0_398, %c0_399], %679 {strides = array<i32>} : memref<2x16x128xf32, #tpu.memory_space<vmem>>, vector<1x16x128xf32>,
    %c0_400 = arith.constant 0 : index
    %c128_401 = arith.constant 128 : index
    %680 = vector.load %arg10[%c0_400, %c128_401] : memref<16x256xf32, #tpu.memory_space<vmem>>, vector<16x128xf32>
    tpu.vector_store %arg10[%c0_400, %c128_401], %676 {strides = array<i32>} : memref<16x256xf32, #tpu.memory_space<vmem>>, vector<16x128xf32>,
    %c7_402 = arith.constant 7 : index
    %c1_403 = arith.constant 1 : index
    %c0_404 = arith.constant 0 : index
    %c0_405 = arith.constant 0 : index
    %681 = vector.load %arg6[%c7_402, %c1_403, %c0_404, %c0_405] : memref<8x2x16x128xf32, #tpu.memory_space<vmem>>, vector<1x1x16x128xf32>
    %682 = vector.shape_cast %681 : vector<1x1x16x128xf32> to vector<16x128xf32>
    %683 = vector.shape_cast %676 : vector<16x128xf32> to vector<1x1x16x128xf32>
    tpu.vector_store %arg6[%c7_402, %c1_403, %c0_404, %c0_405], %683 {strides = array<i32>} : memref<8x2x16x128xf32, #tpu.memory_space<vmem>>, vector<1x1x16x128xf32>,
    %c7_406 = arith.constant 7 : index
    %c1_407 = arith.constant 1 : index
    %c0_408 = arith.constant 0 : index
    %c0_409 = arith.constant 0 : index
    %684 = vector.load %arg7[%c7_406, %c1_407, %c0_408, %c0_409] : memref<8x2x16x128xf32, #tpu.memory_space<vmem>>, vector<1x1x16x128xf32>
    %685 = vector.shape_cast %684 : vector<1x1x16x128xf32> to vector<16x128xf32>
    %686 = vector.shape_cast %674 : vector<16x128xf32> to vector<1x1x16x128xf32>
    tpu.vector_store %arg7[%c7_406, %c1_407, %c0_408, %c0_409], %686 {strides = array<i32>} : memref<8x2x16x128xf32, #tpu.memory_space<vmem>>, vector<1x1x16x128xf32>,
    return
  }
  func.func @transform_0(%arg0: i32, %arg1: i32) -> (i32, i32, i32) {
    %c0_i32 = arith.constant 0 : i32
    %c0_i32_0 = arith.constant 0 : i32
    return %arg1, %arg0, %c0_i32 : i32, i32, i32
  }
  func.func @transform_3(%arg0: i32, %arg1: i32) -> (i32, i32, i32) {
    %c0_i32 = arith.constant 0 : i32
    %c0_i32_0 = arith.constant 0 : i32
    %c0_i32_1 = arith.constant 0 : i32
    %c0_i32_2 = arith.constant 0 : i32
    return %c0_i32, %c0_i32_0, %c0_i32_1 : i32, i32, i32
  }
  func.func @transform_4(%arg0: i32, %arg1: i32) -> (i32, i32, i32, i32) {
    %c0_i32 = arith.constant 0 : i32
    %c0_i32_0 = arith.constant 0 : i32
    %c0_i32_1 = arith.constant 0 : i32
    return %arg1, %c0_i32, %arg0, %c0_i32_0 : i32, i32, i32, i32
  }
  func.func @transform_5(%arg0: i32, %arg1: i32) -> (i32, i32, i32, i32) {
    %c0_i32 = arith.constant 0 : i32
    %c0_i32_0 = arith.constant 0 : i32
    %c0_i32_1 = arith.constant 0 : i32
    return %arg1, %c0_i32, %arg0, %c0_i32_0 : i32, i32, i32, i32
  }
}

</mosaic_0001>

<llo_original>
// kernel: tpu_custom_call.1
$region0: #{tpu_custom_call.1}
  #allocation0 [shape = 'u32[]', space=smem, size = 0x4, offset = 0x4, fixed_abs, tag = 'smem constant byte address 0x4 - core index']
  #allocation1 [shape = 'u32[144,128]{1,0:T(1,128)}', space=vmem, size = 0x12000, scoped, tag = 'internal scratch']
  #allocation2 [shape = 'f32[128,512]{1,0:T(8,128)}', space=vmem, size = 0x40000, scoped, tag = 'scratch operand']
  #allocation3 [shape = 'f32[1,256,512]{2,1,0:T(8,128)}', space=vmem, size = 0x80000, scoped, tag = 'scratch operand']
  #allocation4 [shape = 'f32[16,256]{1,0:T(8,128)}', space=vmem, size = 0x4000, scoped, tag = 'scratch operand']
  #allocation5 [shape = 'f32[2,16,128]{2,1,0:T(8,128)}', space=vmem, size = 0x4000, scoped, tag = 'scratch operand']
  #allocation13 [shape = 's32[]', space=sflag, size = 0x4, offset = 0, fixed_abs, tag = 'sflag constant byte address 0x0 - dummy sync flag']
  #allocation14 [shape = 's32[]', space=sflag, size = 0x4, offset = 0, fixed_abs, tag = 'sflag constant byte address 0x0 - dummy sync flag']
  #allocation15 [shape = 'u32[]', space=smem, size = 0x4, offset = 0x44, fixed_abs, tag = 'smem constant byte address 0x44 - assertion arg 0']
  #allocation16 [shape = 'u32[]', space=smem, size = 0x4, offset = 0x48, fixed_abs, tag = 'smem constant byte address 0x48 - assertion arg 1']
  #allocation18 [shape = 's32[]', space=sflag, size = 0x4, offset = 0, fixed_abs, tag = 'sflag constant byte address 0x0 - dummy sync flag']
  #allocation19 [shape = 's32[]', space=sflag, size = 0x4, offset = 0, fixed_abs, tag = 'sflag constant byte address 0x0 - dummy sync flag']
  %s0 = inlined_call_operand.hbm [shape: f32[16,16,512], index: 0, kind: input, shape index: {}]
  %s1 = inlined_call_operand.hbm [shape: f32[128,512], index: 1, kind: input, shape index: {}]
  %s2 = inlined_call_operand.hbm [shape: f32[1,256,512], index: 2, kind: input, shape index: {}]
  %s3 = inlined_call_operand.vmem [shape: f32[1,1,512], index: 3, kind: input, shape index: {}]
  %s4 = inlined_call_operand.hbm [shape: f32[16,2,16,128], index: 4, kind: output, shape index: {0}]
  %s5 = inlined_call_operand.hbm [shape: f32[16,2,16,128], index: 5, kind: output, shape index: {1}]
  %6 = xla_tuple %s4, %s5
  %s7 = sld [smem:[#allocation0]]
  $region67: #{tpu_custom_call.1} parent=0
    _
  %s9 = ssub.s32 1, %s7
  %s10 = scalar_select 0, %s9, %s7
  $region1: #{tpu_custom_call.1} parent=0
    #allocation6 [shape = 'u8[524288]{0}', space=vmem, size = 0x80000, scoped, tag = 'input window, operand 0']
    #allocation7 [shape = 's32[2]{0}', space=sflag, size = 0x8, scoped, tag = 'scoped memory for tpu_custom_call.1']
    #allocation8 [shape = 's32[2]{0}', space=sflag, size = 0x8, scoped, tag = 'scoped memory for tpu_custom_call.1']
    #allocation9 [shape = 'u8[262144]{0}', space=vmem, size = 0x40000, scoped, tag = 'output window, operand 0']
    #allocation10 [shape = 'u8[262144]{0}', space=vmem, size = 0x40000, scoped, tag = 'output window, operand 1']
    #allocation11 [shape = 's32[2]{0}', space=sflag, size = 0x8, scoped, tag = 'scoped memory for tpu_custom_call.1']
    %11 = vsyncpa [#allocation7], 0
    %s12 = scalar_lea.sflag [#allocation7], 1
    %13 = vsyncpa %s12, 0
    %14 = vsyncpa [#allocation8], 0
    %s15 = scalar_lea.sflag [#allocation8], 1
    %16 = vsyncpa %s15, 0
    %17 = vsyncpa [#allocation11], 0
    %s18 = scalar_lea.sflag [#allocation11], 1
    %19 = vsyncpa %s18, 0
    loop: start=0, step=1, limit=4
    $region2: #{tpu_custom_call.1} parent=1 // loop_pre_header
      _
    $region3: #{tpu_custom_call.1} parent=1 // loop_header
      %s21 = sphi 0, %s25
      %p22 = scmp.ge.s32.totalorder %s21, 4
      %s28 = sphi 0, %s40
      %s29 = sphi 0, %s36
      %s30 = sphi 0, %s28
      %s31 = sphi 0, %s29
      %s32 = sphi 0, %s30
      %s33 = sphi 0, %s31
      %s45 = sphi 0, %s47
      %s48 = sphi 0, %s45
      %s49 = sphi 0, %s48
      %s65 = sphi 0, %s49
      %s69 = sphi 0, %s69
      %s71 = sphi 0, %s69
      %s72 = sphi 0, %s71
      %s86 = sphi 0, %s72
      %s94 = sphi 0, %s96
      %s97 = sphi 0, %s94
      %s98 = sphi 0, %s97
      %s114 = sphi 0, %s98
      %s122 = sphi 0, %s124
      %s125 = sphi 0, %s122
      %s126 = sphi 0, %s125
      %s142 = sphi 0, %s126
    $region4: #{tpu_custom_call.1} parent=1 // loop_header_branch
      %24 = sbr.rel (%p22) target = $region8
    $region5: #{tpu_custom_call.1} parent=1 // loop_body
      %s26 = ssub.s32 %s21, 1
      %s27 = ssub.s32 %s21, 2
      %s34 = sadd.s32 1, %s29
      %p35 = scmp.ge.s32.totalorder %s34, 2
      %s36 = scalar_select %p35, 0, %s34
      %s37 = sadd.s32 1, %s28
      %s38 = scalar_select %p35, %s37, %s28
      %p39 = scmp.ge.s32.totalorder %s38, 1
      %s40 = scalar_select %p39, 0, %s38
      %s41 = ssub.s32 %s29, %s36
      %s42 = ssub.s32 %s28, %s40
      %s43 = sor.u32 %s41, %s42
      %p44 = scmp.eq.s32.totalorder %s43, 0
      %s46 = sadd.s32 %s45, 1
      %s47 = scalar_select %p44, %s45, %s46
      %p50 = pneg %p44
      %p51 = scmp.eq.s32.totalorder %s21, 1
      %p52 = por %p50, %p51
      %p53 = scmp.ne.s32.totalorder %s45, %s48
      %p54 = scmp.eq.s32.totalorder %s21, 0
      %p55 = por %p53, %p54
      %p56 = scmp.ne.s32.totalorder %s45, %s48
      %p57 = scmp.eq.s32.totalorder %s26, 1
      %p58 = por %p56, %p57
      %p59 = scmp.ne.s32.totalorder %s48, %s49
      %p60 = scmp.eq.s32.totalorder %s26, 0
      %p61 = por %p59, %p60
      %p62 = scmp.ne.s32.totalorder %s48, %s49
      %p63 = scmp.eq.s32.totalorder %s27, 1
      %p64 = por %p62, %p63
      %p66 = scmp.ne.s32.totalorder %s49, %s65
      %p67 = scmp.eq.s32.totalorder %s27, 0
      %p68 = por %p66, %p67
      %s70 = sadd.s32 %s69, 1
      %p73 = scmp.eq.s32.totalorder %s21, 1
      %p74 = scmp.ne.s32.totalorder %s69, %s71
      %p75 = scmp.eq.s32.totalorder %s21, 0
      %p76 = por %p74, %p75
      %p77 = scmp.ne.s32.totalorder %s69, %s71
      %p78 = scmp.eq.s32.totalorder %s26, 1
      %p79 = por %p77, %p78
      %p80 = scmp.ne.s32.totalorder %s71, %s72
      %p81 = scmp.eq.s32.totalorder %s26, 0
      %p82 = por %p80, %p81
      %p83 = scmp.ne.s32.totalorder %s71, %s72
      %p84 = scmp.eq.s32.totalorder %s27, 1
      %p85 = por %p83, %p84
      %p87 = scmp.ne.s32.totalorder %s72, %s86
      %p88 = scmp.eq.s32.totalorder %s27, 0
      %p89 = por %p87, %p88
      %s90 = ssub.s32 %s29, %s36
      %s91 = ssub.s32 %s28, %s40
      %s92 = sor.u32 %s90, %s91
      %p93 = scmp.eq.s32.totalorder %s92, 0
      %s95 = sadd.s32 %s94, 1
      %s96 = scalar_select %p93, %s94, %s95
      %p99 = pneg %p93
      %p100 = scmp.eq.s32.totalorder %s21, 1
      %p101 = por %p99, %p100
      %p102 = scmp.ne.s32.totalorder %s94, %s97
      %p103 = scmp.eq.s32.totalorder %s21, 0
      %p104 = por %p102, %p103
      %p105 = scmp.ne.s32.totalorder %s94, %s97
      %p106 = scmp.eq.s32.totalorder %s26, 1
      %p107 = por %p105, %p106
      %p108 = scmp.ne.s32.totalorder %s97, %s98
      %p109 = scmp.eq.s32.totalorder %s26, 0
      %p110 = por %p108, %p109
      %p111 = scmp.ne.s32.totalorder %s97, %s98
      %p112 = scmp.eq.s32.totalorder %s27, 1
      %p113 = por %p111, %p112
      %p115 = scmp.ne.s32.totalorder %s98, %s114
      %p116 = scmp.eq.s32.totalorder %s27, 0
      %p117 = por %p115, %p116
      %s118 = ssub.s32 %s29, %s36
      %s119 = ssub.s32 %s28, %s40
      %s120 = sor.u32 %s118, %s119
      %p121 = scmp.eq.s32.totalorder %s120, 0
      %s123 = sadd.s32 %s122, 1
      %s124 = scalar_select %p121, %s122, %s123
      %p127 = pneg %p121
      %p128 = scmp.eq.s32.totalorder %s21, 1
      %p129 = por %p127, %p128
      %p130 = scmp.ne.s32.totalorder %s122, %s125
      %p131 = scmp.eq.s32.totalorder %s21, 0
      %p132 = por %p130, %p131
      %p133 = scmp.ne.s32.totalorder %s122, %s125
      %p134 = scmp.eq.s32.totalorder %s26, 1
      %p135 = por %p133, %p134
      %p136 = scmp.ne.s32.totalorder %s125, %s126
      %p137 = scmp.eq.s32.totalorder %s26, 0
      %p138 = por %p136, %p137
      %p139 = scmp.ne.s32.totalorder %s125, %s126
      %p140 = scmp.eq.s32.totalorder %s27, 1
      %p141 = por %p139, %p140
      %p143 = scmp.ne.s32.totalorder %s126, %s142
      %p144 = scmp.eq.s32.totalorder %s27, 0
      %p145 = por %p143, %p144
      %p146 = scmp.le.s32.totalorder 1, %s21
      %p147 = scmp.lt.s32.totalorder %s21, 3
      %p148 = pnand %p146, %p147
      %p149 = pneg %p148
      // Predicated region
      $region9: #{tpu_custom_call.1} parent=5 // pred_check
        _
      $region10: #{tpu_custom_call.1} parent=5 // pred_check_branch
        %151 = sbr.rel (%p148) target = $region12
      $region11: #{tpu_custom_call.1} parent=5 // pred_region
        %s152 = ssub.s32 %s21, 1
        // Predicated region
        $region13: #{tpu_custom_call.1} parent=11 // pred_check
          %p153 = pneg %p82
        $region14: #{tpu_custom_call.1} parent=11 // pred_check_branch
          %155 = sbr.rel (%p153) target = $region16
        $region15: #{tpu_custom_call.1} parent=11 // pred_region
          _
        $region16: #{tpu_custom_call.1} parent=11 // pred_fallthru
          _
      $region12: #{tpu_custom_call.1} parent=5 // pred_fallthru
        _
      %p156 = scmp.lt.s32.totalorder %s21, 2
      // Predicated region
      $region17: #{tpu_custom_call.1} parent=5 // pred_check
        %p157 = pneg %p156
      $region18: #{tpu_custom_call.1} parent=5 // pred_check_branch
        %159 = sbr.rel (%p157) target = $region20
      $region19: #{tpu_custom_call.1} parent=5 // pred_region
        // Predicated region
        $region21: #{tpu_custom_call.1} parent=19 // pred_check
          %p160 = pneg %p55
        $region22: #{tpu_custom_call.1} parent=19 // pred_check_branch
          %162 = sbr.rel (%p160) target = $region24
        $region23: #{tpu_custom_call.1} parent=19 // pred_region
          %s163 = sand.u32 %s45, 1
          %s164 = scalar_lea.sflag [#allocation7], %s163
          %s165 = sand.u32 %s45, 1
          %s166 = smul.addr %s165, 512
          %s167 = scalar_lea.vmem [#allocation6], %s166
          %s168 = smul.u32 8, %s29
          %s169 = smul.u32 2, %s28
          %s171 = ssub.s32 8192, 8192
          %172 = vsyncadd %s164, %s171
          %s173 = smul.addr %s169, 4
          %s174 = smul.addr %s168, 8
          %s175 = sadd.s32 %s173, %s174
          %s176 = smul.addr %s175, 128
          %s177 = scalar_lea.hbm %s0, %s176
          %s178 = sshll.u32 %s167, 4
          %s179 = int_to_ptr.vmem [resolvable:$true] %s178
          %184 = dma.hbm_to_vmem [thread:$0]  %s177, 8192, %s179, %s164, 512, 512, 32
        $region24: #{tpu_custom_call.1} parent=19 // pred_fallthru
          _
      $region20: #{tpu_custom_call.1} parent=5 // pred_fallthru
        _
      %p185 = scmp.le.s32.totalorder 1, %s21
      %p186 = scmp.lt.s32.totalorder %s21, 3
      %p187 = pnand %p185, %p186
      %p188 = pneg %p187
      // Predicated region
      $region25: #{tpu_custom_call.1} parent=5 // pred_check
        _
      $region26: #{tpu_custom_call.1} parent=5 // pred_check_branch
        %190 = sbr.rel (%p187) target = $region28
      $region27: #{tpu_custom_call.1} parent=5 // pred_region
        %s191 = ssub.s32 %s21, 1
        %s192 = sand.u32 %s48, 1
        %s193 = scalar_lea.sflag [#allocation7], %s192
        %s194 = sand.u32 %s48, 1
        %s195 = smul.addr %s194, 512
        %s196 = scalar_lea.vmem [#allocation6], %s195
        // Predicated region
        $region29: #{tpu_custom_call.1} parent=27 // pred_check
          %p197 = pneg %p61
        $region30: #{tpu_custom_call.1} parent=27 // pred_check_branch
          %199 = sbr.rel (%p197) target = $region32
        $region31: #{tpu_custom_call.1} parent=27 // pred_region
          %200 = dma.done %s193, 8192
        $region32: #{tpu_custom_call.1} parent=27 // pred_fallthru
          _
        %s201 = sand.u32 %s48, 1
        %s202 = scalar_lea.sflag [#allocation7], %s201
        %s203 = sand.u32 %s48, 1
        %s204 = smul.addr %s203, 512
        %s205 = scalar_lea.vmem [#allocation6], %s204
        %p206 = pneg %p61
        %p207 = pneg %p58
        %p208 = pneg %p82
        %p209 = pneg %p79
        %p210 = pneg %p110
        %p211 = pneg %p107
        %s212 = sand.u32 %s97, 1
        %s213 = scalar_lea.sflag [#allocation8], %s212
        %s214 = sand.u32 %s97, 1
        %s215 = smul.addr %s214, 256
        %s216 = scalar_lea.vmem [#allocation9], %s215
        %p217 = pneg %p138
        %p218 = pneg %p135
        %s219 = sand.u32 %s125, 1
        %s220 = scalar_lea.sflag [#allocation11], %s219
        %s221 = sand.u32 %s125, 1
        %s222 = smul.addr %s221, 256
        %s223 = scalar_lea.vmem [#allocation10], %s222
        %s224 = smul.u32 8, %s31
        %s225 = smul.u32 2, %s30
        %s226 = smul.u32 8, %s31
        %s227 = smul.u32 2, %s30
        %s228 = smul.u32 8, %s31
        %s229 = smul.u32 2, %s30
        %p230 = scmp.eq.s32.totalorder %s31, 0
        // Predicated region
        $region33: #{tpu_custom_call.1} parent=27 // pred_check
          %p231 = pneg %p230
        $region34: #{tpu_custom_call.1} parent=27 // pred_check_branch
          %233 = sbr.rel (%p231) target = $region36
        $region35: #{tpu_custom_call.1} parent=27 // pred_region
          $region37: #{tpu_custom_call.1} parent=35
            #allocation12 [shape = 's32[1]{0}', space=sflag, size = 0x4, scoped, tag = 'scoped memory for tpu_custom_call.1']
            // Predicated region
            $region38: #{tpu_custom_call.1} parent=37 // pred_check
              _
            $region39: #{tpu_custom_call.1} parent=37 // pred_check_branch
              %235 = sbr.rel target = $region41
            $region40: #{tpu_custom_call.1} parent=37 // pred_region
              %236 = sst [smem:[#allocation15]] [#allocation14]
              %237 = sst [smem:[#allocation16]] [#allocation13]
            $region41: #{tpu_custom_call.1} parent=37 // pred_fallthru
              _
            %239 = shalt.err (0)
            %s241 = sshll.u32 [#allocation2], 4
            %s242 = int_to_ptr.vmem [resolvable:$true] %s241
            %244 = dma.hbm_to_vmem [thread:$0]  %s1, 8192, %s242, [#allocation12]
            %s245 = smul.u32 8, 16
            %s246 = smul.u32 %s245, 4
            %s247 = sshll.u32 %s246, 4
            %248 = dma.done [#allocation12], %s247
          $region42: #{tpu_custom_call.1} parent=35
            #allocation17 [shape = 's32[1]{0}', space=sflag, size = 0x4, scoped, tag = 'scoped memory for tpu_custom_call.1']
            // Predicated region
            $region43: #{tpu_custom_call.1} parent=42 // pred_check
              _
            $region44: #{tpu_custom_call.1} parent=42 // pred_check_branch
              %250 = sbr.rel target = $region46
            $region45: #{tpu_custom_call.1} parent=42 // pred_region
              %251 = sst [smem:[#allocation15]] [#allocation19]
              %252 = sst [smem:[#allocation16]] [#allocation18]
            $region46: #{tpu_custom_call.1} parent=42 // pred_fallthru
              _
            %254 = shalt.err (0)
            %s256 = sshll.u32 [#allocation3], 4
            %s257 = int_to_ptr.vmem [resolvable:$true] %s256
            %259 = dma.hbm_to_vmem [thread:$0]  %s2, 16384, %s257, [#allocation17]
            %s260 = smul.u32 8, 1
            %s261 = smul.u32 %s260, 32
            %s262 = smul.u32 %s261, 4
            %s263 = sshll.u32 %s262, 4
            %264 = dma.done [#allocation17], %s263
          %265 = vst [vmem:[#allocation4] sm:$0xff] 0.0
          %266 = vst [vmem:[#allocation4 + $0x8] sm:$0xff] 0.0
          %267 = vst [vmem:[#allocation4 + $0x10] sm:$0xff] 0.0
          %268 = vst [vmem:[#allocation4 + $0x18] sm:$0xff] 0.0
          %269 = vst [vmem:[#allocation5] sm:$0xff] 0.0
          %270 = vst [vmem:[#allocation5 + $0x8] sm:$0xff] 0.0
          %271 = vst [vmem:[#allocation5 + $0x10] sm:$0xff] 0.0
          %272 = vst [vmem:[#allocation5 + $0x18] sm:$0xff] 0.0
        $region36: #{tpu_custom_call.1} parent=27 // pred_fallthru
          _
        %v273 = vld [vmem:[%s3] sm:$0xf]
        %v275 = vlaneseq
        %v276 = vshrl.u32 %v275, 7
        %v277 = vsub.s32 0, %v276
        %v278 = vrot.slane %v273, %v277
        %v279 = vlaneseq
        %v280 = vshrl.u32 %v279, 7
        %v281 = vsub.s32 1, %v280
        %v282 = vrot.slane %v273, %v281
        %v283 = vlaneseq
        %v284 = vshrl.u32 %v283, 7
        %v285 = vsub.s32 2, %v284
        %v286 = vrot.slane %v273, %v285
        %v287 = vlaneseq
        %v288 = vshrl.u32 %v287, 7
        %v289 = vsub.s32 3, %v288
        %v290 = vrot.slane %v273, %v289
        %v295 = vld [vmem:[%s196] sm:$0xff]
        %v296 = vld [vmem:[%s196 + $0x8] sm:$0xff]
        %v297 = vld [vmem:[%s196 + $0x10] sm:$0xff]
        %v298 = vld [vmem:[%s196 + $0x18] sm:$0xff]
        %v299 = vld [vmem:[%s196 + $0x20] sm:$0xff]
        %v300 = vld [vmem:[%s196 + $0x28] sm:$0xff]
        %v301 = vld [vmem:[%s196 + $0x30] sm:$0xff]
        %v302 = vld [vmem:[%s196 + $0x38] sm:$0xff]
        %v303 = vld [vmem:[#allocation4] sm:$0xff]
        %v304 = vld [vmem:[#allocation4 + $0x10] sm:$0xff]
        %v305 = vld [vmem:[#allocation2] sm:$0xff]
        %v306 = vld [vmem:[#allocation2 + $0x8] sm:$0xff]
        %v307 = vld [vmem:[#allocation2 + $0x10] sm:$0xff]
        %v308 = vld [vmem:[#allocation2 + $0x18] sm:$0xff]
        %v309 = vld [vmem:[#allocation2 + $0x20] sm:$0xff]
        %v310 = vld [vmem:[#allocation2 + $0x28] sm:$0xff]
        %v311 = vld [vmem:[#allocation2 + $0x30] sm:$0xff]
        %v312 = vld [vmem:[#allocation2 + $0x38] sm:$0xff]
        %v313 = vld [vmem:[#allocation2 + $0x40] sm:$0xff]
        %v314 = vld [vmem:[#allocation2 + $0x48] sm:$0xff]
        %v315 = vld [vmem:[#allocation2 + $0x50] sm:$0xff]
        %v316 = vld [vmem:[#allocation2 + $0x58] sm:$0xff]
        %v317 = vld [vmem:[#allocation2 + $0x60] sm:$0xff]
        %v318 = vld [vmem:[#allocation2 + $0x68] sm:$0xff]
        %v319 = vld [vmem:[#allocation2 + $0x70] sm:$0xff]
        %v320 = vld [vmem:[#allocation2 + $0x78] sm:$0xff]
        %v321 = vld [vmem:[#allocation2 + $0x80] sm:$0xff]
        %v322 = vld [vmem:[#allocation2 + $0x88] sm:$0xff]
        %v323 = vld [vmem:[#allocation2 + $0x90] sm:$0xff]
        %v324 = vld [vmem:[#allocation2 + $0x98] sm:$0xff]
        %v325 = vld [vmem:[#allocation2 + $0xa0] sm:$0xff]
        %v326 = vld [vmem:[#allocation2 + $0xa8] sm:$0xff]
        %v327 = vld [vmem:[#allocation2 + $0xb0] sm:$0xff]
        %v328 = vld [vmem:[#allocation2 + $0xb8] sm:$0xff]
        %v329 = vld [vmem:[#allocation2 + $0xc0] sm:$0xff]
        %v330 = vld [vmem:[#allocation2 + $0xc8] sm:$0xff]
        %v331 = vld [vmem:[#allocation2 + $0xd0] sm:$0xff]
        %v332 = vld [vmem:[#allocation2 + $0xd8] sm:$0xff]
        %v333 = vld [vmem:[#allocation2 + $0xe0] sm:$0xff]
        %v334 = vld [vmem:[#allocation2 + $0xe8] sm:$0xff]
        %v335 = vld [vmem:[#allocation2 + $0xf0] sm:$0xff]
        %v336 = vld [vmem:[#allocation2 + $0xf8] sm:$0xff]
        %v337 = vld [vmem:[#allocation2 + $0x100] sm:$0xff]
        %v338 = vld [vmem:[#allocation2 + $0x108] sm:$0xff]
        %v339 = vld [vmem:[#allocation2 + $0x110] sm:$0xff]
        %v340 = vld [vmem:[#allocation2 + $0x118] sm:$0xff]
        %v341 = vld [vmem:[#allocation2 + $0x120] sm:$0xff]
        %v342 = vld [vmem:[#allocation2 + $0x128] sm:$0xff]
        %v343 = vld [vmem:[#allocation2 + $0x130] sm:$0xff]
        %v344 = vld [vmem:[#allocation2 + $0x138] sm:$0xff]
        %v345 = vld [vmem:[#allocation2 + $0x140] sm:$0xff]
        %v346 = vld [vmem:[#allocation2 + $0x148] sm:$0xff]
        %v347 = vld [vmem:[#allocation2 + $0x150] sm:$0xff]
        %v348 = vld [vmem:[#allocation2 + $0x158] sm:$0xff]
        %v349 = vld [vmem:[#allocation2 + $0x160] sm:$0xff]
        %v350 = vld [vmem:[#allocation2 + $0x168] sm:$0xff]
        %v351 = vld [vmem:[#allocation2 + $0x170] sm:$0xff]
        %v352 = vld [vmem:[#allocation2 + $0x178] sm:$0xff]
        %v353 = vld [vmem:[#allocation2 + $0x180] sm:$0xff]
        %v354 = vld [vmem:[#allocation2 + $0x188] sm:$0xff]
        %v355 = vld [vmem:[#allocation2 + $0x190] sm:$0xff]
        %v356 = vld [vmem:[#allocation2 + $0x198] sm:$0xff]
        %v357 = vld [vmem:[#allocation2 + $0x1a0] sm:$0xff]
        %v358 = vld [vmem:[#allocation2 + $0x1a8] sm:$0xff]
        %v359 = vld [vmem:[#allocation2 + $0x1b0] sm:$0xff]
        %v360 = vld [vmem:[#allocation2 + $0x1b8] sm:$0xff]
        %v361 = vld [vmem:[#allocation2 + $0x1c0] sm:$0xff]
        %v362 = vld [vmem:[#allocation2 + $0x1c8] sm:$0xff]
        %v363 = vld [vmem:[#allocation2 + $0x1d0] sm:$0xff]
        %v364 = vld [vmem:[#allocation2 + $0x1d8] sm:$0xff]
        %v365 = vld [vmem:[#allocation2 + $0x1e0] sm:$0xff]
        %v366 = vld [vmem:[#allocation2 + $0x1e8] sm:$0xff]
        %v367 = vld [vmem:[#allocation2 + $0x1f0] sm:$0xff]
        %v368 = vld [vmem:[#allocation2 + $0x1f8] sm:$0xff]
        %369 = vmatprep.subr.mxu0 %v306
        %370 = vmatpush1.msra.mxu0 %v305
        %371 = vmatprep.subr.mxu0 %v310
        %372 = vmatpush1.msra.mxu0 %v309
        %373 = vmatprep.subr.mxu0 %v314
        %374 = vmatpush1.msra.mxu0 %v313
        %375 = vmatprep.subr.mxu0 %v318
        %376 = vmatpush1.msra.mxu0 %v317
        %377 = vmatprep.subr.mxu0 %v322
        %378 = vmatpush1.msra.mxu0 %v321
        %379 = vmatprep.subr.mxu0 %v326
        %380 = vmatpush1.msra.mxu0 %v325
        %381 = vmatprep.subr.mxu0 %v330
        %382 = vmatpush1.msra.mxu0 %v329
        %383 = vmatprep.subr.mxu0 %v334
        %384 = vmatpush1.msra.mxu0 %v333
        %385 = vmatprep.subr.mxu0 %v338
        %386 = vmatpush1.msra.mxu0 %v337
        %387 = vmatprep.subr.mxu0 %v342
        %388 = vmatpush1.msra.mxu0 %v341
        %389 = vmatprep.subr.mxu0 %v346
        %390 = vmatpush1.msra.mxu0 %v345
        %391 = vmatprep.subr.mxu0 %v350
        %392 = vmatpush1.msra.mxu0 %v349
        %393 = vmatprep.subr.mxu0 %v354
        %394 = vmatpush1.msra.mxu0 %v353
        %395 = vmatprep.subr.mxu0 %v358
        %396 = vmatpush1.msra.mxu0 %v357
        %397 = vmatprep.subr.mxu0 %v362
        %398 = vmatpush1.msra.mxu0 %v361
        %399 = vmatprep.subr.mxu0 %v366
        %400 = vmatpush1.msra.mxu0 %v365
        %401 = vmatprep.subr.mxu0 0.0
        %402 = vmatpush1.msra.mxu0 0.0
        %403 = vmatprep.subr.mxu0 0.0
        %404 = vmatpush1.msra.mxu0 0.0
        %405 = vmatprep.subr.mxu0 0.0
        %406 = vmatpush1.msra.mxu0 0.0
        %407 = vmatprep.subr.mxu0 0.0
        %408 = vmatpush1.msra.mxu0 0.0
        %409 = vmatprep.subr.mxu0 0.0
        %410 = vmatpush1.msra.mxu0 0.0
        %411 = vmatprep.subr.mxu0 0.0
        %412 = vmatpush1.msra.mxu0 0.0
        %413 = vmatprep.subr.mxu0 0.0
        %414 = vmatpush1.msra.mxu0 0.0
        %415 = vmatprep.subr.mxu0 0.0
        %416 = vmatpush1.msra.mxu0 0.0
        %417 = vmatprep.subr.mxu0 0.0
        %418 = vmatpush1.msra.mxu0 0.0
        %419 = vmatprep.subr.mxu0 0.0
        %420 = vmatpush1.msra.mxu0 0.0
        %421 = vmatprep.subr.mxu0 0.0
        %422 = vmatpush1.msra.mxu0 0.0
        %423 = vmatprep.subr.mxu0 0.0
        %424 = vmatpush1.msra.mxu0 0.0
        %425 = vmatprep.subr.mxu0 0.0
        %426 = vmatpush1.msra.mxu0 0.0
        %427 = vmatprep.subr.mxu0 0.0
        %428 = vmatpush1.msra.mxu0 0.0
        %429 = vmatprep.subr.mxu0 0.0
        %430 = vmatpush1.msra.mxu0 0.0
        %431 = vmatprep.subr.mxu0 0.0
        %432 = vmatpush1.msra.mxu0 0.0
        %433 = vmatprep.mubr.f32.mxu0 0.0
        %434 = vmatmul.mubr.f32.gmra.mrb[0].mxu0 %v303
        %v435 = vpop.f32.mrb[0].mxu0
        %v436 = vadd.f32 0.0, %v435
        %v437 = vpop.f32.mrb[0].mxu0
        %v438 = vadd.f32 0.0, %v437
        %439 = vmatprep.mubr.f32.mxu0 0.0
        %440 = vmatmul.mubr.f32.gmra.mrb[0].mxu0 %v304
        %v441 = vpop.f32.mrb[0].mxu0
        %v442 = vadd.f32 0.0, %v441
        %v443 = vpop.f32.mrb[0].mxu0
        %v444 = vadd.f32 0.0, %v443
        %445 = vdwg.mxu0
        %446 = vmatprep.subr.mxu0 %v308
        %447 = vmatpush1.msra.mxu0 %v307
        %448 = vmatprep.subr.mxu0 %v312
        %449 = vmatpush1.msra.mxu0 %v311
        %450 = vmatprep.subr.mxu0 %v316
        %451 = vmatpush1.msra.mxu0 %v315
        %452 = vmatprep.subr.mxu0 %v320
        %453 = vmatpush1.msra.mxu0 %v319
        %454 = vmatprep.subr.mxu0 %v324
        %455 = vmatpush1.msra.mxu0 %v323
        %456 = vmatprep.subr.mxu0 %v328
        %457 = vmatpush1.msra.mxu0 %v327
        %458 = vmatprep.subr.mxu0 %v332
        %459 = vmatpush1.msra.mxu0 %v331
        %460 = vmatprep.subr.mxu0 %v336
        %461 = vmatpush1.msra.mxu0 %v335
        %462 = vmatprep.subr.mxu0 %v340
        %463 = vmatpush1.msra.mxu0 %v339
        %464 = vmatprep.subr.mxu0 %v344
        %465 = vmatpush1.msra.mxu0 %v343
        %466 = vmatprep.subr.mxu0 %v348
        %467 = vmatpush1.msra.mxu0 %v347
        %468 = vmatprep.subr.mxu0 %v352
        %469 = vmatpush1.msra.mxu0 %v351
        %470 = vmatprep.subr.mxu0 %v356
        %471 = vmatpush1.msra.mxu0 %v355
        %472 = vmatprep.subr.mxu0 %v360
        %473 = vmatpush1.msra.mxu0 %v359
        %474 = vmatprep.subr.mxu0 %v364
        %475 = vmatpush1.msra.mxu0 %v363
        %476 = vmatprep.subr.mxu0 %v368
        %477 = vmatpush1.msra.mxu0 %v367
        %478 = vmatprep.subr.mxu0 0.0
        %479 = vmatpush1.msra.mxu0 0.0
        %480 = vmatprep.subr.mxu0 0.0
        %481 = vmatpush1.msra.mxu0 0.0
        %482 = vmatprep.subr.mxu0 0.0
        %483 = vmatpush1.msra.mxu0 0.0
        %484 = vmatprep.subr.mxu0 0.0
        %485 = vmatpush1.msra.mxu0 0.0
        %486 = vmatprep.subr.mxu0 0.0
        %487 = vmatpush1.msra.mxu0 0.0
        %488 = vmatprep.subr.mxu0 0.0
        %489 = vmatpush1.msra.mxu0 0.0
        %490 = vmatprep.subr.mxu0 0.0
        %491 = vmatpush1.msra.mxu0 0.0
        %492 = vmatprep.subr.mxu0 0.0
        %493 = vmatpush1.msra.mxu0 0.0
        %494 = vmatprep.subr.mxu0 0.0
        %495 = vmatpush1.msra.mxu0 0.0
        %496 = vmatprep.subr.mxu0 0.0
        %497 = vmatpush1.msra.mxu0 0.0
        %498 = vmatprep.subr.mxu0 0.0
        %499 = vmatpush1.msra.mxu0 0.0
        %500 = vmatprep.subr.mxu0 0.0
        %501 = vmatpush1.msra.mxu0 0.0
        %502 = vmatprep.subr.mxu0 0.0
        %503 = vmatpush1.msra.mxu0 0.0
        %504 = vmatprep.subr.mxu0 0.0
        %505 = vmatpush1.msra.mxu0 0.0
        %506 = vmatprep.subr.mxu0 0.0
        %507 = vmatpush1.msra.mxu0 0.0
        %508 = vmatprep.subr.mxu0 0.0
        %509 = vmatpush1.msra.mxu0 0.0
        %510 = vmatprep.mubr.f32.mxu0 0.0
        %511 = vmatmul.mubr.f32.gmra.mrb[0].mxu0 %v303
        %v512 = vpop.f32.mrb[0].mxu0
        %v513 = vadd.f32 0.0, %v512
        %v514 = vpop.f32.mrb[0].mxu0
        %v515 = vadd.f32 0.0, %v514
        %516 = vmatprep.mubr.f32.mxu0 0.0
        %517 = vmatmul.mubr.f32.gmra.mrb[0].mxu0 %v304
        %v518 = vpop.f32.mrb[0].mxu0
        %v519 = vadd.f32 0.0, %v518
        %v520 = vpop.f32.mrb[0].mxu0
        %v521 = vadd.f32 0.0, %v520
        %522 = vdwg.mxu0
        %v523 = vadd.f32 %v295, %v436
        %v524 = vadd.f32 %v296, %v438
        %v525 = vadd.f32 %v297, %v513
        %v526 = vadd.f32 %v298, %v515
        %v527 = vadd.f32 %v299, %v442
        %v528 = vadd.f32 %v300, %v444
        %v529 = vadd.f32 %v301, %v519
        %v530 = vadd.f32 %v302, %v521
        %v531 = vld [vmem:[#allocation5] sm:$0xff]
        %v532 = vld [vmem:[#allocation5 + $0x8] sm:$0xff]
        %v533 = vxor.u32 %v523, 2147483648
        %v534 = vxor.u32 %v527, 2147483648
        %v535 = vmul.f32 %v533, 1.442695
        %v536 = vpow.pop %v535
        %v537 = vmul.f32 %v534, 1.442695
        %v538 = vpow.pop %v537
        %v539 = vadd.f32 %v536, 1.0
        %v540 = vadd.f32 %v538, 1.0
        %v541 = vrcp.pop %v539
        %v542 = vmul.f32 1.0, %v541
        %v543 = vrcp.pop %v540
        %v544 = vmul.f32 1.0, %v543
        %v545 = vxor.u32 %v524, 2147483648
        %v546 = vxor.u32 %v528, 2147483648
        %v547 = vmul.f32 %v545, 1.442695
        %v548 = vpow.pop %v547
        %v549 = vmul.f32 %v546, 1.442695
        %v550 = vpow.pop %v549
        %v551 = vadd.f32 %v548, 1.0
        %v552 = vadd.f32 %v550, 1.0
        %v553 = vrcp.pop %v551
        %v554 = vmul.f32 1.0, %v553
        %v555 = vrcp.pop %v552
        %v556 = vmul.f32 1.0, %v555
        %v557 = vtanh.pop %v525
        %v558 = vtanh.pop %v529
        %v559 = vxor.u32 %v526, 2147483648
        %v560 = vxor.u32 %v530, 2147483648
        %v561 = vmul.f32 %v559, 1.442695
        %v562 = vpow.pop %v561
        %v563 = vmul.f32 %v560, 1.442695
        %v564 = vpow.pop %v563
        %v565 = vadd.f32 %v562, 1.0
        %v566 = vadd.f32 %v564, 1.0
        %v567 = vrcp.pop %v565
        %v568 = vmul.f32 1.0, %v567
        %v569 = vrcp.pop %v566
        %v570 = vmul.f32 1.0, %v569
        %v571 = vmul.f32 %v554, %v531
        %v572 = vmul.f32 %v556, %v532
        %v573 = vmul.f32 %v542, %v557
        %v574 = vmul.f32 %v544, %v558
        %v575 = vadd.f32 %v571, %v573
        %v576 = vadd.f32 %v572, %v574
        %v577 = vtanh.pop %v575
        %v578 = vtanh.pop %v576
        %v579 = vmul.f32 %v568, %v577
        %v580 = vmul.f32 %v570, %v578
        %581 = vst [vmem:[#allocation5] sm:$0xff] %v575
        %582 = vst [vmem:[#allocation5 + $0x8] sm:$0xff] %v576
        %583 = vst [vmem:[#allocation4] sm:$0xff] %v579
        %584 = vst [vmem:[#allocation4 + $0x10] sm:$0xff] %v580
        %585 = vst [vmem:[%s216] sm:$0xff] %v579
        %586 = vst [vmem:[%s216 + $0x8] sm:$0xff] %v580
        %587 = vst [vmem:[%s223] sm:$0xff] %v575
        %588 = vst [vmem:[%s223 + $0x8] sm:$0xff] %v576
        %v589 = vld [vmem:[#allocation4] sm:$0xff]
        %v590 = vld [vmem:[#allocation4 + $0x8] sm:$0xff]
        %v591 = vld [vmem:[#allocation4 + $0x10] sm:$0xff]
        %v592 = vld [vmem:[#allocation4 + $0x18] sm:$0xff]
        %v593 = vld [vmem:[#allocation3] sm:$0xff]
        %v594 = vld [vmem:[#allocation3 + $0x8] sm:$0xff]
        %v595 = vld [vmem:[#allocation3 + $0x10] sm:$0xff]
        %v596 = vld [vmem:[#allocation3 + $0x18] sm:$0xff]
        %v597 = vld [vmem:[#allocation3 + $0x20] sm:$0xff]
        %v598 = vld [vmem:[#allocation3 + $0x28] sm:$0xff]
        %v599 = vld [vmem:[#allocation3 + $0x30] sm:$0xff]
        %v600 = vld [vmem:[#allocation3 + $0x38] sm:$0xff]
        %v601 = vld [vmem:[#allocation3 + $0x40] sm:$0xff]
        %v602 = vld [vmem:[#allocation3 + $0x48] sm:$0xff]
        %v603 = vld [vmem:[#allocation3 + $0x50] sm:$0xff]
        %v604 = vld [vmem:[#allocation3 + $0x58] sm:$0xff]
        %v605 = vld [vmem:[#allocation3 + $0x60] sm:$0xff]
        %v606 = vld [vmem:[#allocation3 + $0x68] sm:$0xff]
        %v607 = vld [vmem:[#allocation3 + $0x70] sm:$0xff]
        %v608 = vld [vmem:[#allocation3 + $0x78] sm:$0xff]
        %v609 = vld [vmem:[#allocation3 + $0x80] sm:$0xff]
        %v610 = vld [vmem:[#allocation3 + $0x88] sm:$0xff]
        %v611 = vld [vmem:[#allocation3 + $0x90] sm:$0xff]
        %v612 = vld [vmem:[#allocation3 + $0x98] sm:$0xff]
        %v613 = vld [vmem:[#allocation3 + $0xa0] sm:$0xff]
        %v614 = vld [vmem:[#allocation3 + $0xa8] sm:$0xff]
        %v615 = vld [vmem:[#allocation3 + $0xb0] sm:$0xff]
        %v616 = vld [vmem:[#allocation3 + $0xb8] sm:$0xff]
        %v617 = vld [vmem:[#allocation3 + $0xc0] sm:$0xff]
        %v618 = vld [vmem:[#allocation3 + $0xc8] sm:$0xff]
        %v619 = vld [vmem:[#allocation3 + $0xd0] sm:$0xff]
        %v620 = vld [vmem:[#allocation3 + $0xd8] sm:$0xff]
        %v621 = vld [vmem:[#allocation3 + $0xe0] sm:$0xff]
        %v622 = vld [vmem:[#allocation3 + $0xe8] sm:$0xff]
        %v623 = vld [vmem:[#allocation3 + $0xf0] sm:$0xff]
        %v624 = vld [vmem:[#allocation3 + $0xf8] sm:$0xff]
        %v625 = vld [vmem:[#allocation3 + $0x100] sm:$0xff]
        %v626 = vld [vmem:[#allocation3 + $0x108] sm:$0xff]
        %v627 = vld [vmem:[#allocation3 + $0x110] sm:$0xff]
        %v628 = vld [vmem:[#allocation3 + $0x118] sm:$0xff]
        %v629 = vld [vmem:[#allocation3 + $0x120] sm:$0xff]
        %v630 = vld [vmem:[#allocation3 + $0x128] sm:$0xff]
        %v631 = vld [vmem:[#allocation3 + $0x130] sm:$0xff]
        %v632 = vld [vmem:[#allocation3 + $0x138] sm:$0xff]
        %v633 = vld [vmem:[#allocation3 + $0x140] sm:$0xff]
        %v634 = vld [vmem:[#allocation3 + $0x148] sm:$0xff]
        %v635 = vld [vmem:[#allocation3 + $0x150] sm:$0xff]
        %v636 = vld [vmem:[#allocation3 + $0x158] sm:$0xff]
        %v637 = vld [vmem:[#allocation3 + $0x160] sm:$0xff]
        %v638 = vld [vmem:[#allocation3 + $0x168] sm:$0xff]
        %v639 = vld [vmem:[#allocation3 + $0x170] sm:$0xff]
        %v640 = vld [vmem:[#allocation3 + $0x178] sm:$0xff]
        %v641 = vld [vmem:[#allocation3 + $0x180] sm:$0xff]
        %v642 = vld [vmem:[#allocation3 + $0x188] sm:$0xff]
        %v643 = vld [vmem:[#allocation3 + $0x190] sm:$0xff]
        %v644 = vld [vmem:[#allocation3 + $0x198] sm:$0xff]
        %v645 = vld [vmem:[#allocation3 + $0x1a0] sm:$0xff]
        %v646 = vld [vmem:[#allocation3 + $0x1a8] sm:$0xff]
        %v647 = vld [vmem:[#allocation3 + $0x1b0] sm:$0xff]
        %v648 = vld [vmem:[#allocation3 + $0x1b8] sm:$0xff]
        %v649 = vld [vmem:[#allocation3 + $0x1c0] sm:$0xff]
        %v650 = vld [vmem:[#allocation3 + $0x1c8] sm:$0xff]
        %v651 = vld [vmem:[#allocation3 + $0x1d0] sm:$0xff]
        %v652 = vld [vmem:[#allocation3 + $0x1d8] sm:$0xff]
        %v653 = vld [vmem:[#allocation3 + $0x1e0] sm:$0xff]
        %v654 = vld [vmem:[#allocation3 + $0x1e8] sm:$0xff]
        %v655 = vld [vmem:[#allocation3 + $0x1f0] sm:$0xff]
        %v656 = vld [vmem:[#allocation3 + $0x1f8] sm:$0xff]
        %v657 = vld [vmem:[#allocation3 + $0x200] sm:$0xff]
        %v658 = vld [vmem:[#allocation3 + $0x208] sm:$0xff]
        %v659 = vld [vmem:[#allocation3 + $0x210] sm:$0xff]
        %v660 = vld [vmem:[#allocation3 + $0x218] sm:$0xff]
        %v661 = vld [vmem:[#allocation3 + $0x220] sm:$0xff]
        %v662 = vld [vmem:[#allocation3 + $0x228] sm:$0xff]
        %v663 = vld [vmem:[#allocation3 + $0x230] sm:$0xff]
        %v664 = vld [vmem:[#allocation3 + $0x238] sm:$0xff]
        %v665 = vld [vmem:[#allocation3 + $0x240] sm:$0xff]
        %v666 = vld [vmem:[#allocation3 + $0x248] sm:$0xff]
        %v667 = vld [vmem:[#allocation3 + $0x250] sm:$0xff]
        %v668 = vld [vmem:[#allocation3 + $0x258] sm:$0xff]
        %v669 = vld [vmem:[#allocation3 + $0x260] sm:$0xff]
        %v670 = vld [vmem:[#allocation3 + $0x268] sm:$0xff]
        %v671 = vld [vmem:[#allocation3 + $0x270] sm:$0xff]
        %v672 = vld [vmem:[#allocation3 + $0x278] sm:$0xff]
        %v673 = vld [vmem:[#allocation3 + $0x280] sm:$0xff]
        %v674 = vld [vmem:[#allocation3 + $0x288] sm:$0xff]
        %v675 = vld [vmem:[#allocation3 + $0x290] sm:$0xff]
        %v676 = vld [vmem:[#allocation3 + $0x298] sm:$0xff]
        %v677 = vld [vmem:[#allocation3 + $0x2a0] sm:$0xff]
        %v678 = vld [vmem:[#allocation3 + $0x2a8] sm:$0xff]
        %v679 = vld [vmem:[#allocation3 + $0x2b0] sm:$0xff]
        %v680 = vld [vmem:[#allocation3 + $0x2b8] sm:$0xff]
        %v681 = vld [vmem:[#allocation3 + $0x2c0] sm:$0xff]
        %v682 = vld [vmem:[#allocation3 + $0x2c8] sm:$0xff]
        %v683 = vld [vmem:[#allocation3 + $0x2d0] sm:$0xff]
        %v684 = vld [vmem:[#allocation3 + $0x2d8] sm:$0xff]
        %v685 = vld [vmem:[#allocation3 + $0x2e0] sm:$0xff]
        %v686 = vld [vmem:[#allocation3 + $0x2e8] sm:$0xff]
        %v687 = vld [vmem:[#allocation3 + $0x2f0] sm:$0xff]
        %v688 = vld [vmem:[#allocation3 + $0x2f8] sm:$0xff]
        %v689 = vld [vmem:[#allocation3 + $0x300] sm:$0xff]
        %v690 = vld [vmem:[#allocation3 + $0x308] sm:$0xff]
        %v691 = vld [vmem:[#allocation3 + $0x310] sm:$0xff]
        %v692 = vld [vmem:[#allocation3 + $0x318] sm:$0xff]
        %v693 = vld [vmem:[#allocation3 + $0x320] sm:$0xff]
        %v694 = vld [vmem:[#allocation3 + $0x328] sm:$0xff]
        %v695 = vld [vmem:[#allocation3 + $0x330] sm:$0xff]
        %v696 = vld [vmem:[#allocation3 + $0x338] sm:$0xff]
        %v697 = vld [vmem:[#allocation3 + $0x340] sm:$0xff]
        %v698 = vld [vmem:[#allocation3 + $0x348] sm:$0xff]
        %v699 = vld [vmem:[#allocation3 + $0x350] sm:$0xff]
        %v700 = vld [vmem:[#allocation3 + $0x358] sm:$0xff]
        %v701 = vld [vmem:[#allocation3 + $0x360] sm:$0xff]
        %v702 = vld [vmem:[#allocation3 + $0x368] sm:$0xff]
        %v703 = vld [vmem:[#allocation3 + $0x370] sm:$0xff]
        %v704 = vld [vmem:[#allocation3 + $0x378] sm:$0xff]
        %v705 = vld [vmem:[#allocation3 + $0x380] sm:$0xff]
        %v706 = vld [vmem:[#allocation3 + $0x388] sm:$0xff]
        %v707 = vld [vmem:[#allocation3 + $0x390] sm:$0xff]
        %v708 = vld [vmem:[#allocation3 + $0x398] sm:$0xff]
        %v709 = vld [vmem:[#allocation3 + $0x3a0] sm:$0xff]
        %v710 = vld [vmem:[#allocation3 + $0x3a8] sm:$0xff]
        %v711 = vld [vmem:[#allocation3 + $0x3b0] sm:$0xff]
        %v712 = vld [vmem:[#allocation3 + $0x3b8] sm:$0xff]
        %v713 = vld [vmem:[#allocation3 + $0x3c0] sm:$0xff]
        %v714 = vld [vmem:[#allocation3 + $0x3c8] sm:$0xff]
        %v715 = vld [vmem:[#allocation3 + $0x3d0] sm:$0xff]
        %v716 = vld [vmem:[#allocation3 + $0x3d8] sm:$0xff]
        %v717 = vld [vmem:[#allocation3 + $0x3e0] sm:$0xff]
        %v718 = vld [vmem:[#allocation3 + $0x3e8] sm:$0xff]
        %v719 = vld [vmem:[#allocation3 + $0x3f0] sm:$0xff]
        %v720 = vld [vmem:[#allocation3 + $0x3f8] sm:$0xff]
        %721 = vmatprep.subr.mxu0 %v594
        %722 = vmatpush1.msra.mxu0 %v593
        %723 = vmatprep.subr.mxu0 %v598
        %724 = vmatpush1.msra.mxu0 %v597
        %725 = vmatprep.subr.mxu0 %v602
        %726 = vmatpush1.msra.mxu0 %v601
        %727 = vmatprep.subr.mxu0 %v606
        %728 = vmatpush1.msra.mxu0 %v605
        %729 = vmatprep.subr.mxu0 %v610
        %730 = vmatpush1.msra.mxu0 %v609
        %731 = vmatprep.subr.mxu0 %v614
        %732 = vmatpush1.msra.mxu0 %v613
        %733 = vmatprep.subr.mxu0 %v618
        %734 = vmatpush1.msra.mxu0 %v617
        %735 = vmatprep.subr.mxu0 %v622
        %736 = vmatpush1.msra.mxu0 %v621
        %737 = vmatprep.subr.mxu0 %v626
        %738 = vmatpush1.msra.mxu0 %v625
        %739 = vmatprep.subr.mxu0 %v630
        %740 = vmatpush1.msra.mxu0 %v629
        %741 = vmatprep.subr.mxu0 %v634
        %742 = vmatpush1.msra.mxu0 %v633
        %743 = vmatprep.subr.mxu0 %v638
        %744 = vmatpush1.msra.mxu0 %v637
        %745 = vmatprep.subr.mxu0 %v642
        %746 = vmatpush1.msra.mxu0 %v641
        %747 = vmatprep.subr.mxu0 %v646
        %748 = vmatpush1.msra.mxu0 %v645
        %749 = vmatprep.subr.mxu0 %v650
        %750 = vmatpush1.msra.mxu0 %v649
        %751 = vmatprep.subr.mxu0 %v654
        %752 = vmatpush1.msra.mxu0 %v653
        %753 = vmatprep.subr.mxu0 %v658
        %754 = vmatpush1.msra.mxu0 %v657
        %755 = vmatprep.subr.mxu0 %v662
        %756 = vmatpush1.msra.mxu0 %v661
        %757 = vmatprep.subr.mxu0 %v666
        %758 = vmatpush1.msra.mxu0 %v665
        %759 = vmatprep.subr.mxu0 %v670
        %760 = vmatpush1.msra.mxu0 %v669
        %761 = vmatprep.subr.mxu0 %v674
        %762 = vmatpush1.msra.mxu0 %v673
        %763 = vmatprep.subr.mxu0 %v678
        %764 = vmatpush1.msra.mxu0 %v677
        %765 = vmatprep.subr.mxu0 %v682
        %766 = vmatpush1.msra.mxu0 %v681
        %767 = vmatprep.subr.mxu0 %v686
        %768 = vmatpush1.msra.mxu0 %v685
        %769 = vmatprep.subr.mxu0 %v690
        %770 = vmatpush1.msra.mxu0 %v689
        %771 = vmatprep.subr.mxu0 %v694
        %772 = vmatpush1.msra.mxu0 %v693
        %773 = vmatprep.subr.mxu0 %v698
        %774 = vmatpush1.msra.mxu0 %v697
        %775 = vmatprep.subr.mxu0 %v702
        %776 = vmatpush1.msra.mxu0 %v701
        %777 = vmatprep.subr.mxu0 %v706
        %778 = vmatpush1.msra.mxu0 %v705
        %779 = vmatprep.subr.mxu0 %v710
        %780 = vmatpush1.msra.mxu0 %v709
        %781 = vmatprep.subr.mxu0 %v714
        %782 = vmatpush1.msra.mxu0 %v713
        %783 = vmatprep.subr.mxu0 %v718
        %784 = vmatpush1.msra.mxu0 %v717
        %785 = vmatprep.mubr.f32.mxu0 %v590
        %786 = vmatmul.mubr.f32.gmra.mrb[0].mxu0 %v589
        %v787 = vpop.f32.mrb[0].mxu0
        %v788 = vadd.f32 0.0, %v787
        %v789 = vpop.f32.mrb[0].mxu0
        %v790 = vadd.f32 0.0, %v789
        %791 = vmatprep.mubr.f32.mxu0 %v592
        %792 = vmatmul.mubr.f32.gmra.mrb[0].mxu0 %v591
        %v793 = vpop.f32.mrb[0].mxu0
        %v794 = vadd.f32 0.0, %v793
        %v795 = vpop.f32.mrb[0].mxu0
        %v796 = vadd.f32 0.0, %v795
        %797 = vdwg.mxu0
        %798 = vmatprep.subr.mxu0 %v596
        %799 = vmatpush1.msra.mxu0 %v595
        %800 = vmatprep.subr.mxu0 %v600
        %801 = vmatpush1.msra.mxu0 %v599
        %802 = vmatprep.subr.mxu0 %v604
        %803 = vmatpush1.msra.mxu0 %v603
        %804 = vmatprep.subr.mxu0 %v608
        %805 = vmatpush1.msra.mxu0 %v607
        %806 = vmatprep.subr.mxu0 %v612
        %807 = vmatpush1.msra.mxu0 %v611
        %808 = vmatprep.subr.mxu0 %v616
        %809 = vmatpush1.msra.mxu0 %v615
        %810 = vmatprep.subr.mxu0 %v620
        %811 = vmatpush1.msra.mxu0 %v619
        %812 = vmatprep.subr.mxu0 %v624
        %813 = vmatpush1.msra.mxu0 %v623
        %814 = vmatprep.subr.mxu0 %v628
        %815 = vmatpush1.msra.mxu0 %v627
        %816 = vmatprep.subr.mxu0 %v632
        %817 = vmatpush1.msra.mxu0 %v631
        %818 = vmatprep.subr.mxu0 %v636
        %819 = vmatpush1.msra.mxu0 %v635
        %820 = vmatprep.subr.mxu0 %v640
        %821 = vmatpush1.msra.mxu0 %v639
        %822 = vmatprep.subr.mxu0 %v644
        %823 = vmatpush1.msra.mxu0 %v643
        %824 = vmatprep.subr.mxu0 %v648
        %825 = vmatpush1.msra.mxu0 %v647
        %826 = vmatprep.subr.mxu0 %v652
        %827 = vmatpush1.msra.mxu0 %v651
        %828 = vmatprep.subr.mxu0 %v656
        %829 = vmatpush1.msra.mxu0 %v655
        %830 = vmatprep.subr.mxu0 %v660
        %831 = vmatpush1.msra.mxu0 %v659
        %832 = vmatprep.subr.mxu0 %v664
        %833 = vmatpush1.msra.mxu0 %v663
        %834 = vmatprep.subr.mxu0 %v668
        %835 = vmatpush1.msra.mxu0 %v667
        %836 = vmatprep.subr.mxu0 %v672
        %837 = vmatpush1.msra.mxu0 %v671
        %838 = vmatprep.subr.mxu0 %v676
        %839 = vmatpush1.msra.mxu0 %v675
        %840 = vmatprep.subr.mxu0 %v680
        %841 = vmatpush1.msra.mxu0 %v679
        %842 = vmatprep.subr.mxu0 %v684
        %843 = vmatpush1.msra.mxu0 %v683
        %844 = vmatprep.subr.mxu0 %v688
        %845 = vmatpush1.msra.mxu0 %v687
        %846 = vmatprep.subr.mxu0 %v692
        %847 = vmatpush1.msra.mxu0 %v691
        %848 = vmatprep.subr.mxu0 %v696
        %849 = vmatpush1.msra.mxu0 %v695
        %850 = vmatprep.subr.mxu0 %v700
        %851 = vmatpush1.msra.mxu0 %v699
        %852 = vmatprep.subr.mxu0 %v704
        %853 = vmatpush1.msra.mxu0 %v703
        %854 = vmatprep.subr.mxu0 %v708
        %855 = vmatpush1.msra.mxu0 %v707
        %856 = vmatprep.subr.mxu0 %v712
        %857 = vmatpush1.msra.mxu0 %v711
        %858 = vmatprep.subr.mxu0 %v716
        %859 = vmatpush1.msra.mxu0 %v715
        %860 = vmatprep.subr.mxu0 %v720
        %861 = vmatpush1.msra.mxu0 %v719
        %862 = vmatprep.mubr.f32.mxu0 %v590
        %863 = vmatmul.mubr.f32.gmra.mrb[0].mxu0 %v589
        %v864 = vpop.f32.mrb[0].mxu0
        %v865 = vadd.f32 0.0, %v864
        %v866 = vpop.f32.mrb[0].mxu0
        %v867 = vadd.f32 0.0, %v866
        %868 = vmatprep.mubr.f32.mxu0 %v592
        %869 = vmatmul.mubr.f32.gmra.mrb[0].mxu0 %v591
        %v870 = vpop.f32.mrb[0].mxu0
        %v871 = vadd.f32 0.0, %v870
        %v872 = vpop.f32.mrb[0].mxu0
        %v873 = vadd.f32 0.0, %v872
        %874 = vdwg.mxu0
        %v875 = vadd.f32 %v278, %v788
        %v876 = vadd.f32 %v282, %v790
        %v877 = vadd.f32 %v286, %v865
        %v878 = vadd.f32 %v290, %v867
        %v879 = vadd.f32 %v278, %v794
        %v880 = vadd.f32 %v282, %v796
        %v881 = vadd.f32 %v286, %v871
        %v882 = vadd.f32 %v290, %v873
        %s883 = scalar_lea.vmem [#allocation5], 16
        %v884 = vld [vmem:[%s883] sm:$0xff]
        %v885 = vld [vmem:[%s883 + $0x8] sm:$0xff]
        %v886 = vxor.u32 %v875, 2147483648
        %v887 = vxor.u32 %v879, 2147483648
        %v888 = vmul.f32 %v886, 1.442695
        %v889 = vpow.pop %v888
        %v890 = vmul.f32 %v887, 1.442695
        %v891 = vpow.pop %v890
        %v892 = vadd.f32 %v889, 1.0
        %v893 = vadd.f32 %v891, 1.0
        %v894 = vrcp.pop %v892
        %v895 = vmul.f32 1.0, %v894
        %v896 = vrcp.pop %v893
        %v897 = vmul.f32 1.0, %v896
        %v898 = vxor.u32 %v876, 2147483648
        %v899 = vxor.u32 %v880, 2147483648
        %v900 = vmul.f32 %v898, 1.442695
        %v901 = vpow.pop %v900
        %v902 = vmul.f32 %v899, 1.442695
        %v903 = vpow.pop %v902
        %v904 = vadd.f32 %v901, 1.0
        %v905 = vadd.f32 %v903, 1.0
        %v906 = vrcp.pop %v904
        %v907 = vmul.f32 1.0, %v906
        %v908 = vrcp.pop %v905
        %v909 = vmul.f32 1.0, %v908
        %v910 = vtanh.pop %v877
        %v911 = vtanh.pop %v881
        %v912 = vxor.u32 %v878, 2147483648
        %v913 = vxor.u32 %v882, 2147483648
        %v914 = vmul.f32 %v912, 1.442695
        %v915 = vpow.pop %v914
        %v916 = vmul.f32 %v913, 1.442695
        %v917 = vpow.pop %v916
        %v918 = vadd.f32 %v915, 1.0
        %v919 = vadd.f32 %v917, 1.0
        %v920 = vrcp.pop %v918
        %v921 = vmul.f32 1.0, %v920
        %v922 = vrcp.pop %v919
        %v923 = vmul.f32 1.0, %v922
        %v924 = vmul.f32 %v907, %v884
        %v925 = vmul.f32 %v909, %v885
        %v926 = vmul.f32 %v895, %v910
        %v927 = vmul.f32 %v897, %v911
        %v928 = vadd.f32 %v924, %v926
        %v929 = vadd.f32 %v925, %v927
        %v930 = vtanh.pop %v928
        %v931 = vtanh.pop %v929
        %v932 = vmul.f32 %v921, %v930
        %v933 = vmul.f32 %v923, %v931
        %934 = vst [vmem:[%s883] sm:$0xff] %v928
        %935 = vst [vmem:[%s883 + $0x8] sm:$0xff] %v929
        %936 = vst [vmem:[#allocation4 + $0x8] sm:$0xff] %v932
        %937 = vst [vmem:[#allocation4 + $0x18] sm:$0xff] %v933
        %s938 = scalar_lea.vmem %s216, 16 [#allocation9]
        %939 = vst [vmem:[%s938] sm:$0xff] %v932
        %940 = vst [vmem:[%s938 + $0x8] sm:$0xff] %v933
        %s941 = scalar_lea.vmem %s223, 16 [#allocation10]
        %942 = vst [vmem:[%s941] sm:$0xff] %v928
        %943 = vst [vmem:[%s941 + $0x8] sm:$0xff] %v929
        %s944 = scalar_lea.vmem %s196, 64 [#allocation6]
        %v945 = vld [vmem:[%s944] sm:$0xff]
        %v946 = vld [vmem:[%s944 + $0x8] sm:$0xff]
        %v947 = vld [vmem:[%s944 + $0x10] sm:$0xff]
        %v948 = vld [vmem:[%s944 + $0x18] sm:$0xff]
        %v949 = vld [vmem:[%s944 + $0x20] sm:$0xff]
        %v950 = vld [vmem:[%s944 + $0x28] sm:$0xff]
        %v951 = vld [vmem:[%s944 + $0x30] sm:$0xff]
        %v952 = vld [vmem:[%s944 + $0x38] sm:$0xff]
        %v953 = vld [vmem:[#allocation4] sm:$0xff]
        %v954 = vld [vmem:[#allocation4 + $0x10] sm:$0xff]
        %v955 = vld [vmem:[#allocation2] sm:$0xff]
        %v956 = vld [vmem:[#allocation2 + $0x8] sm:$0xff]
        %v957 = vld [vmem:[#allocation2 + $0x10] sm:$0xff]
        %v958 = vld [vmem:[#allocation2 + $0x18] sm:$0xff]
        %v959 = vld [vmem:[#allocation2 + $0x20] sm:$0xff]
        %v960 = vld [vmem:[#allocation2 + $0x28] sm:$0xff]
        %v961 = vld [vmem:[#allocation2 + $0x30] sm:$0xff]
        %v962 = vld [vmem:[#allocation2 + $0x38] sm:$0xff]
        %v963 = vld [vmem:[#allocation2 + $0x40] sm:$0xff]
        %v964 = vld [vmem:[#allocation2 + $0x48] sm:$0xff]
        %v965 = vld [vmem:[#allocation2 + $0x50] sm:$0xff]
        %v966 = vld [vmem:[#allocation2 + $0x58] sm:$0xff]
        %v967 = vld [vmem:[#allocation2 + $0x60] sm:$0xff]
        %v968 = vld [vmem:[#allocation2 + $0x68] sm:$0xff]
        %v969 = vld [vmem:[#allocation2 + $0x70] sm:$0xff]
        %v970 = vld [vmem:[#allocation2 + $0x78] sm:$0xff]
        %v971 = vld [vmem:[#allocation2 + $0x80] sm:$0xff]
        %v972 = vld [vmem:[#allocation2 + $0x88] sm:$0xff]
        %v973 = vld [vmem:[#allocation2 + $0x90] sm:$0xff]
        %v974 = vld [vmem:[#allocation2 + $0x98] sm:$0xff]
        %v975 = vld [vmem:[#allocation2 + $0xa0] sm:$0xff]
        %v976 = vld [vmem:[#allocation2 + $0xa8] sm:$0xff]
        %v977 = vld [vmem:[#allocation2 + $0xb0] sm:$0xff]
        %v978 = vld [vmem:[#allocation2 + $0xb8] sm:$0xff]
        %v979 = vld [vmem:[#allocation2 + $0xc0] sm:$0xff]
        %v980 = vld [vmem:[#allocation2 + $0xc8] sm:$0xff]
        %v981 = vld [vmem:[#allocation2 + $0xd0] sm:$0xff]
        %v982 = vld [vmem:[#allocation2 + $0xd8] sm:$0xff]
        %v983 = vld [vmem:[#allocation2 + $0xe0] sm:$0xff]
        %v984 = vld [vmem:[#allocation2 + $0xe8] sm:$0xff]
        %v985 = vld [vmem:[#allocation2 + $0xf0] sm:$0xff]
        %v986 = vld [vmem:[#allocation2 + $0xf8] sm:$0xff]
        %v987 = vld [vmem:[#allocation2 + $0x100] sm:$0xff]
        %v988 = vld [vmem:[#allocation2 + $0x108] sm:$0xff]
        %v989 = vld [vmem:[#allocation2 + $0x110] sm:$0xff]
        %v990 = vld [vmem:[#allocation2 + $0x118] sm:$0xff]
        %v991 = vld [vmem:[#allocation2 + $0x120] sm:$0xff]
        %v992 = vld [vmem:[#allocation2 + $0x128] sm:$0xff]
        %v993 = vld [vmem:[#allocation2 + $0x130] sm:$0xff]
        %v994 = vld [vmem:[#allocation2 + $0x138] sm:$0xff]
        %v995 = vld [vmem:[#allocation2 + $0x140] sm:$0xff]
        %v996 = vld [vmem:[#allocation2 + $0x148] sm:$0xff]
        %v997 = vld [vmem:[#allocation2 + $0x150] sm:$0xff]
        %v998 = vld [vmem:[#allocation2 + $0x158] sm:$0xff]
        %v999 = vld [vmem:[#allocation2 + $0x160] sm:$0xff]
        %v1000 = vld [vmem:[#allocation2 + $0x168] sm:$0xff]
        %v1001 = vld [vmem:[#allocation2 + $0x170] sm:$0xff]
        %v1002 = vld [vmem:[#allocation2 + $0x178] sm:$0xff]
        %v1003 = vld [vmem:[#allocation2 + $0x180] sm:$0xff]
        %v1004 = vld [vmem:[#allocation2 + $0x188] sm:$0xff]
        %v1005 = vld [vmem:[#allocation2 + $0x190] sm:$0xff]
        %v1006 = vld [vmem:[#allocation2 + $0x198] sm:$0xff]
        %v1007 = vld [vmem:[#allocation2 + $0x1a0] sm:$0xff]
        %v1008 = vld [vmem:[#allocation2 + $0x1a8] sm:$0xff]
        %v1009 = vld [vmem:[#allocation2 + $0x1b0] sm:$0xff]
        %v1010 = vld [vmem:[#allocation2 + $0x1b8] sm:$0xff]
        %v1011 = vld [vmem:[#allocation2 + $0x1c0] sm:$0xff]
        %v1012 = vld [vmem:[#allocation2 + $0x1c8] sm:$0xff]
        %v1013 = vld [vmem:[#allocation2 + $0x1d0] sm:$0xff]
        %v1014 = vld [vmem:[#allocation2 + $0x1d8] sm:$0xff]
        %v1015 = vld [vmem:[#allocation2 + $0x1e0] sm:$0xff]
        %v1016 = vld [vmem:[#allocation2 + $0x1e8] sm:$0xff]
        %v1017 = vld [vmem:[#allocation2 + $0x1f0] sm:$0xff]
        %v1018 = vld [vmem:[#allocation2 + $0x1f8] sm:$0xff]
        %1019 = vmatprep.subr.mxu0 %v956
        %1020 = vmatpush1.msra.mxu0 %v955
        %1021 = vmatprep.subr.mxu0 %v960
        %1022 = vmatpush1.msra.mxu0 %v959
        %1023 = vmatprep.subr.mxu0 %v964
        %1024 = vmatpush1.msra.mxu0 %v963
        %1025 = vmatprep.subr.mxu0 %v968
        %1026 = vmatpush1.msra.mxu0 %v967
        %1027 = vmatprep.subr.mxu0 %v972
        %1028 = vmatpush1.msra.mxu0 %v971
        %1029 = vmatprep.subr.mxu0 %v976
        %1030 = vmatpush1.msra.mxu0 %v975
        %1031 = vmatprep.subr.mxu0 %v980
        %1032 = vmatpush1.msra.mxu0 %v979
        %1033 = vmatprep.subr.mxu0 %v984
        %1034 = vmatpush1.msra.mxu0 %v983
        %1035 = vmatprep.subr.mxu0 %v988
        %1036 = vmatpush1.msra.mxu0 %v987
        %1037 = vmatprep.subr.mxu0 %v992
        %1038 = vmatpush1.msra.mxu0 %v991
        %1039 = vmatprep.subr.mxu0 %v996
        %1040 = vmatpush1.msra.mxu0 %v995
        %1041 = vmatprep.subr.mxu0 %v1000
        %1042 = vmatpush1.msra.mxu0 %v999
        %1043 = vmatprep.subr.mxu0 %v1004
        %1044 = vmatpush1.msra.mxu0 %v1003
        %1045 = vmatprep.subr.mxu0 %v1008
        %1046 = vmatpush1.msra.mxu0 %v1007
        %1047 = vmatprep.subr.mxu0 %v1012
        %1048 = vmatpush1.msra.mxu0 %v1011
        %1049 = vmatprep.subr.mxu0 %v1016
        %1050 = vmatpush1.msra.mxu0 %v1015
        %1051 = vmatprep.subr.mxu0 0.0
        %1052 = vmatpush1.msra.mxu0 0.0
        %1053 = vmatprep.subr.mxu0 0.0
        %1054 = vmatpush1.msra.mxu0 0.0
        %1055 = vmatprep.subr.mxu0 0.0
        %1056 = vmatpush1.msra.mxu0 0.0
        %1057 = vmatprep.subr.mxu0 0.0
        %1058 = vmatpush1.msra.mxu0 0.0
        %1059 = vmatprep.subr.mxu0 0.0
        %1060 = vmatpush1.msra.mxu0 0.0
        %1061 = vmatprep.subr.mxu0 0.0
        %1062 = vmatpush1.msra.mxu0 0.0
        %1063 = vmatprep.subr.mxu0 0.0
        %1064 = vmatpush1.msra.mxu0 0.0
        %1065 = vmatprep.subr.mxu0 0.0
        %1066 = vmatpush1.msra.mxu0 0.0
        %1067 = vmatprep.subr.mxu0 0.0
        %1068 = vmatpush1.msra.mxu0 0.0
        %1069 = vmatprep.subr.mxu0 0.0
        %1070 = vmatpush1.msra.mxu0 0.0
        %1071 = vmatprep.subr.mxu0 0.0
        %1072 = vmatpush1.msra.mxu0 0.0
        %1073 = vmatprep.subr.mxu0 0.0
        %1074 = vmatpush1.msra.mxu0 0.0
        %1075 = vmatprep.subr.mxu0 0.0
        %1076 = vmatpush1.msra.mxu0 0.0
        %1077 = vmatprep.subr.mxu0 0.0
        %1078 = vmatpush1.msra.mxu0 0.0
        %1079 = vmatprep.subr.mxu0 0.0
        %1080 = vmatpush1.msra.mxu0 0.0
        %1081 = vmatprep.subr.mxu0 0.0
        %1082 = vmatpush1.msra.mxu0 0.0
        %1083 = vmatprep.mubr.f32.mxu0 0.0
        %1084 = vmatmul.mubr.f32.gmra.mrb[0].mxu0 %v953
        %v1085 = vpop.f32.mrb[0].mxu0
        %v1086 = vadd.f32 0.0, %v1085
        %v1087 = vpop.f32.mrb[0].mxu0
        %v1088 = vadd.f32 0.0, %v1087
        %1089 = vmatprep.mubr.f32.mxu0 0.0
        %1090 = vmatmul.mubr.f32.gmra.mrb[0].mxu0 %v954
        %v1091 = vpop.f32.mrb[0].mxu0
        %v1092 = vadd.f32 0.0, %v1091
        %v1093 = vpop.f32.mrb[0].mxu0
        %v1094 = vadd.f32 0.0, %v1093
        %1095 = vdwg.mxu0
        %1096 = vmatprep.subr.mxu0 %v958
        %1097 = vmatpush1.msra.mxu0 %v957
        %1098 = vmatprep.subr.mxu0 %v962
        %1099 = vmatpush1.msra.mxu0 %v961
        %1100 = vmatprep.subr.mxu0 %v966
        %1101 = vmatpush1.msra.mxu0 %v965
        %1102 = vmatprep.subr.mxu0 %v970
        %1103 = vmatpush1.msra.mxu0 %v969
        %1104 = vmatprep.subr.mxu0 %v974
        %1105 = vmatpush1.msra.mxu0 %v973
        %1106 = vmatprep.subr.mxu0 %v978
        %1107 = vmatpush1.msra.mxu0 %v977
        %1108 = vmatprep.subr.mxu0 %v982
        %1109 = vmatpush1.msra.mxu0 %v981
        %1110 = vmatprep.subr.mxu0 %v986
        %1111 = vmatpush1.msra.mxu0 %v985
        %1112 = vmatprep.subr.mxu0 %v990
        %1113 = vmatpush1.msra.mxu0 %v989
        %1114 = vmatprep.subr.mxu0 %v994
        %1115 = vmatpush1.msra.mxu0 %v993
        %1116 = vmatprep.subr.mxu0 %v998
        %1117 = vmatpush1.msra.mxu0 %v997
        %1118 = vmatprep.subr.mxu0 %v1002
        %1119 = vmatpush1.msra.mxu0 %v1001
        %1120 = vmatprep.subr.mxu0 %v1006
        %1121 = vmatpush1.msra.mxu0 %v1005
        %1122 = vmatprep.subr.mxu0 %v1010
        %1123 = vmatpush1.msra.mxu0 %v1009
        %1124 = vmatprep.subr.mxu0 %v1014
        %1125 = vmatpush1.msra.mxu0 %v1013
        %1126 = vmatprep.subr.mxu0 %v1018
        %1127 = vmatpush1.msra.mxu0 %v1017
        %1128 = vmatprep.subr.mxu0 0.0
        %1129 = vmatpush1.msra.mxu0 0.0
        %1130 = vmatprep.subr.mxu0 0.0
        %1131 = vmatpush1.msra.mxu0 0.0
        %1132 = vmatprep.subr.mxu0 0.0
        %1133 = vmatpush1.msra.mxu0 0.0
        %1134 = vmatprep.subr.mxu0 0.0
        %1135 = vmatpush1.msra.mxu0 0.0
        %1136 = vmatprep.subr.mxu0 0.0
        %1137 = vmatpush1.msra.mxu0 0.0
        %1138 = vmatprep.subr.mxu0 0.0
        %1139 = vmatpush1.msra.mxu0 0.0
        %1140 = vmatprep.subr.mxu0 0.0
        %1141 = vmatpush1.msra.mxu0 0.0
        %1142 = vmatprep.subr.mxu0 0.0
        %1143 = vmatpush1.msra.mxu0 0.0
        %1144 = vmatprep.subr.mxu0 0.0
        %1145 = vmatpush1.msra.mxu0 0.0
        %1146 = vmatprep.subr.mxu0 0.0
        %1147 = vmatpush1.msra.mxu0 0.0
        %1148 = vmatprep.subr.mxu0 0.0
        %1149 = vmatpush1.msra.mxu0 0.0
        %1150 = vmatprep.subr.mxu0 0.0
        %1151 = vmatpush1.msra.mxu0 0.0
        %1152 = vmatprep.subr.mxu0 0.0
        %1153 = vmatpush1.msra.mxu0 0.0
        %1154 = vmatprep.subr.mxu0 0.0
        %1155 = vmatpush1.msra.mxu0 0.0
        %1156 = vmatprep.subr.mxu0 0.0
        %1157 = vmatpush1.msra.mxu0 0.0
        %1158 = vmatprep.subr.mxu0 0.0
        %1159 = vmatpush1.msra.mxu0 0.0
        %1160 = vmatprep.mubr.f32.mxu0 0.0
        %1161 = vmatmul.mubr.f32.gmra.mrb[0].mxu0 %v953
        %v1162 = vpop.f32.mrb[0].mxu0
        %v1163 = vadd.f32 0.0, %v1162
        %v1164 = vpop.f32.mrb[0].mxu0
        %v1165 = vadd.f32 0.0, %v1164
        %1166 = vmatprep.mubr.f32.mxu0 0.0
        %1167 = vmatmul.mubr.f32.gmra.mrb[0].mxu0 %v954
        %v1168 = vpop.f32.mrb[0].mxu0
        %v1169 = vadd.f32 0.0, %v1168
        %v1170 = vpop.f32.mrb[0].mxu0
        %v1171 = vadd.f32 0.0, %v1170
        %1172 = vdwg.mxu0
        %v1173 = vadd.f32 %v945, %v1086
        %v1174 = vadd.f32 %v946, %v1088
        %v1175 = vadd.f32 %v947, %v1163
        %v1176 = vadd.f32 %v948, %v1165
        %v1177 = vadd.f32 %v949, %v1092
        %v1178 = vadd.f32 %v950, %v1094
        %v1179 = vadd.f32 %v951, %v1169
        %v1180 = vadd.f32 %v952, %v1171
        %v1181 = vld [vmem:[#allocation5] sm:$0xff]
        %v1182 = vld [vmem:[#allocation5 + $0x8] sm:$0xff]
        %v1183 = vxor.u32 %v1173, 2147483648
        %v1184 = vxor.u32 %v1177, 2147483648
        %v1185 = vmul.f32 %v1183, 1.442695
        %v1186 = vpow.pop %v1185
        %v1187 = vmul.f32 %v1184, 1.442695
        %v1188 = vpow.pop %v1187
        %v1189 = vadd.f32 %v1186, 1.0
        %v1190 = vadd.f32 %v1188, 1.0
        %v1191 = vrcp.pop %v1189
        %v1192 = vmul.f32 1.0, %v1191
        %v1193 = vrcp.pop %v1190
        %v1194 = vmul.f32 1.0, %v1193
        %v1195 = vxor.u32 %v1174, 2147483648
        %v1196 = vxor.u32 %v1178, 2147483648
        %v1197 = vmul.f32 %v1195, 1.442695
        %v1198 = vpow.pop %v1197
        %v1199 = vmul.f32 %v1196, 1.442695
        %v1200 = vpow.pop %v1199
        %v1201 = vadd.f32 %v1198, 1.0
        %v1202 = vadd.f32 %v1200, 1.0
        %v1203 = vrcp.pop %v1201
        %v1204 = vmul.f32 1.0, %v1203
        %v1205 = vrcp.pop %v1202
        %v1206 = vmul.f32 1.0, %v1205
        %v1207 = vtanh.pop %v1175
        %v1208 = vtanh.pop %v1179
        %v1209 = vxor.u32 %v1176, 2147483648
        %v1210 = vxor.u32 %v1180, 2147483648
        %v1211 = vmul.f32 %v1209, 1.442695
        %v1212 = vpow.pop %v1211
        %v1213 = vmul.f32 %v1210, 1.442695
        %v1214 = vpow.pop %v1213
        %v1215 = vadd.f32 %v1212, 1.0
        %v1216 = vadd.f32 %v1214, 1.0
        %v1217 = vrcp.pop %v1215
        %v1218 = vmul.f32 1.0, %v1217
        %v1219 = vrcp.pop %v1216
        %v1220 = vmul.f32 1.0, %v1219
        %v1221 = vmul.f32 %v1204, %v1181
        %v1222 = vmul.f32 %v1206, %v1182
        %v1223 = vmul.f32 %v1192, %v1207
        %v1224 = vmul.f32 %v1194, %v1208
        %v1225 = vadd.f32 %v1221, %v1223
        %v1226 = vadd.f32 %v1222, %v1224
        %v1227 = vtanh.pop %v1225
        %v1228 = vtanh.pop %v1226
        %v1229 = vmul.f32 %v1218, %v1227
        %v1230 = vmul.f32 %v1220, %v1228
        %1231 = vst [vmem:[#allocation5] sm:$0xff] %v1225
        %1232 = vst [vmem:[#allocation5 + $0x8] sm:$0xff] %v1226
        %1233 = vst [vmem:[#allocation4] sm:$0xff] %v1229
        %1234 = vst [vmem:[#allocation4 + $0x10] sm:$0xff] %v1230
        %s1235 = scalar_lea.vmem %s216, 32 [#allocation9]
        %1236 = vst [vmem:[%s1235] sm:$0xff] %v1229
        %1237 = vst [vmem:[%s1235 + $0x8] sm:$0xff] %v1230
        %s1238 = scalar_lea.vmem %s223, 32 [#allocation10]
        %1239 = vst [vmem:[%s1238] sm:$0xff] %v1225
        %1240 = vst [vmem:[%s1238 + $0x8] sm:$0xff] %v1226
        %v1241 = vld [vmem:[#allocation4] sm:$0xff]
        %v1242 = vld [vmem:[#allocation4 + $0x8] sm:$0xff]
        %v1243 = vld [vmem:[#allocation4 + $0x10] sm:$0xff]
        %v1244 = vld [vmem:[#allocation4 + $0x18] sm:$0xff]
        %v1245 = vld [vmem:[#allocation3] sm:$0xff]
        %v1246 = vld [vmem:[#allocation3 + $0x8] sm:$0xff]
        %v1247 = vld [vmem:[#allocation3 + $0x10] sm:$0xff]
        %v1248 = vld [vmem:[#allocation3 + $0x18] sm:$0xff]
        %v1249 = vld [vmem:[#allocation3 + $0x20] sm:$0xff]
        %v1250 = vld [vmem:[#allocation3 + $0x28] sm:$0xff]
        %v1251 = vld [vmem:[#allocation3 + $0x30] sm:$0xff]
        %v1252 = vld [vmem:[#allocation3 + $0x38] sm:$0xff]
        %v1253 = vld [vmem:[#allocation3 + $0x40] sm:$0xff]
        %v1254 = vld [vmem:[#allocation3 + $0x48] sm:$0xff]
        %v1255 = vld [vmem:[#allocation3 + $0x50] sm:$0xff]
        %v1256 = vld [vmem:[#allocation3 + $0x58] sm:$0xff]
        %v1257 = vld [vmem:[#allocation3 + $0x60] sm:$0xff]
        %v1258 = vld [vmem:[#allocation3 + $0x68] sm:$0xff]
        %v1259 = vld [vmem:[#allocation3 + $0x70] sm:$0xff]
        %v1260 = vld [vmem:[#allocation3 + $0x78] sm:$0xff]
        %v1261 = vld [vmem:[#allocation3 + $0x80] sm:$0xff]
        %v1262 = vld [vmem:[#allocation3 + $0x88] sm:$0xff]
        %v1263 = vld [vmem:[#allocation3 + $0x90] sm:$0xff]
        %v1264 = vld [vmem:[#allocation3 + $0x98] sm:$0xff]
        %v1265 = vld [vmem:[#allocation3 + $0xa0] sm:$0xff]
        %v1266 = vld [vmem:[#allocation3 + $0xa8] sm:$0xff]
        %v1267 = vld [vmem:[#allocation3 + $0xb0] sm:$0xff]
        %v1268 = vld [vmem:[#allocation3 + $0xb8] sm:$0xff]
        %v1269 = vld [vmem:[#allocation3 + $0xc0] sm:$0xff]
        %v1270 = vld [vmem:[#allocation3 + $0xc8] sm:$0xff]
        %v1271 = vld [vmem:[#allocation3 + $0xd0] sm:$0xff]
        %v1272 = vld [vmem:[#allocation3 + $0xd8] sm:$0xff]
        %v1273 = vld [vmem:[#allocation3 + $0xe0] sm:$0xff]
        %v1274 = vld [vmem:[#allocation3 + $0xe8] sm:$0xff]
        %v1275 = vld [vmem:[#allocation3 + $0xf0] sm:$0xff]
        %v1276 = vld [vmem:[#allocation3 + $0xf8] sm:$0xff]
        %v1277 = vld [vmem:[#allocation3 + $0x100] sm:$0xff]
        %v1278 = vld [vmem:[#allocation3 + $0x108] sm:$0xff]
        %v1279 = vld [vmem:[#allocation3 + $0x110] sm:$0xff]
        %v1280 = vld [vmem:[#allocation3 + $0x118] sm:$0xff]
        %v1281 = vld [vmem:[#allocation3 + $0x120] sm:$0xff]
        %v1282 = vld [vmem:[#allocation3 + $0x128] sm:$0xff]
        %v1283 = vld [vmem:[#allocation3 + $0x130] sm:$0xff]
        %v1284 = vld [vmem:[#allocation3 + $0x138] sm:$0xff]
        %v1285 = vld [vmem:[#allocation3 + $0x140] sm:$0xff]
        %v1286 = vld [vmem:[#allocation3 + $0x148] sm:$0xff]
        %v1287 = vld [vmem:[#allocation3 + $0x150] sm:$0xff]
        %v1288 = vld [vmem:[#allocation3 + $0x158] sm:$0xff]
        %v1289 = vld [vmem:[#allocation3 + $0x160] sm:$0xff]
        %v1290 = vld [vmem:[#allocation3 + $0x168] sm:$0xff]
        %v1291 = vld [vmem:[#allocation3 + $0x170] sm:$0xff]
        %v1292 = vld [vmem:[#allocation3 + $0x178] sm:$0xff]
        %v1293 = vld [vmem:[#allocation3 + $0x180] sm:$0xff]
        %v1294 = vld [vmem:[#allocation3 + $0x188] sm:$0xff]
        %v1295 = vld [vmem:[#allocation3 + $0x190] sm:$0xff]
        %v1296 = vld [vmem:[#allocation3 + $0x198] sm:$0xff]
        %v1297 = vld [vmem:[#allocation3 + $0x1a0] sm:$0xff]
        %v1298 = vld [vmem:[#allocation3 + $0x1a8] sm:$0xff]
        %v1299 = vld [vmem:[#allocation3 + $0x1b0] sm:$0xff]
        %v1300 = vld [vmem:[#allocation3 + $0x1b8] sm:$0xff]
        %v1301 = vld [vmem:[#allocation3 + $0x1c0] sm:$0xff]
        %v1302 = vld [vmem:[#allocation3 + $0x1c8] sm:$0xff]
        %v1303 = vld [vmem:[#allocation3 + $0x1d0] sm:$0xff]
        %v1304 = vld [vmem:[#allocation3 + $0x1d8] sm:$0xff]
        %v1305 = vld [vmem:[#allocation3 + $0x1e0] sm:$0xff]
        %v1306 = vld [vmem:[#allocation3 + $0x1e8] sm:$0xff]
        %v1307 = vld [vmem:[#allocation3 + $0x1f0] sm:$0xff]
        %v1308 = vld [vmem:[#allocation3 + $0x1f8] sm:$0xff]
        %v1309 = vld [vmem:[#allocation3 + $0x200] sm:$0xff]
        %v1310 = vld [vmem:[#allocation3 + $0x208] sm:$0xff]
        %v1311 = vld [vmem:[#allocation3 + $0x210] sm:$0xff]
        %v1312 = vld [vmem:[#allocation3 + $0x218] sm:$0xff]
        %v1313 = vld [vmem:[#allocation3 + $0x220] sm:$0xff]
        %v1314 = vld [vmem:[#allocation3 + $0x228] sm:$0xff]
        %v1315 = vld [vmem:[#allocation3 + $0x230] sm:$0xff]
        %v1316 = vld [vmem:[#allocation3 + $0x238] sm:$0xff]
        %v1317 = vld [vmem:[#allocation3 + $0x240] sm:$0xff]
        %v1318 = vld [vmem:[#allocation3 + $0x248] sm:$0xff]
        %v1319 = vld [vmem:[#allocation3 + $0x250] sm:$0xff]
        %v1320 = vld [vmem:[#allocation3 + $0x258] sm:$0xff]
        %v1321 = vld [vmem:[#allocation3 + $0x260] sm:$0xff]
        %v1322 = vld [vmem:[#allocation3 + $0x268] sm:$0xff]
        %v1323 = vld [vmem:[#allocation3 + $0x270] sm:$0xff]
        %v1324 = vld [vmem:[#allocation3 + $0x278] sm:$0xff]
        %v1325 = vld [vmem:[#allocation3 + $0x280] sm:$0xff]
        %v1326 = vld [vmem:[#allocation3 + $0x288] sm:$0xff]
        %v1327 = vld [vmem:[#allocation3 + $0x290] sm:$0xff]
        %v1328 = vld [vmem:[#allocation3 + $0x298] sm:$0xff]
        %v1329 = vld [vmem:[#allocation3 + $0x2a0] sm:$0xff]
        %v1330 = vld [vmem:[#allocation3 + $0x2a8] sm:$0xff]
        %v1331 = vld [vmem:[#allocation3 + $0x2b0] sm:$0xff]
        %v1332 = vld [vmem:[#allocation3 + $0x2b8] sm:$0xff]
        %v1333 = vld [vmem:[#allocation3 + $0x2c0] sm:$0xff]
        %v1334 = vld [vmem:[#allocation3 + $0x2c8] sm:$0xff]
        %v1335 = vld [vmem:[#allocation3 + $0x2d0] sm:$0xff]
        %v1336 = vld [vmem:[#allocation3 + $0x2d8] sm:$0xff]
        %v1337 = vld [vmem:[#allocation3 + $0x2e0] sm:$0xff]
        %v1338 = vld [vmem:[#allocation3 + $0x2e8] sm:$0xff]
        %v1339 = vld [vmem:[#allocation3 + $0x2f0] sm:$0xff]
        %v1340 = vld [vmem:[#allocation3 + $0x2f8] sm:$0xff]
        %v1341 = vld [vmem:[#allocation3 + $0x300] sm:$0xff]
        %v1342 = vld [vmem:[#allocation3 + $0x308] sm:$0xff]
        %v1343 = vld [vmem:[#allocation3 + $0x310] sm:$0xff]
        %v1344 = vld [vmem:[#allocation3 + $0x318] sm:$0xff]
        %v1345 = vld [vmem:[#allocation3 + $0x320] sm:$0xff]
        %v1346 = vld [vmem:[#allocation3 + $0x328] sm:$0xff]
        %v1347 = vld [vmem:[#allocation3 + $0x330] sm:$0xff]
        %v1348 = vld [vmem:[#allocation3 + $0x338] sm:$0xff]
        %v1349 = vld [vmem:[#allocation3 + $0x340] sm:$0xff]
        %v1350 = vld [vmem:[#allocation3 + $0x348] sm:$0xff]
        %v1351 = vld [vmem:[#allocation3 + $0x350] sm:$0xff]
        %v1352 = vld [vmem:[#allocation3 + $0x358] sm:$0xff]
        %v1353 = vld [vmem:[#allocation3 + $0x360] sm:$0xff]
        %v1354 = vld [vmem:[#allocation3 + $0x368] sm:$0xff]
        %v1355 = vld [vmem:[#allocation3 + $0x370] sm:$0xff]
        %v1356 = vld [vmem:[#allocation3 + $0x378] sm:$0xff]
        %v1357 = vld [vmem:[#allocation3 + $0x380] sm:$0xff]
        %v1358 = vld [vmem:[#allocation3 + $0x388] sm:$0xff]
        %v1359 = vld [vmem:[#allocation3 + $0x390] sm:$0xff]
        %v1360 = vld [vmem:[#allocation3 + $0x398] sm:$0xff]
        %v1361 = vld [vmem:[#allocation3 + $0x3a0] sm:$0xff]
        %v1362 = vld [vmem:[#allocation3 + $0x3a8] sm:$0xff]
        %v1363 = vld [vmem:[#allocation3 + $0x3b0] sm:$0xff]
        %v1364 = vld [vmem:[#allocation3 + $0x3b8] sm:$0xff]
        %v1365 = vld [vmem:[#allocation3 + $0x3c0] sm:$0xff]
        %v1366 = vld [vmem:[#allocation3 + $0x3c8] sm:$0xff]
        %v1367 = vld [vmem:[#allocation3 + $0x3d0] sm:$0xff]
        %v1368 = vld [vmem:[#allocation3 + $0x3d8] sm:$0xff]
        %v1369 = vld [vmem:[#allocation3 + $0x3e0] sm:$0xff]
        %v1370 = vld [vmem:[#allocation3 + $0x3e8] sm:$0xff]
        %v1371 = vld [vmem:[#allocation3 + $0x3f0] sm:$0xff]
        %v1372 = vld [vmem:[#allocation3 + $0x3f8] sm:$0xff]
        %1373 = vmatprep.subr.mxu0 %v1246
        %1374 = vmatpush1.msra.mxu0 %v1245
        %1375 = vmatprep.subr.mxu0 %v1250
        %1376 = vmatpush1.msra.mxu0 %v1249
        %1377 = vmatprep.subr.mxu0 %v1254
        %1378 = vmatpush1.msra.mxu0 %v1253
        %1379 = vmatprep.subr.mxu0 %v1258
        %1380 = vmatpush1.msra.mxu0 %v1257
        %1381 = vmatprep.subr.mxu0 %v1262
        %1382 = vmatpush1.msra.mxu0 %v1261
        %1383 = vmatprep.subr.mxu0 %v1266
        %1384 = vmatpush1.msra.mxu0 %v1265
        %1385 = vmatprep.subr.mxu0 %v1270
        %1386 = vmatpush1.msra.mxu0 %v1269
        %1387 = vmatprep.subr.mxu0 %v1274
        %1388 = vmatpush1.msra.mxu0 %v1273
        %1389 = vmatprep.subr.mxu0 %v1278
        %1390 = vmatpush1.msra.mxu0 %v1277
        %1391 = vmatprep.subr.mxu0 %v1282
        %1392 = vmatpush1.msra.mxu0 %v1281
        %1393 = vmatprep.subr.mxu0 %v1286
        %1394 = vmatpush1.msra.mxu0 %v1285
        %1395 = vmatprep.subr.mxu0 %v1290
        %1396 = vmatpush1.msra.mxu0 %v1289
        %1397 = vmatprep.subr.mxu0 %v1294
        %1398 = vmatpush1.msra.mxu0 %v1293
        %1399 = vmatprep.subr.mxu0 %v1298
        %1400 = vmatpush1.msra.mxu0 %v1297
        %1401 = vmatprep.subr.mxu0 %v1302
        %1402 = vmatpush1.msra.mxu0 %v1301
        %1403 = vmatprep.subr.mxu0 %v1306
        %1404 = vmatpush1.msra.mxu0 %v1305
        %1405 = vmatprep.subr.mxu0 %v1310
        %1406 = vmatpush1.msra.mxu0 %v1309
        %1407 = vmatprep.subr.mxu0 %v1314
        %1408 = vmatpush1.msra.mxu0 %v1313
        %1409 = vmatprep.subr.mxu0 %v1318
        %1410 = vmatpush1.msra.mxu0 %v1317
        %1411 = vmatprep.subr.mxu0 %v1322
        %1412 = vmatpush1.msra.mxu0 %v1321
        %1413 = vmatprep.subr.mxu0 %v1326
        %1414 = vmatpush1.msra.mxu0 %v1325
        %1415 = vmatprep.subr.mxu0 %v1330
        %1416 = vmatpush1.msra.mxu0 %v1329
        %1417 = vmatprep.subr.mxu0 %v1334
        %1418 = vmatpush1.msra.mxu0 %v1333
        %1419 = vmatprep.subr.mxu0 %v1338
        %1420 = vmatpush1.msra.mxu0 %v1337
        %1421 = vmatprep.subr.mxu0 %v1342
        %1422 = vmatpush1.msra.mxu0 %v1341
        %1423 = vmatprep.subr.mxu0 %v1346
        %1424 = vmatpush1.msra.mxu0 %v1345
        %1425 = vmatprep.subr.mxu0 %v1350
        %1426 = vmatpush1.msra.mxu0 %v1349
        %1427 = vmatprep.subr.mxu0 %v1354
        %1428 = vmatpush1.msra.mxu0 %v1353
        %1429 = vmatprep.subr.mxu0 %v1358
        %1430 = vmatpush1.msra.mxu0 %v1357
        %1431 = vmatprep.subr.mxu0 %v1362
        %1432 = vmatpush1.msra.mxu0 %v1361
        %1433 = vmatprep.subr.mxu0 %v1366
        %1434 = vmatpush1.msra.mxu0 %v1365
        %1435 = vmatprep.subr.mxu0 %v1370
        %1436 = vmatpush1.msra.mxu0 %v1369
        %1437 = vmatprep.mubr.f32.mxu0 %v1242
        %1438 = vmatmul.mubr.f32.gmra.mrb[0].mxu0 %v1241
        %v1439 = vpop.f32.mrb[0].mxu0
        %v1440 = vadd.f32 0.0, %v1439
        %v1441 = vpop.f32.mrb[0].mxu0
        %v1442 = vadd.f32 0.0, %v1441
        %1443 = vmatprep.mubr.f32.mxu0 %v1244
        %1444 = vmatmul.mubr.f32.gmra.mrb[0].mxu0 %v1243
        %v1445 = vpop.f32.mrb[0].mxu0
        %v1446 = vadd.f32 0.0, %v1445
        %v1447 = vpop.f32.mrb[0].mxu0
        %v1448 = vadd.f32 0.0, %v1447
        %1449 = vdwg.mxu0
        %1450 = vmatprep.subr.mxu0 %v1248
        %1451 = vmatpush1.msra.mxu0 %v1247
        %1452 = vmatprep.subr.mxu0 %v1252
        %1453 = vmatpush1.msra.mxu0 %v1251
        %1454 = vmatprep.subr.mxu0 %v1256
        %1455 = vmatpush1.msra.mxu0 %v1255
        %1456 = vmatprep.subr.mxu0 %v1260
        %1457 = vmatpush1.msra.mxu0 %v1259
        %1458 = vmatprep.subr.mxu0 %v1264
        %1459 = vmatpush1.msra.mxu0 %v1263
        %1460 = vmatprep.subr.mxu0 %v1268
        %1461 = vmatpush1.msra.mxu0 %v1267
        %1462 = vmatprep.subr.mxu0 %v1272
        %1463 = vmatpush1.msra.mxu0 %v1271
        %1464 = vmatprep.subr.mxu0 %v1276
        %1465 = vmatpush1.msra.mxu0 %v1275
        %1466 = vmatprep.subr.mxu0 %v1280
        %1467 = vmatpush1.msra.mxu0 %v1279
        %1468 = vmatprep.subr.mxu0 %v1284
        %1469 = vmatpush1.msra.mxu0 %v1283
        %1470 = vmatprep.subr.mxu0 %v1288
        %1471 = vmatpush1.msra.mxu0 %v1287
        %1472 = vmatprep.subr.mxu0 %v1292
        %1473 = vmatpush1.msra.mxu0 %v1291
        %1474 = vmatprep.subr.mxu0 %v1296
        %1475 = vmatpush1.msra.mxu0 %v1295
        %1476 = vmatprep.subr.mxu0 %v1300
        %1477 = vmatpush1.msra.mxu0 %v1299
        %1478 = vmatprep.subr.mxu0 %v1304
        %1479 = vmatpush1.msra.mxu0 %v1303
        %1480 = vmatprep.subr.mxu0 %v1308
        %1481 = vmatpush1.msra.mxu0 %v1307
        %1482 = vmatprep.subr.mxu0 %v1312
        %1483 = vmatpush1.msra.mxu0 %v1311
        %1484 = vmatprep.subr.mxu0 %v1316
        %1485 = vmatpush1.msra.mxu0 %v1315
        %1486 = vmatprep.subr.mxu0 %v1320
        %1487 = vmatpush1.msra.mxu0 %v1319
        %1488 = vmatprep.subr.mxu0 %v1324
        %1489 = vmatpush1.msra.mxu0 %v1323
        %1490 = vmatprep.subr.mxu0 %v1328
        %1491 = vmatpush1.msra.mxu0 %v1327
        %1492 = vmatprep.subr.mxu0 %v1332
        %1493 = vmatpush1.msra.mxu0 %v1331
        %1494 = vmatprep.subr.mxu0 %v1336
        %1495 = vmatpush1.msra.mxu0 %v1335
        %1496 = vmatprep.subr.mxu0 %v1340
        %1497 = vmatpush1.msra.mxu0 %v1339
        %1498 = vmatprep.subr.mxu0 %v1344
        %1499 = vmatpush1.msra.mxu0 %v1343
        %1500 = vmatprep.subr.mxu0 %v1348
        %1501 = vmatpush1.msra.mxu0 %v1347
        %1502 = vmatprep.subr.mxu0 %v1352
        %1503 = vmatpush1.msra.mxu0 %v1351
        %1504 = vmatprep.subr.mxu0 %v1356
        %1505 = vmatpush1.msra.mxu0 %v1355
        %1506 = vmatprep.subr.mxu0 %v1360
        %1507 = vmatpush1.msra.mxu0 %v1359
        %1508 = vmatprep.subr.mxu0 %v1364
        %1509 = vmatpush1.msra.mxu0 %v1363
        %1510 = vmatprep.subr.mxu0 %v1368
        %1511 = vmatpush1.msra.mxu0 %v1367
        %1512 = vmatprep.subr.mxu0 %v1372
        %1513 = vmatpush1.msra.mxu0 %v1371
        %1514 = vmatprep.mubr.f32.mxu0 %v1242
        %1515 = vmatmul.mubr.f32.gmra.mrb[0].mxu0 %v1241
        %v1516 = vpop.f32.mrb[0].mxu0
        %v1517 = vadd.f32 0.0, %v1516
        %v1518 = vpop.f32.mrb[0].mxu0
        %v1519 = vadd.f32 0.0, %v1518
        %1520 = vmatprep.mubr.f32.mxu0 %v1244
        %1521 = vmatmul.mubr.f32.gmra.mrb[0].mxu0 %v1243
        %v1522 = vpop.f32.mrb[0].mxu0
        %v1523 = vadd.f32 0.0, %v1522
        %v1524 = vpop.f32.mrb[0].mxu0
        %v1525 = vadd.f32 0.0, %v1524
        %1526 = vdwg.mxu0
        %v1527 = vadd.f32 %v278, %v1440
        %v1528 = vadd.f32 %v282, %v1442
        %v1529 = vadd.f32 %v286, %v1517
        %v1530 = vadd.f32 %v290, %v1519
        %v1531 = vadd.f32 %v278, %v1446
        %v1532 = vadd.f32 %v282, %v1448
        %v1533 = vadd.f32 %v286, %v1523
        %v1534 = vadd.f32 %v290, %v1525
        %v1535 = vld [vmem:[%s883] sm:$0xff]
        %v1536 = vld [vmem:[%s883 + $0x8] sm:$0xff]
        %v1537 = vxor.u32 %v1527, 2147483648
        %v1538 = vxor.u32 %v1531, 2147483648
        %v1539 = vmul.f32 %v1537, 1.442695
        %v1540 = vpow.pop %v1539
        %v1541 = vmul.f32 %v1538, 1.442695
        %v1542 = vpow.pop %v1541
        %v1543 = vadd.f32 %v1540, 1.0
        %v1544 = vadd.f32 %v1542, 1.0
        %v1545 = vrcp.pop %v1543
        %v1546 = vmul.f32 1.0, %v1545
        %v1547 = vrcp.pop %v1544
        %v1548 = vmul.f32 1.0, %v1547
        %v1549 = vxor.u32 %v1528, 2147483648
        %v1550 = vxor.u32 %v1532, 2147483648
        %v1551 = vmul.f32 %v1549, 1.442695
        %v1552 = vpow.pop %v1551
        %v1553 = vmul.f32 %v1550, 1.442695
        %v1554 = vpow.pop %v1553
        %v1555 = vadd.f32 %v1552, 1.0
        %v1556 = vadd.f32 %v1554, 1.0
        %v1557 = vrcp.pop %v1555
        %v1558 = vmul.f32 1.0, %v1557
        %v1559 = vrcp.pop %v1556
        %v1560 = vmul.f32 1.0, %v1559
        %v1561 = vtanh.pop %v1529
        %v1562 = vtanh.pop %v1533
        %v1563 = vxor.u32 %v1530, 2147483648
        %v1564 = vxor.u32 %v1534, 2147483648
        %v1565 = vmul.f32 %v1563, 1.442695
        %v1566 = vpow.pop %v1565
        %v1567 = vmul.f32 %v1564, 1.442695
        %v1568 = vpow.pop %v1567
        %v1569 = vadd.f32 %v1566, 1.0
        %v1570 = vadd.f32 %v1568, 1.0
        %v1571 = vrcp.pop %v1569
        %v1572 = vmul.f32 1.0, %v1571
        %v1573 = vrcp.pop %v1570
        %v1574 = vmul.f32 1.0, %v1573
        %v1575 = vmul.f32 %v1558, %v1535
        %v1576 = vmul.f32 %v1560, %v1536
        %v1577 = vmul.f32 %v1546, %v1561
        %v1578 = vmul.f32 %v1548, %v1562
        %v1579 = vadd.f32 %v1575, %v1577
        %v1580 = vadd.f32 %v1576, %v1578
        %v1581 = vtanh.pop %v1579
        %v1582 = vtanh.pop %v1580
        %v1583 = vmul.f32 %v1572, %v1581
        %v1584 = vmul.f32 %v1574, %v1582
        %1585 = vst [vmem:[%s883] sm:$0xff] %v1579
        %1586 = vst [vmem:[%s883 + $0x8] sm:$0xff] %v1580
        %1587 = vst [vmem:[#allocation4 + $0x8] sm:$0xff] %v1583
        %1588 = vst [vmem:[#allocation4 + $0x18] sm:$0xff] %v1584
        %s1589 = scalar_lea.vmem %s216, 48 [#allocation9]
        %1590 = vst [vmem:[%s1589] sm:$0xff] %v1583
        %1591 = vst [vmem:[%s1589 + $0x8] sm:$0xff] %v1584
        %s1592 = scalar_lea.vmem %s223, 48 [#allocation10]
        %1593 = vst [vmem:[%s1592] sm:$0xff] %v1579
        %1594 = vst [vmem:[%s1592 + $0x8] sm:$0xff] %v1580
        %s1595 = scalar_lea.vmem %s196, 128 [#allocation6]
        %v1596 = vld [vmem:[%s1595] sm:$0xff]
        %v1597 = vld [vmem:[%s1595 + $0x8] sm:$0xff]
        %v1598 = vld [vmem:[%s1595 + $0x10] sm:$0xff]
        %v1599 = vld [vmem:[%s1595 + $0x18] sm:$0xff]
        %v1600 = vld [vmem:[%s1595 + $0x20] sm:$0xff]
        %v1601 = vld [vmem:[%s1595 + $0x28] sm:$0xff]
        %v1602 = vld [vmem:[%s1595 + $0x30] sm:$0xff]
        %v1603 = vld [vmem:[%s1595 + $0x38] sm:$0xff]
        %v1604 = vld [vmem:[#allocation4] sm:$0xff]
        %v1605 = vld [vmem:[#allocation4 + $0x10] sm:$0xff]
        %v1606 = vld [vmem:[#allocation2] sm:$0xff]
        %v1607 = vld [vmem:[#allocation2 + $0x8] sm:$0xff]
        %v1608 = vld [vmem:[#allocation2 + $0x10] sm:$0xff]
        %v1609 = vld [vmem:[#allocation2 + $0x18] sm:$0xff]
        %v1610 = vld [vmem:[#allocation2 + $0x20] sm:$0xff]
        %v1611 = vld [vmem:[#allocation2 + $0x28] sm:$0xff]
        %v1612 = vld [vmem:[#allocation2 + $0x30] sm:$0xff]
        %v1613 = vld [vmem:[#allocation2 + $0x38] sm:$0xff]
        %v1614 = vld [vmem:[#allocation2 + $0x40] sm:$0xff]
        %v1615 = vld [vmem:[#allocation2 + $0x48] sm:$0xff]
        %v1616 = vld [vmem:[#allocation2 + $0x50] sm:$0xff]
        %v1617 = vld [vmem:[#allocation2 + $0x58] sm:$0xff]
        %v1618 = vld [vmem:[#allocation2 + $0x60] sm:$0xff]
        %v1619 = vld [vmem:[#allocation2 + $0x68] sm:$0xff]
        %v1620 = vld [vmem:[#allocation2 + $0x70] sm:$0xff]
        %v1621 = vld [vmem:[#allocation2 + $0x78] sm:$0xff]
        %v1622 = vld [vmem:[#allocation2 + $0x80] sm:$0xff]
        %v1623 = vld [vmem:[#allocation2 + $0x88] sm:$0xff]
        %v1624 = vld [vmem:[#allocation2 + $0x90] sm:$0xff]
        %v1625 = vld [vmem:[#allocation2 + $0x98] sm:$0xff]
        %v1626 = vld [vmem:[#allocation2 + $0xa0] sm:$0xff]
        %v1627 = vld [vmem:[#allocation2 + $0xa8] sm:$0xff]
        %v1628 = vld [vmem:[#allocation2 + $0xb0] sm:$0xff]
        %v1629 = vld [vmem:[#allocation2 + $0xb8] sm:$0xff]
        %v1630 = vld [vmem:[#allocation2 + $0xc0] sm:$0xff]
        %v1631 = vld [vmem:[#allocation2 + $0xc8] sm:$0xff]
        %v1632 = vld [vmem:[#allocation2 + $0xd0] sm:$0xff]
        %v1633 = vld [vmem:[#allocation2 + $0xd8] sm:$0xff]
        %v1634 = vld [vmem:[#allocation2 + $0xe0] sm:$0xff]
        %v1635 = vld [vmem:[#allocation2 + $0xe8] sm:$0xff]
        %v1636 = vld [vmem:[#allocation2 + $0xf0] sm:$0xff]
        %v1637 = vld [vmem:[#allocation2 + $0xf8] sm:$0xff]
        %v1638 = vld [vmem:[#allocation2 + $0x100] sm:$0xff]
        %v1639 = vld [vmem:[#allocation2 + $0x108] sm:$0xff]
        %v1640 = vld [vmem:[#allocation2 + $0x110] sm:$0xff]
        %v1641 = vld [vmem:[#allocation2 + $0x118] sm:$0xff]
        %v1642 = vld [vmem:[#allocation2 + $0x120] sm:$0xff]
        %v1643 = vld [vmem:[#allocation2 + $0x128] sm:$0xff]
        %v1644 = vld [vmem:[#allocation2 + $0x130] sm:$0xff]
        %v1645 = vld [vmem:[#allocation2 + $0x138] sm:$0xff]
        %v1646 = vld [vmem:[#allocation2 + $0x140] sm:$0xff]
        %v1647 = vld [vmem:[#allocation2 + $0x148] sm:$0xff]
        %v1648 = vld [vmem:[#allocation2 + $0x150] sm:$0xff]
        %v1649 = vld [vmem:[#allocation2 + $0x158] sm:$0xff]
        %v1650 = vld [vmem:[#allocation2 + $0x160] sm:$0xff]
        %v1651 = vld [vmem:[#allocation2 + $0x168] sm:$0xff]
        %v1652 = vld [vmem:[#allocation2 + $0x170] sm:$0xff]
        %v1653 = vld [vmem:[#allocation2 + $0x178] sm:$0xff]
        %v1654 = vld [vmem:[#allocation2 + $0x180] sm:$0xff]
        %v1655 = vld [vmem:[#allocation2 + $0x188] sm:$0xff]
        %v1656 = vld [vmem:[#allocation2 + $0x190] sm:$0xff]
        %v1657 = vld [vmem:[#allocation2 + $0x198] sm:$0xff]
        %v1658 = vld [vmem:[#allocation2 + $0x1a0] sm:$0xff]
        %v1659 = vld [vmem:[#allocation2 + $0x1a8] sm:$0xff]
        %v1660 = vld [vmem:[#allocation2 + $0x1b0] sm:$0xff]
        %v1661 = vld [vmem:[#allocation2 + $0x1b8] sm:$0xff]
        %v1662 = vld [vmem:[#allocation2 + $0x1c0] sm:$0xff]
        %v1663 = vld [vmem:[#allocation2 + $0x1c8] sm:$0xff]
        %v1664 = vld [vmem:[#allocation2 + $0x1d0] sm:$0xff]
        %v1665 = vld [vmem:[#allocation2 + $0x1d8] sm:$0xff]
        %v1666 = vld [vmem:[#allocation2 + $0x1e0] sm:$0xff]
        %v1667 = vld [vmem:[#allocation2 + $0x1e8] sm:$0xff]
        %v1668 = vld [vmem:[#allocation2 + $0x1f0] sm:$0xff]
        %v1669 = vld [vmem:[#allocation2 + $0x1f8] sm:$0xff]
        %1670 = vmatprep.subr.mxu0 %v1607
        %1671 = vmatpush1.msra.mxu0 %v1606
        %1672 = vmatprep.subr.mxu0 %v1611
        %1673 = vmatpush1.msra.mxu0 %v1610
        %1674 = vmatprep.subr.mxu0 %v1615
        %1675 = vmatpush1.msra.mxu0 %v1614
        %1676 = vmatprep.subr.mxu0 %v1619
        %1677 = vmatpush1.msra.mxu0 %v1618
        %1678 = vmatprep.subr.mxu0 %v1623
        %1679 = vmatpush1.msra.mxu0 %v1622
        %1680 = vmatprep.subr.mxu0 %v1627
        %1681 = vmatpush1.msra.mxu0 %v1626
        %1682 = vmatprep.subr.mxu0 %v1631
        %1683 = vmatpush1.msra.mxu0 %v1630
        %1684 = vmatprep.subr.mxu0 %v1635
        %1685 = vmatpush1.msra.mxu0 %v1634
        %1686 = vmatprep.subr.mxu0 %v1639
        %1687 = vmatpush1.msra.mxu0 %v1638
        %1688 = vmatprep.subr.mxu0 %v1643
        %1689 = vmatpush1.msra.mxu0 %v1642
        %1690 = vmatprep.subr.mxu0 %v1647
        %1691 = vmatpush1.msra.mxu0 %v1646
        %1692 = vmatprep.subr.mxu0 %v1651
        %1693 = vmatpush1.msra.mxu0 %v1650
        %1694 = vmatprep.subr.mxu0 %v1655
        %1695 = vmatpush1.msra.mxu0 %v1654
        %1696 = vmatprep.subr.mxu0 %v1659
        %1697 = vmatpush1.msra.mxu0 %v1658
        %1698 = vmatprep.subr.mxu0 %v1663
        %1699 = vmatpush1.msra.mxu0 %v1662
        %1700 = vmatprep.subr.mxu0 %v1667
        %1701 = vmatpush1.msra.mxu0 %v1666
        %1702 = vmatprep.subr.mxu0 0.0
        %1703 = vmatpush1.msra.mxu0 0.0
        %1704 = vmatprep.subr.mxu0 0.0
        %1705 = vmatpush1.msra.mxu0 0.0
        %1706 = vmatprep.subr.mxu0 0.0
        %1707 = vmatpush1.msra.mxu0 0.0
        %1708 = vmatprep.subr.mxu0 0.0
        %1709 = vmatpush1.msra.mxu0 0.0
        %1710 = vmatprep.subr.mxu0 0.0
        %1711 = vmatpush1.msra.mxu0 0.0
        %1712 = vmatprep.subr.mxu0 0.0
        %1713 = vmatpush1.msra.mxu0 0.0
        %1714 = vmatprep.subr.mxu0 0.0
        %1715 = vmatpush1.msra.mxu0 0.0
        %1716 = vmatprep.subr.mxu0 0.0
        %1717 = vmatpush1.msra.mxu0 0.0
        %1718 = vmatprep.subr.mxu0 0.0
        %1719 = vmatpush1.msra.mxu0 0.0
        %1720 = vmatprep.subr.mxu0 0.0
        %1721 = vmatpush1.msra.mxu0 0.0
        %1722 = vmatprep.subr.mxu0 0.0
        %1723 = vmatpush1.msra.mxu0 0.0
        %1724 = vmatprep.subr.mxu0 0.0
        %1725 = vmatpush1.msra.mxu0 0.0
        %1726 = vmatprep.subr.mxu0 0.0
        %1727 = vmatpush1.msra.mxu0 0.0
        %1728 = vmatprep.subr.mxu0 0.0
        %1729 = vmatpush1.msra.mxu0 0.0
        %1730 = vmatprep.subr.mxu0 0.0
        %1731 = vmatpush1.msra.mxu0 0.0
        %1732 = vmatprep.subr.mxu0 0.0
        %1733 = vmatpush1.msra.mxu0 0.0
        %1734 = vmatprep.mubr.f32.mxu0 0.0
        %1735 = vmatmul.mubr.f32.gmra.mrb[0].mxu0 %v1604
        %v1736 = vpop.f32.mrb[0].mxu0
        %v1737 = vadd.f32 0.0, %v1736
        %v1738 = vpop.f32.mrb[0].mxu0
        %v1739 = vadd.f32 0.0, %v1738
        %1740 = vmatprep.mubr.f32.mxu0 0.0
        %1741 = vmatmul.mubr.f32.gmra.mrb[0].mxu0 %v1605
        %v1742 = vpop.f32.mrb[0].mxu0
        %v1743 = vadd.f32 0.0, %v1742
        %v1744 = vpop.f32.mrb[0].mxu0
        %v1745 = vadd.f32 0.0, %v1744
        %1746 = vdwg.mxu0
        %1747 = vmatprep.subr.mxu0 %v1609
        %1748 = vmatpush1.msra.mxu0 %v1608
        %1749 = vmatprep.subr.mxu0 %v1613
        %1750 = vmatpush1.msra.mxu0 %v1612
        %1751 = vmatprep.subr.mxu0 %v1617
        %1752 = vmatpush1.msra.mxu0 %v1616
        %1753 = vmatprep.subr.mxu0 %v1621
        %1754 = vmatpush1.msra.mxu0 %v1620
        %1755 = vmatprep.subr.mxu0 %v1625
        %1756 = vmatpush1.msra.mxu0 %v1624
        %1757 = vmatprep.subr.mxu0 %v1629
        %1758 = vmatpush1.msra.mxu0 %v1628
        %1759 = vmatprep.subr.mxu0 %v1633
        %1760 = vmatpush1.msra.mxu0 %v1632
        %1761 = vmatprep.subr.mxu0 %v1637
        %1762 = vmatpush1.msra.mxu0 %v1636
        %1763 = vmatprep.subr.mxu0 %v1641
        %1764 = vmatpush1.msra.mxu0 %v1640
        %1765 = vmatprep.subr.mxu0 %v1645
        %1766 = vmatpush1.msra.mxu0 %v1644
        %1767 = vmatprep.subr.mxu0 %v1649
        %1768 = vmatpush1.msra.mxu0 %v1648
        %1769 = vmatprep.subr.mxu0 %v1653
        %1770 = vmatpush1.msra.mxu0 %v1652
        %1771 = vmatprep.subr.mxu0 %v1657
        %1772 = vmatpush1.msra.mxu0 %v1656
        %1773 = vmatprep.subr.mxu0 %v1661
        %1774 = vmatpush1.msra.mxu0 %v1660
        %1775 = vmatprep.subr.mxu0 %v1665
        %1776 = vmatpush1.msra.mxu0 %v1664
        %1777 = vmatprep.subr.mxu0 %v1669
        %1778 = vmatpush1.msra.mxu0 %v1668
        %1779 = vmatprep.subr.mxu0 0.0
        %1780 = vmatpush1.msra.mxu0 0.0
        %1781 = vmatprep.subr.mxu0 0.0
        %1782 = vmatpush1.msra.mxu0 0.0
        %1783 = vmatprep.subr.mxu0 0.0
        %1784 = vmatpush1.msra.mxu0 0.0
        %1785 = vmatprep.subr.mxu0 0.0
        %1786 = vmatpush1.msra.mxu0 0.0
        %1787 = vmatprep.subr.mxu0 0.0
        %1788 = vmatpush1.msra.mxu0 0.0
        %1789 = vmatprep.subr.mxu0 0.0
        %1790 = vmatpush1.msra.mxu0 0.0
        %1791 = vmatprep.subr.mxu0 0.0
        %1792 = vmatpush1.msra.mxu0 0.0
        %1793 = vmatprep.subr.mxu0 0.0
        %1794 = vmatpush1.msra.mxu0 0.0
        %1795 = vmatprep.subr.mxu0 0.0
        %1796 = vmatpush1.msra.mxu0 0.0
        %1797 = vmatprep.subr.mxu0 0.0
        %1798 = vmatpush1.msra.mxu0 0.0
        %1799 = vmatprep.subr.mxu0 0.0
        %1800 = vmatpush1.msra.mxu0 0.0
        %1801 = vmatprep.subr.mxu0 0.0
        %1802 = vmatpush1.msra.mxu0 0.0
        %1803 = vmatprep.subr.mxu0 0.0
        %1804 = vmatpush1.msra.mxu0 0.0
        %1805 = vmatprep.subr.mxu0 0.0
        %1806 = vmatpush1.msra.mxu0 0.0
        %1807 = vmatprep.subr.mxu0 0.0
        %1808 = vmatpush1.msra.mxu0 0.0
        %1809 = vmatprep.subr.mxu0 0.0
        %1810 = vmatpush1.msra.mxu0 0.0
        %1811 = vmatprep.mubr.f32.mxu0 0.0
        %1812 = vmatmul.mubr.f32.gmra.mrb[0].mxu0 %v1604
        %v1813 = vpop.f32.mrb[0].mxu0
        %v1814 = vadd.f32 0.0, %v1813
        %v1815 = vpop.f32.mrb[0].mxu0
        %v1816 = vadd.f32 0.0, %v1815
        %1817 = vmatprep.mubr.f32.mxu0 0.0
        %1818 = vmatmul.mubr.f32.gmra.mrb[0].mxu0 %v1605
        %v1819 = vpop.f32.mrb[0].mxu0
        %v1820 = vadd.f32 0.0, %v1819
        %v1821 = vpop.f32.mrb[0].mxu0
        %v1822 = vadd.f32 0.0, %v1821
        %1823 = vdwg.mxu0
        %v1824 = vadd.f32 %v1596, %v1737
        %v1825 = vadd.f32 %v1597, %v1739
        %v1826 = vadd.f32 %v1598, %v1814
        %v1827 = vadd.f32 %v1599, %v1816
        %v1828 = vadd.f32 %v1600, %v1743
        %v1829 = vadd.f32 %v1601, %v1745
        %v1830 = vadd.f32 %v1602, %v1820
        %v1831 = vadd.f32 %v1603, %v1822
        %v1832 = vld [vmem:[#allocation5] sm:$0xff]
        %v1833 = vld [vmem:[#allocation5 + $0x8] sm:$0xff]
        %v1834 = vxor.u32 %v1824, 2147483648
        %v1835 = vxor.u32 %v1828, 2147483648
        %v1836 = vmul.f32 %v1834, 1.442695
        %v1837 = vpow.pop %v1836
        %v1838 = vmul.f32 %v1835, 1.442695
        %v1839 = vpow.pop %v1838
        %v1840 = vadd.f32 %v1837, 1.0
        %v1841 = vadd.f32 %v1839, 1.0
        %v1842 = vrcp.pop %v1840
        %v1843 = vmul.f32 1.0, %v1842
        %v1844 = vrcp.pop %v1841
        %v1845 = vmul.f32 1.0, %v1844
        %v1846 = vxor.u32 %v1825, 2147483648
        %v1847 = vxor.u32 %v1829, 2147483648
        %v1848 = vmul.f32 %v1846, 1.442695
        %v1849 = vpow.pop %v1848
        %v1850 = vmul.f32 %v1847, 1.442695
        %v1851 = vpow.pop %v1850
        %v1852 = vadd.f32 %v1849, 1.0
        %v1853 = vadd.f32 %v1851, 1.0
        %v1854 = vrcp.pop %v1852
        %v1855 = vmul.f32 1.0, %v1854
        %v1856 = vrcp.pop %v1853
        %v1857 = vmul.f32 1.0, %v1856
        %v1858 = vtanh.pop %v1826
        %v1859 = vtanh.pop %v1830
        %v1860 = vxor.u32 %v1827, 2147483648
        %v1861 = vxor.u32 %v1831, 2147483648
        %v1862 = vmul.f32 %v1860, 1.442695
        %v1863 = vpow.pop %v1862
        %v1864 = vmul.f32 %v1861, 1.442695
        %v1865 = vpow.pop %v1864
        %v1866 = vadd.f32 %v1863, 1.0
        %v1867 = vadd.f32 %v1865, 1.0
        %v1868 = vrcp.pop %v1866
        %v1869 = vmul.f32 1.0, %v1868
        %v1870 = vrcp.pop %v1867
        %v1871 = vmul.f32 1.0, %v1870
        %v1872 = vmul.f32 %v1855, %v1832
        %v1873 = vmul.f32 %v1857, %v1833
        %v1874 = vmul.f32 %v1843, %v1858
        %v1875 = vmul.f32 %v1845, %v1859
        %v1876 = vadd.f32 %v1872, %v1874
        %v1877 = vadd.f32 %v1873, %v1875
        %v1878 = vtanh.pop %v1876
        %v1879 = vtanh.pop %v1877
        %v1880 = vmul.f32 %v1869, %v1878
        %v1881 = vmul.f32 %v1871, %v1879
        %1882 = vst [vmem:[#allocation5] sm:$0xff] %v1876
        %1883 = vst [vmem:[#allocation5 + $0x8] sm:$0xff] %v1877
        %1884 = vst [vmem:[#allocation4] sm:$0xff] %v1880
        %1885 = vst [vmem:[#allocation4 + $0x10] sm:$0xff] %v1881
        %s1886 = scalar_lea.vmem %s216, 64 [#allocation9]
        %1887 = vst [vmem:[%s1886] sm:$0xff] %v1880
        %1888 = vst [vmem:[%s1886 + $0x8] sm:$0xff] %v1881
        %s1889 = scalar_lea.vmem %s223, 64 [#allocation10]
        %1890 = vst [vmem:[%s1889] sm:$0xff] %v1876
        %1891 = vst [vmem:[%s1889 + $0x8] sm:$0xff] %v1877
        %v1892 = vld [vmem:[#allocation4] sm:$0xff]
        %v1893 = vld [vmem:[#allocation4 + $0x8] sm:$0xff]
        %v1894 = vld [vmem:[#allocation4 + $0x10] sm:$0xff]
        %v1895 = vld [vmem:[#allocation4 + $0x18] sm:$0xff]
        %v1896 = vld [vmem:[#allocation3] sm:$0xff]
        %v1897 = vld [vmem:[#allocation3 + $0x8] sm:$0xff]
        %v1898 = vld [vmem:[#allocation3 + $0x10] sm:$0xff]
        %v1899 = vld [vmem:[#allocation3 + $0x18] sm:$0xff]
        %v1900 = vld [vmem:[#allocation3 + $0x20] sm:$0xff]
        %v1901 = vld [vmem:[#allocation3 + $0x28] sm:$0xff]
        %v1902 = vld [vmem:[#allocation3 + $0x30] sm:$0xff]
        %v1903 = vld [vmem:[#allocation3 + $0x38] sm:$0xff]
        %v1904 = vld [vmem:[#allocation3 + $0x40] sm:$0xff]
        %v1905 = vld [vmem:[#allocation3 + $0x48] sm:$0xff]
        %v1906 = vld [vmem:[#allocation3 + $0x50] sm:$0xff]
        %v1907 = vld [vmem:[#allocation3 + $0x58] sm:$0xff]
        %v1908 = vld [vmem:[#allocation3 + $0x60] sm:$0xff]
        %v1909 = vld [vmem:[#allocation3 + $0x68] sm:$0xff]
        %v1910 = vld [vmem:[#allocation3 + $0x70] sm:$0xff]
        %v1911 = vld [vmem:[#allocation3 + $0x78] sm:$0xff]
        %v1912 = vld [vmem:[#allocation3 + $0x80] sm:$0xff]
        %v1913 = vld [vmem:[#allocation3 + $0x88] sm:$0xff]
        %v1914 = vld [vmem:[#allocation3 + $0x90] sm:$0xff]
        %v1915 = vld [vmem:[#allocation3 + $0x98] sm:$0xff]
        %v1916 = vld [vmem:[#allocation3 + $0xa0] sm:$0xff]
        %v1917 = vld [vmem:[#allocation3 + $0xa8] sm:$0xff]
        %v1918 = vld [vmem:[#allocation3 + $0xb0] sm:$0xff]
        %v1919 = vld [vmem:[#allocation3 + $0xb8] sm:$0xff]
        %v1920 = vld [vmem:[#allocation3 + $0xc0] sm:$0xff]
        %v1921 = vld [vmem:[#allocation3 + $0xc8] sm:$0xff]
        %v1922 = vld [vmem:[#allocation3 + $0xd0] sm:$0xff]
        %v1923 = vld [vmem:[#allocation3 + $0xd8] sm:$0xff]
        %v1924 = vld [vmem:[#allocation3 + $0xe0] sm:$0xff]
        %v1925 = vld [vmem:[#allocation3 + $0xe8] sm:$0xff]
        %v1926 = vld [vmem:[#allocation3 + $0xf0] sm:$0xff]
        %v1927 = vld [vmem:[#allocation3 + $0xf8] sm:$0xff]
        %v1928 = vld [vmem:[#allocation3 + $0x100] sm:$0xff]
        %v1929 = vld [vmem:[#allocation3 + $0x108] sm:$0xff]
        %v1930 = vld [vmem:[#allocation3 + $0x110] sm:$0xff]
        %v1931 = vld [vmem:[#allocation3 + $0x118] sm:$0xff]
        %v1932 = vld [vmem:[#allocation3 + $0x120] sm:$0xff]
        %v1933 = vld [vmem:[#allocation3 + $0x128] sm:$0xff]
        %v1934 = vld [vmem:[#allocation3 + $0x130] sm:$0xff]
        %v1935 = vld [vmem:[#allocation3 + $0x138] sm:$0xff]
        %v1936 = vld [vmem:[#allocation3 + $0x140] sm:$0xff]
        %v1937 = vld [vmem:[#allocation3 + $0x148] sm:$0xff]
        %v1938 = vld [vmem:[#allocation3 + $0x150] sm:$0xff]
        %v1939 = vld [vmem:[#allocation3 + $0x158] sm:$0xff]
        %v1940 = vld [vmem:[#allocation3 + $0x160] sm:$0xff]
        %v1941 = vld [vmem:[#allocation3 + $0x168] sm:$0xff]
        %v1942 = vld [vmem:[#allocation3 + $0x170] sm:$0xff]
        %v1943 = vld [vmem:[#allocation3 + $0x178] sm:$0xff]
        %v1944 = vld [vmem:[#allocation3 + $0x180] sm:$0xff]
        %v1945 = vld [vmem:[#allocation3 + $0x188] sm:$0xff]
        %v1946 = vld [vmem:[#allocation3 + $0x190] sm:$0xff]
        %v1947 = vld [vmem:[#allocation3 + $0x198] sm:$0xff]
        %v1948 = vld [vmem:[#allocation3 + $0x1a0] sm:$0xff]
        %v1949 = vld [vmem:[#allocation3 + $0x1a8] sm:$0xff]
        %v1950 = vld [vmem:[#allocation3 + $0x1b0] sm:$0xff]
        %v1951 = vld [vmem:[#allocation3 + $0x1b8] sm:$0xff]
        %v1952 = vld [vmem:[#allocation3 + $0x1c0] sm:$0xff]
        %v1953 = vld [vmem:[#allocation3 + $0x1c8] sm:$0xff]
        %v1954 = vld [vmem:[#allocation3 + $0x1d0] sm:$0xff]
        %v1955 = vld [vmem:[#allocation3 + $0x1d8] sm:$0xff]
        %v1956 = vld [vmem:[#allocation3 + $0x1e0] sm:$0xff]
        %v1957 = vld [vmem:[#allocation3 + $0x1e8] sm:$0xff]
        %v1958 = vld [vmem:[#allocation3 + $0x1f0] sm:$0xff]
        %v1959 = vld [vmem:[#allocation3 + $0x1f8] sm:$0xff]
        %v1960 = vld [vmem:[#allocation3 + $0x200] sm:$0xff]
        %v1961 = vld [vmem:[#allocation3 + $0x208] sm:$0xff]
        %v1962 = vld [vmem:[#allocation3 + $0x210] sm:$0xff]
        %v1963 = vld [vmem:[#allocation3 + $0x218] sm:$0xff]
        %v1964 = vld [vmem:[#allocation3 + $0x220] sm:$0xff]
        %v1965 = vld [vmem:[#allocation3 + $0x228] sm:$0xff]
        %v1966 = vld [vmem:[#allocation3 + $0x230] sm:$0xff]
        %v1967 = vld [vmem:[#allocation3 + $0x238] sm:$0xff]
        %v1968 = vld [vmem:[#allocation3 + $0x240] sm:$0xff]
        %v1969 = vld [vmem:[#allocation3 + $0x248] sm:$0xff]
        %v1970 = vld [vmem:[#allocation3 + $0x250] sm:$0xff]
        %v1971 = vld [vmem:[#allocation3 + $0x258] sm:$0xff]
        %v1972 = vld [vmem:[#allocation3 + $0x260] sm:$0xff]
        %v1973 = vld [vmem:[#allocation3 + $0x268] sm:$0xff]
        %v1974 = vld [vmem:[#allocation3 + $0x270] sm:$0xff]
        %v1975 = vld [vmem:[#allocation3 + $0x278] sm:$0xff]
        %v1976 = vld [vmem:[#allocation3 + $0x280] sm:$0xff]
        %v1977 = vld [vmem:[#allocation3 + $0x288] sm:$0xff]
        %v1978 = vld [vmem:[#allocation3 + $0x290] sm:$0xff]
        %v1979 = vld [vmem:[#allocation3 + $0x298] sm:$0xff]
        %v1980 = vld [vmem:[#allocation3 + $0x2a0] sm:$0xff]
        %v1981 = vld [vmem:[#allocation3 + $0x2a8] sm:$0xff]
        %v1982 = vld [vmem:[#allocation3 + $0x2b0] sm:$0xff]
        %v1983 = vld [vmem:[#allocation3 + $0x2b8] sm:$0xff]
        %v1984 = vld [vmem:[#allocation3 + $0x2c0] sm:$0xff]
        %v1985 = vld [vmem:[#allocation3 + $0x2c8] sm:$0xff]
        %v1986 = vld [vmem:[#allocation3 + $0x2d0] sm:$0xff]
        %v1987 = vld [vmem:[#allocation3 + $0x2d8] sm:$0xff]
        %v1988 = vld [vmem:[#allocation3 + $0x2e0] sm:$0xff]
        %v1989 = vld [vmem:[#allocation3 + $0x2e8] sm:$0xff]
        %v1990 = vld [vmem:[#allocation3 + $0x2f0] sm:$0xff]
        %v1991 = vld [vmem:[#allocation3 + $0x2f8] sm:$0xff]
        %v1992 = vld [vmem:[#allocation3 + $0x300] sm:$0xff]
        %v1993 = vld [vmem:[#allocation3 + $0x308] sm:$0xff]
        %v1994 = vld [vmem:[#allocation3 + $0x310] sm:$0xff]
        %v1995 = vld [vmem:[#allocation3 + $0x318] sm:$0xff]
        %v1996 = vld [vmem:[#allocation3 + $0x320] sm:$0xff]
        %v1997 = vld [vmem:[#allocation3 + $0x328] sm:$0xff]
        %v1998 = vld [vmem:[#allocation3 + $0x330] sm:$0xff]
        %v1999 = vld [vmem:[#allocation3 + $0x338] sm:$0xff]
        %v2000 = vld [vmem:[#allocation3 + $0x340] sm:$0xff]
        %v2001 = vld [vmem:[#allocation3 + $0x348] sm:$0xff]
        %v2002 = vld [vmem:[#allocation3 + $0x350] sm:$0xff]
        %v2003 = vld [vmem:[#allocation3 + $0x358] sm:$0xff]
        %v2004 = vld [vmem:[#allocation3 + $0x360] sm:$0xff]
        %v2005 = vld [vmem:[#allocation3 + $0x368] sm:$0xff]
        %v2006 = vld [vmem:[#allocation3 + $0x370] sm:$0xff]
        %v2007 = vld [vmem:[#allocation3 + $0x378] sm:$0xff]
        %v2008 = vld [vmem:[#allocation3 + $0x380] sm:$0xff]
        %v2009 = vld [vmem:[#allocation3 + $0x388] sm:$0xff]
        %v2010 = vld [vmem:[#allocation3 + $0x390] sm:$0xff]
        %v2011 = vld [vmem:[#allocation3 + $0x398] sm:$0xff]
        %v2012 = vld [vmem:[#allocation3 + $0x3a0] sm:$0xff]
        %v2013 = vld [vmem:[#allocation3 + $0x3a8] sm:$0xff]
        %v2014 = vld [vmem:[#allocation3 + $0x3b0] sm:$0xff]
        %v2015 = vld [vmem:[#allocation3 + $0x3b8] sm:$0xff]
        %v2016 = vld [vmem:[#allocation3 + $0x3c0] sm:$0xff]
        %v2017 = vld [vmem:[#allocation3 + $0x3c8] sm:$0xff]
        %v2018 = vld [vmem:[#allocation3 + $0x3d0] sm:$0xff]
        %v2019 = vld [vmem:[#allocation3 + $0x3d8] sm:$0xff]
        %v2020 = vld [vmem:[#allocation3 + $0x3e0] sm:$0xff]
        %v2021 = vld [vmem:[#allocation3 + $0x3e8] sm:$0xff]
        %v2022 = vld [vmem:[#allocation3 + $0x3f0] sm:$0xff]
        %v2023 = vld [vmem:[#allocation3 + $0x3f8] sm:$0xff]
        %2024 = vmatprep.subr.mxu0 %v1897
        %2025 = vmatpush1.msra.mxu0 %v1896
        %2026 = vmatprep.subr.mxu0 %v1901
        %2027 = vmatpush1.msra.mxu0 %v1900
        %2028 = vmatprep.subr.mxu0 %v1905
        %2029 = vmatpush1.msra.mxu0 %v1904
        %2030 = vmatprep.subr.mxu0 %v1909
        %2031 = vmatpush1.msra.mxu0 %v1908
        %2032 = vmatprep.subr.mxu0 %v1913
        %2033 = vmatpush1.msra.mxu0 %v1912
        %2034 = vmatprep.subr.mxu0 %v1917
        %2035 = vmatpush1.msra.mxu0 %v1916
        %2036 = vmatprep.subr.mxu0 %v1921
        %2037 = vmatpush1.msra.mxu0 %v1920
        %2038 = vmatprep.subr.mxu0 %v1925
        %2039 = vmatpush1.msra.mxu0 %v1924
        %2040 = vmatprep.subr.mxu0 %v1929
        %2041 = vmatpush1.msra.mxu0 %v1928
        %2042 = vmatprep.subr.mxu0 %v1933
        %2043 = vmatpush1.msra.mxu0 %v1932
        %2044 = vmatprep.subr.mxu0 %v1937
        %2045 = vmatpush1.msra.mxu0 %v1936
        %2046 = vmatprep.subr.mxu0 %v1941
        %2047 = vmatpush1.msra.mxu0 %v1940
        %2048 = vmatprep.subr.mxu0 %v1945
        %2049 = vmatpush1.msra.mxu0 %v1944
        %2050 = vmatprep.subr.mxu0 %v1949
        %2051 = vmatpush1.msra.mxu0 %v1948
        %2052 = vmatprep.subr.mxu0 %v1953
        %2053 = vmatpush1.msra.mxu0 %v1952
        %2054 = vmatprep.subr.mxu0 %v1957
        %2055 = vmatpush1.msra.mxu0 %v1956
        %2056 = vmatprep.subr.mxu0 %v1961
        %2057 = vmatpush1.msra.mxu0 %v1960
        %2058 = vmatprep.subr.mxu0 %v1965
        %2059 = vmatpush1.msra.mxu0 %v1964
        %2060 = vmatprep.subr.mxu0 %v1969
        %2061 = vmatpush1.msra.mxu0 %v1968
        %2062 = vmatprep.subr.mxu0 %v1973
        %2063 = vmatpush1.msra.mxu0 %v1972
        %2064 = vmatprep.subr.mxu0 %v1977
        %2065 = vmatpush1.msra.mxu0 %v1976
        %2066 = vmatprep.subr.mxu0 %v1981
        %2067 = vmatpush1.msra.mxu0 %v1980
        %2068 = vmatprep.subr.mxu0 %v1985
        %2069 = vmatpush1.msra.mxu0 %v1984
        %2070 = vmatprep.subr.mxu0 %v1989
        %2071 = vmatpush1.msra.mxu0 %v1988
        %2072 = vmatprep.subr.mxu0 %v1993
        %2073 = vmatpush1.msra.mxu0 %v1992
        %2074 = vmatprep.subr.mxu0 %v1997
        %2075 = vmatpush1.msra.mxu0 %v1996
        %2076 = vmatprep.subr.mxu0 %v2001
        %2077 = vmatpush1.msra.mxu0 %v2000
        %2078 = vmatprep.subr.mxu0 %v2005
        %2079 = vmatpush1.msra.mxu0 %v2004
        %2080 = vmatprep.subr.mxu0 %v2009
        %2081 = vmatpush1.msra.mxu0 %v2008
        %2082 = vmatprep.subr.mxu0 %v2013
        %2083 = vmatpush1.msra.mxu0 %v2012
        %2084 = vmatprep.subr.mxu0 %v2017
        %2085 = vmatpush1.msra.mxu0 %v2016
        %2086 = vmatprep.subr.mxu0 %v2021
        %2087 = vmatpush1.msra.mxu0 %v2020
        %2088 = vmatprep.mubr.f32.mxu0 %v1893
        %2089 = vmatmul.mubr.f32.gmra.mrb[0].mxu0 %v1892
        %v2090 = vpop.f32.mrb[0].mxu0
        %v2091 = vadd.f32 0.0, %v2090
        %v2092 = vpop.f32.mrb[0].mxu0
        %v2093 = vadd.f32 0.0, %v2092
        %2094 = vmatprep.mubr.f32.mxu0 %v1895
        %2095 = vmatmul.mubr.f32.gmra.mrb[0].mxu0 %v1894
        %v2096 = vpop.f32.mrb[0].mxu0
        %v2097 = vadd.f32 0.0, %v2096
        %v2098 = vpop.f32.mrb[0].mxu0
        %v2099 = vadd.f32 0.0, %v2098
        %2100 = vdwg.mxu0
        %2101 = vmatprep.subr.mxu0 %v1899
        %2102 = vmatpush1.msra.mxu0 %v1898
        %2103 = vmatprep.subr.mxu0 %v1903
        %2104 = vmatpush1.msra.mxu0 %v1902
        %2105 = vmatprep.subr.mxu0 %v1907
        %2106 = vmatpush1.msra.mxu0 %v1906
        %2107 = vmatprep.subr.mxu0 %v1911
        %2108 = vmatpush1.msra.mxu0 %v1910
        %2109 = vmatprep.subr.mxu0 %v1915
        %2110 = vmatpush1.msra.mxu0 %v1914
        %2111 = vmatprep.subr.mxu0 %v1919
        %2112 = vmatpush1.msra.mxu0 %v1918
        %2113 = vmatprep.subr.mxu0 %v1923
        %2114 = vmatpush1.msra.mxu0 %v1922
        %2115 = vmatprep.subr.mxu0 %v1927
        %2116 = vmatpush1.msra.mxu0 %v1926
        %2117 = vmatprep.subr.mxu0 %v1931
        %2118 = vmatpush1.msra.mxu0 %v1930
        %2119 = vmatprep.subr.mxu0 %v1935
        %2120 = vmatpush1.msra.mxu0 %v1934
        %2121 = vmatprep.subr.mxu0 %v1939
        %2122 = vmatpush1.msra.mxu0 %v1938
        %2123 = vmatprep.subr.mxu0 %v1943
        %2124 = vmatpush1.msra.mxu0 %v1942
        %2125 = vmatprep.subr.mxu0 %v1947
        %2126 = vmatpush1.msra.mxu0 %v1946
        %2127 = vmatprep.subr.mxu0 %v1951
        %2128 = vmatpush1.msra.mxu0 %v1950
        %2129 = vmatprep.subr.mxu0 %v1955
        %2130 = vmatpush1.msra.mxu0 %v1954
        %2131 = vmatprep.subr.mxu0 %v1959
        %2132 = vmatpush1.msra.mxu0 %v1958
        %2133 = vmatprep.subr.mxu0 %v1963
        %2134 = vmatpush1.msra.mxu0 %v1962
        %2135 = vmatprep.subr.mxu0 %v1967
        %2136 = vmatpush1.msra.mxu0 %v1966
        %2137 = vmatprep.subr.mxu0 %v1971
        %2138 = vmatpush1.msra.mxu0 %v1970
        %2139 = vmatprep.subr.mxu0 %v1975
        %2140 = vmatpush1.msra.mxu0 %v1974
        %2141 = vmatprep.subr.mxu0 %v1979
        %2142 = vmatpush1.msra.mxu0 %v1978
        %2143 = vmatprep.subr.mxu0 %v1983
        %2144 = vmatpush1.msra.mxu0 %v1982
        %2145 = vmatprep.subr.mxu0 %v1987
        %2146 = vmatpush1.msra.mxu0 %v1986
        %2147 = vmatprep.subr.mxu0 %v1991
        %2148 = vmatpush1.msra.mxu0 %v1990
        %2149 = vmatprep.subr.mxu0 %v1995
        %2150 = vmatpush1.msra.mxu0 %v1994
        %2151 = vmatprep.subr.mxu0 %v1999
        %2152 = vmatpush1.msra.mxu0 %v1998
        %2153 = vmatprep.subr.mxu0 %v2003
        %2154 = vmatpush1.msra.mxu0 %v2002
        %2155 = vmatprep.subr.mxu0 %v2007
        %2156 = vmatpush1.msra.mxu0 %v2006
        %2157 = vmatprep.subr.mxu0 %v2011
        %2158 = vmatpush1.msra.mxu0 %v2010
        %2159 = vmatprep.subr.mxu0 %v2015
        %2160 = vmatpush1.msra.mxu0 %v2014
        %2161 = vmatprep.subr.mxu0 %v2019
        %2162 = vmatpush1.msra.mxu0 %v2018
        %2163 = vmatprep.subr.mxu0 %v2023
        %2164 = vmatpush1.msra.mxu0 %v2022
        %2165 = vmatprep.mubr.f32.mxu0 %v1893
        %2166 = vmatmul.mubr.f32.gmra.mrb[0].mxu0 %v1892
        %v2167 = vpop.f32.mrb[0].mxu0
        %v2168 = vadd.f32 0.0, %v2167
        %v2169 = vpop.f32.mrb[0].mxu0
        %v2170 = vadd.f32 0.0, %v2169
        %2171 = vmatprep.mubr.f32.mxu0 %v1895
        %2172 = vmatmul.mubr.f32.gmra.mrb[0].mxu0 %v1894
        %v2173 = vpop.f32.mrb[0].mxu0
        %v2174 = vadd.f32 0.0, %v2173
        %v2175 = vpop.f32.mrb[0].mxu0
        %v2176 = vadd.f32 0.0, %v2175
        %2177 = vdwg.mxu0
        %v2178 = vadd.f32 %v278, %v2091
        %v2179 = vadd.f32 %v282, %v2093
        %v2180 = vadd.f32 %v286, %v2168
        %v2181 = vadd.f32 %v290, %v2170
        %v2182 = vadd.f32 %v278, %v2097
        %v2183 = vadd.f32 %v282, %v2099
        %v2184 = vadd.f32 %v286, %v2174
        %v2185 = vadd.f32 %v290, %v2176
        %v2186 = vld [vmem:[%s883] sm:$0xff]
        %v2187 = vld [vmem:[%s883 + $0x8] sm:$0xff]
        %v2188 = vxor.u32 %v2178, 2147483648
        %v2189 = vxor.u32 %v2182, 2147483648
        %v2190 = vmul.f32 %v2188, 1.442695
        %v2191 = vpow.pop %v2190
        %v2192 = vmul.f32 %v2189, 1.442695
        %v2193 = vpow.pop %v2192
        %v2194 = vadd.f32 %v2191, 1.0
        %v2195 = vadd.f32 %v2193, 1.0
        %v2196 = vrcp.pop %v2194
        %v2197 = vmul.f32 1.0, %v2196
        %v2198 = vrcp.pop %v2195
        %v2199 = vmul.f32 1.0, %v2198
        %v2200 = vxor.u32 %v2179, 2147483648
        %v2201 = vxor.u32 %v2183, 2147483648
        %v2202 = vmul.f32 %v2200, 1.442695
        %v2203 = vpow.pop %v2202
        %v2204 = vmul.f32 %v2201, 1.442695
        %v2205 = vpow.pop %v2204
        %v2206 = vadd.f32 %v2203, 1.0
        %v2207 = vadd.f32 %v2205, 1.0
        %v2208 = vrcp.pop %v2206
        %v2209 = vmul.f32 1.0, %v2208
        %v2210 = vrcp.pop %v2207
        %v2211 = vmul.f32 1.0, %v2210
        %v2212 = vtanh.pop %v2180
        %v2213 = vtanh.pop %v2184
        %v2214 = vxor.u32 %v2181, 2147483648
        %v2215 = vxor.u32 %v2185, 2147483648
        %v2216 = vmul.f32 %v2214, 1.442695
        %v2217 = vpow.pop %v2216
        %v2218 = vmul.f32 %v2215, 1.442695
        %v2219 = vpow.pop %v2218
        %v2220 = vadd.f32 %v2217, 1.0
        %v2221 = vadd.f32 %v2219, 1.0
        %v2222 = vrcp.pop %v2220
        %v2223 = vmul.f32 1.0, %v2222
        %v2224 = vrcp.pop %v2221
        %v2225 = vmul.f32 1.0, %v2224
        %v2226 = vmul.f32 %v2209, %v2186
        %v2227 = vmul.f32 %v2211, %v2187
        %v2228 = vmul.f32 %v2197, %v2212
        %v2229 = vmul.f32 %v2199, %v2213
        %v2230 = vadd.f32 %v2226, %v2228
        %v2231 = vadd.f32 %v2227, %v2229
        %v2232 = vtanh.pop %v2230
        %v2233 = vtanh.pop %v2231
        %v2234 = vmul.f32 %v2223, %v2232
        %v2235 = vmul.f32 %v2225, %v2233
        %2236 = vst [vmem:[%s883] sm:$0xff] %v2230
        %2237 = vst [vmem:[%s883 + $0x8] sm:$0xff] %v2231
        %2238 = vst [vmem:[#allocation4 + $0x8] sm:$0xff] %v2234
        %2239 = vst [vmem:[#allocation4 + $0x18] sm:$0xff] %v2235
        %s2240 = scalar_lea.vmem %s216, 80 [#allocation9]
        %2241 = vst [vmem:[%s2240] sm:$0xff] %v2234
        %2242 = vst [vmem:[%s2240 + $0x8] sm:$0xff] %v2235
        %s2243 = scalar_lea.vmem %s223, 80 [#allocation10]
        %2244 = vst [vmem:[%s2243] sm:$0xff] %v2230
        %2245 = vst [vmem:[%s2243 + $0x8] sm:$0xff] %v2231
        %s2246 = scalar_lea.vmem %s196, 192 [#allocation6]
        %v2247 = vld [vmem:[%s2246] sm:$0xff]
        %v2248 = vld [vmem:[%s2246 + $0x8] sm:$0xff]
        %v2249 = vld [vmem:[%s2246 + $0x10] sm:$0xff]
        %v2250 = vld [vmem:[%s2246 + $0x18] sm:$0xff]
        %v2251 = vld [vmem:[%s2246 + $0x20] sm:$0xff]
        %v2252 = vld [vmem:[%s2246 + $0x28] sm:$0xff]
        %v2253 = vld [vmem:[%s2246 + $0x30] sm:$0xff]
        %v2254 = vld [vmem:[%s2246 + $0x38] sm:$0xff]
        %v2255 = vld [vmem:[#allocation4] sm:$0xff]
        %v2256 = vld [vmem:[#allocation4 + $0x10] sm:$0xff]
        %v2257 = vld [vmem:[#allocation2] sm:$0xff]
        %v2258 = vld [vmem:[#allocation2 + $0x8] sm:$0xff]
        %v2259 = vld [vmem:[#allocation2 + $0x10] sm:$0xff]
        %v2260 = vld [vmem:[#allocation2 + $0x18] sm:$0xff]
        %v2261 = vld [vmem:[#allocation2 + $0x20] sm:$0xff]
        %v2262 = vld [vmem:[#allocation2 + $0x28] sm:$0xff]
        %v2263 = vld [vmem:[#allocation2 + $0x30] sm:$0xff]
        %v2264 = vld [vmem:[#allocation2 + $0x38] sm:$0xff]
        %v2265 = vld [vmem:[#allocation2 + $0x40] sm:$0xff]
        %v2266 = vld [vmem:[#allocation2 + $0x48] sm:$0xff]
        %v2267 = vld [vmem:[#allocation2 + $0x50] sm:$0xff]
        %v2268 = vld [vmem:[#allocation2 + $0x58] sm:$0xff]
        %v2269 = vld [vmem:[#allocation2 + $0x60] sm:$0xff]
        %v2270 = vld [vmem:[#allocation2 + $0x68] sm:$0xff]
        %v2271 = vld [vmem:[#allocation2 + $0x70] sm:$0xff]
        %v2272 = vld [vmem:[#allocation2 + $0x78] sm:$0xff]
        %v2273 = vld [vmem:[#allocation2 + $0x80] sm:$0xff]
        %v2274 = vld [vmem:[#allocation2 + $0x88] sm:$0xff]
        %v2275 = vld [vmem:[#allocation2 + $0x90] sm:$0xff]
        %v2276 = vld [vmem:[#allocation2 + $0x98] sm:$0xff]
        %v2277 = vld [vmem:[#allocation2 + $0xa0] sm:$0xff]
        %v2278 = vld [vmem:[#allocation2 + $0xa8] sm:$0xff]
        %v2279 = vld [vmem:[#allocation2 + $0xb0] sm:$0xff]
        %v2280 = vld [vmem:[#allocation2 + $0xb8] sm:$0xff]
        %v2281 = vld [vmem:[#allocation2 + $0xc0] sm:$0xff]
        %v2282 = vld [vmem:[#allocation2 + $0xc8] sm:$0xff]
        %v2283 = vld [vmem:[#allocation2 + $0xd0] sm:$0xff]
        %v2284 = vld [vmem:[#allocation2 + $0xd8] sm:$0xff]
        %v2285 = vld [vmem:[#allocation2 + $0xe0] sm:$0xff]
        %v2286 = vld [vmem:[#allocation2 + $0xe8] sm:$0xff]
        %v2287 = vld [vmem:[#allocation2 + $0xf0] sm:$0xff]
        %v2288 = vld [vmem:[#allocation2 + $0xf8] sm:$0xff]
        %v2289 = vld [vmem:[#allocation2 + $0x100] sm:$0xff]
        %v2290 = vld [vmem:[#allocation2 + $0x108] sm:$0xff]
        %v2291 = vld [vmem:[#allocation2 + $0x110] sm:$0xff]
        %v2292 = vld [vmem:[#allocation2 + $0x118] sm:$0xff]
        %v2293 = vld [vmem:[#allocation2 + $0x120] sm:$0xff]
        %v2294 = vld [vmem:[#allocation2 + $0x128] sm:$0xff]
        %v2295 = vld [vmem:[#allocation2 + $0x130] sm:$0xff]
        %v2296 = vld [vmem:[#allocation2 + $0x138] sm:$0xff]
        %v2297 = vld [vmem:[#allocation2 + $0x140] sm:$0xff]
        %v2298 = vld [vmem:[#allocation2 + $0x148] sm:$0xff]
        %v2299 = vld [vmem:[#allocation2 + $0x150] sm:$0xff]
        %v2300 = vld [vmem:[#allocation2 + $0x158] sm:$0xff]
        %v2301 = vld [vmem:[#allocation2 + $0x160] sm:$0xff]
        %v2302 = vld [vmem:[#allocation2 + $0x168] sm:$0xff]
        %v2303 = vld [vmem:[#allocation2 + $0x170] sm:$0xff]
        %v2304 = vld [vmem:[#allocation2 + $0x178] sm:$0xff]
        %v2305 = vld [vmem:[#allocation2 + $0x180] sm:$0xff]
        %v2306 = vld [vmem:[#allocation2 + $0x188] sm:$0xff]
        %v2307 = vld [vmem:[#allocation2 + $0x190] sm:$0xff]
        %v2308 = vld [vmem:[#allocation2 + $0x198] sm:$0xff]
        %v2309 = vld [vmem:[#allocation2 + $0x1a0] sm:$0xff]
        %v2310 = vld [vmem:[#allocation2 + $0x1a8] sm:$0xff]
        %v2311 = vld [vmem:[#allocation2 + $0x1b0] sm:$0xff]
        %v2312 = vld [vmem:[#allocation2 + $0x1b8] sm:$0xff]
        %v2313 = vld [vmem:[#allocation2 + $0x1c0] sm:$0xff]
        %v2314 = vld [vmem:[#allocation2 + $0x1c8] sm:$0xff]
        %v2315 = vld [vmem:[#allocation2 + $0x1d0] sm:$0xff]
        %v2316 = vld [vmem:[#allocation2 + $0x1d8] sm:$0xff]
        %v2317 = vld [vmem:[#allocation2 + $0x1e0] sm:$0xff]
        %v2318 = vld [vmem:[#allocation2 + $0x1e8] sm:$0xff]
        %v2319 = vld [vmem:[#allocation2 + $0x1f0] sm:$0xff]
        %v2320 = vld [vmem:[#allocation2 + $0x1f8] sm:$0xff]
        %2321 = vmatprep.subr.mxu0 %v2258
        %2322 = vmatpush1.msra.mxu0 %v2257
        %2323 = vmatprep.subr.mxu0 %v2262
        %2324 = vmatpush1.msra.mxu0 %v2261
        %2325 = vmatprep.subr.mxu0 %v2266
        %2326 = vmatpush1.msra.mxu0 %v2265
        %2327 = vmatprep.subr.mxu0 %v2270
        %2328 = vmatpush1.msra.mxu0 %v2269
        %2329 = vmatprep.subr.mxu0 %v2274
        %2330 = vmatpush1.msra.mxu0 %v2273
        %2331 = vmatprep.subr.mxu0 %v2278
        %2332 = vmatpush1.msra.mxu0 %v2277
        %2333 = vmatprep.subr.mxu0 %v2282
        %2334 = vmatpush1.msra.mxu0 %v2281
        %2335 = vmatprep.subr.mxu0 %v2286
        %2336 = vmatpush1.msra.mxu0 %v2285
        %2337 = vmatprep.subr.mxu0 %v2290
        %2338 = vmatpush1.msra.mxu0 %v2289
        %2339 = vmatprep.subr.mxu0 %v2294
        %2340 = vmatpush1.msra.mxu0 %v2293
        %2341 = vmatprep.subr.mxu0 %v2298
        %2342 = vmatpush1.msra.mxu0 %v2297
        %2343 = vmatprep.subr.mxu0 %v2302
        %2344 = vmatpush1.msra.mxu0 %v2301
        %2345 = vmatprep.subr.mxu0 %v2306
        %2346 = vmatpush1.msra.mxu0 %v2305
        %2347 = vmatprep.subr.mxu0 %v2310
        %2348 = vmatpush1.msra.mxu0 %v2309
        %2349 = vmatprep.subr.mxu0 %v2314
        %2350 = vmatpush1.msra.mxu0 %v2313
        %2351 = vmatprep.subr.mxu0 %v2318
        %2352 = vmatpush1.msra.mxu0 %v2317
        %2353 = vmatprep.subr.mxu0 0.0
        %2354 = vmatpush1.msra.mxu0 0.0
        %2355 = vmatprep.subr.mxu0 0.0
        %2356 = vmatpush1.msra.mxu0 0.0
        %2357 = vmatprep.subr.mxu0 0.0
        %2358 = vmatpush1.msra.mxu0 0.0
        %2359 = vmatprep.subr.mxu0 0.0
        %2360 = vmatpush1.msra.mxu0 0.0
        %2361 = vmatprep.subr.mxu0 0.0
        %2362 = vmatpush1.msra.mxu0 0.0
        %2363 = vmatprep.subr.mxu0 0.0
        %2364 = vmatpush1.msra.mxu0 0.0
        %2365 = vmatprep.subr.mxu0 0.0
        %2366 = vmatpush1.msra.mxu0 0.0
        %2367 = vmatprep.subr.mxu0 0.0
        %2368 = vmatpush1.msra.mxu0 0.0
        %2369 = vmatprep.subr.mxu0 0.0
        %2370 = vmatpush1.msra.mxu0 0.0
        %2371 = vmatprep.subr.mxu0 0.0
        %2372 = vmatpush1.msra.mxu0 0.0
        %2373 = vmatprep.subr.mxu0 0.0
        %2374 = vmatpush1.msra.mxu0 0.0
        %2375 = vmatprep.subr.mxu0 0.0
        %2376 = vmatpush1.msra.mxu0 0.0
        %2377 = vmatprep.subr.mxu0 0.0
        %2378 = vmatpush1.msra.mxu0 0.0
        %2379 = vmatprep.subr.mxu0 0.0
        %2380 = vmatpush1.msra.mxu0 0.0
        %2381 = vmatprep.subr.mxu0 0.0
        %2382 = vmatpush1.msra.mxu0 0.0
        %2383 = vmatprep.subr.mxu0 0.0
        %2384 = vmatpush1.msra.mxu0 0.0
        %2385 = vmatprep.mubr.f32.mxu0 0.0
        %2386 = vmatmul.mubr.f32.gmra.mrb[0].mxu0 %v2255
        %v2387 = vpop.f32.mrb[0].mxu0
        %v2388 = vadd.f32 0.0, %v2387
        %v2389 = vpop.f32.mrb[0].mxu0
        %v2390 = vadd.f32 0.0, %v2389
        %2391 = vmatprep.mubr.f32.mxu0 0.0
        %2392 = vmatmul.mubr.f32.gmra.mrb[0].mxu0 %v2256
        %v2393 = vpop.f32.mrb[0].mxu0
        %v2394 = vadd.f32 0.0, %v2393
        %v2395 = vpop.f32.mrb[0].mxu0
        %v2396 = vadd.f32 0.0, %v2395
        %2397 = vdwg.mxu0
        %2398 = vmatprep.subr.mxu0 %v2260
        %2399 = vmatpush1.msra.mxu0 %v2259
        %2400 = vmatprep.subr.mxu0 %v2264
        %2401 = vmatpush1.msra.mxu0 %v2263
        %2402 = vmatprep.subr.mxu0 %v2268
        %2403 = vmatpush1.msra.mxu0 %v2267
        %2404 = vmatprep.subr.mxu0 %v2272
        %2405 = vmatpush1.msra.mxu0 %v2271
        %2406 = vmatprep.subr.mxu0 %v2276
        %2407 = vmatpush1.msra.mxu0 %v2275
        %2408 = vmatprep.subr.mxu0 %v2280
        %2409 = vmatpush1.msra.mxu0 %v2279
        %2410 = vmatprep.subr.mxu0 %v2284
        %2411 = vmatpush1.msra.mxu0 %v2283
        %2412 = vmatprep.subr.mxu0 %v2288
        %2413 = vmatpush1.msra.mxu0 %v2287
        %2414 = vmatprep.subr.mxu0 %v2292
        %2415 = vmatpush1.msra.mxu0 %v2291
        %2416 = vmatprep.subr.mxu0 %v2296
        %2417 = vmatpush1.msra.mxu0 %v2295
        %2418 = vmatprep.subr.mxu0 %v2300
        %2419 = vmatpush1.msra.mxu0 %v2299
        %2420 = vmatprep.subr.mxu0 %v2304
        %2421 = vmatpush1.msra.mxu0 %v2303
        %2422 = vmatprep.subr.mxu0 %v2308
        %2423 = vmatpush1.msra.mxu0 %v2307
        %2424 = vmatprep.subr.mxu0 %v2312
        %2425 = vmatpush1.msra.mxu0 %v2311
        %2426 = vmatprep.subr.mxu0 %v2316
        %2427 = vmatpush1.msra.mxu0 %v2315
        %2428 = vmatprep.subr.mxu0 %v2320
        %2429 = vmatpush1.msra.mxu0 %v2319
        %2430 = vmatprep.subr.mxu0 0.0
        %2431 = vmatpush1.msra.mxu0 0.0
        %2432 = vmatprep.subr.mxu0 0.0
        %2433 = vmatpush1.msra.mxu0 0.0
        %2434 = vmatprep.subr.mxu0 0.0
        %2435 = vmatpush1.msra.mxu0 0.0
        %2436 = vmatprep.subr.mxu0 0.0
        %2437 = vmatpush1.msra.mxu0 0.0
        %2438 = vmatprep.subr.mxu0 0.0
        %2439 = vmatpush1.msra.mxu0 0.0
        %2440 = vmatprep.subr.mxu0 0.0
        %2441 = vmatpush1.msra.mxu0 0.0
        %2442 = vmatprep.subr.mxu0 0.0
        %2443 = vmatpush1.msra.mxu0 0.0
        %2444 = vmatprep.subr.mxu0 0.0
        %2445 = vmatpush1.msra.mxu0 0.0
        %2446 = vmatprep.subr.mxu0 0.0
        %2447 = vmatpush1.msra.mxu0 0.0
        %2448 = vmatprep.subr.mxu0 0.0
        %2449 = vmatpush1.msra.mxu0 0.0
        %2450 = vmatprep.subr.mxu0 0.0
        %2451 = vmatpush1.msra.mxu0 0.0
        %2452 = vmatprep.subr.mxu0 0.0
        %2453 = vmatpush1.msra.mxu0 0.0
        %2454 = vmatprep.subr.mxu0 0.0
        %2455 = vmatpush1.msra.mxu0 0.0
        %2456 = vmatprep.subr.mxu0 0.0
        %2457 = vmatpush1.msra.mxu0 0.0
        %2458 = vmatprep.subr.mxu0 0.0
        %2459 = vmatpush1.msra.mxu0 0.0
        %2460 = vmatprep.subr.mxu0 0.0
        %2461 = vmatpush1.msra.mxu0 0.0
        %2462 = vmatprep.mubr.f32.mxu0 0.0
        %2463 = vmatmul.mubr.f32.gmra.mrb[0].mxu0 %v2255
        %v2464 = vpop.f32.mrb[0].mxu0
        %v2465 = vadd.f32 0.0, %v2464
        %v2466 = vpop.f32.mrb[0].mxu0
        %v2467 = vadd.f32 0.0, %v2466
        %2468 = vmatprep.mubr.f32.mxu0 0.0
        %2469 = vmatmul.mubr.f32.gmra.mrb[0].mxu0 %v2256
        %v2470 = vpop.f32.mrb[0].mxu0
        %v2471 = vadd.f32 0.0, %v2470
        %v2472 = vpop.f32.mrb[0].mxu0
        %v2473 = vadd.f32 0.0, %v2472
        %2474 = vdwg.mxu0
        %v2475 = vadd.f32 %v2247, %v2388
        %v2476 = vadd.f32 %v2248, %v2390
        %v2477 = vadd.f32 %v2249, %v2465
        %v2478 = vadd.f32 %v2250, %v2467
        %v2479 = vadd.f32 %v2251, %v2394
        %v2480 = vadd.f32 %v2252, %v2396
        %v2481 = vadd.f32 %v2253, %v2471
        %v2482 = vadd.f32 %v2254, %v2473
        %v2483 = vld [vmem:[#allocation5] sm:$0xff]
        %v2484 = vld [vmem:[#allocation5 + $0x8] sm:$0xff]
        %v2485 = vxor.u32 %v2475, 2147483648
        %v2486 = vxor.u32 %v2479, 2147483648
        %v2487 = vmul.f32 %v2485, 1.442695
        %v2488 = vpow.pop %v2487
        %v2489 = vmul.f32 %v2486, 1.442695
        %v2490 = vpow.pop %v2489
        %v2491 = vadd.f32 %v2488, 1.0
        %v2492 = vadd.f32 %v2490, 1.0
        %v2493 = vrcp.pop %v2491
        %v2494 = vmul.f32 1.0, %v2493
        %v2495 = vrcp.pop %v2492
        %v2496 = vmul.f32 1.0, %v2495
        %v2497 = vxor.u32 %v2476, 2147483648
        %v2498 = vxor.u32 %v2480, 2147483648
        %v2499 = vmul.f32 %v2497, 1.442695
        %v2500 = vpow.pop %v2499
        %v2501 = vmul.f32 %v2498, 1.442695
        %v2502 = vpow.pop %v2501
        %v2503 = vadd.f32 %v2500, 1.0
        %v2504 = vadd.f32 %v2502, 1.0
        %v2505 = vrcp.pop %v2503
        %v2506 = vmul.f32 1.0, %v2505
        %v2507 = vrcp.pop %v2504
        %v2508 = vmul.f32 1.0, %v2507
        %v2509 = vtanh.pop %v2477
        %v2510 = vtanh.pop %v2481
        %v2511 = vxor.u32 %v2478, 2147483648
        %v2512 = vxor.u32 %v2482, 2147483648
        %v2513 = vmul.f32 %v2511, 1.442695
        %v2514 = vpow.pop %v2513
        %v2515 = vmul.f32 %v2512, 1.442695
        %v2516 = vpow.pop %v2515
        %v2517 = vadd.f32 %v2514, 1.0
        %v2518 = vadd.f32 %v2516, 1.0
        %v2519 = vrcp.pop %v2517
        %v2520 = vmul.f32 1.0, %v2519
        %v2521 = vrcp.pop %v2518
        %v2522 = vmul.f32 1.0, %v2521
        %v2523 = vmul.f32 %v2506, %v2483
        %v2524 = vmul.f32 %v2508, %v2484
        %v2525 = vmul.f32 %v2494, %v2509
        %v2526 = vmul.f32 %v2496, %v2510
        %v2527 = vadd.f32 %v2523, %v2525
        %v2528 = vadd.f32 %v2524, %v2526
        %v2529 = vtanh.pop %v2527
        %v2530 = vtanh.pop %v2528
        %v2531 = vmul.f32 %v2520, %v2529
        %v2532 = vmul.f32 %v2522, %v2530
        %2533 = vst [vmem:[#allocation5] sm:$0xff] %v2527
        %2534 = vst [vmem:[#allocation5 + $0x8] sm:$0xff] %v2528
        %2535 = vst [vmem:[#allocation4] sm:$0xff] %v2531
        %2536 = vst [vmem:[#allocation4 + $0x10] sm:$0xff] %v2532
        %s2537 = scalar_lea.vmem %s216, 96 [#allocation9]
        %2538 = vst [vmem:[%s2537] sm:$0xff] %v2531
        %2539 = vst [vmem:[%s2537 + $0x8] sm:$0xff] %v2532
        %s2540 = scalar_lea.vmem %s223, 96 [#allocation10]
        %2541 = vst [vmem:[%s2540] sm:$0xff] %v2527
        %2542 = vst [vmem:[%s2540 + $0x8] sm:$0xff] %v2528
        %v2543 = vld [vmem:[#allocation4] sm:$0xff]
        %v2544 = vld [vmem:[#allocation4 + $0x8] sm:$0xff]
        %v2545 = vld [vmem:[#allocation4 + $0x10] sm:$0xff]
        %v2546 = vld [vmem:[#allocation4 + $0x18] sm:$0xff]
        %v2547 = vld [vmem:[#allocation3] sm:$0xff]
        %v2548 = vld [vmem:[#allocation3 + $0x8] sm:$0xff]
        %v2549 = vld [vmem:[#allocation3 + $0x10] sm:$0xff]
        %v2550 = vld [vmem:[#allocation3 + $0x18] sm:$0xff]
        %v2551 = vld [vmem:[#allocation3 + $0x20] sm:$0xff]
        %v2552 = vld [vmem:[#allocation3 + $0x28] sm:$0xff]
        %v2553 = vld [vmem:[#allocation3 + $0x30] sm:$0xff]
        %v2554 = vld [vmem:[#allocation3 + $0x38] sm:$0xff]
        %v2555 = vld [vmem:[#allocation3 + $0x40] sm:$0xff]
        %v2556 = vld [vmem:[#allocation3 + $0x48] sm:$0xff]
        %v2557 = vld [vmem:[#allocation3 + $0x50] sm:$0xff]
        %v2558 = vld [vmem:[#allocation3 + $0x58] sm:$0xff]
        %v2559 = vld [vmem:[#allocation3 + $0x60] sm:$0xff]
        %v2560 = vld [vmem:[#allocation3 + $0x68] sm:$0xff]
        %v2561 = vld [vmem:[#allocation3 + $0x70] sm:$0xff]
        %v2562 = vld [vmem:[#allocation3 + $0x78] sm:$0xff]
        %v2563 = vld [vmem:[#allocation3 + $0x80] sm:$0xff]
        %v2564 = vld [vmem:[#allocation3 + $0x88] sm:$0xff]
        %v2565 = vld [vmem:[#allocation3 + $0x90] sm:$0xff]
        %v2566 = vld [vmem:[#allocation3 + $0x98] sm:$0xff]
        %v2567 = vld [vmem:[#allocation3 + $0xa0] sm:$0xff]
        %v2568 = vld [vmem:[#allocation3 + $0xa8] sm:$0xff]
        %v2569 = vld [vmem:[#allocation3 + $0xb0] sm:$0xff]
        %v2570 = vld [vmem:[#allocation3 + $0xb8] sm:$0xff]
        %v2571 = vld [vmem:[#allocation3 + $0xc0] sm:$0xff]
        %v2572 = vld [vmem:[#allocation3 + $0xc8] sm:$0xff]
        %v2573 = vld [vmem:[#allocation3 + $0xd0] sm:$0xff]
        %v2574 = vld [vmem:[#allocation3 + $0xd8] sm:$0xff]
        %v2575 = vld [vmem:[#allocation3 + $0xe0] sm:$0xff]
        %v2576 = vld [vmem:[#allocation3 + $0xe8] sm:$0xff]
        %v2577 = vld [vmem:[#allocation3 + $0xf0] sm:$0xff]
        %v2578 = vld [vmem:[#allocation3 + $0xf8] sm:$0xff]
        %v2579 = vld [vmem:[#allocation3 + $0x100] sm:$0xff]
        %v2580 = vld [vmem:[#allocation3 + $0x108] sm:$0xff]
        %v2581 = vld [vmem:[#allocation3 + $0x110] sm:$0xff]
        %v2582 = vld [vmem:[#allocation3 + $0x118] sm:$0xff]
        %v2583 = vld [vmem:[#allocation3 + $0x120] sm:$0xff]
        %v2584 = vld [vmem:[#allocation3 + $0x128] sm:$0xff]
        %v2585 = vld [vmem:[#allocation3 + $0x130] sm:$0xff]
        %v2586 = vld [vmem:[#allocation3 + $0x138] sm:$0xff]
        %v2587 = vld [vmem:[#allocation3 + $0x140] sm:$0xff]
        %v2588 = vld [vmem:[#allocation3 + $0x148] sm:$0xff]
        %v2589 = vld [vmem:[#allocation3 + $0x150] sm:$0xff]
        %v2590 = vld [vmem:[#allocation3 + $0x158] sm:$0xff]
        %v2591 = vld [vmem:[#allocation3 + $0x160] sm:$0xff]
        %v2592 = vld [vmem:[#allocation3 + $0x168] sm:$0xff]
        %v2593 = vld [vmem:[#allocation3 + $0x170] sm:$0xff]
        %v2594 = vld [vmem:[#allocation3 + $0x178] sm:$0xff]
        %v2595 = vld [vmem:[#allocation3 + $0x180] sm:$0xff]
        %v2596 = vld [vmem:[#allocation3 + $0x188] sm:$0xff]
        %v2597 = vld [vmem:[#allocation3 + $0x190] sm:$0xff]
        %v2598 = vld [vmem:[#allocation3 + $0x198] sm:$0xff]
        %v2599 = vld [vmem:[#allocation3 + $0x1a0] sm:$0xff]
        %v2600 = vld [vmem:[#allocation3 + $0x1a8] sm:$0xff]
        %v2601 = vld [vmem:[#allocation3 + $0x1b0] sm:$0xff]
        %v2602 = vld [vmem:[#allocation3 + $0x1b8] sm:$0xff]
        %v2603 = vld [vmem:[#allocation3 + $0x1c0] sm:$0xff]
        %v2604 = vld [vmem:[#allocation3 + $0x1c8] sm:$0xff]
        %v2605 = vld [vmem:[#allocation3 + $0x1d0] sm:$0xff]
        %v2606 = vld [vmem:[#allocation3 + $0x1d8] sm:$0xff]
        %v2607 = vld [vmem:[#allocation3 + $0x1e0] sm:$0xff]
        %v2608 = vld [vmem:[#allocation3 + $0x1e8] sm:$0xff]
        %v2609 = vld [vmem:[#allocation3 + $0x1f0] sm:$0xff]
        %v2610 = vld [vmem:[#allocation3 + $0x1f8] sm:$0xff]
        %v2611 = vld [vmem:[#allocation3 + $0x200] sm:$0xff]
        %v2612 = vld [vmem:[#allocation3 + $0x208] sm:$0xff]
        %v2613 = vld [vmem:[#allocation3 + $0x210] sm:$0xff]
        %v2614 = vld [vmem:[#allocation3 + $0x218] sm:$0xff]
        %v2615 = vld [vmem:[#allocation3 + $0x220] sm:$0xff]
        %v2616 = vld [vmem:[#allocation3 + $0x228] sm:$0xff]
        %v2617 = vld [vmem:[#allocation3 + $0x230] sm:$0xff]
        %v2618 = vld [vmem:[#allocation3 + $0x238] sm:$0xff]
        %v2619 = vld [vmem:[#allocation3 + $0x240] sm:$0xff]
        %v2620 = vld [vmem:[#allocation3 + $0x248] sm:$0xff]
        %v2621 = vld [vmem:[#allocation3 + $0x250] sm:$0xff]
        %v2622 = vld [vmem:[#allocation3 + $0x258] sm:$0xff]
        %v2623 = vld [vmem:[#allocation3 + $0x260] sm:$0xff]
        %v2624 = vld [vmem:[#allocation3 + $0x268] sm:$0xff]
        %v2625 = vld [vmem:[#allocation3 + $0x270] sm:$0xff]
        %v2626 = vld [vmem:[#allocation3 + $0x278] sm:$0xff]
        %v2627 = vld [vmem:[#allocation3 + $0x280] sm:$0xff]
        %v2628 = vld [vmem:[#allocation3 + $0x288] sm:$0xff]
        %v2629 = vld [vmem:[#allocation3 + $0x290] sm:$0xff]
        %v2630 = vld [vmem:[#allocation3 + $0x298] sm:$0xff]
        %v2631 = vld [vmem:[#allocation3 + $0x2a0] sm:$0xff]
        %v2632 = vld [vmem:[#allocation3 + $0x2a8] sm:$0xff]
        %v2633 = vld [vmem:[#allocation3 + $0x2b0] sm:$0xff]
        %v2634 = vld [vmem:[#allocation3 + $0x2b8] sm:$0xff]
        %v2635 = vld [vmem:[#allocation3 + $0x2c0] sm:$0xff]
        %v2636 = vld [vmem:[#allocation3 + $0x2c8] sm:$0xff]
        %v2637 = vld [vmem:[#allocation3 + $0x2d0] sm:$0xff]
        %v2638 = vld [vmem:[#allocation3 + $0x2d8] sm:$0xff]
        %v2639 = vld [vmem:[#allocation3 + $0x2e0] sm:$0xff]
        %v2640 = vld [vmem:[#allocation3 + $0x2e8] sm:$0xff]
        %v2641 = vld [vmem:[#allocation3 + $0x2f0] sm:$0xff]
        %v2642 = vld [vmem:[#allocation3 + $0x2f8] sm:$0xff]
        %v2643 = vld [vmem:[#allocation3 + $0x300] sm:$0xff]
        %v2644 = vld [vmem:[#allocation3 + $0x308] sm:$0xff]
        %v2645 = vld [vmem:[#allocation3 + $0x310] sm:$0xff]
        %v2646 = vld [vmem:[#allocation3 + $0x318] sm:$0xff]
        %v2647 = vld [vmem:[#allocation3 + $0x320] sm:$0xff]
        %v2648 = vld [vmem:[#allocation3 + $0x328] sm:$0xff]
        %v2649 = vld [vmem:[#allocation3 + $0x330] sm:$0xff]
        %v2650 = vld [vmem:[#allocation3 + $0x338] sm:$0xff]
        %v2651 = vld [vmem:[#allocation3 + $0x340] sm:$0xff]
        %v2652 = vld [vmem:[#allocation3 + $0x348] sm:$0xff]
        %v2653 = vld [vmem:[#allocation3 + $0x350] sm:$0xff]
        %v2654 = vld [vmem:[#allocation3 + $0x358] sm:$0xff]
        %v2655 = vld [vmem:[#allocation3 + $0x360] sm:$0xff]
        %v2656 = vld [vmem:[#allocation3 + $0x368] sm:$0xff]
        %v2657 = vld [vmem:[#allocation3 + $0x370] sm:$0xff]
        %v2658 = vld [vmem:[#allocation3 + $0x378] sm:$0xff]
        %v2659 = vld [vmem:[#allocation3 + $0x380] sm:$0xff]
        %v2660 = vld [vmem:[#allocation3 + $0x388] sm:$0xff]
        %v2661 = vld [vmem:[#allocation3 + $0x390] sm:$0xff]
        %v2662 = vld [vmem:[#allocation3 + $0x398] sm:$0xff]
        %v2663 = vld [vmem:[#allocation3 + $0x3a0] sm:$0xff]
        %v2664 = vld [vmem:[#allocation3 + $0x3a8] sm:$0xff]
        %v2665 = vld [vmem:[#allocation3 + $0x3b0] sm:$0xff]
        %v2666 = vld [vmem:[#allocation3 + $0x3b8] sm:$0xff]
        %v2667 = vld [vmem:[#allocation3 + $0x3c0] sm:$0xff]
        %v2668 = vld [vmem:[#allocation3 + $0x3c8] sm:$0xff]
        %v2669 = vld [vmem:[#allocation3 + $0x3d0] sm:$0xff]
        %v2670 = vld [vmem:[#allocation3 + $0x3d8] sm:$0xff]
        %v2671 = vld [vmem:[#allocation3 + $0x3e0] sm:$0xff]
        %v2672 = vld [vmem:[#allocation3 + $0x3e8] sm:$0xff]
        %v2673 = vld [vmem:[#allocation3 + $0x3f0] sm:$0xff]
        %v2674 = vld [vmem:[#allocation3 + $0x3f8] sm:$0xff]
        %2675 = vmatprep.subr.mxu0 %v2548
        %2676 = vmatpush1.msra.mxu0 %v2547
        %2677 = vmatprep.subr.mxu0 %v2552
        %2678 = vmatpush1.msra.mxu0 %v2551
        %2679 = vmatprep.subr.mxu0 %v2556
        %2680 = vmatpush1.msra.mxu0 %v2555
        %2681 = vmatprep.subr.mxu0 %v2560
        %2682 = vmatpush1.msra.mxu0 %v2559
        %2683 = vmatprep.subr.mxu0 %v2564
        %2684 = vmatpush1.msra.mxu0 %v2563
        %2685 = vmatprep.subr.mxu0 %v2568
        %2686 = vmatpush1.msra.mxu0 %v2567
        %2687 = vmatprep.subr.mxu0 %v2572
        %2688 = vmatpush1.msra.mxu0 %v2571
        %2689 = vmatprep.subr.mxu0 %v2576
        %2690 = vmatpush1.msra.mxu0 %v2575
        %2691 = vmatprep.subr.mxu0 %v2580
        %2692 = vmatpush1.msra.mxu0 %v2579
        %2693 = vmatprep.subr.mxu0 %v2584
        %2694 = vmatpush1.msra.mxu0 %v2583
        %2695 = vmatprep.subr.mxu0 %v2588
        %2696 = vmatpush1.msra.mxu0 %v2587
        %2697 = vmatprep.subr.mxu0 %v2592
        %2698 = vmatpush1.msra.mxu0 %v2591
        %2699 = vmatprep.subr.mxu0 %v2596
        %2700 = vmatpush1.msra.mxu0 %v2595
        %2701 = vmatprep.subr.mxu0 %v2600
        %2702 = vmatpush1.msra.mxu0 %v2599
        %2703 = vmatprep.subr.mxu0 %v2604
        %2704 = vmatpush1.msra.mxu0 %v2603
        %2705 = vmatprep.subr.mxu0 %v2608
        %2706 = vmatpush1.msra.mxu0 %v2607
        %2707 = vmatprep.subr.mxu0 %v2612
        %2708 = vmatpush1.msra.mxu0 %v2611
        %2709 = vmatprep.subr.mxu0 %v2616
        %2710 = vmatpush1.msra.mxu0 %v2615
        %2711 = vmatprep.subr.mxu0 %v2620
        %2712 = vmatpush1.msra.mxu0 %v2619
        %2713 = vmatprep.subr.mxu0 %v2624
        %2714 = vmatpush1.msra.mxu0 %v2623
        %2715 = vmatprep.subr.mxu0 %v2628
        %2716 = vmatpush1.msra.mxu0 %v2627
        %2717 = vmatprep.subr.mxu0 %v2632
        %2718 = vmatpush1.msra.mxu0 %v2631
        %2719 = vmatprep.subr.mxu0 %v2636
        %2720 = vmatpush1.msra.mxu0 %v2635
        %2721 = vmatprep.subr.mxu0 %v2640
        %2722 = vmatpush1.msra.mxu0 %v2639
        %2723 = vmatprep.subr.mxu0 %v2644
        %2724 = vmatpush1.msra.mxu0 %v2643
        %2725 = vmatprep.subr.mxu0 %v2648
        %2726 = vmatpush1.msra.mxu0 %v2647
        %2727 = vmatprep.subr.mxu0 %v2652
        %2728 = vmatpush1.msra.mxu0 %v2651
        %2729 = vmatprep.subr.mxu0 %v2656
        %2730 = vmatpush1.msra.mxu0 %v2655
        %2731 = vmatprep.subr.mxu0 %v2660
        %2732 = vmatpush1.msra.mxu0 %v2659
        %2733 = vmatprep.subr.mxu0 %v2664
        %2734 = vmatpush1.msra.mxu0 %v2663
        %2735 = vmatprep.subr.mxu0 %v2668
        %2736 = vmatpush1.msra.mxu0 %v2667
        %2737 = vmatprep.subr.mxu0 %v2672
        %2738 = vmatpush1.msra.mxu0 %v2671
        %2739 = vmatprep.mubr.f32.mxu0 %v2544
        %2740 = vmatmul.mubr.f32.gmra.mrb[0].mxu0 %v2543
        %v2741 = vpop.f32.mrb[0].mxu0
        %v2742 = vadd.f32 0.0, %v2741
        %v2743 = vpop.f32.mrb[0].mxu0
        %v2744 = vadd.f32 0.0, %v2743
        %2745 = vmatprep.mubr.f32.mxu0 %v2546
        %2746 = vmatmul.mubr.f32.gmra.mrb[0].mxu0 %v2545
        %v2747 = vpop.f32.mrb[0].mxu0
        %v2748 = vadd.f32 0.0, %v2747
        %v2749 = vpop.f32.mrb[0].mxu0
        %v2750 = vadd.f32 0.0, %v2749
        %2751 = vdwg.mxu0
        %2752 = vmatprep.subr.mxu0 %v2550
        %2753 = vmatpush1.msra.mxu0 %v2549
        %2754 = vmatprep.subr.mxu0 %v2554
        %2755 = vmatpush1.msra.mxu0 %v2553
        %2756 = vmatprep.subr.mxu0 %v2558
        %2757 = vmatpush1.msra.mxu0 %v2557
        %2758 = vmatprep.subr.mxu0 %v2562
        %2759 = vmatpush1.msra.mxu0 %v2561
        %2760 = vmatprep.subr.mxu0 %v2566
        %2761 = vmatpush1.msra.mxu0 %v2565
        %2762 = vmatprep.subr.mxu0 %v2570
        %2763 = vmatpush1.msra.mxu0 %v2569
        %2764 = vmatprep.subr.mxu0 %v2574
        %2765 = vmatpush1.msra.mxu0 %v2573
        %2766 = vmatprep.subr.mxu0 %v2578
        %2767 = vmatpush1.msra.mxu0 %v2577
        %2768 = vmatprep.subr.mxu0 %v2582
        %2769 = vmatpush1.msra.mxu0 %v2581
        %2770 = vmatprep.subr.mxu0 %v2586
        %2771 = vmatpush1.msra.mxu0 %v2585
        %2772 = vmatprep.subr.mxu0 %v2590
        %2773 = vmatpush1.msra.mxu0 %v2589
        %2774 = vmatprep.subr.mxu0 %v2594
        %2775 = vmatpush1.msra.mxu0 %v2593
        %2776 = vmatprep.subr.mxu0 %v2598
        %2777 = vmatpush1.msra.mxu0 %v2597
        %2778 = vmatprep.subr.mxu0 %v2602
        %2779 = vmatpush1.msra.mxu0 %v2601
        %2780 = vmatprep.subr.mxu0 %v2606
        %2781 = vmatpush1.msra.mxu0 %v2605
        %2782 = vmatprep.subr.mxu0 %v2610
        %2783 = vmatpush1.msra.mxu0 %v2609
        %2784 = vmatprep.subr.mxu0 %v2614
        %2785 = vmatpush1.msra.mxu0 %v2613
        %2786 = vmatprep.subr.mxu0 %v2618
        %2787 = vmatpush1.msra.mxu0 %v2617
        %2788 = vmatprep.subr.mxu0 %v2622
        %2789 = vmatpush1.msra.mxu0 %v2621
        %2790 = vmatprep.subr.mxu0 %v2626
        %2791 = vmatpush1.msra.mxu0 %v2625
        %2792 = vmatprep.subr.mxu0 %v2630
        %2793 = vmatpush1.msra.mxu0 %v2629
        %2794 = vmatprep.subr.mxu0 %v2634
        %2795 = vmatpush1.msra.mxu0 %v2633
        %2796 = vmatprep.subr.mxu0 %v2638
        %2797 = vmatpush1.msra.mxu0 %v2637
        %2798 = vmatprep.subr.mxu0 %v2642
        %2799 = vmatpush1.msra.mxu0 %v2641
        %2800 = vmatprep.subr.mxu0 %v2646
        %2801 = vmatpush1.msra.mxu0 %v2645
        %2802 = vmatprep.subr.mxu0 %v2650
        %2803 = vmatpush1.msra.mxu0 %v2649
        %2804 = vmatprep.subr.mxu0 %v2654
        %2805 = vmatpush1.msra.mxu0 %v2653
        %2806 = vmatprep.subr.mxu0 %v2658
        %2807 = vmatpush1.msra.mxu0 %v2657
        %2808 = vmatprep.subr.mxu0 %v2662
        %2809 = vmatpush1.msra.mxu0 %v2661
        %2810 = vmatprep.subr.mxu0 %v2666
        %2811 = vmatpush1.msra.mxu0 %v2665
        %2812 = vmatprep.subr.mxu0 %v2670
        %2813 = vmatpush1.msra.mxu0 %v2669
        %2814 = vmatprep.subr.mxu0 %v2674
        %2815 = vmatpush1.msra.mxu0 %v2673
        %2816 = vmatprep.mubr.f32.mxu0 %v2544
        %2817 = vmatmul.mubr.f32.gmra.mrb[0].mxu0 %v2543
        %v2818 = vpop.f32.mrb[0].mxu0
        %v2819 = vadd.f32 0.0, %v2818
        %v2820 = vpop.f32.mrb[0].mxu0
        %v2821 = vadd.f32 0.0, %v2820
        %2822 = vmatprep.mubr.f32.mxu0 %v2546
        %2823 = vmatmul.mubr.f32.gmra.mrb[0].mxu0 %v2545
        %v2824 = vpop.f32.mrb[0].mxu0
        %v2825 = vadd.f32 0.0, %v2824
        %v2826 = vpop.f32.mrb[0].mxu0
        %v2827 = vadd.f32 0.0, %v2826
        %2828 = vdwg.mxu0
        %v2829 = vadd.f32 %v278, %v2742
        %v2830 = vadd.f32 %v282, %v2744
        %v2831 = vadd.f32 %v286, %v2819
        %v2832 = vadd.f32 %v290, %v2821
        %v2833 = vadd.f32 %v278, %v2748
        %v2834 = vadd.f32 %v282, %v2750
        %v2835 = vadd.f32 %v286, %v2825
        %v2836 = vadd.f32 %v290, %v2827
        %v2837 = vld [vmem:[%s883] sm:$0xff]
        %v2838 = vld [vmem:[%s883 + $0x8] sm:$0xff]
        %v2839 = vxor.u32 %v2829, 2147483648
        %v2840 = vxor.u32 %v2833, 2147483648
        %v2841 = vmul.f32 %v2839, 1.442695
        %v2842 = vpow.pop %v2841
        %v2843 = vmul.f32 %v2840, 1.442695
        %v2844 = vpow.pop %v2843
        %v2845 = vadd.f32 %v2842, 1.0
        %v2846 = vadd.f32 %v2844, 1.0
        %v2847 = vrcp.pop %v2845
        %v2848 = vmul.f32 1.0, %v2847
        %v2849 = vrcp.pop %v2846
        %v2850 = vmul.f32 1.0, %v2849
        %v2851 = vxor.u32 %v2830, 2147483648
        %v2852 = vxor.u32 %v2834, 2147483648
        %v2853 = vmul.f32 %v2851, 1.442695
        %v2854 = vpow.pop %v2853
        %v2855 = vmul.f32 %v2852, 1.442695
        %v2856 = vpow.pop %v2855
        %v2857 = vadd.f32 %v2854, 1.0
        %v2858 = vadd.f32 %v2856, 1.0
        %v2859 = vrcp.pop %v2857
        %v2860 = vmul.f32 1.0, %v2859
        %v2861 = vrcp.pop %v2858
        %v2862 = vmul.f32 1.0, %v2861
        %v2863 = vtanh.pop %v2831
        %v2864 = vtanh.pop %v2835
        %v2865 = vxor.u32 %v2832, 2147483648
        %v2866 = vxor.u32 %v2836, 2147483648
        %v2867 = vmul.f32 %v2865, 1.442695
        %v2868 = vpow.pop %v2867
        %v2869 = vmul.f32 %v2866, 1.442695
        %v2870 = vpow.pop %v2869
        %v2871 = vadd.f32 %v2868, 1.0
        %v2872 = vadd.f32 %v2870, 1.0
        %v2873 = vrcp.pop %v2871
        %v2874 = vmul.f32 1.0, %v2873
        %v2875 = vrcp.pop %v2872
        %v2876 = vmul.f32 1.0, %v2875
        %v2877 = vmul.f32 %v2860, %v2837
        %v2878 = vmul.f32 %v2862, %v2838
        %v2879 = vmul.f32 %v2848, %v2863
        %v2880 = vmul.f32 %v2850, %v2864
        %v2881 = vadd.f32 %v2877, %v2879
        %v2882 = vadd.f32 %v2878, %v2880
        %v2883 = vtanh.pop %v2881
        %v2884 = vtanh.pop %v2882
        %v2885 = vmul.f32 %v2874, %v2883
        %v2886 = vmul.f32 %v2876, %v2884
        %2887 = vst [vmem:[%s883] sm:$0xff] %v2881
        %2888 = vst [vmem:[%s883 + $0x8] sm:$0xff] %v2882
        %2889 = vst [vmem:[#allocation4 + $0x8] sm:$0xff] %v2885
        %2890 = vst [vmem:[#allocation4 + $0x18] sm:$0xff] %v2886
        %s2891 = scalar_lea.vmem %s216, 112 [#allocation9]
        %2892 = vst [vmem:[%s2891] sm:$0xff] %v2885
        %2893 = vst [vmem:[%s2891 + $0x8] sm:$0xff] %v2886
        %s2894 = scalar_lea.vmem %s223, 112 [#allocation10]
        %2895 = vst [vmem:[%s2894] sm:$0xff] %v2881
        %2896 = vst [vmem:[%s2894 + $0x8] sm:$0xff] %v2882
        %s2897 = scalar_lea.vmem %s196, 256 [#allocation6]
        %v2898 = vld [vmem:[%s2897] sm:$0xff]
        %v2899 = vld [vmem:[%s2897 + $0x8] sm:$0xff]
        %v2900 = vld [vmem:[%s2897 + $0x10] sm:$0xff]
        %v2901 = vld [vmem:[%s2897 + $0x18] sm:$0xff]
        %v2902 = vld [vmem:[%s2897 + $0x20] sm:$0xff]
        %v2903 = vld [vmem:[%s2897 + $0x28] sm:$0xff]
        %v2904 = vld [vmem:[%s2897 + $0x30] sm:$0xff]
        %v2905 = vld [vmem:[%s2897 + $0x38] sm:$0xff]
        %v2906 = vld [vmem:[#allocation4] sm:$0xff]
        %v2907 = vld [vmem:[#allocation4 + $0x10] sm:$0xff]
        %v2908 = vld [vmem:[#allocation2] sm:$0xff]
        %v2909 = vld [vmem:[#allocation2 + $0x8] sm:$0xff]
        %v2910 = vld [vmem:[#allocation2 + $0x10] sm:$0xff]
        %v2911 = vld [vmem:[#allocation2 + $0x18] sm:$0xff]
        %v2912 = vld [vmem:[#allocation2 + $0x20] sm:$0xff]
        %v2913 = vld [vmem:[#allocation2 + $0x28] sm:$0xff]
        %v2914 = vld [vmem:[#allocation2 + $0x30] sm:$0xff]
        %v2915 = vld [vmem:[#allocation2 + $0x38] sm:$0xff]
        %v2916 = vld [vmem:[#allocation2 + $0x40] sm:$0xff]
        %v2917 = vld [vmem:[#allocation2 + $0x48] sm:$0xff]
        %v2918 = vld [vmem:[#allocation2 + $0x50] sm:$0xff]
        %v2919 = vld [vmem:[#allocation2 + $0x58] sm:$0xff]
        %v2920 = vld [vmem:[#allocation2 + $0x60] sm:$0xff]
        %v2921 = vld [vmem:[#allocation2 + $0x68] sm:$0xff]
        %v2922 = vld [vmem:[#allocation2 + $0x70] sm:$0xff]
        %v2923 = vld [vmem:[#allocation2 + $0x78] sm:$0xff]
        %v2924 = vld [vmem:[#allocation2 + $0x80] sm:$0xff]
        %v2925 = vld [vmem:[#allocation2 + $0x88] sm:$0xff]
        %v2926 = vld [vmem:[#allocation2 + $0x90] sm:$0xff]
        %v2927 = vld [vmem:[#allocation2 + $0x98] sm:$0xff]
        %v2928 = vld [vmem:[#allocation2 + $0xa0] sm:$0xff]
        %v2929 = vld [vmem:[#allocation2 + $0xa8] sm:$0xff]
        %v2930 = vld [vmem:[#allocation2 + $0xb0] sm:$0xff]
        %v2931 = vld [vmem:[#allocation2 + $0xb8] sm:$0xff]
        %v2932 = vld [vmem:[#allocation2 + $0xc0] sm:$0xff]
        %v2933 = vld [vmem:[#allocation2 + $0xc8] sm:$0xff]
        %v2934 = vld [vmem:[#allocation2 + $0xd0] sm:$0xff]
        %v2935 = vld [vmem:[#allocation2 + $0xd8] sm:$0xff]
        %v2936 = vld [vmem:[#allocation2 + $0xe0] sm:$0xff]
        %v2937 = vld [vmem:[#allocation2 + $0xe8] sm:$0xff]
        %v2938 = vld [vmem:[#allocation2 + $0xf0] sm:$0xff]
        %v2939 = vld [vmem:[#allocation2 + $0xf8] sm:$0xff]
        %v2940 = vld [vmem:[#allocation2 + $0x100] sm:$0xff]
        %v2941 = vld [vmem:[#allocation2 + $0x108] sm:$0xff]
        %v2942 = vld [vmem:[#allocation2 + $0x110] sm:$0xff]
        %v2943 = vld [vmem:[#allocation2 + $0x118] sm:$0xff]
        %v2944 = vld [vmem:[#allocation2 + $0x120] sm:$0xff]
        %v2945 = vld [vmem:[#allocation2 + $0x128] sm:$0xff]
        %v2946 = vld [vmem:[#allocation2 + $0x130] sm:$0xff]
        %v2947 = vld [vmem:[#allocation2 + $0x138] sm:$0xff]
        %v2948 = vld [vmem:[#allocation2 + $0x140] sm:$0xff]
        %v2949 = vld [vmem:[#allocation2 + $0x148] sm:$0xff]
        %v2950 = vld [vmem:[#allocation2 + $0x150] sm:$0xff]
        %v2951 = vld [vmem:[#allocation2 + $0x158] sm:$0xff]
        %v2952 = vld [vmem:[#allocation2 + $0x160] sm:$0xff]
        %v2953 = vld [vmem:[#allocation2 + $0x168] sm:$0xff]
        %v2954 = vld [vmem:[#allocation2 + $0x170] sm:$0xff]
        %v2955 = vld [vmem:[#allocation2 + $0x178] sm:$0xff]
        %v2956 = vld [vmem:[#allocation2 + $0x180] sm:$0xff]
        %v2957 = vld [vmem:[#allocation2 + $0x188] sm:$0xff]
        %v2958 = vld [vmem:[#allocation2 + $0x190] sm:$0xff]
        %v2959 = vld [vmem:[#allocation2 + $0x198] sm:$0xff]
        %v2960 = vld [vmem:[#allocation2 + $0x1a0] sm:$0xff]
        %v2961 = vld [vmem:[#allocation2 + $0x1a8] sm:$0xff]
        %v2962 = vld [vmem:[#allocation2 + $0x1b0] sm:$0xff]
        %v2963 = vld [vmem:[#allocation2 + $0x1b8] sm:$0xff]
        %v2964 = vld [vmem:[#allocation2 + $0x1c0] sm:$0xff]
        %v2965 = vld [vmem:[#allocation2 + $0x1c8] sm:$0xff]
        %v2966 = vld [vmem:[#allocation2 + $0x1d0] sm:$0xff]
        %v2967 = vld [vmem:[#allocation2 + $0x1d8] sm:$0xff]
        %v2968 = vld [vmem:[#allocation2 + $0x1e0] sm:$0xff]
        %v2969 = vld [vmem:[#allocation2 + $0x1e8] sm:$0xff]
        %v2970 = vld [vmem:[#allocation2 + $0x1f0] sm:$0xff]
        %v2971 = vld [vmem:[#allocation2 + $0x1f8] sm:$0xff]
        %2972 = vmatprep.subr.mxu0 %v2909
        %2973 = vmatpush1.msra.mxu0 %v2908
        %2974 = vmatprep.subr.mxu0 %v2913
        %2975 = vmatpush1.msra.mxu0 %v2912
        %2976 = vmatprep.subr.mxu0 %v2917
        %2977 = vmatpush1.msra.mxu0 %v2916
        %2978 = vmatprep.subr.mxu0 %v2921
        %2979 = vmatpush1.msra.mxu0 %v2920
        %2980 = vmatprep.subr.mxu0 %v2925
        %2981 = vmatpush1.msra.mxu0 %v2924
        %2982 = vmatprep.subr.mxu0 %v2929
        %2983 = vmatpush1.msra.mxu0 %v2928
        %2984 = vmatprep.subr.mxu0 %v2933
        %2985 = vmatpush1.msra.mxu0 %v2932
        %2986 = vmatprep.subr.mxu0 %v2937
        %2987 = vmatpush1.msra.mxu0 %v2936
        %2988 = vmatprep.subr.mxu0 %v2941
        %2989 = vmatpush1.msra.mxu0 %v2940
        %2990 = vmatprep.subr.mxu0 %v2945
        %2991 = vmatpush1.msra.mxu0 %v2944
        %2992 = vmatprep.subr.mxu0 %v2949
        %2993 = vmatpush1.msra.mxu0 %v2948
        %2994 = vmatprep.subr.mxu0 %v2953
        %2995 = vmatpush1.msra.mxu0 %v2952
        %2996 = vmatprep.subr.mxu0 %v2957
        %2997 = vmatpush1.msra.mxu0 %v2956
        %2998 = vmatprep.subr.mxu0 %v2961
        %2999 = vmatpush1.msra.mxu0 %v2960
        %3000 = vmatprep.subr.mxu0 %v2965
        %3001 = vmatpush1.msra.mxu0 %v2964
        %3002 = vmatprep.subr.mxu0 %v2969
        %3003 = vmatpush1.msra.mxu0 %v2968
        %3004 = vmatprep.subr.mxu0 0.0
        %3005 = vmatpush1.msra.mxu0 0.0
        %3006 = vmatprep.subr.mxu0 0.0
        %3007 = vmatpush1.msra.mxu0 0.0
        %3008 = vmatprep.subr.mxu0 0.0
        %3009 = vmatpush1.msra.mxu0 0.0
        %3010 = vmatprep.subr.mxu0 0.0
        %3011 = vmatpush1.msra.mxu0 0.0
        %3012 = vmatprep.subr.mxu0 0.0
        %3013 = vmatpush1.msra.mxu0 0.0
        %3014 = vmatprep.subr.mxu0 0.0
        %3015 = vmatpush1.msra.mxu0 0.0
        %3016 = vmatprep.subr.mxu0 0.0
        %3017 = vmatpush1.msra.mxu0 0.0
        %3018 = vmatprep.subr.mxu0 0.0
        %3019 = vmatpush1.msra.mxu0 0.0
        %3020 = vmatprep.subr.mxu0 0.0
        %3021 = vmatpush1.msra.mxu0 0.0
        %3022 = vmatprep.subr.mxu0 0.0
        %3023 = vmatpush1.msra.mxu0 0.0
        %3024 = vmatprep.subr.mxu0 0.0
        %3025 = vmatpush1.msra.mxu0 0.0
        %3026 = vmatprep.subr.mxu0 0.0
        %3027 = vmatpush1.msra.mxu0 0.0
        %3028 = vmatprep.subr.mxu0 0.0
        %3029 = vmatpush1.msra.mxu0 0.0
        %3030 = vmatprep.subr.mxu0 0.0
        %3031 = vmatpush1.msra.mxu0 0.0
        %3032 = vmatprep.subr.mxu0 0.0
        %3033 = vmatpush1.msra.mxu0 0.0
        %3034 = vmatprep.subr.mxu0 0.0
        %3035 = vmatpush1.msra.mxu0 0.0
        %3036 = vmatprep.mubr.f32.mxu0 0.0
        %3037 = vmatmul.mubr.f32.gmra.mrb[0].mxu0 %v2906
        %v3038 = vpop.f32.mrb[0].mxu0
        %v3039 = vadd.f32 0.0, %v3038
        %v3040 = vpop.f32.mrb[0].mxu0
        %v3041 = vadd.f32 0.0, %v3040
        %3042 = vmatprep.mubr.f32.mxu0 0.0
        %3043 = vmatmul.mubr.f32.gmra.mrb[0].mxu0 %v2907
        %v3044 = vpop.f32.mrb[0].mxu0
        %v3045 = vadd.f32 0.0, %v3044
        %v3046 = vpop.f32.mrb[0].mxu0
        %v3047 = vadd.f32 0.0, %v3046
        %3048 = vdwg.mxu0
        %3049 = vmatprep.subr.mxu0 %v2911
        %3050 = vmatpush1.msra.mxu0 %v2910
        %3051 = vmatprep.subr.mxu0 %v2915
        %3052 = vmatpush1.msra.mxu0 %v2914
        %3053 = vmatprep.subr.mxu0 %v2919
        %3054 = vmatpush1.msra.mxu0 %v2918
        %3055 = vmatprep.subr.mxu0 %v2923
        %3056 = vmatpush1.msra.mxu0 %v2922
        %3057 = vmatprep.subr.mxu0 %v2927
        %3058 = vmatpush1.msra.mxu0 %v2926
        %3059 = vmatprep.subr.mxu0 %v2931
        %3060 = vmatpush1.msra.mxu0 %v2930
        %3061 = vmatprep.subr.mxu0 %v2935
        %3062 = vmatpush1.msra.mxu0 %v2934
        %3063 = vmatprep.subr.mxu0 %v2939
        %3064 = vmatpush1.msra.mxu0 %v2938
        %3065 = vmatprep.subr.mxu0 %v2943
        %3066 = vmatpush1.msra.mxu0 %v2942
        %3067 = vmatprep.subr.mxu0 %v2947
        %3068 = vmatpush1.msra.mxu0 %v2946
        %3069 = vmatprep.subr.mxu0 %v2951
        %3070 = vmatpush1.msra.mxu0 %v2950
        %3071 = vmatprep.subr.mxu0 %v2955
        %3072 = vmatpush1.msra.mxu0 %v2954
        %3073 = vmatprep.subr.mxu0 %v2959
        %3074 = vmatpush1.msra.mxu0 %v2958
        %3075 = vmatprep.subr.mxu0 %v2963
        %3076 = vmatpush1.msra.mxu0 %v2962
        %3077 = vmatprep.subr.mxu0 %v2967
        %3078 = vmatpush1.msra.mxu0 %v2966
        %3079 = vmatprep.subr.mxu0 %v2971
        %3080 = vmatpush1.msra.mxu0 %v2970
        %3081 = vmatprep.subr.mxu0 0.0
        %3082 = vmatpush1.msra.mxu0 0.0
        %3083 = vmatprep.subr.mxu0 0.0
        %3084 = vmatpush1.msra.mxu0 0.0
        %3085 = vmatprep.subr.mxu0 0.0
        %3086 = vmatpush1.msra.mxu0 0.0
        %3087 = vmatprep.subr.mxu0 0.0
        %3088 = vmatpush1.msra.mxu0 0.0
        %3089 = vmatprep.subr.mxu0 0.0
        %3090 = vmatpush1.msra.mxu0 0.0
        %3091 = vmatprep.subr.mxu0 0.0
        %3092 = vmatpush1.msra.mxu0 0.0
        %3093 = vmatprep.subr.mxu0 0.0
        %3094 = vmatpush1.msra.mxu0 0.0
        %3095 = vmatprep.subr.mxu0 0.0
        %3096 = vmatpush1.msra.mxu0 0.0
        %3097 = vmatprep.subr.mxu0 0.0
        %3098 = vmatpush1.msra.mxu0 0.0
        %3099 = vmatprep.subr.mxu0 0.0
        %3100 = vmatpush1.msra.mxu0 0.0
        %3101 = vmatprep.subr.mxu0 0.0
        %3102 = vmatpush1.msra.mxu0 0.0
        %3103 = vmatprep.subr.mxu0 0.0
        %3104 = vmatpush1.msra.mxu0 0.0
        %3105 = vmatprep.subr.mxu0 0.0
        %3106 = vmatpush1.msra.mxu0 0.0
        %3107 = vmatprep.subr.mxu0 0.0
        %3108 = vmatpush1.msra.mxu0 0.0
        %3109 = vmatprep.subr.mxu0 0.0
        %3110 = vmatpush1.msra.mxu0 0.0
        %3111 = vmatprep.subr.mxu0 0.0
        %3112 = vmatpush1.msra.mxu0 0.0
        %3113 = vmatprep.mubr.f32.mxu0 0.0
        %3114 = vmatmul.mubr.f32.gmra.mrb[0].mxu0 %v2906
        %v3115 = vpop.f32.mrb[0].mxu0
        %v3116 = vadd.f32 0.0, %v3115
        %v3117 = vpop.f32.mrb[0].mxu0
        %v3118 = vadd.f32 0.0, %v3117
        %3119 = vmatprep.mubr.f32.mxu0 0.0
        %3120 = vmatmul.mubr.f32.gmra.mrb[0].mxu0 %v2907
        %v3121 = vpop.f32.mrb[0].mxu0
        %v3122 = vadd.f32 0.0, %v3121
        %v3123 = vpop.f32.mrb[0].mxu0
        %v3124 = vadd.f32 0.0, %v3123
        %3125 = vdwg.mxu0
        %v3126 = vadd.f32 %v2898, %v3039
        %v3127 = vadd.f32 %v2899, %v3041
        %v3128 = vadd.f32 %v2900, %v3116
        %v3129 = vadd.f32 %v2901, %v3118
        %v3130 = vadd.f32 %v2902, %v3045
        %v3131 = vadd.f32 %v2903, %v3047
        %v3132 = vadd.f32 %v2904, %v3122
        %v3133 = vadd.f32 %v2905, %v3124
        %v3134 = vld [vmem:[#allocation5] sm:$0xff]
        %v3135 = vld [vmem:[#allocation5 + $0x8] sm:$0xff]
        %v3136 = vxor.u32 %v3126, 2147483648
        %v3137 = vxor.u32 %v3130, 2147483648
        %v3138 = vmul.f32 %v3136, 1.442695
        %v3139 = vpow.pop %v3138
        %v3140 = vmul.f32 %v3137, 1.442695
        %v3141 = vpow.pop %v3140
        %v3142 = vadd.f32 %v3139, 1.0
        %v3143 = vadd.f32 %v3141, 1.0
        %v3144 = vrcp.pop %v3142
        %v3145 = vmul.f32 1.0, %v3144
        %v3146 = vrcp.pop %v3143
        %v3147 = vmul.f32 1.0, %v3146
        %v3148 = vxor.u32 %v3127, 2147483648
        %v3149 = vxor.u32 %v3131, 2147483648
        %v3150 = vmul.f32 %v3148, 1.442695
        %v3151 = vpow.pop %v3150
        %v3152 = vmul.f32 %v3149, 1.442695
        %v3153 = vpow.pop %v3152
        %v3154 = vadd.f32 %v3151, 1.0
        %v3155 = vadd.f32 %v3153, 1.0
        %v3156 = vrcp.pop %v3154
        %v3157 = vmul.f32 1.0, %v3156
        %v3158 = vrcp.pop %v3155
        %v3159 = vmul.f32 1.0, %v3158
        %v3160 = vtanh.pop %v3128
        %v3161 = vtanh.pop %v3132
        %v3162 = vxor.u32 %v3129, 2147483648
        %v3163 = vxor.u32 %v3133, 2147483648
        %v3164 = vmul.f32 %v3162, 1.442695
        %v3165 = vpow.pop %v3164
        %v3166 = vmul.f32 %v3163, 1.442695
        %v3167 = vpow.pop %v3166
        %v3168 = vadd.f32 %v3165, 1.0
        %v3169 = vadd.f32 %v3167, 1.0
        %v3170 = vrcp.pop %v3168
        %v3171 = vmul.f32 1.0, %v3170
        %v3172 = vrcp.pop %v3169
        %v3173 = vmul.f32 1.0, %v3172
        %v3174 = vmul.f32 %v3157, %v3134
        %v3175 = vmul.f32 %v3159, %v3135
        %v3176 = vmul.f32 %v3145, %v3160
        %v3177 = vmul.f32 %v3147, %v3161
        %v3178 = vadd.f32 %v3174, %v3176
        %v3179 = vadd.f32 %v3175, %v3177
        %v3180 = vtanh.pop %v3178
        %v3181 = vtanh.pop %v3179
        %v3182 = vmul.f32 %v3171, %v3180
        %v3183 = vmul.f32 %v3173, %v3181
        %3184 = vst [vmem:[#allocation5] sm:$0xff] %v3178
        %3185 = vst [vmem:[#allocation5 + $0x8] sm:$0xff] %v3179
        %3186 = vst [vmem:[#allocation4] sm:$0xff] %v3182
        %3187 = vst [vmem:[#allocation4 + $0x10] sm:$0xff] %v3183
        %s3188 = scalar_lea.vmem %s216, 128 [#allocation9]
        %3189 = vst [vmem:[%s3188] sm:$0xff] %v3182
        %3190 = vst [vmem:[%s3188 + $0x8] sm:$0xff] %v3183
        %s3191 = scalar_lea.vmem %s223, 128 [#allocation10]
        %3192 = vst [vmem:[%s3191] sm:$0xff] %v3178
        %3193 = vst [vmem:[%s3191 + $0x8] sm:$0xff] %v3179
        %v3194 = vld [vmem:[#allocation4] sm:$0xff]
        %v3195 = vld [vmem:[#allocation4 + $0x8] sm:$0xff]
        %v3196 = vld [vmem:[#allocation4 + $0x10] sm:$0xff]
        %v3197 = vld [vmem:[#allocation4 + $0x18] sm:$0xff]
        %v3198 = vld [vmem:[#allocation3] sm:$0xff]
        %v3199 = vld [vmem:[#allocation3 + $0x8] sm:$0xff]
        %v3200 = vld [vmem:[#allocation3 + $0x10] sm:$0xff]
        %v3201 = vld [vmem:[#allocation3 + $0x18] sm:$0xff]
        %v3202 = vld [vmem:[#allocation3 + $0x20] sm:$0xff]
        %v3203 = vld [vmem:[#allocation3 + $0x28] sm:$0xff]
        %v3204 = vld [vmem:[#allocation3 + $0x30] sm:$0xff]
        %v3205 = vld [vmem:[#allocation3 + $0x38] sm:$0xff]
        %v3206 = vld [vmem:[#allocation3 + $0x40] sm:$0xff]
        %v3207 = vld [vmem:[#allocation3 + $0x48] sm:$0xff]
        %v3208 = vld [vmem:[#allocation3 + $0x50] sm:$0xff]
        %v3209 = vld [vmem:[#allocation3 + $0x58] sm:$0xff]
        %v3210 = vld [vmem:[#allocation3 + $0x60] sm:$0xff]
        %v3211 = vld [vmem:[#allocation3 + $0x68] sm:$0xff]
        %v3212 = vld [vmem:[#allocation3 + $0x70] sm:$0xff]
        %v3213 = vld [vmem:[#allocation3 + $0x78] sm:$0xff]
        %v3214 = vld [vmem:[#allocation3 + $0x80] sm:$0xff]
        %v3215 = vld [vmem:[#allocation3 + $0x88] sm:$0xff]
        %v3216 = vld [vmem:[#allocation3 + $0x90] sm:$0xff]
        %v3217 = vld [vmem:[#allocation3 + $0x98] sm:$0xff]
        %v3218 = vld [vmem:[#allocation3 + $0xa0] sm:$0xff]
        %v3219 = vld [vmem:[#allocation3 + $0xa8] sm:$0xff]
        %v3220 = vld [vmem:[#allocation3 + $0xb0] sm:$0xff]
        %v3221 = vld [vmem:[#allocation3 + $0xb8] sm:$0xff]
        %v3222 = vld [vmem:[#allocation3 + $0xc0] sm:$0xff]
        %v3223 = vld [vmem:[#allocation3 + $0xc8] sm:$0xff]
        %v3224 = vld [vmem:[#allocation3 + $0xd0] sm:$0xff]
        %v3225 = vld [vmem:[#allocation3 + $0xd8] sm:$0xff]
        %v3226 = vld [vmem:[#allocation3 + $0xe0] sm:$0xff]
        %v3227 = vld [vmem:[#allocation3 + $0xe8] sm:$0xff]
        %v3228 = vld [vmem:[#allocation3 + $0xf0] sm:$0xff]
        %v3229 = vld [vmem:[#allocation3 + $0xf8] sm:$0xff]
        %v3230 = vld [vmem:[#allocation3 + $0x100] sm:$0xff]
        %v3231 = vld [vmem:[#allocation3 + $0x108] sm:$0xff]
        %v3232 = vld [vmem:[#allocation3 + $0x110] sm:$0xff]
        %v3233 = vld [vmem:[#allocation3 + $0x118] sm:$0xff]
        %v3234 = vld [vmem:[#allocation3 + $0x120] sm:$0xff]
        %v3235 = vld [vmem:[#allocation3 + $0x128] sm:$0xff]
        %v3236 = vld [vmem:[#allocation3 + $0x130] sm:$0xff]
        %v3237 = vld [vmem:[#allocation3 + $0x138] sm:$0xff]
        %v3238 = vld [vmem:[#allocation3 + $0x140] sm:$0xff]
        %v3239 = vld [vmem:[#allocation3 + $0x148] sm:$0xff]
        %v3240 = vld [vmem:[#allocation3 + $0x150] sm:$0xff]
        %v3241 = vld [vmem:[#allocation3 + $0x158] sm:$0xff]
        %v3242 = vld [vmem:[#allocation3 + $0x160] sm:$0xff]
        %v3243 = vld [vmem:[#allocation3 + $0x168] sm:$0xff]
        %v3244 = vld [vmem:[#allocation3 + $0x170] sm:$0xff]
        %v3245 = vld [vmem:[#allocation3 + $0x178] sm:$0xff]
        %v3246 = vld [vmem:[#allocation3 + $0x180] sm:$0xff]
        %v3247 = vld [vmem:[#allocation3 + $0x188] sm:$0xff]
        %v3248 = vld [vmem:[#allocation3 + $0x190] sm:$0xff]
        %v3249 = vld [vmem:[#allocation3 + $0x198] sm:$0xff]
        %v3250 = vld [vmem:[#allocation3 + $0x1a0] sm:$0xff]
        %v3251 = vld [vmem:[#allocation3 + $0x1a8] sm:$0xff]
        %v3252 = vld [vmem:[#allocation3 + $0x1b0] sm:$0xff]
        %v3253 = vld [vmem:[#allocation3 + $0x1b8] sm:$0xff]
        %v3254 = vld [vmem:[#allocation3 + $0x1c0] sm:$0xff]
        %v3255 = vld [vmem:[#allocation3 + $0x1c8] sm:$0xff]
        %v3256 = vld [vmem:[#allocation3 + $0x1d0] sm:$0xff]
        %v3257 = vld [vmem:[#allocation3 + $0x1d8] sm:$0xff]
        %v3258 = vld [vmem:[#allocation3 + $0x1e0] sm:$0xff]
        %v3259 = vld [vmem:[#allocation3 + $0x1e8] sm:$0xff]
        %v3260 = vld [vmem:[#allocation3 + $0x1f0] sm:$0xff]
        %v3261 = vld [vmem:[#allocation3 + $0x1f8] sm:$0xff]
        %v3262 = vld [vmem:[#allocation3 + $0x200] sm:$0xff]
        %v3263 = vld [vmem:[#allocation3 + $0x208] sm:$0xff]
        %v3264 = vld [vmem:[#allocation3 + $0x210] sm:$0xff]
        %v3265 = vld [vmem:[#allocation3 + $0x218] sm:$0xff]
        %v3266 = vld [vmem:[#allocation3 + $0x220] sm:$0xff]
        %v3267 = vld [vmem:[#allocation3 + $0x228] sm:$0xff]
        %v3268 = vld [vmem:[#allocation3 + $0x230] sm:$0xff]
        %v3269 = vld [vmem:[#allocation3 + $0x238] sm:$0xff]
        %v3270 = vld [vmem:[#allocation3 + $0x240] sm:$0xff]
        %v3271 = vld [vmem:[#allocation3 + $0x248] sm:$0xff]
        %v3272 = vld [vmem:[#allocation3 + $0x250] sm:$0xff]
        %v3273 = vld [vmem:[#allocation3 + $0x258] sm:$0xff]
        %v3274 = vld [vmem:[#allocation3 + $0x260] sm:$0xff]
        %v3275 = vld [vmem:[#allocation3 + $0x268] sm:$0xff]
        %v3276 = vld [vmem:[#allocation3 + $0x270] sm:$0xff]
        %v3277 = vld [vmem:[#allocation3 + $0x278] sm:$0xff]
        %v3278 = vld [vmem:[#allocation3 + $0x280] sm:$0xff]
        %v3279 = vld [vmem:[#allocation3 + $0x288] sm:$0xff]
        %v3280 = vld [vmem:[#allocation3 + $0x290] sm:$0xff]
        %v3281 = vld [vmem:[#allocation3 + $0x298] sm:$0xff]
        %v3282 = vld [vmem:[#allocation3 + $0x2a0] sm:$0xff]
        %v3283 = vld [vmem:[#allocation3 + $0x2a8] sm:$0xff]
        %v3284 = vld [vmem:[#allocation3 + $0x2b0] sm:$0xff]
        %v3285 = vld [vmem:[#allocation3 + $0x2b8] sm:$0xff]
        %v3286 = vld [vmem:[#allocation3 + $0x2c0] sm:$0xff]
        %v3287 = vld [vmem:[#allocation3 + $0x2c8] sm:$0xff]
        %v3288 = vld [vmem:[#allocation3 + $0x2d0] sm:$0xff]
        %v3289 = vld [vmem:[#allocation3 + $0x2d8] sm:$0xff]
        %v3290 = vld [vmem:[#allocation3 + $0x2e0] sm:$0xff]
        %v3291 = vld [vmem:[#allocation3 + $0x2e8] sm:$0xff]
        %v3292 = vld [vmem:[#allocation3 + $0x2f0] sm:$0xff]
        %v3293 = vld [vmem:[#allocation3 + $0x2f8] sm:$0xff]
        %v3294 = vld [vmem:[#allocation3 + $0x300] sm:$0xff]
        %v3295 = vld [vmem:[#allocation3 + $0x308] sm:$0xff]
        %v3296 = vld [vmem:[#allocation3 + $0x310] sm:$0xff]
        %v3297 = vld [vmem:[#allocation3 + $0x318] sm:$0xff]
        %v3298 = vld [vmem:[#allocation3 + $0x320] sm:$0xff]
        %v3299 = vld [vmem:[#allocation3 + $0x328] sm:$0xff]
        %v3300 = vld [vmem:[#allocation3 + $0x330] sm:$0xff]
        %v3301 = vld [vmem:[#allocation3 + $0x338] sm:$0xff]
        %v3302 = vld [vmem:[#allocation3 + $0x340] sm:$0xff]
        %v3303 = vld [vmem:[#allocation3 + $0x348] sm:$0xff]
        %v3304 = vld [vmem:[#allocation3 + $0x350] sm:$0xff]
        %v3305 = vld [vmem:[#allocation3 + $0x358] sm:$0xff]
        %v3306 = vld [vmem:[#allocation3 + $0x360] sm:$0xff]
        %v3307 = vld [vmem:[#allocation3 + $0x368] sm:$0xff]
        %v3308 = vld [vmem:[#allocation3 + $0x370] sm:$0xff]
        %v3309 = vld [vmem:[#allocation3 + $0x378] sm:$0xff]
        %v3310 = vld [vmem:[#allocation3 + $0x380] sm:$0xff]
        %v3311 = vld [vmem:[#allocation3 + $0x388] sm:$0xff]
        %v3312 = vld [vmem:[#allocation3 + $0x390] sm:$0xff]
        %v3313 = vld [vmem:[#allocation3 + $0x398] sm:$0xff]
        %v3314 = vld [vmem:[#allocation3 + $0x3a0] sm:$0xff]
        %v3315 = vld [vmem:[#allocation3 + $0x3a8] sm:$0xff]
        %v3316 = vld [vmem:[#allocation3 + $0x3b0] sm:$0xff]
        %v3317 = vld [vmem:[#allocation3 + $0x3b8] sm:$0xff]
        %v3318 = vld [vmem:[#allocation3 + $0x3c0] sm:$0xff]
        %v3319 = vld [vmem:[#allocation3 + $0x3c8] sm:$0xff]
        %v3320 = vld [vmem:[#allocation3 + $0x3d0] sm:$0xff]
        %v3321 = vld [vmem:[#allocation3 + $0x3d8] sm:$0xff]
        %v3322 = vld [vmem:[#allocation3 + $0x3e0] sm:$0xff]
        %v3323 = vld [vmem:[#allocation3 + $0x3e8] sm:$0xff]
        %v3324 = vld [vmem:[#allocation3 + $0x3f0] sm:$0xff]
        %v3325 = vld [vmem:[#allocation3 + $0x3f8] sm:$0xff]
        %3326 = vmatprep.subr.mxu0 %v3199
        %3327 = vmatpush1.msra.mxu0 %v3198
        %3328 = vmatprep.subr.mxu0 %v3203
        %3329 = vmatpush1.msra.mxu0 %v3202
        %3330 = vmatprep.subr.mxu0 %v3207
        %3331 = vmatpush1.msra.mxu0 %v3206
        %3332 = vmatprep.subr.mxu0 %v3211
        %3333 = vmatpush1.msra.mxu0 %v3210
        %3334 = vmatprep.subr.mxu0 %v3215
        %3335 = vmatpush1.msra.mxu0 %v3214
        %3336 = vmatprep.subr.mxu0 %v3219
        %3337 = vmatpush1.msra.mxu0 %v3218
        %3338 = vmatprep.subr.mxu0 %v3223
        %3339 = vmatpush1.msra.mxu0 %v3222
        %3340 = vmatprep.subr.mxu0 %v3227
        %3341 = vmatpush1.msra.mxu0 %v3226
        %3342 = vmatprep.subr.mxu0 %v3231
        %3343 = vmatpush1.msra.mxu0 %v3230
        %3344 = vmatprep.subr.mxu0 %v3235
        %3345 = vmatpush1.msra.mxu0 %v3234
        %3346 = vmatprep.subr.mxu0 %v3239
        %3347 = vmatpush1.msra.mxu0 %v3238
        %3348 = vmatprep.subr.mxu0 %v3243
        %3349 = vmatpush1.msra.mxu0 %v3242
        %3350 = vmatprep.subr.mxu0 %v3247
        %3351 = vmatpush1.msra.mxu0 %v3246
        %3352 = vmatprep.subr.mxu0 %v3251
        %3353 = vmatpush1.msra.mxu0 %v3250
        %3354 = vmatprep.subr.mxu0 %v3255
        %3355 = vmatpush1.msra.mxu0 %v3254
        %3356 = vmatprep.subr.mxu0 %v3259
        %3357 = vmatpush1.msra.mxu0 %v3258
        %3358 = vmatprep.subr.mxu0 %v3263
        %3359 = vmatpush1.msra.mxu0 %v3262
        %3360 = vmatprep.subr.mxu0 %v3267
        %3361 = vmatpush1.msra.mxu0 %v3266
        %3362 = vmatprep.subr.mxu0 %v3271
        %3363 = vmatpush1.msra.mxu0 %v3270
        %3364 = vmatprep.subr.mxu0 %v3275
        %3365 = vmatpush1.msra.mxu0 %v3274
        %3366 = vmatprep.subr.mxu0 %v3279
        %3367 = vmatpush1.msra.mxu0 %v3278
        %3368 = vmatprep.subr.mxu0 %v3283
        %3369 = vmatpush1.msra.mxu0 %v3282
        %3370 = vmatprep.subr.mxu0 %v3287
        %3371 = vmatpush1.msra.mxu0 %v3286
        %3372 = vmatprep.subr.mxu0 %v3291
        %3373 = vmatpush1.msra.mxu0 %v3290
        %3374 = vmatprep.subr.mxu0 %v3295
        %3375 = vmatpush1.msra.mxu0 %v3294
        %3376 = vmatprep.subr.mxu0 %v3299
        %3377 = vmatpush1.msra.mxu0 %v3298
        %3378 = vmatprep.subr.mxu0 %v3303
        %3379 = vmatpush1.msra.mxu0 %v3302
        %3380 = vmatprep.subr.mxu0 %v3307
        %3381 = vmatpush1.msra.mxu0 %v3306
        %3382 = vmatprep.subr.mxu0 %v3311
        %3383 = vmatpush1.msra.mxu0 %v3310
        %3384 = vmatprep.subr.mxu0 %v3315
        %3385 = vmatpush1.msra.mxu0 %v3314
        %3386 = vmatprep.subr.mxu0 %v3319
        %3387 = vmatpush1.msra.mxu0 %v3318
        %3388 = vmatprep.subr.mxu0 %v3323
        %3389 = vmatpush1.msra.mxu0 %v3322
        %3390 = vmatprep.mubr.f32.mxu0 %v3195
        %3391 = vmatmul.mubr.f32.gmra.mrb[0].mxu0 %v3194
        %v3392 = vpop.f32.mrb[0].mxu0
        %v3393 = vadd.f32 0.0, %v3392
        %v3394 = vpop.f32.mrb[0].mxu0
        %v3395 = vadd.f32 0.0, %v3394
        %3396 = vmatprep.mubr.f32.mxu0 %v3197
        %3397 = vmatmul.mubr.f32.gmra.mrb[0].mxu0 %v3196
        %v3398 = vpop.f32.mrb[0].mxu0
        %v3399 = vadd.f32 0.0, %v3398
        %v3400 = vpop.f32.mrb[0].mxu0
        %v3401 = vadd.f32 0.0, %v3400
        %3402 = vdwg.mxu0
        %3403 = vmatprep.subr.mxu0 %v3201
        %3404 = vmatpush1.msra.mxu0 %v3200
        %3405 = vmatprep.subr.mxu0 %v3205
        %3406 = vmatpush1.msra.mxu0 %v3204
        %3407 = vmatprep.subr.mxu0 %v3209
        %3408 = vmatpush1.msra.mxu0 %v3208
        %3409 = vmatprep.subr.mxu0 %v3213
        %3410 = vmatpush1.msra.mxu0 %v3212
        %3411 = vmatprep.subr.mxu0 %v3217
        %3412 = vmatpush1.msra.mxu0 %v3216
        %3413 = vmatprep.subr.mxu0 %v3221
        %3414 = vmatpush1.msra.mxu0 %v3220
        %3415 = vmatprep.subr.mxu0 %v3225
        %3416 = vmatpush1.msra.mxu0 %v3224
        %3417 = vmatprep.subr.mxu0 %v3229
        %3418 = vmatpush1.msra.mxu0 %v3228
        %3419 = vmatprep.subr.mxu0 %v3233
        %3420 = vmatpush1.msra.mxu0 %v3232
        %3421 = vmatprep.subr.mxu0 %v3237
        %3422 = vmatpush1.msra.mxu0 %v3236
        %3423 = vmatprep.subr.mxu0 %v3241
        %3424 = vmatpush1.msra.mxu0 %v3240
        %3425 = vmatprep.subr.mxu0 %v3245
        %3426 = vmatpush1.msra.mxu0 %v3244
        %3427 = vmatprep.subr.mxu0 %v3249
        %3428 = vmatpush1.msra.mxu0 %v3248
        %3429 = vmatprep.subr.mxu0 %v3253
        %3430 = vmatpush1.msra.mxu0 %v3252
        %3431 = vmatprep.subr.mxu0 %v3257
        %3432 = vmatpush1.msra.mxu0 %v3256
        %3433 = vmatprep.subr.mxu0 %v3261
        %3434 = vmatpush1.msra.mxu0 %v3260
        %3435 = vmatprep.subr.mxu0 %v3265
        %3436 = vmatpush1.msra.mxu0 %v3264
        %3437 = vmatprep.subr.mxu0 %v3269
        %3438 = vmatpush1.msra.mxu0 %v3268
        %3439 = vmatprep.subr.mxu0 %v3273
        %3440 = vmatpush1.msra.mxu0 %v3272
        %3441 = vmatprep.subr.mxu0 %v3277
        %3442 = vmatpush1.msra.mxu0 %v3276
        %3443 = vmatprep.subr.mxu0 %v3281
        %3444 = vmatpush1.msra.mxu0 %v3280
        %3445 = vmatprep.subr.mxu0 %v3285
        %3446 = vmatpush1.msra.mxu0 %v3284
        %3447 = vmatprep.subr.mxu0 %v3289
        %3448 = vmatpush1.msra.mxu0 %v3288
        %3449 = vmatprep.subr.mxu0 %v3293
        %3450 = vmatpush1.msra.mxu0 %v3292
        %3451 = vmatprep.subr.mxu0 %v3297
        %3452 = vmatpush1.msra.mxu0 %v3296
        %3453 = vmatprep.subr.mxu0 %v3301
        %3454 = vmatpush1.msra.mxu0 %v3300
        %3455 = vmatprep.subr.mxu0 %v3305
        %3456 = vmatpush1.msra.mxu0 %v3304
        %3457 = vmatprep.subr.mxu0 %v3309
        %3458 = vmatpush1.msra.mxu0 %v3308
        %3459 = vmatprep.subr.mxu0 %v3313
        %3460 = vmatpush1.msra.mxu0 %v3312
        %3461 = vmatprep.subr.mxu0 %v3317
        %3462 = vmatpush1.msra.mxu0 %v3316
        %3463 = vmatprep.subr.mxu0 %v3321
        %3464 = vmatpush1.msra.mxu0 %v3320
        %3465 = vmatprep.subr.mxu0 %v3325
        %3466 = vmatpush1.msra.mxu0 %v3324
        %3467 = vmatprep.mubr.f32.mxu0 %v3195
        %3468 = vmatmul.mubr.f32.gmra.mrb[0].mxu0 %v3194
        %v3469 = vpop.f32.mrb[0].mxu0
        %v3470 = vadd.f32 0.0, %v3469
        %v3471 = vpop.f32.mrb[0].mxu0
        %v3472 = vadd.f32 0.0, %v3471
        %3473 = vmatprep.mubr.f32.mxu0 %v3197
        %3474 = vmatmul.mubr.f32.gmra.mrb[0].mxu0 %v3196
        %v3475 = vpop.f32.mrb[0].mxu0
        %v3476 = vadd.f32 0.0, %v3475
        %v3477 = vpop.f32.mrb[0].mxu0
        %v3478 = vadd.f32 0.0, %v3477
        %3479 = vdwg.mxu0
        %v3480 = vadd.f32 %v278, %v3393
        %v3481 = vadd.f32 %v282, %v3395
        %v3482 = vadd.f32 %v286, %v3470
        %v3483 = vadd.f32 %v290, %v3472
        %v3484 = vadd.f32 %v278, %v3399
        %v3485 = vadd.f32 %v282, %v3401
        %v3486 = vadd.f32 %v286, %v3476
        %v3487 = vadd.f32 %v290, %v3478
        %v3488 = vld [vmem:[%s883] sm:$0xff]
        %v3489 = vld [vmem:[%s883 + $0x8] sm:$0xff]
        %v3490 = vxor.u32 %v3480, 2147483648
        %v3491 = vxor.u32 %v3484, 2147483648
        %v3492 = vmul.f32 %v3490, 1.442695
        %v3493 = vpow.pop %v3492
        %v3494 = vmul.f32 %v3491, 1.442695
        %v3495 = vpow.pop %v3494
        %v3496 = vadd.f32 %v3493, 1.0
        %v3497 = vadd.f32 %v3495, 1.0
        %v3498 = vrcp.pop %v3496
        %v3499 = vmul.f32 1.0, %v3498
        %v3500 = vrcp.pop %v3497
        %v3501 = vmul.f32 1.0, %v3500
        %v3502 = vxor.u32 %v3481, 2147483648
        %v3503 = vxor.u32 %v3485, 2147483648
        %v3504 = vmul.f32 %v3502, 1.442695
        %v3505 = vpow.pop %v3504
        %v3506 = vmul.f32 %v3503, 1.442695
        %v3507 = vpow.pop %v3506
        %v3508 = vadd.f32 %v3505, 1.0
        %v3509 = vadd.f32 %v3507, 1.0
        %v3510 = vrcp.pop %v3508
        %v3511 = vmul.f32 1.0, %v3510
        %v3512 = vrcp.pop %v3509
        %v3513 = vmul.f32 1.0, %v3512
        %v3514 = vtanh.pop %v3482
        %v3515 = vtanh.pop %v3486
        %v3516 = vxor.u32 %v3483, 2147483648
        %v3517 = vxor.u32 %v3487, 2147483648
        %v3518 = vmul.f32 %v3516, 1.442695
        %v3519 = vpow.pop %v3518
        %v3520 = vmul.f32 %v3517, 1.442695
        %v3521 = vpow.pop %v3520
        %v3522 = vadd.f32 %v3519, 1.0
        %v3523 = vadd.f32 %v3521, 1.0
        %v3524 = vrcp.pop %v3522
        %v3525 = vmul.f32 1.0, %v3524
        %v3526 = vrcp.pop %v3523
        %v3527 = vmul.f32 1.0, %v3526
        %v3528 = vmul.f32 %v3511, %v3488
        %v3529 = vmul.f32 %v3513, %v3489
        %v3530 = vmul.f32 %v3499, %v3514
        %v3531 = vmul.f32 %v3501, %v3515
        %v3532 = vadd.f32 %v3528, %v3530
        %v3533 = vadd.f32 %v3529, %v3531
        %v3534 = vtanh.pop %v3532
        %v3535 = vtanh.pop %v3533
        %v3536 = vmul.f32 %v3525, %v3534
        %v3537 = vmul.f32 %v3527, %v3535
        %3538 = vst [vmem:[%s883] sm:$0xff] %v3532
        %3539 = vst [vmem:[%s883 + $0x8] sm:$0xff] %v3533
        %3540 = vst [vmem:[#allocation4 + $0x8] sm:$0xff] %v3536
        %3541 = vst [vmem:[#allocation4 + $0x18] sm:$0xff] %v3537
        %s3542 = scalar_lea.vmem %s216, 144 [#allocation9]
        %3543 = vst [vmem:[%s3542] sm:$0xff] %v3536
        %3544 = vst [vmem:[%s3542 + $0x8] sm:$0xff] %v3537
        %s3545 = scalar_lea.vmem %s223, 144 [#allocation10]
        %3546 = vst [vmem:[%s3545] sm:$0xff] %v3532
        %3547 = vst [vmem:[%s3545 + $0x8] sm:$0xff] %v3533
        %s3548 = scalar_lea.vmem %s196, 320 [#allocation6]
        %v3549 = vld [vmem:[%s3548] sm:$0xff]
        %v3550 = vld [vmem:[%s3548 + $0x8] sm:$0xff]
        %v3551 = vld [vmem:[%s3548 + $0x10] sm:$0xff]
        %v3552 = vld [vmem:[%s3548 + $0x18] sm:$0xff]
        %v3553 = vld [vmem:[%s3548 + $0x20] sm:$0xff]
        %v3554 = vld [vmem:[%s3548 + $0x28] sm:$0xff]
        %v3555 = vld [vmem:[%s3548 + $0x30] sm:$0xff]
        %v3556 = vld [vmem:[%s3548 + $0x38] sm:$0xff]
        %v3557 = vld [vmem:[#allocation4] sm:$0xff]
        %v3558 = vld [vmem:[#allocation4 + $0x10] sm:$0xff]
        %v3559 = vld [vmem:[#allocation2] sm:$0xff]
        %v3560 = vld [vmem:[#allocation2 + $0x8] sm:$0xff]
        %v3561 = vld [vmem:[#allocation2 + $0x10] sm:$0xff]
        %v3562 = vld [vmem:[#allocation2 + $0x18] sm:$0xff]
        %v3563 = vld [vmem:[#allocation2 + $0x20] sm:$0xff]
        %v3564 = vld [vmem:[#allocation2 + $0x28] sm:$0xff]
        %v3565 = vld [vmem:[#allocation2 + $0x30] sm:$0xff]
        %v3566 = vld [vmem:[#allocation2 + $0x38] sm:$0xff]
        %v3567 = vld [vmem:[#allocation2 + $0x40] sm:$0xff]
        %v3568 = vld [vmem:[#allocation2 + $0x48] sm:$0xff]
        %v3569 = vld [vmem:[#allocation2 + $0x50] sm:$0xff]
        %v3570 = vld [vmem:[#allocation2 + $0x58] sm:$0xff]
        %v3571 = vld [vmem:[#allocation2 + $0x60] sm:$0xff]
        %v3572 = vld [vmem:[#allocation2 + $0x68] sm:$0xff]
        %v3573 = vld [vmem:[#allocation2 + $0x70] sm:$0xff]
        %v3574 = vld [vmem:[#allocation2 + $0x78] sm:$0xff]
        %v3575 = vld [vmem:[#allocation2 + $0x80] sm:$0xff]
        %v3576 = vld [vmem:[#allocation2 + $0x88] sm:$0xff]
        %v3577 = vld [vmem:[#allocation2 + $0x90] sm:$0xff]
        %v3578 = vld [vmem:[#allocation2 + $0x98] sm:$0xff]
        %v3579 = vld [vmem:[#allocation2 + $0xa0] sm:$0xff]
        %v3580 = vld [vmem:[#allocation2 + $0xa8] sm:$0xff]
        %v3581 = vld [vmem:[#allocation2 + $0xb0] sm:$0xff]
        %v3582 = vld [vmem:[#allocation2 + $0xb8] sm:$0xff]
        %v3583 = vld [vmem:[#allocation2 + $0xc0] sm:$0xff]
        %v3584 = vld [vmem:[#allocation2 + $0xc8] sm:$0xff]
        %v3585 = vld [vmem:[#allocation2 + $0xd0] sm:$0xff]
        %v3586 = vld [vmem:[#allocation2 + $0xd8] sm:$0xff]
        %v3587 = vld [vmem:[#allocation2 + $0xe0] sm:$0xff]
        %v3588 = vld [vmem:[#allocation2 + $0xe8] sm:$0xff]
        %v3589 = vld [vmem:[#allocation2 + $0xf0] sm:$0xff]
        %v3590 = vld [vmem:[#allocation2 + $0xf8] sm:$0xff]
        %v3591 = vld [vmem:[#allocation2 + $0x100] sm:$0xff]
        %v3592 = vld [vmem:[#allocation2 + $0x108] sm:$0xff]
        %v3593 = vld [vmem:[#allocation2 + $0x110] sm:$0xff]
        %v3594 = vld [vmem:[#allocation2 + $0x118] sm:$0xff]
        %v3595 = vld [vmem:[#allocation2 + $0x120] sm:$0xff]
        %v3596 = vld [vmem:[#allocation2 + $0x128] sm:$0xff]
        %v3597 = vld [vmem:[#allocation2 + $0x130] sm:$0xff]
        %v3598 = vld [vmem:[#allocation2 + $0x138] sm:$0xff]
        %v3599 = vld [vmem:[#allocation2 + $0x140] sm:$0xff]
        %v3600 = vld [vmem:[#allocation2 + $0x148] sm:$0xff]
        %v3601 = vld [vmem:[#allocation2 + $0x150] sm:$0xff]
        %v3602 = vld [vmem:[#allocation2 + $0x158] sm:$0xff]
        %v3603 = vld [vmem:[#allocation2 + $0x160] sm:$0xff]
        %v3604 = vld [vmem:[#allocation2 + $0x168] sm:$0xff]
        %v3605 = vld [vmem:[#allocation2 + $0x170] sm:$0xff]
        %v3606 = vld [vmem:[#allocation2 + $0x178] sm:$0xff]
        %v3607 = vld [vmem:[#allocation2 + $0x180] sm:$0xff]
        %v3608 = vld [vmem:[#allocation2 + $0x188] sm:$0xff]
        %v3609 = vld [vmem:[#allocation2 + $0x190] sm:$0xff]
        %v3610 = vld [vmem:[#allocation2 + $0x198] sm:$0xff]
        %v3611 = vld [vmem:[#allocation2 + $0x1a0] sm:$0xff]
        %v3612 = vld [vmem:[#allocation2 + $0x1a8] sm:$0xff]
        %v3613 = vld [vmem:[#allocation2 + $0x1b0] sm:$0xff]
        %v3614 = vld [vmem:[#allocation2 + $0x1b8] sm:$0xff]
        %v3615 = vld [vmem:[#allocation2 + $0x1c0] sm:$0xff]
        %v3616 = vld [vmem:[#allocation2 + $0x1c8] sm:$0xff]
        %v3617 = vld [vmem:[#allocation2 + $0x1d0] sm:$0xff]
        %v3618 = vld [vmem:[#allocation2 + $0x1d8] sm:$0xff]
        %v3619 = vld [vmem:[#allocation2 + $0x1e0] sm:$0xff]
        %v3620 = vld [vmem:[#allocation2 + $0x1e8] sm:$0xff]
        %v3621 = vld [vmem:[#allocation2 + $0x1f0] sm:$0xff]
        %v3622 = vld [vmem:[#allocation2 + $0x1f8] sm:$0xff]
        %3623 = vmatprep.subr.mxu0 %v3560
        %3624 = vmatpush1.msra.mxu0 %v3559
        %3625 = vmatprep.subr.mxu0 %v3564
        %3626 = vmatpush1.msra.mxu0 %v3563
        %3627 = vmatprep.subr.mxu0 %v3568
        %3628 = vmatpush1.msra.mxu0 %v3567
        %3629 = vmatprep.subr.mxu0 %v3572
        %3630 = vmatpush1.msra.mxu0 %v3571
        %3631 = vmatprep.subr.mxu0 %v3576
        %3632 = vmatpush1.msra.mxu0 %v3575
        %3633 = vmatprep.subr.mxu0 %v3580
        %3634 = vmatpush1.msra.mxu0 %v3579
        %3635 = vmatprep.subr.mxu0 %v3584
        %3636 = vmatpush1.msra.mxu0 %v3583
        %3637 = vmatprep.subr.mxu0 %v3588
        %3638 = vmatpush1.msra.mxu0 %v3587
        %3639 = vmatprep.subr.mxu0 %v3592
        %3640 = vmatpush1.msra.mxu0 %v3591
        %3641 = vmatprep.subr.mxu0 %v3596
        %3642 = vmatpush1.msra.mxu0 %v3595
        %3643 = vmatprep.subr.mxu0 %v3600
        %3644 = vmatpush1.msra.mxu0 %v3599
        %3645 = vmatprep.subr.mxu0 %v3604
        %3646 = vmatpush1.msra.mxu0 %v3603
        %3647 = vmatprep.subr.mxu0 %v3608
        %3648 = vmatpush1.msra.mxu0 %v3607
        %3649 = vmatprep.subr.mxu0 %v3612
        %3650 = vmatpush1.msra.mxu0 %v3611
        %3651 = vmatprep.subr.mxu0 %v3616
        %3652 = vmatpush1.msra.mxu0 %v3615
        %3653 = vmatprep.subr.mxu0 %v3620
        %3654 = vmatpush1.msra.mxu0 %v3619
        %3655 = vmatprep.subr.mxu0 0.0
        %3656 = vmatpush1.msra.mxu0 0.0
        %3657 = vmatprep.subr.mxu0 0.0
        %3658 = vmatpush1.msra.mxu0 0.0
        %3659 = vmatprep.subr.mxu0 0.0
        %3660 = vmatpush1.msra.mxu0 0.0
        %3661 = vmatprep.subr.mxu0 0.0
        %3662 = vmatpush1.msra.mxu0 0.0
        %3663 = vmatprep.subr.mxu0 0.0
        %3664 = vmatpush1.msra.mxu0 0.0
        %3665 = vmatprep.subr.mxu0 0.0
        %3666 = vmatpush1.msra.mxu0 0.0
        %3667 = vmatprep.subr.mxu0 0.0
        %3668 = vmatpush1.msra.mxu0 0.0
        %3669 = vmatprep.subr.mxu0 0.0
        %3670 = vmatpush1.msra.mxu0 0.0
        %3671 = vmatprep.subr.mxu0 0.0
        %3672 = vmatpush1.msra.mxu0 0.0
        %3673 = vmatprep.subr.mxu0 0.0
        %3674 = vmatpush1.msra.mxu0 0.0
        %3675 = vmatprep.subr.mxu0 0.0
        %3676 = vmatpush1.msra.mxu0 0.0
        %3677 = vmatprep.subr.mxu0 0.0
        %3678 = vmatpush1.msra.mxu0 0.0
        %3679 = vmatprep.subr.mxu0 0.0
        %3680 = vmatpush1.msra.mxu0 0.0
        %3681 = vmatprep.subr.mxu0 0.0
        %3682 = vmatpush1.msra.mxu0 0.0
        %3683 = vmatprep.subr.mxu0 0.0
        %3684 = vmatpush1.msra.mxu0 0.0
        %3685 = vmatprep.subr.mxu0 0.0
        %3686 = vmatpush1.msra.mxu0 0.0
        %3687 = vmatprep.mubr.f32.mxu0 0.0
        %3688 = vmatmul.mubr.f32.gmra.mrb[0].mxu0 %v3557
        %v3689 = vpop.f32.mrb[0].mxu0
        %v3690 = vadd.f32 0.0, %v3689
        %v3691 = vpop.f32.mrb[0].mxu0
        %v3692 = vadd.f32 0.0, %v3691
        %3693 = vmatprep.mubr.f32.mxu0 0.0
        %3694 = vmatmul.mubr.f32.gmra.mrb[0].mxu0 %v3558
        %v3695 = vpop.f32.mrb[0].mxu0
        %v3696 = vadd.f32 0.0, %v3695
        %v3697 = vpop.f32.mrb[0].mxu0
        %v3698 = vadd.f32 0.0, %v3697
        %3699 = vdwg.mxu0
        %3700 = vmatprep.subr.mxu0 %v3562
        %3701 = vmatpush1.msra.mxu0 %v3561
        %3702 = vmatprep.subr.mxu0 %v3566
        %3703 = vmatpush1.msra.mxu0 %v3565
        %3704 = vmatprep.subr.mxu0 %v3570
        %3705 = vmatpush1.msra.mxu0 %v3569
        %3706 = vmatprep.subr.mxu0 %v3574
        %3707 = vmatpush1.msra.mxu0 %v3573
        %3708 = vmatprep.subr.mxu0 %v3578
        %3709 = vmatpush1.msra.mxu0 %v3577
        %3710 = vmatprep.subr.mxu0 %v3582
        %3711 = vmatpush1.msra.mxu0 %v3581
        %3712 = vmatprep.subr.mxu0 %v3586
        %3713 = vmatpush1.msra.mxu0 %v3585
        %3714 = vmatprep.subr.mxu0 %v3590
        %3715 = vmatpush1.msra.mxu0 %v3589
        %3716 = vmatprep.subr.mxu0 %v3594
        %3717 = vmatpush1.msra.mxu0 %v3593
        %3718 = vmatprep.subr.mxu0 %v3598
        %3719 = vmatpush1.msra.mxu0 %v3597
        %3720 = vmatprep.subr.mxu0 %v3602
        %3721 = vmatpush1.msra.mxu0 %v3601
        %3722 = vmatprep.subr.mxu0 %v3606
        %3723 = vmatpush1.msra.mxu0 %v3605
        %3724 = vmatprep.subr.mxu0 %v3610
        %3725 = vmatpush1.msra.mxu0 %v3609
        %3726 = vmatprep.subr.mxu0 %v3614
        %3727 = vmatpush1.msra.mxu0 %v3613
        %3728 = vmatprep.subr.mxu0 %v3618
        %3729 = vmatpush1.msra.mxu0 %v3617
        %3730 = vmatprep.subr.mxu0 %v3622
        %3731 = vmatpush1.msra.mxu0 %v3621
        %3732 = vmatprep.subr.mxu0 0.0
        %3733 = vmatpush1.msra.mxu0 0.0
        %3734 = vmatprep.subr.mxu0 0.0
        %3735 = vmatpush1.msra.mxu0 0.0
        %3736 = vmatprep.subr.mxu0 0.0
        %3737 = vmatpush1.msra.mxu0 0.0
        %3738 = vmatprep.subr.mxu0 0.0
        %3739 = vmatpush1.msra.mxu0 0.0
        %3740 = vmatprep.subr.mxu0 0.0
        %3741 = vmatpush1.msra.mxu0 0.0
        %3742 = vmatprep.subr.mxu0 0.0
        %3743 = vmatpush1.msra.mxu0 0.0
        %3744 = vmatprep.subr.mxu0 0.0
        %3745 = vmatpush1.msra.mxu0 0.0
        %3746 = vmatprep.subr.mxu0 0.0
        %3747 = vmatpush1.msra.mxu0 0.0
        %3748 = vmatprep.subr.mxu0 0.0
        %3749 = vmatpush1.msra.mxu0 0.0
        %3750 = vmatprep.subr.mxu0 0.0
        %3751 = vmatpush1.msra.mxu0 0.0
        %3752 = vmatprep.subr.mxu0 0.0
        %3753 = vmatpush1.msra.mxu0 0.0
        %3754 = vmatprep.subr.mxu0 0.0
        %3755 = vmatpush1.msra.mxu0 0.0
        %3756 = vmatprep.subr.mxu0 0.0
        %3757 = vmatpush1.msra.mxu0 0.0
        %3758 = vmatprep.subr.mxu0 0.0
        %3759 = vmatpush1.msra.mxu0 0.0
        %3760 = vmatprep.subr.mxu0 0.0
        %3761 = vmatpush1.msra.mxu0 0.0
        %3762 = vmatprep.subr.mxu0 0.0
        %3763 = vmatpush1.msra.mxu0 0.0
        %3764 = vmatprep.mubr.f32.mxu0 0.0
        %3765 = vmatmul.mubr.f32.gmra.mrb[0].mxu0 %v3557
        %v3766 = vpop.f32.mrb[0].mxu0
        %v3767 = vadd.f32 0.0, %v3766
        %v3768 = vpop.f32.mrb[0].mxu0
        %v3769 = vadd.f32 0.0, %v3768
        %3770 = vmatprep.mubr.f32.mxu0 0.0
        %3771 = vmatmul.mubr.f32.gmra.mrb[0].mxu0 %v3558
        %v3772 = vpop.f32.mrb[0].mxu0
        %v3773 = vadd.f32 0.0, %v3772
        %v3774 = vpop.f32.mrb[0].mxu0
        %v3775 = vadd.f32 0.0, %v3774
        %3776 = vdwg.mxu0
        %v3777 = vadd.f32 %v3549, %v3690
        %v3778 = vadd.f32 %v3550, %v3692
        %v3779 = vadd.f32 %v3551, %v3767
        %v3780 = vadd.f32 %v3552, %v3769
        %v3781 = vadd.f32 %v3553, %v3696
        %v3782 = vadd.f32 %v3554, %v3698
        %v3783 = vadd.f32 %v3555, %v3773
        %v3784 = vadd.f32 %v3556, %v3775
        %v3785 = vld [vmem:[#allocation5] sm:$0xff]
        %v3786 = vld [vmem:[#allocation5 + $0x8] sm:$0xff]
        %v3787 = vxor.u32 %v3777, 2147483648
        %v3788 = vxor.u32 %v3781, 2147483648
        %v3789 = vmul.f32 %v3787, 1.442695
        %v3790 = vpow.pop %v3789
        %v3791 = vmul.f32 %v3788, 1.442695
        %v3792 = vpow.pop %v3791
        %v3793 = vadd.f32 %v3790, 1.0
        %v3794 = vadd.f32 %v3792, 1.0
        %v3795 = vrcp.pop %v3793
        %v3796 = vmul.f32 1.0, %v3795
        %v3797 = vrcp.pop %v3794
        %v3798 = vmul.f32 1.0, %v3797
        %v3799 = vxor.u32 %v3778, 2147483648
        %v3800 = vxor.u32 %v3782, 2147483648
        %v3801 = vmul.f32 %v3799, 1.442695
        %v3802 = vpow.pop %v3801
        %v3803 = vmul.f32 %v3800, 1.442695
        %v3804 = vpow.pop %v3803
        %v3805 = vadd.f32 %v3802, 1.0
        %v3806 = vadd.f32 %v3804, 1.0
        %v3807 = vrcp.pop %v3805
        %v3808 = vmul.f32 1.0, %v3807
        %v3809 = vrcp.pop %v3806
        %v3810 = vmul.f32 1.0, %v3809
        %v3811 = vtanh.pop %v3779
        %v3812 = vtanh.pop %v3783
        %v3813 = vxor.u32 %v3780, 2147483648
        %v3814 = vxor.u32 %v3784, 2147483648
        %v3815 = vmul.f32 %v3813, 1.442695
        %v3816 = vpow.pop %v3815
        %v3817 = vmul.f32 %v3814, 1.442695
        %v3818 = vpow.pop %v3817
        %v3819 = vadd.f32 %v3816, 1.0
        %v3820 = vadd.f32 %v3818, 1.0
        %v3821 = vrcp.pop %v3819
        %v3822 = vmul.f32 1.0, %v3821
        %v3823 = vrcp.pop %v3820
        %v3824 = vmul.f32 1.0, %v3823
        %v3825 = vmul.f32 %v3808, %v3785
        %v3826 = vmul.f32 %v3810, %v3786
        %v3827 = vmul.f32 %v3796, %v3811
        %v3828 = vmul.f32 %v3798, %v3812
        %v3829 = vadd.f32 %v3825, %v3827
        %v3830 = vadd.f32 %v3826, %v3828
        %v3831 = vtanh.pop %v3829
        %v3832 = vtanh.pop %v3830
        %v3833 = vmul.f32 %v3822, %v3831
        %v3834 = vmul.f32 %v3824, %v3832
        %3835 = vst [vmem:[#allocation5] sm:$0xff] %v3829
        %3836 = vst [vmem:[#allocation5 + $0x8] sm:$0xff] %v3830
        %3837 = vst [vmem:[#allocation4] sm:$0xff] %v3833
        %3838 = vst [vmem:[#allocation4 + $0x10] sm:$0xff] %v3834
        %s3839 = scalar_lea.vmem %s216, 160 [#allocation9]
        %3840 = vst [vmem:[%s3839] sm:$0xff] %v3833
        %3841 = vst [vmem:[%s3839 + $0x8] sm:$0xff] %v3834
        %s3842 = scalar_lea.vmem %s223, 160 [#allocation10]
        %3843 = vst [vmem:[%s3842] sm:$0xff] %v3829
        %3844 = vst [vmem:[%s3842 + $0x8] sm:$0xff] %v3830
        %v3845 = vld [vmem:[#allocation4] sm:$0xff]
        %v3846 = vld [vmem:[#allocation4 + $0x8] sm:$0xff]
        %v3847 = vld [vmem:[#allocation4 + $0x10] sm:$0xff]
        %v3848 = vld [vmem:[#allocation4 + $0x18] sm:$0xff]
        %v3849 = vld [vmem:[#allocation3] sm:$0xff]
        %v3850 = vld [vmem:[#allocation3 + $0x8] sm:$0xff]
        %v3851 = vld [vmem:[#allocation3 + $0x10] sm:$0xff]
        %v3852 = vld [vmem:[#allocation3 + $0x18] sm:$0xff]
        %v3853 = vld [vmem:[#allocation3 + $0x20] sm:$0xff]
        %v3854 = vld [vmem:[#allocation3 + $0x28] sm:$0xff]
        %v3855 = vld [vmem:[#allocation3 + $0x30] sm:$0xff]
        %v3856 = vld [vmem:[#allocation3 + $0x38] sm:$0xff]
        %v3857 = vld [vmem:[#allocation3 + $0x40] sm:$0xff]
        %v3858 = vld [vmem:[#allocation3 + $0x48] sm:$0xff]
        %v3859 = vld [vmem:[#allocation3 + $0x50] sm:$0xff]
        %v3860 = vld [vmem:[#allocation3 + $0x58] sm:$0xff]
        %v3861 = vld [vmem:[#allocation3 + $0x60] sm:$0xff]
        %v3862 = vld [vmem:[#allocation3 + $0x68] sm:$0xff]
        %v3863 = vld [vmem:[#allocation3 + $0x70] sm:$0xff]
        %v3864 = vld [vmem:[#allocation3 + $0x78] sm:$0xff]
        %v3865 = vld [vmem:[#allocation3 + $0x80] sm:$0xff]
        %v3866 = vld [vmem:[#allocation3 + $0x88] sm:$0xff]
        %v3867 = vld [vmem:[#allocation3 + $0x90] sm:$0xff]
        %v3868 = vld [vmem:[#allocation3 + $0x98] sm:$0xff]
        %v3869 = vld [vmem:[#allocation3 + $0xa0] sm:$0xff]
        %v3870 = vld [vmem:[#allocation3 + $0xa8] sm:$0xff]
        %v3871 = vld [vmem:[#allocation3 + $0xb0] sm:$0xff]
        %v3872 = vld [vmem:[#allocation3 + $0xb8] sm:$0xff]
        %v3873 = vld [vmem:[#allocation3 + $0xc0] sm:$0xff]
        %v3874 = vld [vmem:[#allocation3 + $0xc8] sm:$0xff]
        %v3875 = vld [vmem:[#allocation3 + $0xd0] sm:$0xff]
        %v3876 = vld [vmem:[#allocation3 + $0xd8] sm:$0xff]
        %v3877 = vld [vmem:[#allocation3 + $0xe0] sm:$0xff]
        %v3878 = vld [vmem:[#allocation3 + $0xe8] sm:$0xff]
        %v3879 = vld [vmem:[#allocation3 + $0xf0] sm:$0xff]
        %v3880 = vld [vmem:[#allocation3 + $0xf8] sm:$0xff]
        %v3881 = vld [vmem:[#allocation3 + $0x100] sm:$0xff]
        %v3882 = vld [vmem:[#allocation3 + $0x108] sm:$0xff]
        %v3883 = vld [vmem:[#allocation3 + $0x110] sm:$0xff]
        %v3884 = vld [vmem:[#allocation3 + $0x118] sm:$0xff]
        %v3885 = vld [vmem:[#allocation3 + $0x120] sm:$0xff]
        %v3886 = vld [vmem:[#allocation3 + $0x128] sm:$0xff]
        %v3887 = vld [vmem:[#allocation3 + $0x130] sm:$0xff]
        %v3888 = vld [vmem:[#allocation3 + $0x138] sm:$0xff]
        %v3889 = vld [vmem:[#allocation3 + $0x140] sm:$0xff]
        %v3890 = vld [vmem:[#allocation3 + $0x148] sm:$0xff]
        %v3891 = vld [vmem:[#allocation3 + $0x150] sm:$0xff]
        %v3892 = vld [vmem:[#allocation3 + $0x158] sm:$0xff]
        %v3893 = vld [vmem:[#allocation3 + $0x160] sm:$0xff]
        %v3894 = vld [vmem:[#allocation3 + $0x168] sm:$0xff]
        %v3895 = vld [vmem:[#allocation3 + $0x170] sm:$0xff]
        %v3896 = vld [vmem:[#allocation3 + $0x178] sm:$0xff]
        %v3897 = vld [vmem:[#allocation3 + $0x180] sm:$0xff]
        %v3898 = vld [vmem:[#allocation3 + $0x188] sm:$0xff]
        %v3899 = vld [vmem:[#allocation3 + $0x190] sm:$0xff]
        %v3900 = vld [vmem:[#allocation3 + $0x198] sm:$0xff]
        %v3901 = vld [vmem:[#allocation3 + $0x1a0] sm:$0xff]
        %v3902 = vld [vmem:[#allocation3 + $0x1a8] sm:$0xff]
        %v3903 = vld [vmem:[#allocation3 + $0x1b0] sm:$0xff]
        %v3904 = vld [vmem:[#allocation3 + $0x1b8] sm:$0xff]
        %v3905 = vld [vmem:[#allocation3 + $0x1c0] sm:$0xff]
        %v3906 = vld [vmem:[#allocation3 + $0x1c8] sm:$0xff]
        %v3907 = vld [vmem:[#allocation3 + $0x1d0] sm:$0xff]
        %v3908 = vld [vmem:[#allocation3 + $0x1d8] sm:$0xff]
        %v3909 = vld [vmem:[#allocation3 + $0x1e0] sm:$0xff]
        %v3910 = vld [vmem:[#allocation3 + $0x1e8] sm:$0xff]
        %v3911 = vld [vmem:[#allocation3 + $0x1f0] sm:$0xff]
        %v3912 = vld [vmem:[#allocation3 + $0x1f8] sm:$0xff]
        %v3913 = vld [vmem:[#allocation3 + $0x200] sm:$0xff]
        %v3914 = vld [vmem:[#allocation3 + $0x208] sm:$0xff]
        %v3915 = vld [vmem:[#allocation3 + $0x210] sm:$0xff]
        %v3916 = vld [vmem:[#allocation3 + $0x218] sm:$0xff]
        %v3917 = vld [vmem:[#allocation3 + $0x220] sm:$0xff]
        %v3918 = vld [vmem:[#allocation3 + $0x228] sm:$0xff]
        %v3919 = vld [vmem:[#allocation3 + $0x230] sm:$0xff]
        %v3920 = vld [vmem:[#allocation3 + $0x238] sm:$0xff]
        %v3921 = vld [vmem:[#allocation3 + $0x240] sm:$0xff]
        %v3922 = vld [vmem:[#allocation3 + $0x248] sm:$0xff]
        %v3923 = vld [vmem:[#allocation3 + $0x250] sm:$0xff]
        %v3924 = vld [vmem:[#allocation3 + $0x258] sm:$0xff]
        %v3925 = vld [vmem:[#allocation3 + $0x260] sm:$0xff]
        %v3926 = vld [vmem:[#allocation3 + $0x268] sm:$0xff]
        %v3927 = vld [vmem:[#allocation3 + $0x270] sm:$0xff]
        %v3928 = vld [vmem:[#allocation3 + $0x278] sm:$0xff]
        %v3929 = vld [vmem:[#allocation3 + $0x280] sm:$0xff]
        %v3930 = vld [vmem:[#allocation3 + $0x288] sm:$0xff]
        %v3931 = vld [vmem:[#allocation3 + $0x290] sm:$0xff]
        %v3932 = vld [vmem:[#allocation3 + $0x298] sm:$0xff]
        %v3933 = vld [vmem:[#allocation3 + $0x2a0] sm:$0xff]
        %v3934 = vld [vmem:[#allocation3 + $0x2a8] sm:$0xff]
        %v3935 = vld [vmem:[#allocation3 + $0x2b0] sm:$0xff]
        %v3936 = vld [vmem:[#allocation3 + $0x2b8] sm:$0xff]
        %v3937 = vld [vmem:[#allocation3 + $0x2c0] sm:$0xff]
        %v3938 = vld [vmem:[#allocation3 + $0x2c8] sm:$0xff]
        %v3939 = vld [vmem:[#allocation3 + $0x2d0] sm:$0xff]
        %v3940 = vld [vmem:[#allocation3 + $0x2d8] sm:$0xff]
        %v3941 = vld [vmem:[#allocation3 + $0x2e0] sm:$0xff]
        %v3942 = vld [vmem:[#allocation3 + $0x2e8] sm:$0xff]
        %v3943 = vld [vmem:[#allocation3 + $0x2f0] sm:$0xff]
        %v3944 = vld [vmem:[#allocation3 + $0x2f8] sm:$0xff]
        %v3945 = vld [vmem:[#allocation3 + $0x300] sm:$0xff]
        %v3946 = vld [vmem:[#allocation3 + $0x308] sm:$0xff]
        %v3947 = vld [vmem:[#allocation3 + $0x310] sm:$0xff]
        %v3948 = vld [vmem:[#allocation3 + $0x318] sm:$0xff]
        %v3949 = vld [vmem:[#allocation3 + $0x320] sm:$0xff]
        %v3950 = vld [vmem:[#allocation3 + $0x328] sm:$0xff]
        %v3951 = vld [vmem:[#allocation3 + $0x330] sm:$0xff]
        %v3952 = vld [vmem:[#allocation3 + $0x338] sm:$0xff]
        %v3953 = vld [vmem:[#allocation3 + $0x340] sm:$0xff]
        %v3954 = vld [vmem:[#allocation3 + $0x348] sm:$0xff]
        %v3955 = vld [vmem:[#allocation3 + $0x350] sm:$0xff]
        %v3956 = vld [vmem:[#allocation3 + $0x358] sm:$0xff]
        %v3957 = vld [vmem:[#allocation3 + $0x360] sm:$0xff]
        %v3958 = vld [vmem:[#allocation3 + $0x368] sm:$0xff]
        %v3959 = vld [vmem:[#allocation3 + $0x370] sm:$0xff]
        %v3960 = vld [vmem:[#allocation3 + $0x378] sm:$0xff]
        %v3961 = vld [vmem:[#allocation3 + $0x380] sm:$0xff]
        %v3962 = vld [vmem:[#allocation3 + $0x388] sm:$0xff]
        %v3963 = vld [vmem:[#allocation3 + $0x390] sm:$0xff]
        %v3964 = vld [vmem:[#allocation3 + $0x398] sm:$0xff]
        %v3965 = vld [vmem:[#allocation3 + $0x3a0] sm:$0xff]
        %v3966 = vld [vmem:[#allocation3 + $0x3a8] sm:$0xff]
        %v3967 = vld [vmem:[#allocation3 + $0x3b0] sm:$0xff]
        %v3968 = vld [vmem:[#allocation3 + $0x3b8] sm:$0xff]
        %v3969 = vld [vmem:[#allocation3 + $0x3c0] sm:$0xff]
        %v3970 = vld [vmem:[#allocation3 + $0x3c8] sm:$0xff]
        %v3971 = vld [vmem:[#allocation3 + $0x3d0] sm:$0xff]
        %v3972 = vld [vmem:[#allocation3 + $0x3d8] sm:$0xff]
        %v3973 = vld [vmem:[#allocation3 + $0x3e0] sm:$0xff]
        %v3974 = vld [vmem:[#allocation3 + $0x3e8] sm:$0xff]
        %v3975 = vld [vmem:[#allocation3 + $0x3f0] sm:$0xff]
        %v3976 = vld [vmem:[#allocation3 + $0x3f8] sm:$0xff]
        %3977 = vmatprep.subr.mxu0 %v3850
        %3978 = vmatpush1.msra.mxu0 %v3849
        %3979 = vmatprep.subr.mxu0 %v3854
        %3980 = vmatpush1.msra.mxu0 %v3853
        %3981 = vmatprep.subr.mxu0 %v3858
        %3982 = vmatpush1.msra.mxu0 %v3857
        %3983 = vmatprep.subr.mxu0 %v3862
        %3984 = vmatpush1.msra.mxu0 %v3861
        %3985 = vmatprep.subr.mxu0 %v3866
        %3986 = vmatpush1.msra.mxu0 %v3865
        %3987 = vmatprep.subr.mxu0 %v3870
        %3988 = vmatpush1.msra.mxu0 %v3869
        %3989 = vmatprep.subr.mxu0 %v3874
        %3990 = vmatpush1.msra.mxu0 %v3873
        %3991 = vmatprep.subr.mxu0 %v3878
        %3992 = vmatpush1.msra.mxu0 %v3877
        %3993 = vmatprep.subr.mxu0 %v3882
        %3994 = vmatpush1.msra.mxu0 %v3881
        %3995 = vmatprep.subr.mxu0 %v3886
        %3996 = vmatpush1.msra.mxu0 %v3885
        %3997 = vmatprep.subr.mxu0 %v3890
        %3998 = vmatpush1.msra.mxu0 %v3889
        %3999 = vmatprep.subr.mxu0 %v3894
        %4000 = vmatpush1.msra.mxu0 %v3893
        %4001 = vmatprep.subr.mxu0 %v3898
        %4002 = vmatpush1.msra.mxu0 %v3897
        %4003 = vmatprep.subr.mxu0 %v3902
        %4004 = vmatpush1.msra.mxu0 %v3901
        %4005 = vmatprep.subr.mxu0 %v3906
        %4006 = vmatpush1.msra.mxu0 %v3905
        %4007 = vmatprep.subr.mxu0 %v3910
        %4008 = vmatpush1.msra.mxu0 %v3909
        %4009 = vmatprep.subr.mxu0 %v3914
        %4010 = vmatpush1.msra.mxu0 %v3913
        %4011 = vmatprep.subr.mxu0 %v3918
        %4012 = vmatpush1.msra.mxu0 %v3917
        %4013 = vmatprep.subr.mxu0 %v3922
        %4014 = vmatpush1.msra.mxu0 %v3921
        %4015 = vmatprep.subr.mxu0 %v3926
        %4016 = vmatpush1.msra.mxu0 %v3925
        %4017 = vmatprep.subr.mxu0 %v3930
        %4018 = vmatpush1.msra.mxu0 %v3929
        %4019 = vmatprep.subr.mxu0 %v3934
        %4020 = vmatpush1.msra.mxu0 %v3933
        %4021 = vmatprep.subr.mxu0 %v3938
        %4022 = vmatpush1.msra.mxu0 %v3937
        %4023 = vmatprep.subr.mxu0 %v3942
        %4024 = vmatpush1.msra.mxu0 %v3941
        %4025 = vmatprep.subr.mxu0 %v3946
        %4026 = vmatpush1.msra.mxu0 %v3945
        %4027 = vmatprep.subr.mxu0 %v3950
        %4028 = vmatpush1.msra.mxu0 %v3949
        %4029 = vmatprep.subr.mxu0 %v3954
        %4030 = vmatpush1.msra.mxu0 %v3953
        %4031 = vmatprep.subr.mxu0 %v3958
        %4032 = vmatpush1.msra.mxu0 %v3957
        %4033 = vmatprep.subr.mxu0 %v3962
        %4034 = vmatpush1.msra.mxu0 %v3961
        %4035 = vmatprep.subr.mxu0 %v3966
        %4036 = vmatpush1.msra.mxu0 %v3965
        %4037 = vmatprep.subr.mxu0 %v3970
        %4038 = vmatpush1.msra.mxu0 %v3969
        %4039 = vmatprep.subr.mxu0 %v3974
        %4040 = vmatpush1.msra.mxu0 %v3973
        %4041 = vmatprep.mubr.f32.mxu0 %v3846
        %4042 = vmatmul.mubr.f32.gmra.mrb[0].mxu0 %v3845
        %v4043 = vpop.f32.mrb[0].mxu0
        %v4044 = vadd.f32 0.0, %v4043
        %v4045 = vpop.f32.mrb[0].mxu0
        %v4046 = vadd.f32 0.0, %v4045
        %4047 = vmatprep.mubr.f32.mxu0 %v3848
        %4048 = vmatmul.mubr.f32.gmra.mrb[0].mxu0 %v3847
        %v4049 = vpop.f32.mrb[0].mxu0
        %v4050 = vadd.f32 0.0, %v4049
        %v4051 = vpop.f32.mrb[0].mxu0
        %v4052 = vadd.f32 0.0, %v4051
        %4053 = vdwg.mxu0
        %4054 = vmatprep.subr.mxu0 %v3852
        %4055 = vmatpush1.msra.mxu0 %v3851
        %4056 = vmatprep.subr.mxu0 %v3856
        %4057 = vmatpush1.msra.mxu0 %v3855
        %4058 = vmatprep.subr.mxu0 %v3860
        %4059 = vmatpush1.msra.mxu0 %v3859
        %4060 = vmatprep.subr.mxu0 %v3864
        %4061 = vmatpush1.msra.mxu0 %v3863
        %4062 = vmatprep.subr.mxu0 %v3868
        %4063 = vmatpush1.msra.mxu0 %v3867
        %4064 = vmatprep.subr.mxu0 %v3872
        %4065 = vmatpush1.msra.mxu0 %v3871
        %4066 = vmatprep.subr.mxu0 %v3876
        %4067 = vmatpush1.msra.mxu0 %v3875
        %4068 = vmatprep.subr.mxu0 %v3880
        %4069 = vmatpush1.msra.mxu0 %v3879
        %4070 = vmatprep.subr.mxu0 %v3884
        %4071 = vmatpush1.msra.mxu0 %v3883
        %4072 = vmatprep.subr.mxu0 %v3888
        %4073 = vmatpush1.msra.mxu0 %v3887
        %4074 = vmatprep.subr.mxu0 %v3892
        %4075 = vmatpush1.msra.mxu0 %v3891
        %4076 = vmatprep.subr.mxu0 %v3896
        %4077 = vmatpush1.msra.mxu0 %v3895
        %4078 = vmatprep.subr.mxu0 %v3900
        %4079 = vmatpush1.msra.mxu0 %v3899
        %4080 = vmatprep.subr.mxu0 %v3904
        %4081 = vmatpush1.msra.mxu0 %v3903
        %4082 = vmatprep.subr.mxu0 %v3908
        %4083 = vmatpush1.msra.mxu0 %v3907
        %4084 = vmatprep.subr.mxu0 %v3912
        %4085 = vmatpush1.msra.mxu0 %v3911
        %4086 = vmatprep.subr.mxu0 %v3916
        %4087 = vmatpush1.msra.mxu0 %v3915
        %4088 = vmatprep.subr.mxu0 %v3920
        %4089 = vmatpush1.msra.mxu0 %v3919
        %4090 = vmatprep.subr.mxu0 %v3924
        %4091 = vmatpush1.msra.mxu0 %v3923
        %4092 = vmatprep.subr.mxu0 %v3928
        %4093 = vmatpush1.msra.mxu0 %v3927
        %4094 = vmatprep.subr.mxu0 %v3932
        %4095 = vmatpush1.msra.mxu0 %v3931
        %4096 = vmatprep.subr.mxu0 %v3936
        %4097 = vmatpush1.msra.mxu0 %v3935
        %4098 = vmatprep.subr.mxu0 %v3940
        %4099 = vmatpush1.msra.mxu0 %v3939
        %4100 = vmatprep.subr.mxu0 %v3944
        %4101 = vmatpush1.msra.mxu0 %v3943
        %4102 = vmatprep.subr.mxu0 %v3948
        %4103 = vmatpush1.msra.mxu0 %v3947
        %4104 = vmatprep.subr.mxu0 %v3952
        %4105 = vmatpush1.msra.mxu0 %v3951
        %4106 = vmatprep.subr.mxu0 %v3956
        %4107 = vmatpush1.msra.mxu0 %v3955
        %4108 = vmatprep.subr.mxu0 %v3960
        %4109 = vmatpush1.msra.mxu0 %v3959
        %4110 = vmatprep.subr.mxu0 %v3964
        %4111 = vmatpush1.msra.mxu0 %v3963
        %4112 = vmatprep.subr.mxu0 %v3968
        %4113 = vmatpush1.msra.mxu0 %v3967
        %4114 = vmatprep.subr.mxu0 %v3972
        %4115 = vmatpush1.msra.mxu0 %v3971
        %4116 = vmatprep.subr.mxu0 %v3976
        %4117 = vmatpush1.msra.mxu0 %v3975
        %4118 = vmatprep.mubr.f32.mxu0 %v3846
        %4119 = vmatmul.mubr.f32.gmra.mrb[0].mxu0 %v3845
        %v4120 = vpop.f32.mrb[0].mxu0
        %v4121 = vadd.f32 0.0, %v4120
        %v4122 = vpop.f32.mrb[0].mxu0
        %v4123 = vadd.f32 0.0, %v4122
        %4124 = vmatprep.mubr.f32.mxu0 %v3848
        %4125 = vmatmul.mubr.f32.gmra.mrb[0].mxu0 %v3847
        %v4126 = vpop.f32.mrb[0].mxu0
        %v4127 = vadd.f32 0.0, %v4126
        %v4128 = vpop.f32.mrb[0].mxu0
        %v4129 = vadd.f32 0.0, %v4128
        %4130 = vdwg.mxu0
        %v4131 = vadd.f32 %v278, %v4044
        %v4132 = vadd.f32 %v282, %v4046
        %v4133 = vadd.f32 %v286, %v4121
        %v4134 = vadd.f32 %v290, %v4123
        %v4135 = vadd.f32 %v278, %v4050
        %v4136 = vadd.f32 %v282, %v4052
        %v4137 = vadd.f32 %v286, %v4127
        %v4138 = vadd.f32 %v290, %v4129
        %v4139 = vld [vmem:[%s883] sm:$0xff]
        %v4140 = vld [vmem:[%s883 + $0x8] sm:$0xff]
        %v4141 = vxor.u32 %v4131, 2147483648
        %v4142 = vxor.u32 %v4135, 2147483648
        %v4143 = vmul.f32 %v4141, 1.442695
        %v4144 = vpow.pop %v4143
        %v4145 = vmul.f32 %v4142, 1.442695
        %v4146 = vpow.pop %v4145
        %v4147 = vadd.f32 %v4144, 1.0
        %v4148 = vadd.f32 %v4146, 1.0
        %v4149 = vrcp.pop %v4147
        %v4150 = vmul.f32 1.0, %v4149
        %v4151 = vrcp.pop %v4148
        %v4152 = vmul.f32 1.0, %v4151
        %v4153 = vxor.u32 %v4132, 2147483648
        %v4154 = vxor.u32 %v4136, 2147483648
        %v4155 = vmul.f32 %v4153, 1.442695
        %v4156 = vpow.pop %v4155
        %v4157 = vmul.f32 %v4154, 1.442695
        %v4158 = vpow.pop %v4157
        %v4159 = vadd.f32 %v4156, 1.0
        %v4160 = vadd.f32 %v4158, 1.0
        %v4161 = vrcp.pop %v4159
        %v4162 = vmul.f32 1.0, %v4161
        %v4163 = vrcp.pop %v4160
        %v4164 = vmul.f32 1.0, %v4163
        %v4165 = vtanh.pop %v4133
        %v4166 = vtanh.pop %v4137
        %v4167 = vxor.u32 %v4134, 2147483648
        %v4168 = vxor.u32 %v4138, 2147483648
        %v4169 = vmul.f32 %v4167, 1.442695
        %v4170 = vpow.pop %v4169
        %v4171 = vmul.f32 %v4168, 1.442695
        %v4172 = vpow.pop %v4171
        %v4173 = vadd.f32 %v4170, 1.0
        %v4174 = vadd.f32 %v4172, 1.0
        %v4175 = vrcp.pop %v4173
        %v4176 = vmul.f32 1.0, %v4175
        %v4177 = vrcp.pop %v4174
        %v4178 = vmul.f32 1.0, %v4177
        %v4179 = vmul.f32 %v4162, %v4139
        %v4180 = vmul.f32 %v4164, %v4140
        %v4181 = vmul.f32 %v4150, %v4165
        %v4182 = vmul.f32 %v4152, %v4166
        %v4183 = vadd.f32 %v4179, %v4181
        %v4184 = vadd.f32 %v4180, %v4182
        %v4185 = vtanh.pop %v4183
        %v4186 = vtanh.pop %v4184
        %v4187 = vmul.f32 %v4176, %v4185
        %v4188 = vmul.f32 %v4178, %v4186
        %4189 = vst [vmem:[%s883] sm:$0xff] %v4183
        %4190 = vst [vmem:[%s883 + $0x8] sm:$0xff] %v4184
        %4191 = vst [vmem:[#allocation4 + $0x8] sm:$0xff] %v4187
        %4192 = vst [vmem:[#allocation4 + $0x18] sm:$0xff] %v4188
        %s4193 = scalar_lea.vmem %s216, 176 [#allocation9]
        %4194 = vst [vmem:[%s4193] sm:$0xff] %v4187
        %4195 = vst [vmem:[%s4193 + $0x8] sm:$0xff] %v4188
        %s4196 = scalar_lea.vmem %s223, 176 [#allocation10]
        %4197 = vst [vmem:[%s4196] sm:$0xff] %v4183
        %4198 = vst [vmem:[%s4196 + $0x8] sm:$0xff] %v4184
        %s4199 = scalar_lea.vmem %s196, 384 [#allocation6]
        %v4200 = vld [vmem:[%s4199] sm:$0xff]
        %v4201 = vld [vmem:[%s4199 + $0x8] sm:$0xff]
        %v4202 = vld [vmem:[%s4199 + $0x10] sm:$0xff]
        %v4203 = vld [vmem:[%s4199 + $0x18] sm:$0xff]
        %v4204 = vld [vmem:[%s4199 + $0x20] sm:$0xff]
        %v4205 = vld [vmem:[%s4199 + $0x28] sm:$0xff]
        %v4206 = vld [vmem:[%s4199 + $0x30] sm:$0xff]
        %v4207 = vld [vmem:[%s4199 + $0x38] sm:$0xff]
        %v4208 = vld [vmem:[#allocation4] sm:$0xff]
        %v4209 = vld [vmem:[#allocation4 + $0x10] sm:$0xff]
        %v4210 = vld [vmem:[#allocation2] sm:$0xff]
        %v4211 = vld [vmem:[#allocation2 + $0x8] sm:$0xff]
        %v4212 = vld [vmem:[#allocation2 + $0x10] sm:$0xff]
        %v4213 = vld [vmem:[#allocation2 + $0x18] sm:$0xff]
        %v4214 = vld [vmem:[#allocation2 + $0x20] sm:$0xff]
        %v4215 = vld [vmem:[#allocation2 + $0x28] sm:$0xff]
        %v4216 = vld [vmem:[#allocation2 + $0x30] sm:$0xff]
        %v4217 = vld [vmem:[#allocation2 + $0x38] sm:$0xff]
        %v4218 = vld [vmem:[#allocation2 + $0x40] sm:$0xff]
        %v4219 = vld [vmem:[#allocation2 + $0x48] sm:$0xff]
        %v4220 = vld [vmem:[#allocation2 + $0x50] sm:$0xff]
        %v4221 = vld [vmem:[#allocation2 + $0x58] sm:$0xff]
        %v4222 = vld [vmem:[#allocation2 + $0x60] sm:$0xff]
        %v4223 = vld [vmem:[#allocation2 + $0x68] sm:$0xff]
        %v4224 = vld [vmem:[#allocation2 + $0x70] sm:$0xff]
        %v4225 = vld [vmem:[#allocation2 + $0x78] sm:$0xff]
        %v4226 = vld [vmem:[#allocation2 + $0x80] sm:$0xff]
        %v4227 = vld [vmem:[#allocation2 + $0x88] sm:$0xff]
        %v4228 = vld [vmem:[#allocation2 + $0x90] sm:$0xff]
        %v4229 = vld [vmem:[#allocation2 + $0x98] sm:$0xff]
        %v4230 = vld [vmem:[#allocation2 + $0xa0] sm:$0xff]
        %v4231 = vld [vmem:[#allocation2 + $0xa8] sm:$0xff]
        %v4232 = vld [vmem:[#allocation2 + $0xb0] sm:$0xff]
        %v4233 = vld [vmem:[#allocation2 + $0xb8] sm:$0xff]
        %v4234 = vld [vmem:[#allocation2 + $0xc0] sm:$0xff]
        %v4235 = vld [vmem:[#allocation2 + $0xc8] sm:$0xff]
        %v4236 = vld [vmem:[#allocation2 + $0xd0] sm:$0xff]
        %v4237 = vld [vmem:[#allocation2 + $0xd8] sm:$0xff]
        %v4238 = vld [vmem:[#allocation2 + $0xe0] sm:$0xff]
        %v4239 = vld [vmem:[#allocation2 + $0xe8] sm:$0xff]
        %v4240 = vld [vmem:[#allocation2 + $0xf0] sm:$0xff]
        %v4241 = vld [vmem:[#allocation2 + $0xf8] sm:$0xff]
        %v4242 = vld [vmem:[#allocation2 + $0x100] sm:$0xff]
        %v4243 = vld [vmem:[#allocation2 + $0x108] sm:$0xff]
        %v4244 = vld [vmem:[#allocation2 + $0x110] sm:$0xff]
        %v4245 = vld [vmem:[#allocation2 + $0x118] sm:$0xff]
        %v4246 = vld [vmem:[#allocation2 + $0x120] sm:$0xff]
        %v4247 = vld [vmem:[#allocation2 + $0x128] sm:$0xff]
        %v4248 = vld [vmem:[#allocation2 + $0x130] sm:$0xff]
        %v4249 = vld [vmem:[#allocation2 + $0x138] sm:$0xff]
        %v4250 = vld [vmem:[#allocation2 + $0x140] sm:$0xff]
        %v4251 = vld [vmem:[#allocation2 + $0x148] sm:$0xff]
        %v4252 = vld [vmem:[#allocation2 + $0x150] sm:$0xff]
        %v4253 = vld [vmem:[#allocation2 + $0x158] sm:$0xff]
        %v4254 = vld [vmem:[#allocation2 + $0x160] sm:$0xff]
        %v4255 = vld [vmem:[#allocation2 + $0x168] sm:$0xff]
        %v4256 = vld [vmem:[#allocation2 + $0x170] sm:$0xff]
        %v4257 = vld [vmem:[#allocation2 + $0x178] sm:$0xff]
        %v4258 = vld [vmem:[#allocation2 + $0x180] sm:$0xff]
        %v4259 = vld [vmem:[#allocation2 + $0x188] sm:$0xff]
        %v4260 = vld [vmem:[#allocation2 + $0x190] sm:$0xff]
        %v4261 = vld [vmem:[#allocation2 + $0x198] sm:$0xff]
        %v4262 = vld [vmem:[#allocation2 + $0x1a0] sm:$0xff]
        %v4263 = vld [vmem:[#allocation2 + $0x1a8] sm:$0xff]
        %v4264 = vld [vmem:[#allocation2 + $0x1b0] sm:$0xff]
        %v4265 = vld [vmem:[#allocation2 + $0x1b8] sm:$0xff]
        %v4266 = vld [vmem:[#allocation2 + $0x1c0] sm:$0xff]
        %v4267 = vld [vmem:[#allocation2 + $0x1c8] sm:$0xff]
        %v4268 = vld [vmem:[#allocation2 + $0x1d0] sm:$0xff]
        %v4269 = vld [vmem:[#allocation2 + $0x1d8] sm:$0xff]
        %v4270 = vld [vmem:[#allocation2 + $0x1e0] sm:$0xff]
        %v4271 = vld [vmem:[#allocation2 + $0x1e8] sm:$0xff]
        %v4272 = vld [vmem:[#allocation2 + $0x1f0] sm:$0xff]
        %v4273 = vld [vmem:[#allocation2 + $0x1f8] sm:$0xff]
        %4274 = vmatprep.subr.mxu0 %v4211
        %4275 = vmatpush1.msra.mxu0 %v4210
        %4276 = vmatprep.subr.mxu0 %v4215
        %4277 = vmatpush1.msra.mxu0 %v4214
        %4278 = vmatprep.subr.mxu0 %v4219
        %4279 = vmatpush1.msra.mxu0 %v4218
        %4280 = vmatprep.subr.mxu0 %v4223
        %4281 = vmatpush1.msra.mxu0 %v4222
        %4282 = vmatprep.subr.mxu0 %v4227
        %4283 = vmatpush1.msra.mxu0 %v4226
        %4284 = vmatprep.subr.mxu0 %v4231
        %4285 = vmatpush1.msra.mxu0 %v4230
        %4286 = vmatprep.subr.mxu0 %v4235
        %4287 = vmatpush1.msra.mxu0 %v4234
        %4288 = vmatprep.subr.mxu0 %v4239
        %4289 = vmatpush1.msra.mxu0 %v4238
        %4290 = vmatprep.subr.mxu0 %v4243
        %4291 = vmatpush1.msra.mxu0 %v4242
        %4292 = vmatprep.subr.mxu0 %v4247
        %4293 = vmatpush1.msra.mxu0 %v4246
        %4294 = vmatprep.subr.mxu0 %v4251
        %4295 = vmatpush1.msra.mxu0 %v4250
        %4296 = vmatprep.subr.mxu0 %v4255
        %4297 = vmatpush1.msra.mxu0 %v4254
        %4298 = vmatprep.subr.mxu0 %v4259
        %4299 = vmatpush1.msra.mxu0 %v4258
        %4300 = vmatprep.subr.mxu0 %v4263
        %4301 = vmatpush1.msra.mxu0 %v4262
        %4302 = vmatprep.subr.mxu0 %v4267
        %4303 = vmatpush1.msra.mxu0 %v4266
        %4304 = vmatprep.subr.mxu0 %v4271
        %4305 = vmatpush1.msra.mxu0 %v4270
        %4306 = vmatprep.subr.mxu0 0.0
        %4307 = vmatpush1.msra.mxu0 0.0
        %4308 = vmatprep.subr.mxu0 0.0
        %4309 = vmatpush1.msra.mxu0 0.0
        %4310 = vmatprep.subr.mxu0 0.0
        %4311 = vmatpush1.msra.mxu0 0.0
        %4312 = vmatprep.subr.mxu0 0.0
        %4313 = vmatpush1.msra.mxu0 0.0
        %4314 = vmatprep.subr.mxu0 0.0
        %4315 = vmatpush1.msra.mxu0 0.0
        %4316 = vmatprep.subr.mxu0 0.0
        %4317 = vmatpush1.msra.mxu0 0.0
        %4318 = vmatprep.subr.mxu0 0.0
        %4319 = vmatpush1.msra.mxu0 0.0
        %4320 = vmatprep.subr.mxu0 0.0
        %4321 = vmatpush1.msra.mxu0 0.0
        %4322 = vmatprep.subr.mxu0 0.0
        %4323 = vmatpush1.msra.mxu0 0.0
        %4324 = vmatprep.subr.mxu0 0.0
        %4325 = vmatpush1.msra.mxu0 0.0
        %4326 = vmatprep.subr.mxu0 0.0
        %4327 = vmatpush1.msra.mxu0 0.0
        %4328 = vmatprep.subr.mxu0 0.0
        %4329 = vmatpush1.msra.mxu0 0.0
        %4330 = vmatprep.subr.mxu0 0.0
        %4331 = vmatpush1.msra.mxu0 0.0
        %4332 = vmatprep.subr.mxu0 0.0
        %4333 = vmatpush1.msra.mxu0 0.0
        %4334 = vmatprep.subr.mxu0 0.0
        %4335 = vmatpush1.msra.mxu0 0.0
        %4336 = vmatprep.subr.mxu0 0.0
        %4337 = vmatpush1.msra.mxu0 0.0
        %4338 = vmatprep.mubr.f32.mxu0 0.0
        %4339 = vmatmul.mubr.f32.gmra.mrb[0].mxu0 %v4208
        %v4340 = vpop.f32.mrb[0].mxu0
        %v4341 = vadd.f32 0.0, %v4340
        %v4342 = vpop.f32.mrb[0].mxu0
        %v4343 = vadd.f32 0.0, %v4342
        %4344 = vmatprep.mubr.f32.mxu0 0.0
        %4345 = vmatmul.mubr.f32.gmra.mrb[0].mxu0 %v4209
        %v4346 = vpop.f32.mrb[0].mxu0
        %v4347 = vadd.f32 0.0, %v4346
        %v4348 = vpop.f32.mrb[0].mxu0
        %v4349 = vadd.f32 0.0, %v4348
        %4350 = vdwg.mxu0
        %4351 = vmatprep.subr.mxu0 %v4213
        %4352 = vmatpush1.msra.mxu0 %v4212
        %4353 = vmatprep.subr.mxu0 %v4217
        %4354 = vmatpush1.msra.mxu0 %v4216
        %4355 = vmatprep.subr.mxu0 %v4221
        %4356 = vmatpush1.msra.mxu0 %v4220
        %4357 = vmatprep.subr.mxu0 %v4225
        %4358 = vmatpush1.msra.mxu0 %v4224
        %4359 = vmatprep.subr.mxu0 %v4229
        %4360 = vmatpush1.msra.mxu0 %v4228
        %4361 = vmatprep.subr.mxu0 %v4233
        %4362 = vmatpush1.msra.mxu0 %v4232
        %4363 = vmatprep.subr.mxu0 %v4237
        %4364 = vmatpush1.msra.mxu0 %v4236
        %4365 = vmatprep.subr.mxu0 %v4241
        %4366 = vmatpush1.msra.mxu0 %v4240
        %4367 = vmatprep.subr.mxu0 %v4245
        %4368 = vmatpush1.msra.mxu0 %v4244
        %4369 = vmatprep.subr.mxu0 %v4249
        %4370 = vmatpush1.msra.mxu0 %v4248
        %4371 = vmatprep.subr.mxu0 %v4253
        %4372 = vmatpush1.msra.mxu0 %v4252
        %4373 = vmatprep.subr.mxu0 %v4257
        %4374 = vmatpush1.msra.mxu0 %v4256
        %4375 = vmatprep.subr.mxu0 %v4261
        %4376 = vmatpush1.msra.mxu0 %v4260
        %4377 = vmatprep.subr.mxu0 %v4265
        %4378 = vmatpush1.msra.mxu0 %v4264
        %4379 = vmatprep.subr.mxu0 %v4269
        %4380 = vmatpush1.msra.mxu0 %v4268
        %4381 = vmatprep.subr.mxu0 %v4273
        %4382 = vmatpush1.msra.mxu0 %v4272
        %4383 = vmatprep.subr.mxu0 0.0
        %4384 = vmatpush1.msra.mxu0 0.0
        %4385 = vmatprep.subr.mxu0 0.0
        %4386 = vmatpush1.msra.mxu0 0.0
        %4387 = vmatprep.subr.mxu0 0.0
        %4388 = vmatpush1.msra.mxu0 0.0
        %4389 = vmatprep.subr.mxu0 0.0
        %4390 = vmatpush1.msra.mxu0 0.0
        %4391 = vmatprep.subr.mxu0 0.0
        %4392 = vmatpush1.msra.mxu0 0.0
        %4393 = vmatprep.subr.mxu0 0.0
        %4394 = vmatpush1.msra.mxu0 0.0
        %4395 = vmatprep.subr.mxu0 0.0
        %4396 = vmatpush1.msra.mxu0 0.0
        %4397 = vmatprep.subr.mxu0 0.0
        %4398 = vmatpush1.msra.mxu0 0.0
        %4399 = vmatprep.subr.mxu0 0.0
        %4400 = vmatpush1.msra.mxu0 0.0
        %4401 = vmatprep.subr.mxu0 0.0
        %4402 = vmatpush1.msra.mxu0 0.0
        %4403 = vmatprep.subr.mxu0 0.0
        %4404 = vmatpush1.msra.mxu0 0.0
        %4405 = vmatprep.subr.mxu0 0.0
        %4406 = vmatpush1.msra.mxu0 0.0
        %4407 = vmatprep.subr.mxu0 0.0
        %4408 = vmatpush1.msra.mxu0 0.0
        %4409 = vmatprep.subr.mxu0 0.0
        %4410 = vmatpush1.msra.mxu0 0.0
        %4411 = vmatprep.subr.mxu0 0.0
        %4412 = vmatpush1.msra.mxu0 0.0
        %4413 = vmatprep.subr.mxu0 0.0
        %4414 = vmatpush1.msra.mxu0 0.0
        %4415 = vmatprep.mubr.f32.mxu0 0.0
        %4416 = vmatmul.mubr.f32.gmra.mrb[0].mxu0 %v4208
        %v4417 = vpop.f32.mrb[0].mxu0
        %v4418 = vadd.f32 0.0, %v4417
        %v4419 = vpop.f32.mrb[0].mxu0
        %v4420 = vadd.f32 0.0, %v4419
        %4421 = vmatprep.mubr.f32.mxu0 0.0
        %4422 = vmatmul.mubr.f32.gmra.mrb[0].mxu0 %v4209
        %v4423 = vpop.f32.mrb[0].mxu0
        %v4424 = vadd.f32 0.0, %v4423
        %v4425 = vpop.f32.mrb[0].mxu0
        %v4426 = vadd.f32 0.0, %v4425
        %4427 = vdwg.mxu0
        %v4428 = vadd.f32 %v4200, %v4341
        %v4429 = vadd.f32 %v4201, %v4343
        %v4430 = vadd.f32 %v4202, %v4418
        %v4431 = vadd.f32 %v4203, %v4420
        %v4432 = vadd.f32 %v4204, %v4347
        %v4433 = vadd.f32 %v4205, %v4349
        %v4434 = vadd.f32 %v4206, %v4424
        %v4435 = vadd.f32 %v4207, %v4426
        %v4436 = vld [vmem:[#allocation5] sm:$0xff]
        %v4437 = vld [vmem:[#allocation5 + $0x8] sm:$0xff]
        %v4438 = vxor.u32 %v4428, 2147483648
        %v4439 = vxor.u32 %v4432, 2147483648
        %v4440 = vmul.f32 %v4438, 1.442695
        %v4441 = vpow.pop %v4440
        %v4442 = vmul.f32 %v4439, 1.442695
        %v4443 = vpow.pop %v4442
        %v4444 = vadd.f32 %v4441, 1.0
        %v4445 = vadd.f32 %v4443, 1.0
        %v4446 = vrcp.pop %v4444
        %v4447 = vmul.f32 1.0, %v4446
        %v4448 = vrcp.pop %v4445
        %v4449 = vmul.f32 1.0, %v4448
        %v4450 = vxor.u32 %v4429, 2147483648
        %v4451 = vxor.u32 %v4433, 2147483648
        %v4452 = vmul.f32 %v4450, 1.442695
        %v4453 = vpow.pop %v4452
        %v4454 = vmul.f32 %v4451, 1.442695
        %v4455 = vpow.pop %v4454
        %v4456 = vadd.f32 %v4453, 1.0
        %v4457 = vadd.f32 %v4455, 1.0
        %v4458 = vrcp.pop %v4456
        %v4459 = vmul.f32 1.0, %v4458
        %v4460 = vrcp.pop %v4457
        %v4461 = vmul.f32 1.0, %v4460
        %v4462 = vtanh.pop %v4430
        %v4463 = vtanh.pop %v4434
        %v4464 = vxor.u32 %v4431, 2147483648
        %v4465 = vxor.u32 %v4435, 2147483648
        %v4466 = vmul.f32 %v4464, 1.442695
        %v4467 = vpow.pop %v4466
        %v4468 = vmul.f32 %v4465, 1.442695
        %v4469 = vpow.pop %v4468
        %v4470 = vadd.f32 %v4467, 1.0
        %v4471 = vadd.f32 %v4469, 1.0
        %v4472 = vrcp.pop %v4470
        %v4473 = vmul.f32 1.0, %v4472
        %v4474 = vrcp.pop %v4471
        %v4475 = vmul.f32 1.0, %v4474
        %v4476 = vmul.f32 %v4459, %v4436
        %v4477 = vmul.f32 %v4461, %v4437
        %v4478 = vmul.f32 %v4447, %v4462
        %v4479 = vmul.f32 %v4449, %v4463
        %v4480 = vadd.f32 %v4476, %v4478
        %v4481 = vadd.f32 %v4477, %v4479
        %v4482 = vtanh.pop %v4480
        %v4483 = vtanh.pop %v4481
        %v4484 = vmul.f32 %v4473, %v4482
        %v4485 = vmul.f32 %v4475, %v4483
        %4486 = vst [vmem:[#allocation5] sm:$0xff] %v4480
        %4487 = vst [vmem:[#allocation5 + $0x8] sm:$0xff] %v4481
        %4488 = vst [vmem:[#allocation4] sm:$0xff] %v4484
        %4489 = vst [vmem:[#allocation4 + $0x10] sm:$0xff] %v4485
        %s4490 = scalar_lea.vmem %s216, 192 [#allocation9]
        %4491 = vst [vmem:[%s4490] sm:$0xff] %v4484
        %4492 = vst [vmem:[%s4490 + $0x8] sm:$0xff] %v4485
        %s4493 = scalar_lea.vmem %s223, 192 [#allocation10]
        %4494 = vst [vmem:[%s4493] sm:$0xff] %v4480
        %4495 = vst [vmem:[%s4493 + $0x8] sm:$0xff] %v4481
        %v4496 = vld [vmem:[#allocation4] sm:$0xff]
        %v4497 = vld [vmem:[#allocation4 + $0x8] sm:$0xff]
        %v4498 = vld [vmem:[#allocation4 + $0x10] sm:$0xff]
        %v4499 = vld [vmem:[#allocation4 + $0x18] sm:$0xff]
        %v4500 = vld [vmem:[#allocation3] sm:$0xff]
        %v4501 = vld [vmem:[#allocation3 + $0x8] sm:$0xff]
        %v4502 = vld [vmem:[#allocation3 + $0x10] sm:$0xff]
        %v4503 = vld [vmem:[#allocation3 + $0x18] sm:$0xff]
        %v4504 = vld [vmem:[#allocation3 + $0x20] sm:$0xff]
        %v4505 = vld [vmem:[#allocation3 + $0x28] sm:$0xff]
        %v4506 = vld [vmem:[#allocation3 + $0x30] sm:$0xff]
        %v4507 = vld [vmem:[#allocation3 + $0x38] sm:$0xff]
        %v4508 = vld [vmem:[#allocation3 + $0x40] sm:$0xff]
        %v4509 = vld [vmem:[#allocation3 + $0x48] sm:$0xff]
        %v4510 = vld [vmem:[#allocation3 + $0x50] sm:$0xff]
        %v4511 = vld [vmem:[#allocation3 + $0x58] sm:$0xff]
        %v4512 = vld [vmem:[#allocation3 + $0x60] sm:$0xff]
        %v4513 = vld [vmem:[#allocation3 + $0x68] sm:$0xff]
        %v4514 = vld [vmem:[#allocation3 + $0x70] sm:$0xff]
        %v4515 = vld [vmem:[#allocation3 + $0x78] sm:$0xff]
        %v4516 = vld [vmem:[#allocation3 + $0x80] sm:$0xff]
        %v4517 = vld [vmem:[#allocation3 + $0x88] sm:$0xff]
        %v4518 = vld [vmem:[#allocation3 + $0x90] sm:$0xff]
        %v4519 = vld [vmem:[#allocation3 + $0x98] sm:$0xff]
        %v4520 = vld [vmem:[#allocation3 + $0xa0] sm:$0xff]
        %v4521 = vld [vmem:[#allocation3 + $0xa8] sm:$0xff]
        %v4522 = vld [vmem:[#allocation3 + $0xb0] sm:$0xff]
        %v4523 = vld [vmem:[#allocation3 + $0xb8] sm:$0xff]
        %v4524 = vld [vmem:[#allocation3 + $0xc0] sm:$0xff]
        %v4525 = vld [vmem:[#allocation3 + $0xc8] sm:$0xff]
        %v4526 = vld [vmem:[#allocation3 + $0xd0] sm:$0xff]
        %v4527 = vld [vmem:[#allocation3 + $0xd8] sm:$0xff]
        %v4528 = vld [vmem:[#allocation3 + $0xe0] sm:$0xff]
        %v4529 = vld [vmem:[#allocation3 + $0xe8] sm:$0xff]
        %v4530 = vld [vmem:[#allocation3 + $0xf0] sm:$0xff]
        %v4531 = vld [vmem:[#allocation3 + $0xf8] sm:$0xff]
        %v4532 = vld [vmem:[#allocation3 + $0x100] sm:$0xff]
        %v4533 = vld [vmem:[#allocation3 + $0x108] sm:$0xff]
        %v4534 = vld [vmem:[#allocation3 + $0x110] sm:$0xff]
        %v4535 = vld [vmem:[#allocation3 + $0x118] sm:$0xff]
        %v4536 = vld [vmem:[#allocation3 + $0x120] sm:$0xff]
        %v4537 = vld [vmem:[#allocation3 + $0x128] sm:$0xff]
        %v4538 = vld [vmem:[#allocation3 + $0x130] sm:$0xff]
        %v4539 = vld [vmem:[#allocation3 + $0x138] sm:$0xff]
        %v4540 = vld [vmem:[#allocation3 + $0x140] sm:$0xff]
        %v4541 = vld [vmem:[#allocation3 + $0x148] sm:$0xff]
        %v4542 = vld [vmem:[#allocation3 + $0x150] sm:$0xff]
        %v4543 = vld [vmem:[#allocation3 + $0x158] sm:$0xff]
        %v4544 = vld [vmem:[#allocation3 + $0x160] sm:$0xff]
        %v4545 = vld [vmem:[#allocation3 + $0x168] sm:$0xff]
        %v4546 = vld [vmem:[#allocation3 + $0x170] sm:$0xff]
        %v4547 = vld [vmem:[#allocation3 + $0x178] sm:$0xff]
        %v4548 = vld [vmem:[#allocation3 + $0x180] sm:$0xff]
        %v4549 = vld [vmem:[#allocation3 + $0x188] sm:$0xff]
        %v4550 = vld [vmem:[#allocation3 + $0x190] sm:$0xff]
        %v4551 = vld [vmem:[#allocation3 + $0x198] sm:$0xff]
        %v4552 = vld [vmem:[#allocation3 + $0x1a0] sm:$0xff]
        %v4553 = vld [vmem:[#allocation3 + $0x1a8] sm:$0xff]
        %v4554 = vld [vmem:[#allocation3 + $0x1b0] sm:$0xff]
        %v4555 = vld [vmem:[#allocation3 + $0x1b8] sm:$0xff]
        %v4556 = vld [vmem:[#allocation3 + $0x1c0] sm:$0xff]
        %v4557 = vld [vmem:[#allocation3 + $0x1c8] sm:$0xff]
        %v4558 = vld [vmem:[#allocation3 + $0x1d0] sm:$0xff]
        %v4559 = vld [vmem:[#allocation3 + $0x1d8] sm:$0xff]
        %v4560 = vld [vmem:[#allocation3 + $0x1e0] sm:$0xff]
        %v4561 = vld [vmem:[#allocation3 + $0x1e8] sm:$0xff]
        %v4562 = vld [vmem:[#allocation3 + $0x1f0] sm:$0xff]
        %v4563 = vld [vmem:[#allocation3 + $0x1f8] sm:$0xff]
        %v4564 = vld [vmem:[#allocation3 + $0x200] sm:$0xff]
        %v4565 = vld [vmem:[#allocation3 + $0x208] sm:$0xff]
        %v4566 = vld [vmem:[#allocation3 + $0x210] sm:$0xff]
        %v4567 = vld [vmem:[#allocation3 + $0x218] sm:$0xff]
        %v4568 = vld [vmem:[#allocation3 + $0x220] sm:$0xff]
        %v4569 = vld [vmem:[#allocation3 + $0x228] sm:$0xff]
        %v4570 = vld [vmem:[#allocation3 + $0x230] sm:$0xff]
        %v4571 = vld [vmem:[#allocation3 + $0x238] sm:$0xff]
        %v4572 = vld [vmem:[#allocation3 + $0x240] sm:$0xff]
        %v4573 = vld [vmem:[#allocation3 + $0x248] sm:$0xff]
        %v4574 = vld [vmem:[#allocation3 + $0x250] sm:$0xff]
        %v4575 = vld [vmem:[#allocation3 + $0x258] sm:$0xff]
        %v4576 = vld [vmem:[#allocation3 + $0x260] sm:$0xff]
        %v4577 = vld [vmem:[#allocation3 + $0x268] sm:$0xff]
        %v4578 = vld [vmem:[#allocation3 + $0x270] sm:$0xff]
        %v4579 = vld [vmem:[#allocation3 + $0x278] sm:$0xff]
        %v4580 = vld [vmem:[#allocation3 + $0x280] sm:$0xff]
        %v4581 = vld [vmem:[#allocation3 + $0x288] sm:$0xff]
        %v4582 = vld [vmem:[#allocation3 + $0x290] sm:$0xff]
        %v4583 = vld [vmem:[#allocation3 + $0x298] sm:$0xff]
        %v4584 = vld [vmem:[#allocation3 + $0x2a0] sm:$0xff]
        %v4585 = vld [vmem:[#allocation3 + $0x2a8] sm:$0xff]
        %v4586 = vld [vmem:[#allocation3 + $0x2b0] sm:$0xff]
        %v4587 = vld [vmem:[#allocation3 + $0x2b8] sm:$0xff]
        %v4588 = vld [vmem:[#allocation3 + $0x2c0] sm:$0xff]
        %v4589 = vld [vmem:[#allocation3 + $0x2c8] sm:$0xff]
        %v4590 = vld [vmem:[#allocation3 + $0x2d0] sm:$0xff]
        %v4591 = vld [vmem:[#allocation3 + $0x2d8] sm:$0xff]
        %v4592 = vld [vmem:[#allocation3 + $0x2e0] sm:$0xff]
        %v4593 = vld [vmem:[#allocation3 + $0x2e8] sm:$0xff]
        %v4594 = vld [vmem:[#allocation3 + $0x2f0] sm:$0xff]
        %v4595 = vld [vmem:[#allocation3 + $0x2f8] sm:$0xff]
        %v4596 = vld [vmem:[#allocation3 + $0x300] sm:$0xff]
        %v4597 = vld [vmem:[#allocation3 + $0x308] sm:$0xff]
        %v4598 = vld [vmem:[#allocation3 + $0x310] sm:$0xff]
        %v4599 = vld [vmem:[#allocation3 + $0x318] sm:$0xff]
        %v4600 = vld [vmem:[#allocation3 + $0x320] sm:$0xff]
        %v4601 = vld [vmem:[#allocation3 + $0x328] sm:$0xff]
        %v4602 = vld [vmem:[#allocation3 + $0x330] sm:$0xff]
        %v4603 = vld [vmem:[#allocation3 + $0x338] sm:$0xff]
        %v4604 = vld [vmem:[#allocation3 + $0x340] sm:$0xff]
        %v4605 = vld [vmem:[#allocation3 + $0x348] sm:$0xff]
        %v4606 = vld [vmem:[#allocation3 + $0x350] sm:$0xff]
        %v4607 = vld [vmem:[#allocation3 + $0x358] sm:$0xff]
        %v4608 = vld [vmem:[#allocation3 + $0x360] sm:$0xff]
        %v4609 = vld [vmem:[#allocation3 + $0x368] sm:$0xff]
        %v4610 = vld [vmem:[#allocation3 + $0x370] sm:$0xff]
        %v4611 = vld [vmem:[#allocation3 + $0x378] sm:$0xff]
        %v4612 = vld [vmem:[#allocation3 + $0x380] sm:$0xff]
        %v4613 = vld [vmem:[#allocation3 + $0x388] sm:$0xff]
        %v4614 = vld [vmem:[#allocation3 + $0x390] sm:$0xff]
        %v4615 = vld [vmem:[#allocation3 + $0x398] sm:$0xff]
        %v4616 = vld [vmem:[#allocation3 + $0x3a0] sm:$0xff]
        %v4617 = vld [vmem:[#allocation3 + $0x3a8] sm:$0xff]
        %v4618 = vld [vmem:[#allocation3 + $0x3b0] sm:$0xff]
        %v4619 = vld [vmem:[#allocation3 + $0x3b8] sm:$0xff]
        %v4620 = vld [vmem:[#allocation3 + $0x3c0] sm:$0xff]
        %v4621 = vld [vmem:[#allocation3 + $0x3c8] sm:$0xff]
        %v4622 = vld [vmem:[#allocation3 + $0x3d0] sm:$0xff]
        %v4623 = vld [vmem:[#allocation3 + $0x3d8] sm:$0xff]
        %v4624 = vld [vmem:[#allocation3 + $0x3e0] sm:$0xff]
        %v4625 = vld [vmem:[#allocation3 + $0x3e8] sm:$0xff]
        %v4626 = vld [vmem:[#allocation3 + $0x3f0] sm:$0xff]
        %v4627 = vld [vmem:[#allocation3 + $0x3f8] sm:$0xff]
        %4628 = vmatprep.subr.mxu0 %v4501
        %4629 = vmatpush1.msra.mxu0 %v4500
        %4630 = vmatprep.subr.mxu0 %v4505
        %4631 = vmatpush1.msra.mxu0 %v4504
        %4632 = vmatprep.subr.mxu0 %v4509
        %4633 = vmatpush1.msra.mxu0 %v4508
        %4634 = vmatprep.subr.mxu0 %v4513
        %4635 = vmatpush1.msra.mxu0 %v4512
        %4636 = vmatprep.subr.mxu0 %v4517
        %4637 = vmatpush1.msra.mxu0 %v4516
        %4638 = vmatprep.subr.mxu0 %v4521
        %4639 = vmatpush1.msra.mxu0 %v4520
        %4640 = vmatprep.subr.mxu0 %v4525
        %4641 = vmatpush1.msra.mxu0 %v4524
        %4642 = vmatprep.subr.mxu0 %v4529
        %4643 = vmatpush1.msra.mxu0 %v4528
        %4644 = vmatprep.subr.mxu0 %v4533
        %4645 = vmatpush1.msra.mxu0 %v4532
        %4646 = vmatprep.subr.mxu0 %v4537
        %4647 = vmatpush1.msra.mxu0 %v4536
        %4648 = vmatprep.subr.mxu0 %v4541
        %4649 = vmatpush1.msra.mxu0 %v4540
        %4650 = vmatprep.subr.mxu0 %v4545
        %4651 = vmatpush1.msra.mxu0 %v4544
        %4652 = vmatprep.subr.mxu0 %v4549
        %4653 = vmatpush1.msra.mxu0 %v4548
        %4654 = vmatprep.subr.mxu0 %v4553
        %4655 = vmatpush1.msra.mxu0 %v4552
        %4656 = vmatprep.subr.mxu0 %v4557
        %4657 = vmatpush1.msra.mxu0 %v4556
        %4658 = vmatprep.subr.mxu0 %v4561
        %4659 = vmatpush1.msra.mxu0 %v4560
        %4660 = vmatprep.subr.mxu0 %v4565
        %4661 = vmatpush1.msra.mxu0 %v4564
        %4662 = vmatprep.subr.mxu0 %v4569
        %4663 = vmatpush1.msra.mxu0 %v4568
        %4664 = vmatprep.subr.mxu0 %v4573
        %4665 = vmatpush1.msra.mxu0 %v4572
        %4666 = vmatprep.subr.mxu0 %v4577
        %4667 = vmatpush1.msra.mxu0 %v4576
        %4668 = vmatprep.subr.mxu0 %v4581
        %4669 = vmatpush1.msra.mxu0 %v4580
        %4670 = vmatprep.subr.mxu0 %v4585
        %4671 = vmatpush1.msra.mxu0 %v4584
        %4672 = vmatprep.subr.mxu0 %v4589
        %4673 = vmatpush1.msra.mxu0 %v4588
        %4674 = vmatprep.subr.mxu0 %v4593
        %4675 = vmatpush1.msra.mxu0 %v4592
        %4676 = vmatprep.subr.mxu0 %v4597
        %4677 = vmatpush1.msra.mxu0 %v4596
        %4678 = vmatprep.subr.mxu0 %v4601
        %4679 = vmatpush1.msra.mxu0 %v4600
        %4680 = vmatprep.subr.mxu0 %v4605
        %4681 = vmatpush1.msra.mxu0 %v4604
        %4682 = vmatprep.subr.mxu0 %v4609
        %4683 = vmatpush1.msra.mxu0 %v4608
        %4684 = vmatprep.subr.mxu0 %v4613
        %4685 = vmatpush1.msra.mxu0 %v4612
        %4686 = vmatprep.subr.mxu0 %v4617
        %4687 = vmatpush1.msra.mxu0 %v4616
        %4688 = vmatprep.subr.mxu0 %v4621
        %4689 = vmatpush1.msra.mxu0 %v4620
        %4690 = vmatprep.subr.mxu0 %v4625
        %4691 = vmatpush1.msra.mxu0 %v4624
        %4692 = vmatprep.mubr.f32.mxu0 %v4497
        %4693 = vmatmul.mubr.f32.gmra.mrb[0].mxu0 %v4496
        %v4694 = vpop.f32.mrb[0].mxu0
        %v4695 = vadd.f32 0.0, %v4694
        %v4696 = vpop.f32.mrb[0].mxu0
        %v4697 = vadd.f32 0.0, %v4696
        %4698 = vmatprep.mubr.f32.mxu0 %v4499
        %4699 = vmatmul.mubr.f32.gmra.mrb[0].mxu0 %v4498
        %v4700 = vpop.f32.mrb[0].mxu0
        %v4701 = vadd.f32 0.0, %v4700
        %v4702 = vpop.f32.mrb[0].mxu0
        %v4703 = vadd.f32 0.0, %v4702
        %4704 = vdwg.mxu0
        %4705 = vmatprep.subr.mxu0 %v4503
        %4706 = vmatpush1.msra.mxu0 %v4502
        %4707 = vmatprep.subr.mxu0 %v4507
        %4708 = vmatpush1.msra.mxu0 %v4506
        %4709 = vmatprep.subr.mxu0 %v4511
        %4710 = vmatpush1.msra.mxu0 %v4510
        %4711 = vmatprep.subr.mxu0 %v4515
        %4712 = vmatpush1.msra.mxu0 %v4514
        %4713 = vmatprep.subr.mxu0 %v4519
        %4714 = vmatpush1.msra.mxu0 %v4518
        %4715 = vmatprep.subr.mxu0 %v4523
        %4716 = vmatpush1.msra.mxu0 %v4522
        %4717 = vmatprep.subr.mxu0 %v4527
        %4718 = vmatpush1.msra.mxu0 %v4526
        %4719 = vmatprep.subr.mxu0 %v4531
        %4720 = vmatpush1.msra.mxu0 %v4530
        %4721 = vmatprep.subr.mxu0 %v4535
        %4722 = vmatpush1.msra.mxu0 %v4534
        %4723 = vmatprep.subr.mxu0 %v4539
        %4724 = vmatpush1.msra.mxu0 %v4538
        %4725 = vmatprep.subr.mxu0 %v4543
        %4726 = vmatpush1.msra.mxu0 %v4542
        %4727 = vmatprep.subr.mxu0 %v4547
        %4728 = vmatpush1.msra.mxu0 %v4546
        %4729 = vmatprep.subr.mxu0 %v4551
        %4730 = vmatpush1.msra.mxu0 %v4550
        %4731 = vmatprep.subr.mxu0 %v4555
        %4732 = vmatpush1.msra.mxu0 %v4554
        %4733 = vmatprep.subr.mxu0 %v4559
        %4734 = vmatpush1.msra.mxu0 %v4558
        %4735 = vmatprep.subr.mxu0 %v4563
        %4736 = vmatpush1.msra.mxu0 %v4562
        %4737 = vmatprep.subr.mxu0 %v4567
        %4738 = vmatpush1.msra.mxu0 %v4566
        %4739 = vmatprep.subr.mxu0 %v4571
        %4740 = vmatpush1.msra.mxu0 %v4570
        %4741 = vmatprep.subr.mxu0 %v4575
        %4742 = vmatpush1.msra.mxu0 %v4574
        %4743 = vmatprep.subr.mxu0 %v4579
        %4744 = vmatpush1.msra.mxu0 %v4578
        %4745 = vmatprep.subr.mxu0 %v4583
        %4746 = vmatpush1.msra.mxu0 %v4582
        %4747 = vmatprep.subr.mxu0 %v4587
        %4748 = vmatpush1.msra.mxu0 %v4586
        %4749 = vmatprep.subr.mxu0 %v4591
        %4750 = vmatpush1.msra.mxu0 %v4590
        %4751 = vmatprep.subr.mxu0 %v4595
        %4752 = vmatpush1.msra.mxu0 %v4594
        %4753 = vmatprep.subr.mxu0 %v4599
        %4754 = vmatpush1.msra.mxu0 %v4598
        %4755 = vmatprep.subr.mxu0 %v4603
        %4756 = vmatpush1.msra.mxu0 %v4602
        %4757 = vmatprep.subr.mxu0 %v4607
        %4758 = vmatpush1.msra.mxu0 %v4606
        %4759 = vmatprep.subr.mxu0 %v4611
        %4760 = vmatpush1.msra.mxu0 %v4610
        %4761 = vmatprep.subr.mxu0 %v4615
        %4762 = vmatpush1.msra.mxu0 %v4614
        %4763 = vmatprep.subr.mxu0 %v4619
        %4764 = vmatpush1.msra.mxu0 %v4618
        %4765 = vmatprep.subr.mxu0 %v4623
        %4766 = vmatpush1.msra.mxu0 %v4622
        %4767 = vmatprep.subr.mxu0 %v4627
        %4768 = vmatpush1.msra.mxu0 %v4626
        %4769 = vmatprep.mubr.f32.mxu0 %v4497
        %4770 = vmatmul.mubr.f32.gmra.mrb[0].mxu0 %v4496
        %v4771 = vpop.f32.mrb[0].mxu0
        %v4772 = vadd.f32 0.0, %v4771
        %v4773 = vpop.f32.mrb[0].mxu0
        %v4774 = vadd.f32 0.0, %v4773
        %4775 = vmatprep.mubr.f32.mxu0 %v4499
        %4776 = vmatmul.mubr.f32.gmra.mrb[0].mxu0 %v4498
        %v4777 = vpop.f32.mrb[0].mxu0
        %v4778 = vadd.f32 0.0, %v4777
        %v4779 = vpop.f32.mrb[0].mxu0
        %v4780 = vadd.f32 0.0, %v4779
        %4781 = vdwg.mxu0
        %v4782 = vadd.f32 %v278, %v4695
        %v4783 = vadd.f32 %v282, %v4697
        %v4784 = vadd.f32 %v286, %v4772
        %v4785 = vadd.f32 %v290, %v4774
        %v4786 = vadd.f32 %v278, %v4701
        %v4787 = vadd.f32 %v282, %v4703
        %v4788 = vadd.f32 %v286, %v4778
        %v4789 = vadd.f32 %v290, %v4780
        %v4790 = vld [vmem:[%s883] sm:$0xff]
        %v4791 = vld [vmem:[%s883 + $0x8] sm:$0xff]
        %v4792 = vxor.u32 %v4782, 2147483648
        %v4793 = vxor.u32 %v4786, 2147483648
        %v4794 = vmul.f32 %v4792, 1.442695
        %v4795 = vpow.pop %v4794
        %v4796 = vmul.f32 %v4793, 1.442695
        %v4797 = vpow.pop %v4796
        %v4798 = vadd.f32 %v4795, 1.0
        %v4799 = vadd.f32 %v4797, 1.0
        %v4800 = vrcp.pop %v4798
        %v4801 = vmul.f32 1.0, %v4800
        %v4802 = vrcp.pop %v4799
        %v4803 = vmul.f32 1.0, %v4802
        %v4804 = vxor.u32 %v4783, 2147483648
        %v4805 = vxor.u32 %v4787, 2147483648
        %v4806 = vmul.f32 %v4804, 1.442695
        %v4807 = vpow.pop %v4806
        %v4808 = vmul.f32 %v4805, 1.442695
        %v4809 = vpow.pop %v4808
        %v4810 = vadd.f32 %v4807, 1.0
        %v4811 = vadd.f32 %v4809, 1.0
        %v4812 = vrcp.pop %v4810
        %v4813 = vmul.f32 1.0, %v4812
        %v4814 = vrcp.pop %v4811
        %v4815 = vmul.f32 1.0, %v4814
        %v4816 = vtanh.pop %v4784
        %v4817 = vtanh.pop %v4788
        %v4818 = vxor.u32 %v4785, 2147483648
        %v4819 = vxor.u32 %v4789, 2147483648
        %v4820 = vmul.f32 %v4818, 1.442695
        %v4821 = vpow.pop %v4820
        %v4822 = vmul.f32 %v4819, 1.442695
        %v4823 = vpow.pop %v4822
        %v4824 = vadd.f32 %v4821, 1.0
        %v4825 = vadd.f32 %v4823, 1.0
        %v4826 = vrcp.pop %v4824
        %v4827 = vmul.f32 1.0, %v4826
        %v4828 = vrcp.pop %v4825
        %v4829 = vmul.f32 1.0, %v4828
        %v4830 = vmul.f32 %v4813, %v4790
        %v4831 = vmul.f32 %v4815, %v4791
        %v4832 = vmul.f32 %v4801, %v4816
        %v4833 = vmul.f32 %v4803, %v4817
        %v4834 = vadd.f32 %v4830, %v4832
        %v4835 = vadd.f32 %v4831, %v4833
        %v4836 = vtanh.pop %v4834
        %v4837 = vtanh.pop %v4835
        %v4838 = vmul.f32 %v4827, %v4836
        %v4839 = vmul.f32 %v4829, %v4837
        %4840 = vst [vmem:[%s883] sm:$0xff] %v4834
        %4841 = vst [vmem:[%s883 + $0x8] sm:$0xff] %v4835
        %4842 = vst [vmem:[#allocation4 + $0x8] sm:$0xff] %v4838
        %4843 = vst [vmem:[#allocation4 + $0x18] sm:$0xff] %v4839
        %s4844 = scalar_lea.vmem %s216, 208 [#allocation9]
        %4845 = vst [vmem:[%s4844] sm:$0xff] %v4838
        %4846 = vst [vmem:[%s4844 + $0x8] sm:$0xff] %v4839
        %s4847 = scalar_lea.vmem %s223, 208 [#allocation10]
        %4848 = vst [vmem:[%s4847] sm:$0xff] %v4834
        %4849 = vst [vmem:[%s4847 + $0x8] sm:$0xff] %v4835
        %s4850 = scalar_lea.vmem %s196, 448 [#allocation6]
        %v4851 = vld [vmem:[%s4850] sm:$0xff]
        %v4852 = vld [vmem:[%s4850 + $0x8] sm:$0xff]
        %v4853 = vld [vmem:[%s4850 + $0x10] sm:$0xff]
        %v4854 = vld [vmem:[%s4850 + $0x18] sm:$0xff]
        %v4855 = vld [vmem:[%s4850 + $0x20] sm:$0xff]
        %v4856 = vld [vmem:[%s4850 + $0x28] sm:$0xff]
        %v4857 = vld [vmem:[%s4850 + $0x30] sm:$0xff]
        %v4858 = vld [vmem:[%s4850 + $0x38] sm:$0xff]
        %v4859 = vld [vmem:[#allocation4] sm:$0xff]
        %v4860 = vld [vmem:[#allocation4 + $0x10] sm:$0xff]
        %v4861 = vld [vmem:[#allocation2] sm:$0xff]
        %v4862 = vld [vmem:[#allocation2 + $0x8] sm:$0xff]
        %v4863 = vld [vmem:[#allocation2 + $0x10] sm:$0xff]
        %v4864 = vld [vmem:[#allocation2 + $0x18] sm:$0xff]
        %v4865 = vld [vmem:[#allocation2 + $0x20] sm:$0xff]
        %v4866 = vld [vmem:[#allocation2 + $0x28] sm:$0xff]
        %v4867 = vld [vmem:[#allocation2 + $0x30] sm:$0xff]
        %v4868 = vld [vmem:[#allocation2 + $0x38] sm:$0xff]
        %v4869 = vld [vmem:[#allocation2 + $0x40] sm:$0xff]
        %v4870 = vld [vmem:[#allocation2 + $0x48] sm:$0xff]
        %v4871 = vld [vmem:[#allocation2 + $0x50] sm:$0xff]
        %v4872 = vld [vmem:[#allocation2 + $0x58] sm:$0xff]
        %v4873 = vld [vmem:[#allocation2 + $0x60] sm:$0xff]
        %v4874 = vld [vmem:[#allocation2 + $0x68] sm:$0xff]
        %v4875 = vld [vmem:[#allocation2 + $0x70] sm:$0xff]
        %v4876 = vld [vmem:[#allocation2 + $0x78] sm:$0xff]
        %v4877 = vld [vmem:[#allocation2 + $0x80] sm:$0xff]
        %v4878 = vld [vmem:[#allocation2 + $0x88] sm:$0xff]
        %v4879 = vld [vmem:[#allocation2 + $0x90] sm:$0xff]
        %v4880 = vld [vmem:[#allocation2 + $0x98] sm:$0xff]
        %v4881 = vld [vmem:[#allocation2 + $0xa0] sm:$0xff]
        %v4882 = vld [vmem:[#allocation2 + $0xa8] sm:$0xff]
        %v4883 = vld [vmem:[#allocation2 + $0xb0] sm:$0xff]
        %v4884 = vld [vmem:[#allocation2 + $0xb8] sm:$0xff]
        %v4885 = vld [vmem:[#allocation2 + $0xc0] sm:$0xff]
        %v4886 = vld [vmem:[#allocation2 + $0xc8] sm:$0xff]
        %v4887 = vld [vmem:[#allocation2 + $0xd0] sm:$0xff]
        %v4888 = vld [vmem:[#allocation2 + $0xd8] sm:$0xff]
        %v4889 = vld [vmem:[#allocation2 + $0xe0] sm:$0xff]
        %v4890 = vld [vmem:[#allocation2 + $0xe8] sm:$0xff]
        %v4891 = vld [vmem:[#allocation2 + $0xf0] sm:$0xff]
        %v4892 = vld [vmem:[#allocation2 + $0xf8] sm:$0xff]
        %v4893 = vld [vmem:[#allocation2 + $0x100] sm:$0xff]
        %v4894 = vld [vmem:[#allocation2 + $0x108] sm:$0xff]
        %v4895 = vld [vmem:[#allocation2 + $0x110] sm:$0xff]
        %v4896 = vld [vmem:[#allocation2 + $0x118] sm:$0xff]
        %v4897 = vld [vmem:[#allocation2 + $0x120] sm:$0xff]
        %v4898 = vld [vmem:[#allocation2 + $0x128] sm:$0xff]
        %v4899 = vld [vmem:[#allocation2 + $0x130] sm:$0xff]
        %v4900 = vld [vmem:[#allocation2 + $0x138] sm:$0xff]
        %v4901 = vld [vmem:[#allocation2 + $0x140] sm:$0xff]
        %v4902 = vld [vmem:[#allocation2 + $0x148] sm:$0xff]
        %v4903 = vld [vmem:[#allocation2 + $0x150] sm:$0xff]
        %v4904 = vld [vmem:[#allocation2 + $0x158] sm:$0xff]
        %v4905 = vld [vmem:[#allocation2 + $0x160] sm:$0xff]
        %v4906 = vld [vmem:[#allocation2 + $0x168] sm:$0xff]
        %v4907 = vld [vmem:[#allocation2 + $0x170] sm:$0xff]
        %v4908 = vld [vmem:[#allocation2 + $0x178] sm:$0xff]
        %v4909 = vld [vmem:[#allocation2 + $0x180] sm:$0xff]
        %v4910 = vld [vmem:[#allocation2 + $0x188] sm:$0xff]
        %v4911 = vld [vmem:[#allocation2 + $0x190] sm:$0xff]
        %v4912 = vld [vmem:[#allocation2 + $0x198] sm:$0xff]
        %v4913 = vld [vmem:[#allocation2 + $0x1a0] sm:$0xff]
        %v4914 = vld [vmem:[#allocation2 + $0x1a8] sm:$0xff]
        %v4915 = vld [vmem:[#allocation2 + $0x1b0] sm:$0xff]
        %v4916 = vld [vmem:[#allocation2 + $0x1b8] sm:$0xff]
        %v4917 = vld [vmem:[#allocation2 + $0x1c0] sm:$0xff]
        %v4918 = vld [vmem:[#allocation2 + $0x1c8] sm:$0xff]
        %v4919 = vld [vmem:[#allocation2 + $0x1d0] sm:$0xff]
        %v4920 = vld [vmem:[#allocation2 + $0x1d8] sm:$0xff]
        %v4921 = vld [vmem:[#allocation2 + $0x1e0] sm:$0xff]
        %v4922 = vld [vmem:[#allocation2 + $0x1e8] sm:$0xff]
        %v4923 = vld [vmem:[#allocation2 + $0x1f0] sm:$0xff]
        %v4924 = vld [vmem:[#allocation2 + $0x1f8] sm:$0xff]
        %4925 = vmatprep.subr.mxu0 %v4862
        %4926 = vmatpush1.msra.mxu0 %v4861
        %4927 = vmatprep.subr.mxu0 %v4866
        %4928 = vmatpush1.msra.mxu0 %v4865
        %4929 = vmatprep.subr.mxu0 %v4870
        %4930 = vmatpush1.msra.mxu0 %v4869
        %4931 = vmatprep.subr.mxu0 %v4874
        %4932 = vmatpush1.msra.mxu0 %v4873
        %4933 = vmatprep.subr.mxu0 %v4878
        %4934 = vmatpush1.msra.mxu0 %v4877
        %4935 = vmatprep.subr.mxu0 %v4882
        %4936 = vmatpush1.msra.mxu0 %v4881
        %4937 = vmatprep.subr.mxu0 %v4886
        %4938 = vmatpush1.msra.mxu0 %v4885
        %4939 = vmatprep.subr.mxu0 %v4890
        %4940 = vmatpush1.msra.mxu0 %v4889
        %4941 = vmatprep.subr.mxu0 %v4894
        %4942 = vmatpush1.msra.mxu0 %v4893
        %4943 = vmatprep.subr.mxu0 %v4898
        %4944 = vmatpush1.msra.mxu0 %v4897
        %4945 = vmatprep.subr.mxu0 %v4902
        %4946 = vmatpush1.msra.mxu0 %v4901
        %4947 = vmatprep.subr.mxu0 %v4906
        %4948 = vmatpush1.msra.mxu0 %v4905
        %4949 = vmatprep.subr.mxu0 %v4910
        %4950 = vmatpush1.msra.mxu0 %v4909
        %4951 = vmatprep.subr.mxu0 %v4914
        %4952 = vmatpush1.msra.mxu0 %v4913
        %4953 = vmatprep.subr.mxu0 %v4918
        %4954 = vmatpush1.msra.mxu0 %v4917
        %4955 = vmatprep.subr.mxu0 %v4922
        %4956 = vmatpush1.msra.mxu0 %v4921
        %4957 = vmatprep.subr.mxu0 0.0
        %4958 = vmatpush1.msra.mxu0 0.0
        %4959 = vmatprep.subr.mxu0 0.0
        %4960 = vmatpush1.msra.mxu0 0.0
        %4961 = vmatprep.subr.mxu0 0.0
        %4962 = vmatpush1.msra.mxu0 0.0
        %4963 = vmatprep.subr.mxu0 0.0
        %4964 = vmatpush1.msra.mxu0 0.0
        %4965 = vmatprep.subr.mxu0 0.0
        %4966 = vmatpush1.msra.mxu0 0.0
        %4967 = vmatprep.subr.mxu0 0.0
        %4968 = vmatpush1.msra.mxu0 0.0
        %4969 = vmatprep.subr.mxu0 0.0
        %4970 = vmatpush1.msra.mxu0 0.0
        %4971 = vmatprep.subr.mxu0 0.0
        %4972 = vmatpush1.msra.mxu0 0.0
        %4973 = vmatprep.subr.mxu0 0.0
        %4974 = vmatpush1.msra.mxu0 0.0
        %4975 = vmatprep.subr.mxu0 0.0
        %4976 = vmatpush1.msra.mxu0 0.0
        %4977 = vmatprep.subr.mxu0 0.0
        %4978 = vmatpush1.msra.mxu0 0.0
        %4979 = vmatprep.subr.mxu0 0.0
        %4980 = vmatpush1.msra.mxu0 0.0
        %4981 = vmatprep.subr.mxu0 0.0
        %4982 = vmatpush1.msra.mxu0 0.0
        %4983 = vmatprep.subr.mxu0 0.0
        %4984 = vmatpush1.msra.mxu0 0.0
        %4985 = vmatprep.subr.mxu0 0.0
        %4986 = vmatpush1.msra.mxu0 0.0
        %4987 = vmatprep.subr.mxu0 0.0
        %4988 = vmatpush1.msra.mxu0 0.0
        %4989 = vmatprep.mubr.f32.mxu0 0.0
        %4990 = vmatmul.mubr.f32.gmra.mrb[0].mxu0 %v4859
        %v4991 = vpop.f32.mrb[0].mxu0
        %v4992 = vadd.f32 0.0, %v4991
        %v4993 = vpop.f32.mrb[0].mxu0
        %v4994 = vadd.f32 0.0, %v4993
        %4995 = vmatprep.mubr.f32.mxu0 0.0
        %4996 = vmatmul.mubr.f32.gmra.mrb[0].mxu0 %v4860
        %v4997 = vpop.f32.mrb[0].mxu0
        %v4998 = vadd.f32 0.0, %v4997
        %v4999 = vpop.f32.mrb[0].mxu0
        %v5000 = vadd.f32 0.0, %v4999
        %5001 = vdwg.mxu0
        %5002 = vmatprep.subr.mxu0 %v4864
        %5003 = vmatpush1.msra.mxu0 %v4863
        %5004 = vmatprep.subr.mxu0 %v4868
        %5005 = vmatpush1.msra.mxu0 %v4867
        %5006 = vmatprep.subr.mxu0 %v4872
        %5007 = vmatpush1.msra.mxu0 %v4871
        %5008 = vmatprep.subr.mxu0 %v4876
        %5009 = vmatpush1.msra.mxu0 %v4875
        %5010 = vmatprep.subr.mxu0 %v4880
        %5011 = vmatpush1.msra.mxu0 %v4879
        %5012 = vmatprep.subr.mxu0 %v4884
        %5013 = vmatpush1.msra.mxu0 %v4883
        %5014 = vmatprep.subr.mxu0 %v4888
        %5015 = vmatpush1.msra.mxu0 %v4887
        %5016 = vmatprep.subr.mxu0 %v4892
        %5017 = vmatpush1.msra.mxu0 %v4891
        %5018 = vmatprep.subr.mxu0 %v4896
        %5019 = vmatpush1.msra.mxu0 %v4895
        %5020 = vmatprep.subr.mxu0 %v4900
        %5021 = vmatpush1.msra.mxu0 %v4899
        %5022 = vmatprep.subr.mxu0 %v4904
        %5023 = vmatpush1.msra.mxu0 %v4903
        %5024 = vmatprep.subr.mxu0 %v4908
        %5025 = vmatpush1.msra.mxu0 %v4907
        %5026 = vmatprep.subr.mxu0 %v4912
        %5027 = vmatpush1.msra.mxu0 %v4911
        %5028 = vmatprep.subr.mxu0 %v4916
        %5029 = vmatpush1.msra.mxu0 %v4915
        %5030 = vmatprep.subr.mxu0 %v4920
        %5031 = vmatpush1.msra.mxu0 %v4919
        %5032 = vmatprep.subr.mxu0 %v4924
        %5033 = vmatpush1.msra.mxu0 %v4923
        %5034 = vmatprep.subr.mxu0 0.0
        %5035 = vmatpush1.msra.mxu0 0.0
        %5036 = vmatprep.subr.mxu0 0.0
        %5037 = vmatpush1.msra.mxu0 0.0
        %5038 = vmatprep.subr.mxu0 0.0
        %5039 = vmatpush1.msra.mxu0 0.0
        %5040 = vmatprep.subr.mxu0 0.0
        %5041 = vmatpush1.msra.mxu0 0.0
        %5042 = vmatprep.subr.mxu0 0.0
        %5043 = vmatpush1.msra.mxu0 0.0
        %5044 = vmatprep.subr.mxu0 0.0
        %5045 = vmatpush1.msra.mxu0 0.0
        %5046 = vmatprep.subr.mxu0 0.0
        %5047 = vmatpush1.msra.mxu0 0.0
        %5048 = vmatprep.subr.mxu0 0.0
        %5049 = vmatpush1.msra.mxu0 0.0
        %5050 = vmatprep.subr.mxu0 0.0
        %5051 = vmatpush1.msra.mxu0 0.0
        %5052 = vmatprep.subr.mxu0 0.0
        %5053 = vmatpush1.msra.mxu0 0.0
        %5054 = vmatprep.subr.mxu0 0.0
        %5055 = vmatpush1.msra.mxu0 0.0
        %5056 = vmatprep.subr.mxu0 0.0
        %5057 = vmatpush1.msra.mxu0 0.0
        %5058 = vmatprep.subr.mxu0 0.0
        %5059 = vmatpush1.msra.mxu0 0.0
        %5060 = vmatprep.subr.mxu0 0.0
        %5061 = vmatpush1.msra.mxu0 0.0
        %5062 = vmatprep.subr.mxu0 0.0
        %5063 = vmatpush1.msra.mxu0 0.0
        %5064 = vmatprep.subr.mxu0 0.0
        %5065 = vmatpush1.msra.mxu0 0.0
        %5066 = vmatprep.mubr.f32.mxu0 0.0
        %5067 = vmatmul.mubr.f32.gmra.mrb[0].mxu0 %v4859
        %v5068 = vpop.f32.mrb[0].mxu0
        %v5069 = vadd.f32 0.0, %v5068
        %v5070 = vpop.f32.mrb[0].mxu0
        %v5071 = vadd.f32 0.0, %v5070
        %5072 = vmatprep.mubr.f32.mxu0 0.0
        %5073 = vmatmul.mubr.f32.gmra.mrb[0].mxu0 %v4860
        %v5074 = vpop.f32.mrb[0].mxu0
        %v5075 = vadd.f32 0.0, %v5074
        %v5076 = vpop.f32.mrb[0].mxu0
        %v5077 = vadd.f32 0.0, %v5076
        %5078 = vdwg.mxu0
        %v5079 = vadd.f32 %v4851, %v4992
        %v5080 = vadd.f32 %v4852, %v4994
        %v5081 = vadd.f32 %v4853, %v5069
        %v5082 = vadd.f32 %v4854, %v5071
        %v5083 = vadd.f32 %v4855, %v4998
        %v5084 = vadd.f32 %v4856, %v5000
        %v5085 = vadd.f32 %v4857, %v5075
        %v5086 = vadd.f32 %v4858, %v5077
        %v5087 = vld [vmem:[#allocation5] sm:$0xff]
        %v5088 = vld [vmem:[#allocation5 + $0x8] sm:$0xff]
        %v5089 = vxor.u32 %v5079, 2147483648
        %v5090 = vxor.u32 %v5083, 2147483648
        %v5091 = vmul.f32 %v5089, 1.442695
        %v5092 = vpow.pop %v5091
        %v5093 = vmul.f32 %v5090, 1.442695
        %v5094 = vpow.pop %v5093
        %v5095 = vadd.f32 %v5092, 1.0
        %v5096 = vadd.f32 %v5094, 1.0
        %v5097 = vrcp.pop %v5095
        %v5098 = vmul.f32 1.0, %v5097
        %v5099 = vrcp.pop %v5096
        %v5100 = vmul.f32 1.0, %v5099
        %v5101 = vxor.u32 %v5080, 2147483648
        %v5102 = vxor.u32 %v5084, 2147483648
        %v5103 = vmul.f32 %v5101, 1.442695
        %v5104 = vpow.pop %v5103
        %v5105 = vmul.f32 %v5102, 1.442695
        %v5106 = vpow.pop %v5105
        %v5107 = vadd.f32 %v5104, 1.0
        %v5108 = vadd.f32 %v5106, 1.0
        %v5109 = vrcp.pop %v5107
        %v5110 = vmul.f32 1.0, %v5109
        %v5111 = vrcp.pop %v5108
        %v5112 = vmul.f32 1.0, %v5111
        %v5113 = vtanh.pop %v5081
        %v5114 = vtanh.pop %v5085
        %v5115 = vxor.u32 %v5082, 2147483648
        %v5116 = vxor.u32 %v5086, 2147483648
        %v5117 = vmul.f32 %v5115, 1.442695
        %v5118 = vpow.pop %v5117
        %v5119 = vmul.f32 %v5116, 1.442695
        %v5120 = vpow.pop %v5119
        %v5121 = vadd.f32 %v5118, 1.0
        %v5122 = vadd.f32 %v5120, 1.0
        %v5123 = vrcp.pop %v5121
        %v5124 = vmul.f32 1.0, %v5123
        %v5125 = vrcp.pop %v5122
        %v5126 = vmul.f32 1.0, %v5125
        %v5127 = vmul.f32 %v5110, %v5087
        %v5128 = vmul.f32 %v5112, %v5088
        %v5129 = vmul.f32 %v5098, %v5113
        %v5130 = vmul.f32 %v5100, %v5114
        %v5131 = vadd.f32 %v5127, %v5129
        %v5132 = vadd.f32 %v5128, %v5130
        %v5133 = vtanh.pop %v5131
        %v5134 = vtanh.pop %v5132
        %v5135 = vmul.f32 %v5124, %v5133
        %v5136 = vmul.f32 %v5126, %v5134
        %5137 = vst [vmem:[#allocation5] sm:$0xff] %v5131
        %5138 = vst [vmem:[#allocation5 + $0x8] sm:$0xff] %v5132
        %5139 = vst [vmem:[#allocation4] sm:$0xff] %v5135
        %5140 = vst [vmem:[#allocation4 + $0x10] sm:$0xff] %v5136
        %s5141 = scalar_lea.vmem %s216, 224 [#allocation9]
        %5142 = vst [vmem:[%s5141] sm:$0xff] %v5135
        %5143 = vst [vmem:[%s5141 + $0x8] sm:$0xff] %v5136
        %s5144 = scalar_lea.vmem %s223, 224 [#allocation10]
        %5145 = vst [vmem:[%s5144] sm:$0xff] %v5131
        %5146 = vst [vmem:[%s5144 + $0x8] sm:$0xff] %v5132
        %v5147 = vld [vmem:[#allocation4] sm:$0xff]
        %v5148 = vld [vmem:[#allocation4 + $0x8] sm:$0xff]
        %v5149 = vld [vmem:[#allocation4 + $0x10] sm:$0xff]
        %v5150 = vld [vmem:[#allocation4 + $0x18] sm:$0xff]
        %v5151 = vld [vmem:[#allocation3] sm:$0xff]
        %v5152 = vld [vmem:[#allocation3 + $0x8] sm:$0xff]
        %v5153 = vld [vmem:[#allocation3 + $0x10] sm:$0xff]
        %v5154 = vld [vmem:[#allocation3 + $0x18] sm:$0xff]
        %v5155 = vld [vmem:[#allocation3 + $0x20] sm:$0xff]
        %v5156 = vld [vmem:[#allocation3 + $0x28] sm:$0xff]
        %v5157 = vld [vmem:[#allocation3 + $0x30] sm:$0xff]
        %v5158 = vld [vmem:[#allocation3 + $0x38] sm:$0xff]
        %v5159 = vld [vmem:[#allocation3 + $0x40] sm:$0xff]
        %v5160 = vld [vmem:[#allocation3 + $0x48] sm:$0xff]
        %v5161 = vld [vmem:[#allocation3 + $0x50] sm:$0xff]
        %v5162 = vld [vmem:[#allocation3 + $0x58] sm:$0xff]
        %v5163 = vld [vmem:[#allocation3 + $0x60] sm:$0xff]
        %v5164 = vld [vmem:[#allocation3 + $0x68] sm:$0xff]
        %v5165 = vld [vmem:[#allocation3 + $0x70] sm:$0xff]
        %v5166 = vld [vmem:[#allocation3 + $0x78] sm:$0xff]
        %v5167 = vld [vmem:[#allocation3 + $0x80] sm:$0xff]
        %v5168 = vld [vmem:[#allocation3 + $0x88] sm:$0xff]
        %v5169 = vld [vmem:[#allocation3 + $0x90] sm:$0xff]
        %v5170 = vld [vmem:[#allocation3 + $0x98] sm:$0xff]
        %v5171 = vld [vmem:[#allocation3 + $0xa0] sm:$0xff]
        %v5172 = vld [vmem:[#allocation3 + $0xa8] sm:$0xff]
        %v5173 = vld [vmem:[#allocation3 + $0xb0] sm:$0xff]
        %v5174 = vld [vmem:[#allocation3 + $0xb8] sm:$0xff]
        %v5175 = vld [vmem:[#allocation3 + $0xc0] sm:$0xff]
        %v5176 = vld [vmem:[#allocation3 + $0xc8] sm:$0xff]
        %v5177 = vld [vmem:[#allocation3 + $0xd0] sm:$0xff]
        %v5178 = vld [vmem:[#allocation3 + $0xd8] sm:$0xff]
        %v5179 = vld [vmem:[#allocation3 + $0xe0] sm:$0xff]
        %v5180 = vld [vmem:[#allocation3 + $0xe8] sm:$0xff]
        %v5181 = vld [vmem:[#allocation3 + $0xf0] sm:$0xff]
        %v5182 = vld [vmem:[#allocation3 + $0xf8] sm:$0xff]
        %v5183 = vld [vmem:[#allocation3 + $0x100] sm:$0xff]
        %v5184 = vld [vmem:[#allocation3 + $0x108] sm:$0xff]
        %v5185 = vld [vmem:[#allocation3 + $0x110] sm:$0xff]
        %v5186 = vld [vmem:[#allocation3 + $0x118] sm:$0xff]
        %v5187 = vld [vmem:[#allocation3 + $0x120] sm:$0xff]
        %v5188 = vld [vmem:[#allocation3 + $0x128] sm:$0xff]
        %v5189 = vld [vmem:[#allocation3 + $0x130] sm:$0xff]
        %v5190 = vld [vmem:[#allocation3 + $0x138] sm:$0xff]
        %v5191 = vld [vmem:[#allocation3 + $0x140] sm:$0xff]
        %v5192 = vld [vmem:[#allocation3 + $0x148] sm:$0xff]
        %v5193 = vld [vmem:[#allocation3 + $0x150] sm:$0xff]
        %v5194 = vld [vmem:[#allocation3 + $0x158] sm:$0xff]
        %v5195 = vld [vmem:[#allocation3 + $0x160] sm:$0xff]
        %v5196 = vld [vmem:[#allocation3 + $0x168] sm:$0xff]
        %v5197 = vld [vmem:[#allocation3 + $0x170] sm:$0xff]
        %v5198 = vld [vmem:[#allocation3 + $0x178] sm:$0xff]
        %v5199 = vld [vmem:[#allocation3 + $0x180] sm:$0xff]
        %v5200 = vld [vmem:[#allocation3 + $0x188] sm:$0xff]
        %v5201 = vld [vmem:[#allocation3 + $0x190] sm:$0xff]
        %v5202 = vld [vmem:[#allocation3 + $0x198] sm:$0xff]
        %v5203 = vld [vmem:[#allocation3 + $0x1a0] sm:$0xff]
        %v5204 = vld [vmem:[#allocation3 + $0x1a8] sm:$0xff]
        %v5205 = vld [vmem:[#allocation3 + $0x1b0] sm:$0xff]
        %v5206 = vld [vmem:[#allocation3 + $0x1b8] sm:$0xff]
        %v5207 = vld [vmem:[#allocation3 + $0x1c0] sm:$0xff]
        %v5208 = vld [vmem:[#allocation3 + $0x1c8] sm:$0xff]
        %v5209 = vld [vmem:[#allocation3 + $0x1d0] sm:$0xff]
        %v5210 = vld [vmem:[#allocation3 + $0x1d8] sm:$0xff]
        %v5211 = vld [vmem:[#allocation3 + $0x1e0] sm:$0xff]
        %v5212 = vld [vmem:[#allocation3 + $0x1e8] sm:$0xff]
        %v5213 = vld [vmem:[#allocation3 + $0x1f0] sm:$0xff]
        %v5214 = vld [vmem:[#allocation3 + $0x1f8] sm:$0xff]
        %v5215 = vld [vmem:[#allocation3 + $0x200] sm:$0xff]
        %v5216 = vld [vmem:[#allocation3 + $0x208] sm:$0xff]
        %v5217 = vld [vmem:[#allocation3 + $0x210] sm:$0xff]
        %v5218 = vld [vmem:[#allocation3 + $0x218] sm:$0xff]
        %v5219 = vld [vmem:[#allocation3 + $0x220] sm:$0xff]
        %v5220 = vld [vmem:[#allocation3 + $0x228] sm:$0xff]
        %v5221 = vld [vmem:[#allocation3 + $0x230] sm:$0xff]
        %v5222 = vld [vmem:[#allocation3 + $0x238] sm:$0xff]
        %v5223 = vld [vmem:[#allocation3 + $0x240] sm:$0xff]
        %v5224 = vld [vmem:[#allocation3 + $0x248] sm:$0xff]
        %v5225 = vld [vmem:[#allocation3 + $0x250] sm:$0xff]
        %v5226 = vld [vmem:[#allocation3 + $0x258] sm:$0xff]
        %v5227 = vld [vmem:[#allocation3 + $0x260] sm:$0xff]
        %v5228 = vld [vmem:[#allocation3 + $0x268] sm:$0xff]
        %v5229 = vld [vmem:[#allocation3 + $0x270] sm:$0xff]
        %v5230 = vld [vmem:[#allocation3 + $0x278] sm:$0xff]
        %v5231 = vld [vmem:[#allocation3 + $0x280] sm:$0xff]
        %v5232 = vld [vmem:[#allocation3 + $0x288] sm:$0xff]
        %v5233 = vld [vmem:[#allocation3 + $0x290] sm:$0xff]
        %v5234 = vld [vmem:[#allocation3 + $0x298] sm:$0xff]
        %v5235 = vld [vmem:[#allocation3 + $0x2a0] sm:$0xff]
        %v5236 = vld [vmem:[#allocation3 + $0x2a8] sm:$0xff]
        %v5237 = vld [vmem:[#allocation3 + $0x2b0] sm:$0xff]
        %v5238 = vld [vmem:[#allocation3 + $0x2b8] sm:$0xff]
        %v5239 = vld [vmem:[#allocation3 + $0x2c0] sm:$0xff]
        %v5240 = vld [vmem:[#allocation3 + $0x2c8] sm:$0xff]
        %v5241 = vld [vmem:[#allocation3 + $0x2d0] sm:$0xff]
        %v5242 = vld [vmem:[#allocation3 + $0x2d8] sm:$0xff]
        %v5243 = vld [vmem:[#allocation3 + $0x2e0] sm:$0xff]
        %v5244 = vld [vmem:[#allocation3 + $0x2e8] sm:$0xff]
        %v5245 = vld [vmem:[#allocation3 + $0x2f0] sm:$0xff]
        %v5246 = vld [vmem:[#allocation3 + $0x2f8] sm:$0xff]
        %v5247 = vld [vmem:[#allocation3 + $0x300] sm:$0xff]
        %v5248 = vld [vmem:[#allocation3 + $0x308] sm:$0xff]
        %v5249 = vld [vmem:[#allocation3 + $0x310] sm:$0xff]
        %v5250 = vld [vmem:[#allocation3 + $0x318] sm:$0xff]
        %v5251 = vld [vmem:[#allocation3 + $0x320] sm:$0xff]
        %v5252 = vld [vmem:[#allocation3 + $0x328] sm:$0xff]
        %v5253 = vld [vmem:[#allocation3 + $0x330] sm:$0xff]
        %v5254 = vld [vmem:[#allocation3 + $0x338] sm:$0xff]
        %v5255 = vld [vmem:[#allocation3 + $0x340] sm:$0xff]
        %v5256 = vld [vmem:[#allocation3 + $0x348] sm:$0xff]
        %v5257 = vld [vmem:[#allocation3 + $0x350] sm:$0xff]
        %v5258 = vld [vmem:[#allocation3 + $0x358] sm:$0xff]
        %v5259 = vld [vmem:[#allocation3 + $0x360] sm:$0xff]
        %v5260 = vld [vmem:[#allocation3 + $0x368] sm:$0xff]
        %v5261 = vld [vmem:[#allocation3 + $0x370] sm:$0xff]
        %v5262 = vld [vmem:[#allocation3 + $0x378] sm:$0xff]
        %v5263 = vld [vmem:[#allocation3 + $0x380] sm:$0xff]
        %v5264 = vld [vmem:[#allocation3 + $0x388] sm:$0xff]
        %v5265 = vld [vmem:[#allocation3 + $0x390] sm:$0xff]
        %v5266 = vld [vmem:[#allocation3 + $0x398] sm:$0xff]
        %v5267 = vld [vmem:[#allocation3 + $0x3a0] sm:$0xff]
        %v5268 = vld [vmem:[#allocation3 + $0x3a8] sm:$0xff]
        %v5269 = vld [vmem:[#allocation3 + $0x3b0] sm:$0xff]
        %v5270 = vld [vmem:[#allocation3 + $0x3b8] sm:$0xff]
        %v5271 = vld [vmem:[#allocation3 + $0x3c0] sm:$0xff]
        %v5272 = vld [vmem:[#allocation3 + $0x3c8] sm:$0xff]
        %v5273 = vld [vmem:[#allocation3 + $0x3d0] sm:$0xff]
        %v5274 = vld [vmem:[#allocation3 + $0x3d8] sm:$0xff]
        %v5275 = vld [vmem:[#allocation3 + $0x3e0] sm:$0xff]
        %v5276 = vld [vmem:[#allocation3 + $0x3e8] sm:$0xff]
        %v5277 = vld [vmem:[#allocation3 + $0x3f0] sm:$0xff]
        %v5278 = vld [vmem:[#allocation3 + $0x3f8] sm:$0xff]
        %5279 = vmatprep.subr.mxu0 %v5152
        %5280 = vmatpush1.msra.mxu0 %v5151
        %5281 = vmatprep.subr.mxu0 %v5156
        %5282 = vmatpush1.msra.mxu0 %v5155
        %5283 = vmatprep.subr.mxu0 %v5160
        %5284 = vmatpush1.msra.mxu0 %v5159
        %5285 = vmatprep.subr.mxu0 %v5164
        %5286 = vmatpush1.msra.mxu0 %v5163
        %5287 = vmatprep.subr.mxu0 %v5168
        %5288 = vmatpush1.msra.mxu0 %v5167
        %5289 = vmatprep.subr.mxu0 %v5172
        %5290 = vmatpush1.msra.mxu0 %v5171
        %5291 = vmatprep.subr.mxu0 %v5176
        %5292 = vmatpush1.msra.mxu0 %v5175
        %5293 = vmatprep.subr.mxu0 %v5180
        %5294 = vmatpush1.msra.mxu0 %v5179
        %5295 = vmatprep.subr.mxu0 %v5184
        %5296 = vmatpush1.msra.mxu0 %v5183
        %5297 = vmatprep.subr.mxu0 %v5188
        %5298 = vmatpush1.msra.mxu0 %v5187
        %5299 = vmatprep.subr.mxu0 %v5192
        %5300 = vmatpush1.msra.mxu0 %v5191
        %5301 = vmatprep.subr.mxu0 %v5196
        %5302 = vmatpush1.msra.mxu0 %v5195
        %5303 = vmatprep.subr.mxu0 %v5200
        %5304 = vmatpush1.msra.mxu0 %v5199
        %5305 = vmatprep.subr.mxu0 %v5204
        %5306 = vmatpush1.msra.mxu0 %v5203
        %5307 = vmatprep.subr.mxu0 %v5208
        %5308 = vmatpush1.msra.mxu0 %v5207
        %5309 = vmatprep.subr.mxu0 %v5212
        %5310 = vmatpush1.msra.mxu0 %v5211
        %5311 = vmatprep.subr.mxu0 %v5216
        %5312 = vmatpush1.msra.mxu0 %v5215
        %5313 = vmatprep.subr.mxu0 %v5220
        %5314 = vmatpush1.msra.mxu0 %v5219
        %5315 = vmatprep.subr.mxu0 %v5224
        %5316 = vmatpush1.msra.mxu0 %v5223
        %5317 = vmatprep.subr.mxu0 %v5228
        %5318 = vmatpush1.msra.mxu0 %v5227
        %5319 = vmatprep.subr.mxu0 %v5232
        %5320 = vmatpush1.msra.mxu0 %v5231
        %5321 = vmatprep.subr.mxu0 %v5236
        %5322 = vmatpush1.msra.mxu0 %v5235
        %5323 = vmatprep.subr.mxu0 %v5240
        %5324 = vmatpush1.msra.mxu0 %v5239
        %5325 = vmatprep.subr.mxu0 %v5244
        %5326 = vmatpush1.msra.mxu0 %v5243
        %5327 = vmatprep.subr.mxu0 %v5248
        %5328 = vmatpush1.msra.mxu0 %v5247
        %5329 = vmatprep.subr.mxu0 %v5252
        %5330 = vmatpush1.msra.mxu0 %v5251
        %5331 = vmatprep.subr.mxu0 %v5256
        %5332 = vmatpush1.msra.mxu0 %v5255
        %5333 = vmatprep.subr.mxu0 %v5260
        %5334 = vmatpush1.msra.mxu0 %v5259
        %5335 = vmatprep.subr.mxu0 %v5264
        %5336 = vmatpush1.msra.mxu0 %v5263
        %5337 = vmatprep.subr.mxu0 %v5268
        %5338 = vmatpush1.msra.mxu0 %v5267
        %5339 = vmatprep.subr.mxu0 %v5272
        %5340 = vmatpush1.msra.mxu0 %v5271
        %5341 = vmatprep.subr.mxu0 %v5276
        %5342 = vmatpush1.msra.mxu0 %v5275
        %5343 = vmatprep.mubr.f32.mxu0 %v5148
        %5344 = vmatmul.mubr.f32.gmra.mrb[0].mxu0 %v5147
        %v5345 = vpop.f32.mrb[0].mxu0
        %v5346 = vadd.f32 0.0, %v5345
        %v5347 = vpop.f32.mrb[0].mxu0
        %v5348 = vadd.f32 0.0, %v5347
        %5349 = vmatprep.mubr.f32.mxu0 %v5150
        %5350 = vmatmul.mubr.f32.gmra.mrb[0].mxu0 %v5149
        %v5351 = vpop.f32.mrb[0].mxu0
        %v5352 = vadd.f32 0.0, %v5351
        %v5353 = vpop.f32.mrb[0].mxu0
        %v5354 = vadd.f32 0.0, %v5353
        %5355 = vdwg.mxu0
        %5356 = vmatprep.subr.mxu0 %v5154
        %5357 = vmatpush1.msra.mxu0 %v5153
        %5358 = vmatprep.subr.mxu0 %v5158
        %5359 = vmatpush1.msra.mxu0 %v5157
        %5360 = vmatprep.subr.mxu0 %v5162
        %5361 = vmatpush1.msra.mxu0 %v5161
        %5362 = vmatprep.subr.mxu0 %v5166
        %5363 = vmatpush1.msra.mxu0 %v5165
        %5364 = vmatprep.subr.mxu0 %v5170
        %5365 = vmatpush1.msra.mxu0 %v5169
        %5366 = vmatprep.subr.mxu0 %v5174
        %5367 = vmatpush1.msra.mxu0 %v5173
        %5368 = vmatprep.subr.mxu0 %v5178
        %5369 = vmatpush1.msra.mxu0 %v5177
        %5370 = vmatprep.subr.mxu0 %v5182
        %5371 = vmatpush1.msra.mxu0 %v5181
        %5372 = vmatprep.subr.mxu0 %v5186
        %5373 = vmatpush1.msra.mxu0 %v5185
        %5374 = vmatprep.subr.mxu0 %v5190
        %5375 = vmatpush1.msra.mxu0 %v5189
        %5376 = vmatprep.subr.mxu0 %v5194
        %5377 = vmatpush1.msra.mxu0 %v5193
        %5378 = vmatprep.subr.mxu0 %v5198
        %5379 = vmatpush1.msra.mxu0 %v5197
        %5380 = vmatprep.subr.mxu0 %v5202
        %5381 = vmatpush1.msra.mxu0 %v5201
        %5382 = vmatprep.subr.mxu0 %v5206
        %5383 = vmatpush1.msra.mxu0 %v5205
        %5384 = vmatprep.subr.mxu0 %v5210
        %5385 = vmatpush1.msra.mxu0 %v5209
        %5386 = vmatprep.subr.mxu0 %v5214
        %5387 = vmatpush1.msra.mxu0 %v5213
        %5388 = vmatprep.subr.mxu0 %v5218
        %5389 = vmatpush1.msra.mxu0 %v5217
        %5390 = vmatprep.subr.mxu0 %v5222
        %5391 = vmatpush1.msra.mxu0 %v5221
        %5392 = vmatprep.subr.mxu0 %v5226
        %5393 = vmatpush1.msra.mxu0 %v5225
        %5394 = vmatprep.subr.mxu0 %v5230
        %5395 = vmatpush1.msra.mxu0 %v5229
        %5396 = vmatprep.subr.mxu0 %v5234
        %5397 = vmatpush1.msra.mxu0 %v5233
        %5398 = vmatprep.subr.mxu0 %v5238
        %5399 = vmatpush1.msra.mxu0 %v5237
        %5400 = vmatprep.subr.mxu0 %v5242
        %5401 = vmatpush1.msra.mxu0 %v5241
        %5402 = vmatprep.subr.mxu0 %v5246
        %5403 = vmatpush1.msra.mxu0 %v5245
        %5404 = vmatprep.subr.mxu0 %v5250
        %5405 = vmatpush1.msra.mxu0 %v5249
        %5406 = vmatprep.subr.mxu0 %v5254
        %5407 = vmatpush1.msra.mxu0 %v5253
        %5408 = vmatprep.subr.mxu0 %v5258
        %5409 = vmatpush1.msra.mxu0 %v5257
        %5410 = vmatprep.subr.mxu0 %v5262
        %5411 = vmatpush1.msra.mxu0 %v5261
        %5412 = vmatprep.subr.mxu0 %v5266
        %5413 = vmatpush1.msra.mxu0 %v5265
        %5414 = vmatprep.subr.mxu0 %v5270
        %5415 = vmatpush1.msra.mxu0 %v5269
        %5416 = vmatprep.subr.mxu0 %v5274
        %5417 = vmatpush1.msra.mxu0 %v5273
        %5418 = vmatprep.subr.mxu0 %v5278
        %5419 = vmatpush1.msra.mxu0 %v5277
        %5420 = vmatprep.mubr.f32.mxu0 %v5148
        %5421 = vmatmul.mubr.f32.gmra.mrb[0].mxu0 %v5147
        %v5422 = vpop.f32.mrb[0].mxu0
        %v5423 = vadd.f32 0.0, %v5422
        %v5424 = vpop.f32.mrb[0].mxu0
        %v5425 = vadd.f32 0.0, %v5424
        %5426 = vmatprep.mubr.f32.mxu0 %v5150
        %5427 = vmatmul.mubr.f32.gmra.mrb[0].mxu0 %v5149
        %v5428 = vpop.f32.mrb[0].mxu0
        %v5429 = vadd.f32 0.0, %v5428
        %v5430 = vpop.f32.mrb[0].mxu0
        %v5431 = vadd.f32 0.0, %v5430
        %5432 = vdwg.mxu0
        %v5433 = vadd.f32 %v278, %v5346
        %v5434 = vadd.f32 %v282, %v5348
        %v5435 = vadd.f32 %v286, %v5423
        %v5436 = vadd.f32 %v290, %v5425
        %v5437 = vadd.f32 %v278, %v5352
        %v5438 = vadd.f32 %v282, %v5354
        %v5439 = vadd.f32 %v286, %v5429
        %v5440 = vadd.f32 %v290, %v5431
        %v5441 = vld [vmem:[%s883] sm:$0xff]
        %v5442 = vld [vmem:[%s883 + $0x8] sm:$0xff]
        %v5443 = vxor.u32 %v5433, 2147483648
        %v5444 = vxor.u32 %v5437, 2147483648
        %v5445 = vmul.f32 %v5443, 1.442695
        %v5446 = vpow.pop %v5445
        %v5447 = vmul.f32 %v5444, 1.442695
        %v5448 = vpow.pop %v5447
        %v5449 = vadd.f32 %v5446, 1.0
        %v5450 = vadd.f32 %v5448, 1.0
        %v5451 = vrcp.pop %v5449
        %v5452 = vmul.f32 1.0, %v5451
        %v5453 = vrcp.pop %v5450
        %v5454 = vmul.f32 1.0, %v5453
        %v5455 = vxor.u32 %v5434, 2147483648
        %v5456 = vxor.u32 %v5438, 2147483648
        %v5457 = vmul.f32 %v5455, 1.442695
        %v5458 = vpow.pop %v5457
        %v5459 = vmul.f32 %v5456, 1.442695
        %v5460 = vpow.pop %v5459
        %v5461 = vadd.f32 %v5458, 1.0
        %v5462 = vadd.f32 %v5460, 1.0
        %v5463 = vrcp.pop %v5461
        %v5464 = vmul.f32 1.0, %v5463
        %v5465 = vrcp.pop %v5462
        %v5466 = vmul.f32 1.0, %v5465
        %v5467 = vtanh.pop %v5435
        %v5468 = vtanh.pop %v5439
        %v5469 = vxor.u32 %v5436, 2147483648
        %v5470 = vxor.u32 %v5440, 2147483648
        %v5471 = vmul.f32 %v5469, 1.442695
        %v5472 = vpow.pop %v5471
        %v5473 = vmul.f32 %v5470, 1.442695
        %v5474 = vpow.pop %v5473
        %v5475 = vadd.f32 %v5472, 1.0
        %v5476 = vadd.f32 %v5474, 1.0
        %v5477 = vrcp.pop %v5475
        %v5478 = vmul.f32 1.0, %v5477
        %v5479 = vrcp.pop %v5476
        %v5480 = vmul.f32 1.0, %v5479
        %v5481 = vmul.f32 %v5464, %v5441
        %v5482 = vmul.f32 %v5466, %v5442
        %v5483 = vmul.f32 %v5452, %v5467
        %v5484 = vmul.f32 %v5454, %v5468
        %v5485 = vadd.f32 %v5481, %v5483
        %v5486 = vadd.f32 %v5482, %v5484
        %v5487 = vtanh.pop %v5485
        %v5488 = vtanh.pop %v5486
        %v5489 = vmul.f32 %v5478, %v5487
        %v5490 = vmul.f32 %v5480, %v5488
        %5491 = vst [vmem:[%s883] sm:$0xff] %v5485
        %5492 = vst [vmem:[%s883 + $0x8] sm:$0xff] %v5486
        %5493 = vst [vmem:[#allocation4 + $0x8] sm:$0xff] %v5489
        %5494 = vst [vmem:[#allocation4 + $0x18] sm:$0xff] %v5490
        %s5495 = scalar_lea.vmem %s216, 240 [#allocation9]
        %5496 = vst [vmem:[%s5495] sm:$0xff] %v5489
        %5497 = vst [vmem:[%s5495 + $0x8] sm:$0xff] %v5490
        %s5498 = scalar_lea.vmem %s223, 240 [#allocation10]
        %5499 = vst [vmem:[%s5498] sm:$0xff] %v5485
        %5500 = vst [vmem:[%s5498 + $0x8] sm:$0xff] %v5486
        %s5501 = sand.u32 %s97, 1
        %s5502 = scalar_lea.sflag [#allocation8], %s5501
        %s5503 = sand.u32 %s97, 1
        %s5504 = smul.addr %s5503, 256
        %s5505 = scalar_lea.vmem [#allocation9], %s5504
        %s5506 = sand.u32 %s125, 1
        %s5507 = scalar_lea.sflag [#allocation11], %s5506
        %s5508 = sand.u32 %s125, 1
        %s5509 = smul.addr %s5508, 256
        %s5510 = scalar_lea.vmem [#allocation10], %s5509
        // Predicated region
        $region47: #{tpu_custom_call.1} parent=27 // pred_check
          %p5511 = pneg %p107
        $region48: #{tpu_custom_call.1} parent=27 // pred_check_branch
          %5513 = sbr.rel (%p5511) target = $region50
        $region49: #{tpu_custom_call.1} parent=27 // pred_region
          %s5514 = smul.u32 8, %s31
          %s5515 = smul.u32 2, %s30
          %s5517 = ssub.s32 4096, 4096
          %5518 = vsyncadd %s5502, %s5517
          %s5519 = smul.addr %s5514, 4
          %s5520 = sadd.s32 %s5515, %s5519
          %s5521 = smul.addr %s5520, 128
          %s5522 = scalar_lea.hbm %s4, %s5521
          %s5523 = sshll.u32 %s5505, 4
          %s5524 = int_to_ptr.vmem [resolvable:$true] %s5523
          %5529 = dma.vmem_to_hbm [thread:$0]  %s5524, 4096, %s5522, %s5502, 128, 128, 8
        $region50: #{tpu_custom_call.1} parent=27 // pred_fallthru
          _
        // Predicated region
        $region51: #{tpu_custom_call.1} parent=27 // pred_check
          %p5530 = pneg %p135
        $region52: #{tpu_custom_call.1} parent=27 // pred_check_branch
          %5532 = sbr.rel (%p5530) target = $region54
        $region53: #{tpu_custom_call.1} parent=27 // pred_region
          %s5533 = smul.u32 8, %s31
          %s5534 = smul.u32 2, %s30
          %s5536 = ssub.s32 4096, 4096
          %5537 = vsyncadd %s5507, %s5536
          %s5538 = smul.addr %s5533, 4
          %s5539 = sadd.s32 %s5534, %s5538
          %s5540 = smul.addr %s5539, 128
          %s5541 = scalar_lea.hbm %s5, %s5540
          %s5542 = sshll.u32 %s5510, 4
          %s5543 = int_to_ptr.vmem [resolvable:$true] %s5542
          %5548 = dma.vmem_to_hbm [thread:$0]  %s5543, 4096, %s5541, %s5507, 128, 128, 8
        $region54: #{tpu_custom_call.1} parent=27 // pred_fallthru
          _
      $region28: #{tpu_custom_call.1} parent=5 // pred_fallthru
        _
      %p5549 = scmp.le.s32.totalorder 2, %s21
      // Predicated region
      $region55: #{tpu_custom_call.1} parent=5 // pred_check
        %p5550 = pneg %p5549
      $region56: #{tpu_custom_call.1} parent=5 // pred_check_branch
        %5552 = sbr.rel (%p5550) target = $region58
      $region57: #{tpu_custom_call.1} parent=5 // pred_region
        %s5553 = ssub.s32 %s21, 2
        // Predicated region
        $region59: #{tpu_custom_call.1} parent=57 // pred_check
          %p5554 = pneg %p113
        $region60: #{tpu_custom_call.1} parent=57 // pred_check_branch
          %5556 = sbr.rel (%p5554) target = $region62
        $region61: #{tpu_custom_call.1} parent=57 // pred_region
          %s5557 = sand.u32 %s98, 1
          %s5558 = scalar_lea.sflag [#allocation8], %s5557
          %s5559 = sand.u32 %s98, 1
          %s5560 = smul.addr %s5559, 256
          %s5561 = scalar_lea.vmem [#allocation9], %s5560
          %5562 = dma.done %s5558, 4096
        $region62: #{tpu_custom_call.1} parent=57 // pred_fallthru
          _
        // Predicated region
        $region63: #{tpu_custom_call.1} parent=57 // pred_check
          %p5563 = pneg %p141
        $region64: #{tpu_custom_call.1} parent=57 // pred_check_branch
          %5565 = sbr.rel (%p5563) target = $region66
        $region65: #{tpu_custom_call.1} parent=57 // pred_region
          %s5566 = sand.u32 %s126, 1
          %s5567 = scalar_lea.sflag [#allocation11], %s5566
          %s5568 = sand.u32 %s126, 1
          %s5569 = smul.addr %s5568, 256
          %s5570 = scalar_lea.vmem [#allocation10], %s5569
          %5571 = dma.done %s5567, 4096
        $region66: #{tpu_custom_call.1} parent=57 // pred_fallthru
          _
      $region58: #{tpu_custom_call.1} parent=5 // pred_fallthru
        _
    $region6: #{tpu_custom_call.1} parent=1 // loop_footer
      %s25 = sadd.s32 1, %s21
    $region7: #{tpu_custom_call.1} parent=1 // loop_footer_branch
      %20 = sbr.rel target = $region3
    $region8: #{tpu_custom_call.1} parent=1 // loop_exit
      _
    %5572 = vsyncpa [#allocation7], 1
    %s5573 = scalar_lea.sflag [#allocation7], 1
    %5574 = vsyncpa %s5573, 1
    %5575 = vsyncpa [#allocation8], 1
    %s5576 = scalar_lea.sflag [#allocation8], 1
    %5577 = vsyncpa %s5576, 1
    %5578 = vsyncpa [#allocation11], 1
    %s5579 = scalar_lea.sflag [#allocation11], 1
    %5580 = vsyncpa %s5579, 1

</llo_original>
